<compile_context>
chip_gen: v6e
topology: v6e:2x2x1
jax: 0.10.0
libtpu: 0.0.40
codegen_flags: <defaults>
</compile_context>

<pallas_src>
import functools

import jax
import jax.numpy as jnp
from jax import lax
from jax.experimental import pallas as pl
from jax.experimental.pallas import tpu as pltpu


def _shift_h(x, dy):
    """y[:, i] = x[:, i + dy], zero-filled outside [0, H). dy in {-1, 0, 1}."""
    if dy == 0:
        return x
    H = x.shape[1]
    z = jnp.zeros_like(x[:, :1])
    if dy > 0:
        return jnp.concatenate([x[:, dy:], z], axis=1)
    return jnp.concatenate([z, x[:, :H + dy]], axis=1)


def _edge_masks(shape):
    """Hoisted W-boundary masks: (valid for dx=-1, valid for dx=+1)."""
    col = lax.broadcasted_iota(jnp.int32, shape, 2)
    W = shape[2]
    return col >= 1, col <= W - 2


def _shift_w(x, dx, masks):
    """y[:, :, j] = x[:, :, j + dx], zero-filled outside [0, W). dx in {-1,0,1}."""
    if dx == 0:
        return x
    W = x.shape[2]
    rolled = pltpu.roll(x, shift=(-dx) % W, axis=2)   # rolled[..,j,.] = x[..,j+dx,.]
    valid = masks[1] if dx > 0 else masks[0]
    return jnp.where(valid, rolled, jnp.zeros_like(rolled))


def _build_patches(x, masks, dtype):
    """The 9 shifted views of x for a 3x3/stride-1/pad-1 conv (tap = 3*ky+kx),
    cast once to the MXU operand dtype."""
    pats = []
    for ky in range(3):
        xh = _shift_h(x, ky - 1)
        for kx in range(3):
            pats.append(_shift_w(xh, kx - 1, masks).astype(dtype))
    return pats


def _conv_lstm_kernel(x_ref, h_ref, c_ref, wt_ref, bt_ref, wg_ref, bg_ref,
                      h_out_ref, c_out_ref):
    f32 = jnp.float32
    bf16 = jnp.bfloat16
    _, H, W, Cin = x_ref.shape
    Cout = h_ref.shape[3]
    G = 4 * Cout                    # fused gate lanes: [forget|input|output|state]

    # Per-lane nonlinearity selectors: sigmoid(z) = 0.5*tanh(0.5 z) + 0.5 on the
    # first 3*Cout lanes, tanh(z) on the last Cout lanes -> one EUP tanh pass.
    lane = lax.broadcasted_iota(jnp.int32, (1, G), 1)
    is_sig = lane < 3 * Cout
    nl_s = jnp.where(is_sig, 0.5, 1.0)
    nl_off = jnp.where(is_sig, 0.5, 0.0)

    x = x_ref[...].astype(f32)
    h = h_ref[...].astype(f32)

    # ---- transform conv: hidden (Cout) -> Cin; bf16 MXU operands, f32 acc ----
    M = H * W
    h_pats = _build_patches(h, _edge_masks(h.shape), bf16)
    t_acc = jnp.zeros((M, Cin), f32)
    for t in range(9):
        t_acc = t_acc + jnp.dot(h_pats[t].reshape(M, Cout), wt_ref[t],
                                preferred_element_type=f32)
    u = (x.reshape(M, Cin) + t_acc + bt_ref[...]).reshape(1, H, W, Cin)

    # ---- fused gate conv (4 gates concatenated along lanes), in H-strips ----
    u_pats = _build_patches(u, _edge_masks(u.shape), bf16)
    wg = [wg_ref[t] for t in range(9)]           # (Cin, 4*Cout) bf16 tap slabs
    bg = bg_ref[...]

    SH = 8 if H % 8 == 0 else H                  # strip height (acc = 16 vregs)
    for r0 in range(0, H, SH):
        rows = SH * W
        acc = jnp.zeros((rows, G), f32)
        for t in range(9):
            p = u_pats[t][:, r0:r0 + SH].reshape(rows, Cin)
            acc = acc + jnp.dot(p, wg[t], preferred_element_type=f32)
        acc = acc + bg

        gates = jnp.tanh(acc * nl_s) * nl_s + nl_off     # all 4 gates, 1 tanh pass
        fg = gates[:, 0 * Cout:1 * Cout]
        ig = gates[:, 1 * Cout:2 * Cout]
        og = gates[:, 2 * Cout:3 * Cout]
        sg = gates[:, 3 * Cout:4 * Cout]

        c_old = c_ref[:, r0:r0 + SH].reshape(rows, Cout).astype(f32)
        c_new = fg * c_old + ig * sg
        h_new = og * jnp.tanh(c_new)

        c_out_ref[:, r0:r0 + SH] = c_new.reshape(1, SH, W, Cout).astype(c_out_ref.dtype)
        h_out_ref[:, r0:r0 + SH] = h_new.reshape(1, SH, W, Cout).astype(h_out_ref.dtype)


def _fuse_params(params):
    """Concat the 4 gate convs along Cout, flatten taps, cast weights to bf16."""
    (wt, bt), (wf, bf_), (wi, bi), (wo, bo), (ws, bs) = params
    wg = jnp.concatenate([wf, wi, wo, ws], axis=-1)      # (3,3,Cin,4*Cout)
    bg = jnp.concatenate([bf_, bi, bo, bs], axis=-1)     # (1,4*Cout)
    wt_r = wt.reshape(9, wt.shape[2], wt.shape[3]).astype(jnp.bfloat16)
    wg_r = wg.reshape(9, wg.shape[2], wg.shape[3]).astype(jnp.bfloat16)
    return wt_r, bt.astype(jnp.float32), wg_r, bg.astype(jnp.float32)


@functools.partial(jax.jit, donate_argnums=(1, 2))
def conv2d_lstm_cell(x, hidden, cell, params):
    """Pallas Conv2dLSTMCell forward.  Returns (new_hidden, new_cell).
    hidden/cell are donated and aliased to the outputs (in-place state update)."""
    wt_r, bt, wg_r, bg = _fuse_params(params)
    B, H, W, Cin = x.shape
    Cout = hidden.shape[-1]

    vmem = pl.BlockSpec(memory_space=pltpu.MemorySpace.VMEM)   # whole array in VMEM
    blk_in = pl.BlockSpec((1, H, W, Cin), lambda b: (b, 0, 0, 0))
    blk_st = pl.BlockSpec((1, H, W, Cout), lambda b: (b, 0, 0, 0))

    h_new, c_new = pl.pallas_call(
        _conv_lstm_kernel,
        grid=(B,),
        in_specs=[blk_in, blk_st, blk_st, vmem, vmem, vmem, vmem],
        out_specs=(blk_st, blk_st),
        out_shape=(jax.ShapeDtypeStruct(hidden.shape, hidden.dtype),
                   jax.ShapeDtypeStruct(cell.shape, cell.dtype)),
        input_output_aliases={1: 0, 2: 1},          # hidden->h_out, cell->c_out
        compiler_params=pltpu.CompilerParams(
            dimension_semantics=("parallel",),
            vmem_limit_bytes=32 * 1024 * 1024),
    )(x, hidden, cell, wt_r, bt, wg_r, bg)
    return h_new, c_new


# ---------------- pure-JAX reference (for correctness check) ----------------
def _conv3x3_ref(x, w, b):
    y = lax.conv_general_dilated(x, w, window_strides=(1, 1), padding='SAME',
                                 dimension_numbers=('NHWC', 'HWIO', 'NHWC'))
    return y + b.reshape(1, 1, 1, -1)


def conv2d_lstm_cell_ref(x, hidden, cell, params):
    (wt, bt), (wf, bf_), (wi, bi), (wo, bo), (ws, bs) = params
    u = x + _conv3x3_ref(hidden, wt, bt)
    f = jax.nn.sigmoid(_conv3x3_ref(u, wf, bf_))
    i = jax.nn.sigmoid(_conv3x3_ref(u, wi, bi))
    o = jax.nn.sigmoid(_conv3x3_ref(u, wo, bo))
    g = jnp.tanh(_conv3x3_ref(u, ws, bs))
    c_new = f * cell + i * g
    h_new = o * jnp.tanh(c_new)
    return h_new, c_new


if __name__ == "__main__":
    B, H, W = 2, 16, 16
    C_IN, C_OUT = 8, 32   # in_channels / out_channels of the LSTM cell

    key = jax.random.PRNGKey(0)
    ks = jax.random.split(key, 13)

    def conv_params(kw, kb, cin, cout):
        bound = 1.0 / (cin * 9) ** 0.5
        w = jax.random.uniform(kw, (3, 3, cin, cout), jnp.float32, -bound, bound)
        b = jax.random.uniform(kb, (1, cout), jnp.float32, -bound, bound)
        return w, b

    params = (
        conv_params(ks[0], ks[1], C_OUT, C_IN),   # transform: out_ch -> in_ch
        conv_params(ks[2], ks[3], C_IN, C_OUT),   # forget
        conv_params(ks[4], ks[5], C_IN, C_OUT),   # input
        conv_params(ks[6], ks[7], C_IN, C_OUT),   # output
        conv_params(ks[8], ks[9], C_IN, C_OUT),   # state
    )

    x = jax.random.normal(ks[10], (B, H, W, C_IN), jnp.float32)
    hidden = jax.random.normal(ks[11], (B, H, W, C_OUT), jnp.float32)
    cell = jax.random.normal(ks[12], (B, H, W, C_OUT), jnp.float32)

    # Reference first: hidden/cell are donated to (and aliased by) the kernel.
    h_ref, c_ref = conv2d_lstm_cell_ref(x, hidden, cell, params)

    h_new, c_new = conv2d_lstm_cell(x, hidden, cell, params)
    jax.block_until_ready((h_new, c_new))

    err = max(float(jnp.max(jnp.abs(h_new - h_ref))),
              float(jnp.max(jnp.abs(c_new - c_ref))))
    # Tolerance sized for bf16 MXU operands with f32 accumulation.
    assert err < 3e-2, f"kernel/reference mismatch: max abs err = {err}"
    print("KERNEL_OK")
</pallas_src>

<mosaic_0001>
module attributes {stable_mosaic.version = 11 : i64} {
  func.func @_conv_lstm_kernel(%arg0: i32, %arg1: memref<1x16x16x8xf32, #tpu.memory_space<vmem>>, %arg2: memref<1x16x16x32xf32, #tpu.memory_space<vmem>>, %arg3: memref<1x16x16x32xf32, #tpu.memory_space<vmem>>, %arg4: memref<9x32x8xbf16, #tpu.memory_space<vmem>>, %arg5: memref<1x8xf32, #tpu.memory_space<vmem>>, %arg6: memref<9x8x128xbf16, #tpu.memory_space<vmem>>, %arg7: memref<1x128xf32, #tpu.memory_space<vmem>>, %arg8: memref<1x16x16x32xf32, #tpu.memory_space<vmem>>, %arg9: memref<1x16x16x32xf32, #tpu.memory_space<vmem>>) attributes {dimension_semantics = [#tpu.dimension_semantics<parallel>], iteration_bounds = array<i64: 2>, scalar_prefetch = 0 : i64, scratch_operands = 0 : i64, tpu.core_type = #tpu.core_type<tc>, window_params = [{transform_indices = @transform_0, window_bounds = array<i64: 1, 16, 16, 8>}, {transform_indices = @transform_1, window_bounds = array<i64: 1, 16, 16, 32>}, {transform_indices = @transform_2, window_bounds = array<i64: 1, 16, 16, 32>}, {pipeline_mode = #tpu.pipeline_mode<synchronous>, transform_indices = @transform_3, window_bounds = array<i64: 9, 32, 8>}, {pipeline_mode = #tpu.pipeline_mode<synchronous>, transform_indices = @transform_4, window_bounds = array<i64: 1, 8>}, {pipeline_mode = #tpu.pipeline_mode<synchronous>, transform_indices = @transform_5, window_bounds = array<i64: 9, 8, 128>}, {pipeline_mode = #tpu.pipeline_mode<synchronous>, transform_indices = @transform_6, window_bounds = array<i64: 1, 128>}, {transform_indices = @transform_7, window_bounds = array<i64: 1, 16, 16, 32>}, {transform_indices = @transform_8, window_bounds = array<i64: 1, 16, 16, 32>}]} {
    %0 = tpu.iota {dimensions = array<i32: 1>} : vector<1x128xi32>
    %c96_i32 = arith.constant 96 : i32
    %1 = vector.broadcast %c96_i32 : i32 to vector<1x128xi32>
    %2 = arith.cmpi slt, %0, %1 : vector<1x128xi32>
    %cst = arith.constant 5.000000e-01 : f32
    %cst_0 = arith.constant 1.000000e+00 : f32
    %3 = vector.broadcast %cst : f32 to vector<1x128xf32>
    %4 = vector.broadcast %cst_0 : f32 to vector<1x128xf32>
    %5 = arith.select %2, %3, %4 : vector<1x128xi1>, vector<1x128xf32>
    %cst_1 = arith.constant 5.000000e-01 : f32
    %cst_2 = arith.constant 0.000000e+00 : f32
    %6 = vector.broadcast %cst_1 : f32 to vector<1x128xf32>
    %7 = vector.broadcast %cst_2 : f32 to vector<1x128xf32>
    %8 = arith.select %2, %6, %7 : vector<1x128xi1>, vector<1x128xf32>
    %c0 = arith.constant 0 : index
    %c0_3 = arith.constant 0 : index
    %c0_4 = arith.constant 0 : index
    %c0_5 = arith.constant 0 : index
    %9 = vector.load %arg1[%c0, %c0_3, %c0_4, %c0_5] : memref<1x16x16x8xf32, #tpu.memory_space<vmem>>, vector<1x16x16x8xf32>
    %c0_6 = arith.constant 0 : index
    %c0_7 = arith.constant 0 : index
    %c0_8 = arith.constant 0 : index
    %c0_9 = arith.constant 0 : index
    %10 = vector.load %arg2[%c0_6, %c0_7, %c0_8, %c0_9] : memref<1x16x16x32xf32, #tpu.memory_space<vmem>>, vector<1x16x16x32xf32>
    %11 = tpu.iota {dimensions = array<i32: 2>} : vector<1x16x16x32xi32>
    %c1_i32 = arith.constant 1 : i32
    %12 = vector.broadcast %c1_i32 : i32 to vector<1x16x16x32xi32>
    %13 = arith.cmpi sge, %11, %12 : vector<1x16x16x32xi32>
    %c14_i32 = arith.constant 14 : i32
    %14 = vector.broadcast %c14_i32 : i32 to vector<1x16x16x32xi32>
    %15 = arith.cmpi sle, %11, %14 : vector<1x16x16x32xi32>
    %cst_10 = arith.constant 0.000000e+00 : f32
    %16 = vector.broadcast %cst_10 : f32 to vector<1x1x16x32xf32>
    %17 = vector.extract_strided_slice %10 {offsets = [0, 0, 0, 0], sizes = [1, 15, 16, 32], strides = [1, 1, 1, 1]} : vector<1x16x16x32xf32> to vector<1x15x16x32xf32>
    %18 = tpu.concatenate %16, %17 in 1 : vector<1x1x16x32xf32>, vector<1x15x16x32xf32> -> vector<1x16x16x32xf32>
    %c1_i32_11 = arith.constant 1 : i32
    %19 = tpu.dynamic_rotate %18 by %c1_i32_11 dim 2 : vector<1x16x16x32xf32>, i32 -> vector<1x16x16x32xf32>
    %cst_12 = arith.constant 0.000000e+00 : f32
    %20 = vector.broadcast %cst_12 : f32 to vector<1x16x16x32xf32>
    %21 = arith.select %13, %19, %20 : vector<1x16x16x32xi1>, vector<1x16x16x32xf32>
    %22 = arith.truncf %21 : vector<1x16x16x32xf32> to vector<1x16x16x32xbf16>
    %23 = arith.truncf %18 : vector<1x16x16x32xf32> to vector<1x16x16x32xbf16>
    %c15_i32 = arith.constant 15 : i32
    %24 = tpu.dynamic_rotate %18 by %c15_i32 dim 2 : vector<1x16x16x32xf32>, i32 -> vector<1x16x16x32xf32>
    %cst_13 = arith.constant 0.000000e+00 : f32
    %25 = vector.broadcast %cst_13 : f32 to vector<1x16x16x32xf32>
    %26 = arith.select %15, %24, %25 : vector<1x16x16x32xi1>, vector<1x16x16x32xf32>
    %27 = arith.truncf %26 : vector<1x16x16x32xf32> to vector<1x16x16x32xbf16>
    %c1_i32_14 = arith.constant 1 : i32
    %28 = tpu.dynamic_rotate %10 by %c1_i32_14 dim 2 : vector<1x16x16x32xf32>, i32 -> vector<1x16x16x32xf32>
    %cst_15 = arith.constant 0.000000e+00 : f32
    %29 = vector.broadcast %cst_15 : f32 to vector<1x16x16x32xf32>
    %30 = arith.select %13, %28, %29 : vector<1x16x16x32xi1>, vector<1x16x16x32xf32>
    %31 = arith.truncf %30 : vector<1x16x16x32xf32> to vector<1x16x16x32xbf16>
    %32 = arith.truncf %10 : vector<1x16x16x32xf32> to vector<1x16x16x32xbf16>
    %c15_i32_16 = arith.constant 15 : i32
    %33 = tpu.dynamic_rotate %10 by %c15_i32_16 dim 2 : vector<1x16x16x32xf32>, i32 -> vector<1x16x16x32xf32>
    %cst_17 = arith.constant 0.000000e+00 : f32
    %34 = vector.broadcast %cst_17 : f32 to vector<1x16x16x32xf32>
    %35 = arith.select %15, %33, %34 : vector<1x16x16x32xi1>, vector<1x16x16x32xf32>
    %36 = arith.truncf %35 : vector<1x16x16x32xf32> to vector<1x16x16x32xbf16>
    %cst_18 = arith.constant 0.000000e+00 : f32
    %37 = vector.broadcast %cst_18 : f32 to vector<1x1x16x32xf32>
    %38 = vector.extract_strided_slice %10 {offsets = [0, 1, 0, 0], sizes = [1, 15, 16, 32], strides = [1, 1, 1, 1]} : vector<1x16x16x32xf32> to vector<1x15x16x32xf32>
    %39 = tpu.concatenate %38, %37 in 1 : vector<1x15x16x32xf32>, vector<1x1x16x32xf32> -> vector<1x16x16x32xf32>
    %c1_i32_19 = arith.constant 1 : i32
    %40 = tpu.dynamic_rotate %39 by %c1_i32_19 dim 2 : vector<1x16x16x32xf32>, i32 -> vector<1x16x16x32xf32>
    %cst_20 = arith.constant 0.000000e+00 : f32
    %41 = vector.broadcast %cst_20 : f32 to vector<1x16x16x32xf32>
    %42 = arith.select %13, %40, %41 : vector<1x16x16x32xi1>, vector<1x16x16x32xf32>
    %43 = arith.truncf %42 : vector<1x16x16x32xf32> to vector<1x16x16x32xbf16>
    %44 = arith.truncf %39 : vector<1x16x16x32xf32> to vector<1x16x16x32xbf16>
    %c15_i32_21 = arith.constant 15 : i32
    %45 = tpu.dynamic_rotate %39 by %c15_i32_21 dim 2 : vector<1x16x16x32xf32>, i32 -> vector<1x16x16x32xf32>
    %cst_22 = arith.constant 0.000000e+00 : f32
    %46 = vector.broadcast %cst_22 : f32 to vector<1x16x16x32xf32>
    %47 = arith.select %15, %45, %46 : vector<1x16x16x32xi1>, vector<1x16x16x32xf32>
    %48 = arith.truncf %47 : vector<1x16x16x32xf32> to vector<1x16x16x32xbf16>
    %cst_23 = arith.constant 0.000000e+00 : f32
    %49 = vector.broadcast %cst_23 : f32 to vector<256x8xf32>
    %50 = vector.shape_cast %22 : vector<1x16x16x32xbf16> to vector<256x32xbf16>
    %c0_24 = arith.constant 0 : index
    %c0_25 = arith.constant 0 : index
    %c0_26 = arith.constant 0 : index
    %51 = vector.load %arg4[%c0_24, %c0_25, %c0_26] : memref<9x32x8xbf16, #tpu.memory_space<vmem>>, vector<1x32x8xbf16>
    %52 = vector.shape_cast %51 : vector<1x32x8xbf16> to vector<32x8xbf16>
    %cst_27 = arith.constant dense<0.000000e+00> : vector<256x8xf32>
    %53 = tpu.matmul %50, %52, %cst_27 {dimension_numbers = #tpu.dot_dimension_numbers<[1], [0], [0], [1], [0, 0, 1, 1], [], []>} : vector<256x32xbf16>, vector<32x8xbf16>, vector<256x8xf32> -> vector<256x8xf32>
    %54 = arith.addf %49, %53 : vector<256x8xf32>
    %55 = vector.shape_cast %23 : vector<1x16x16x32xbf16> to vector<256x32xbf16>
    %c1 = arith.constant 1 : index
    %c0_28 = arith.constant 0 : index
    %c0_29 = arith.constant 0 : index
    %56 = vector.load %arg4[%c1, %c0_28, %c0_29] : memref<9x32x8xbf16, #tpu.memory_space<vmem>>, vector<1x32x8xbf16>
    %57 = vector.shape_cast %56 : vector<1x32x8xbf16> to vector<32x8xbf16>
    %cst_30 = arith.constant dense<0.000000e+00> : vector<256x8xf32>
    %58 = tpu.matmul %55, %57, %cst_30 {dimension_numbers = #tpu.dot_dimension_numbers<[1], [0], [0], [1], [0, 0, 1, 1], [], []>} : vector<256x32xbf16>, vector<32x8xbf16>, vector<256x8xf32> -> vector<256x8xf32>
    %59 = arith.addf %54, %58 : vector<256x8xf32>
    %60 = vector.shape_cast %27 : vector<1x16x16x32xbf16> to vector<256x32xbf16>
    %c2 = arith.constant 2 : index
    %c0_31 = arith.constant 0 : index
    %c0_32 = arith.constant 0 : index
    %61 = vector.load %arg4[%c2, %c0_31, %c0_32] : memref<9x32x8xbf16, #tpu.memory_space<vmem>>, vector<1x32x8xbf16>
    %62 = vector.shape_cast %61 : vector<1x32x8xbf16> to vector<32x8xbf16>
    %cst_33 = arith.constant dense<0.000000e+00> : vector<256x8xf32>
    %63 = tpu.matmul %60, %62, %cst_33 {dimension_numbers = #tpu.dot_dimension_numbers<[1], [0], [0], [1], [0, 0, 1, 1], [], []>} : vector<256x32xbf16>, vector<32x8xbf16>, vector<256x8xf32> -> vector<256x8xf32>
    %64 = arith.addf %59, %63 : vector<256x8xf32>
    %65 = vector.shape_cast %31 : vector<1x16x16x32xbf16> to vector<256x32xbf16>
    %c3 = arith.constant 3 : index
    %c0_34 = arith.constant 0 : index
    %c0_35 = arith.constant 0 : index
    %66 = vector.load %arg4[%c3, %c0_34, %c0_35] : memref<9x32x8xbf16, #tpu.memory_space<vmem>>, vector<1x32x8xbf16>
    %67 = vector.shape_cast %66 : vector<1x32x8xbf16> to vector<32x8xbf16>
    %cst_36 = arith.constant dense<0.000000e+00> : vector<256x8xf32>
    %68 = tpu.matmul %65, %67, %cst_36 {dimension_numbers = #tpu.dot_dimension_numbers<[1], [0], [0], [1], [0, 0, 1, 1], [], []>} : vector<256x32xbf16>, vector<32x8xbf16>, vector<256x8xf32> -> vector<256x8xf32>
    %69 = arith.addf %64, %68 : vector<256x8xf32>
    %70 = vector.shape_cast %32 : vector<1x16x16x32xbf16> to vector<256x32xbf16>
    %c4 = arith.constant 4 : index
    %c0_37 = arith.constant 0 : index
    %c0_38 = arith.constant 0 : index
    %71 = vector.load %arg4[%c4, %c0_37, %c0_38] : memref<9x32x8xbf16, #tpu.memory_space<vmem>>, vector<1x32x8xbf16>
    %72 = vector.shape_cast %71 : vector<1x32x8xbf16> to vector<32x8xbf16>
    %cst_39 = arith.constant dense<0.000000e+00> : vector<256x8xf32>
    %73 = tpu.matmul %70, %72, %cst_39 {dimension_numbers = #tpu.dot_dimension_numbers<[1], [0], [0], [1], [0, 0, 1, 1], [], []>} : vector<256x32xbf16>, vector<32x8xbf16>, vector<256x8xf32> -> vector<256x8xf32>
    %74 = arith.addf %69, %73 : vector<256x8xf32>
    %75 = vector.shape_cast %36 : vector<1x16x16x32xbf16> to vector<256x32xbf16>
    %c5 = arith.constant 5 : index
    %c0_40 = arith.constant 0 : index
    %c0_41 = arith.constant 0 : index
    %76 = vector.load %arg4[%c5, %c0_40, %c0_41] : memref<9x32x8xbf16, #tpu.memory_space<vmem>>, vector<1x32x8xbf16>
    %77 = vector.shape_cast %76 : vector<1x32x8xbf16> to vector<32x8xbf16>
    %cst_42 = arith.constant dense<0.000000e+00> : vector<256x8xf32>
    %78 = tpu.matmul %75, %77, %cst_42 {dimension_numbers = #tpu.dot_dimension_numbers<[1], [0], [0], [1], [0, 0, 1, 1], [], []>} : vector<256x32xbf16>, vector<32x8xbf16>, vector<256x8xf32> -> vector<256x8xf32>
    %79 = arith.addf %74, %78 : vector<256x8xf32>
    %80 = vector.shape_cast %43 : vector<1x16x16x32xbf16> to vector<256x32xbf16>
    %c6 = arith.constant 6 : index
    %c0_43 = arith.constant 0 : index
    %c0_44 = arith.constant 0 : index
    %81 = vector.load %arg4[%c6, %c0_43, %c0_44] : memref<9x32x8xbf16, #tpu.memory_space<vmem>>, vector<1x32x8xbf16>
    %82 = vector.shape_cast %81 : vector<1x32x8xbf16> to vector<32x8xbf16>
    %cst_45 = arith.constant dense<0.000000e+00> : vector<256x8xf32>
    %83 = tpu.matmul %80, %82, %cst_45 {dimension_numbers = #tpu.dot_dimension_numbers<[1], [0], [0], [1], [0, 0, 1, 1], [], []>} : vector<256x32xbf16>, vector<32x8xbf16>, vector<256x8xf32> -> vector<256x8xf32>
    %84 = arith.addf %79, %83 : vector<256x8xf32>
    %85 = vector.shape_cast %44 : vector<1x16x16x32xbf16> to vector<256x32xbf16>
    %c7 = arith.constant 7 : index
    %c0_46 = arith.constant 0 : index
    %c0_47 = arith.constant 0 : index
    %86 = vector.load %arg4[%c7, %c0_46, %c0_47] : memref<9x32x8xbf16, #tpu.memory_space<vmem>>, vector<1x32x8xbf16>
    %87 = vector.shape_cast %86 : vector<1x32x8xbf16> to vector<32x8xbf16>
    %cst_48 = arith.constant dense<0.000000e+00> : vector<256x8xf32>
    %88 = tpu.matmul %85, %87, %cst_48 {dimension_numbers = #tpu.dot_dimension_numbers<[1], [0], [0], [1], [0, 0, 1, 1], [], []>} : vector<256x32xbf16>, vector<32x8xbf16>, vector<256x8xf32> -> vector<256x8xf32>
    %89 = arith.addf %84, %88 : vector<256x8xf32>
    %90 = vector.shape_cast %48 : vector<1x16x16x32xbf16> to vector<256x32xbf16>
    %c8 = arith.constant 8 : index
    %c0_49 = arith.constant 0 : index
    %c0_50 = arith.constant 0 : index
    %91 = vector.load %arg4[%c8, %c0_49, %c0_50] : memref<9x32x8xbf16, #tpu.memory_space<vmem>>, vector<1x32x8xbf16>
    %92 = vector.shape_cast %91 : vector<1x32x8xbf16> to vector<32x8xbf16>
    %cst_51 = arith.constant dense<0.000000e+00> : vector<256x8xf32>
    %93 = tpu.matmul %90, %92, %cst_51 {dimension_numbers = #tpu.dot_dimension_numbers<[1], [0], [0], [1], [0, 0, 1, 1], [], []>} : vector<256x32xbf16>, vector<32x8xbf16>, vector<256x8xf32> -> vector<256x8xf32>
    %94 = arith.addf %89, %93 : vector<256x8xf32>
    %95 = vector.shape_cast %9 : vector<1x16x16x8xf32> to vector<256x8xf32>
    %96 = arith.addf %95, %94 : vector<256x8xf32>
    %c0_52 = arith.constant 0 : index
    %c0_53 = arith.constant 0 : index
    %97 = vector.load %arg5[%c0_52, %c0_53] : memref<1x8xf32, #tpu.memory_space<vmem>>, vector<1x8xf32>
    %98 = vector.broadcast %97 : vector<1x8xf32> to vector<256x8xf32>
    %99 = arith.addf %96, %98 : vector<256x8xf32>
    %100 = vector.shape_cast %99 : vector<256x8xf32> to vector<1x16x16x8xf32>
    %101 = tpu.iota {dimensions = array<i32: 2>} : vector<1x16x16x8xi32>
    %c1_i32_54 = arith.constant 1 : i32
    %102 = vector.broadcast %c1_i32_54 : i32 to vector<1x16x16x8xi32>
    %103 = arith.cmpi sge, %101, %102 : vector<1x16x16x8xi32>
    %c14_i32_55 = arith.constant 14 : i32
    %104 = vector.broadcast %c14_i32_55 : i32 to vector<1x16x16x8xi32>
    %105 = arith.cmpi sle, %101, %104 : vector<1x16x16x8xi32>
    %cst_56 = arith.constant 0.000000e+00 : f32
    %106 = vector.broadcast %cst_56 : f32 to vector<1x1x16x8xf32>
    %107 = vector.extract_strided_slice %100 {offsets = [0, 0, 0, 0], sizes = [1, 15, 16, 8], strides = [1, 1, 1, 1]} : vector<1x16x16x8xf32> to vector<1x15x16x8xf32>
    %108 = tpu.concatenate %106, %107 in 1 : vector<1x1x16x8xf32>, vector<1x15x16x8xf32> -> vector<1x16x16x8xf32>
    %c1_i32_57 = arith.constant 1 : i32
    %109 = tpu.dynamic_rotate %108 by %c1_i32_57 dim 2 : vector<1x16x16x8xf32>, i32 -> vector<1x16x16x8xf32>
    %cst_58 = arith.constant 0.000000e+00 : f32
    %110 = vector.broadcast %cst_58 : f32 to vector<1x16x16x8xf32>
    %111 = arith.select %103, %109, %110 : vector<1x16x16x8xi1>, vector<1x16x16x8xf32>
    %112 = arith.truncf %111 : vector<1x16x16x8xf32> to vector<1x16x16x8xbf16>
    %113 = arith.truncf %108 : vector<1x16x16x8xf32> to vector<1x16x16x8xbf16>
    %c15_i32_59 = arith.constant 15 : i32
    %114 = tpu.dynamic_rotate %108 by %c15_i32_59 dim 2 : vector<1x16x16x8xf32>, i32 -> vector<1x16x16x8xf32>
    %cst_60 = arith.constant 0.000000e+00 : f32
    %115 = vector.broadcast %cst_60 : f32 to vector<1x16x16x8xf32>
    %116 = arith.select %105, %114, %115 : vector<1x16x16x8xi1>, vector<1x16x16x8xf32>
    %117 = arith.truncf %116 : vector<1x16x16x8xf32> to vector<1x16x16x8xbf16>
    %c1_i32_61 = arith.constant 1 : i32
    %118 = tpu.dynamic_rotate %100 by %c1_i32_61 dim 2 : vector<1x16x16x8xf32>, i32 -> vector<1x16x16x8xf32>
    %cst_62 = arith.constant 0.000000e+00 : f32
    %119 = vector.broadcast %cst_62 : f32 to vector<1x16x16x8xf32>
    %120 = arith.select %103, %118, %119 : vector<1x16x16x8xi1>, vector<1x16x16x8xf32>
    %121 = arith.truncf %120 : vector<1x16x16x8xf32> to vector<1x16x16x8xbf16>
    %122 = arith.truncf %100 : vector<1x16x16x8xf32> to vector<1x16x16x8xbf16>
    %c15_i32_63 = arith.constant 15 : i32
    %123 = tpu.dynamic_rotate %100 by %c15_i32_63 dim 2 : vector<1x16x16x8xf32>, i32 -> vector<1x16x16x8xf32>
    %cst_64 = arith.constant 0.000000e+00 : f32
    %124 = vector.broadcast %cst_64 : f32 to vector<1x16x16x8xf32>
    %125 = arith.select %105, %123, %124 : vector<1x16x16x8xi1>, vector<1x16x16x8xf32>
    %126 = arith.truncf %125 : vector<1x16x16x8xf32> to vector<1x16x16x8xbf16>
    %cst_65 = arith.constant 0.000000e+00 : f32
    %127 = vector.broadcast %cst_65 : f32 to vector<1x1x16x8xf32>
    %128 = vector.extract_strided_slice %100 {offsets = [0, 1, 0, 0], sizes = [1, 15, 16, 8], strides = [1, 1, 1, 1]} : vector<1x16x16x8xf32> to vector<1x15x16x8xf32>
    %129 = tpu.concatenate %128, %127 in 1 : vector<1x15x16x8xf32>, vector<1x1x16x8xf32> -> vector<1x16x16x8xf32>
    %c1_i32_66 = arith.constant 1 : i32
    %130 = tpu.dynamic_rotate %129 by %c1_i32_66 dim 2 : vector<1x16x16x8xf32>, i32 -> vector<1x16x16x8xf32>
    %cst_67 = arith.constant 0.000000e+00 : f32
    %131 = vector.broadcast %cst_67 : f32 to vector<1x16x16x8xf32>
    %132 = arith.select %103, %130, %131 : vector<1x16x16x8xi1>, vector<1x16x16x8xf32>
    %133 = arith.truncf %132 : vector<1x16x16x8xf32> to vector<1x16x16x8xbf16>
    %134 = arith.truncf %129 : vector<1x16x16x8xf32> to vector<1x16x16x8xbf16>
    %c15_i32_68 = arith.constant 15 : i32
    %135 = tpu.dynamic_rotate %129 by %c15_i32_68 dim 2 : vector<1x16x16x8xf32>, i32 -> vector<1x16x16x8xf32>
    %cst_69 = arith.constant 0.000000e+00 : f32
    %136 = vector.broadcast %cst_69 : f32 to vector<1x16x16x8xf32>
    %137 = arith.select %105, %135, %136 : vector<1x16x16x8xi1>, vector<1x16x16x8xf32>
    %138 = arith.truncf %137 : vector<1x16x16x8xf32> to vector<1x16x16x8xbf16>
    %c0_70 = arith.constant 0 : index
    %c0_71 = arith.constant 0 : index
    %c0_72 = arith.constant 0 : index
    %139 = vector.load %arg6[%c0_70, %c0_71, %c0_72] : memref<9x8x128xbf16, #tpu.memory_space<vmem>>, vector<1x8x128xbf16>
    %140 = vector.shape_cast %139 : vector<1x8x128xbf16> to vector<8x128xbf16>
    %c1_73 = arith.constant 1 : index
    %c0_74 = arith.constant 0 : index
    %c0_75 = arith.constant 0 : index
    %141 = vector.load %arg6[%c1_73, %c0_74, %c0_75] : memref<9x8x128xbf16, #tpu.memory_space<vmem>>, vector<1x8x128xbf16>
    %142 = vector.shape_cast %141 : vector<1x8x128xbf16> to vector<8x128xbf16>
    %c2_76 = arith.constant 2 : index
    %c0_77 = arith.constant 0 : index
    %c0_78 = arith.constant 0 : index
    %143 = vector.load %arg6[%c2_76, %c0_77, %c0_78] : memref<9x8x128xbf16, #tpu.memory_space<vmem>>, vector<1x8x128xbf16>
    %144 = vector.shape_cast %143 : vector<1x8x128xbf16> to vector<8x128xbf16>
    %c3_79 = arith.constant 3 : index
    %c0_80 = arith.constant 0 : index
    %c0_81 = arith.constant 0 : index
    %145 = vector.load %arg6[%c3_79, %c0_80, %c0_81] : memref<9x8x128xbf16, #tpu.memory_space<vmem>>, vector<1x8x128xbf16>
    %146 = vector.shape_cast %145 : vector<1x8x128xbf16> to vector<8x128xbf16>
    %c4_82 = arith.constant 4 : index
    %c0_83 = arith.constant 0 : index
    %c0_84 = arith.constant 0 : index
    %147 = vector.load %arg6[%c4_82, %c0_83, %c0_84] : memref<9x8x128xbf16, #tpu.memory_space<vmem>>, vector<1x8x128xbf16>
    %148 = vector.shape_cast %147 : vector<1x8x128xbf16> to vector<8x128xbf16>
    %c5_85 = arith.constant 5 : index
    %c0_86 = arith.constant 0 : index
    %c0_87 = arith.constant 0 : index
    %149 = vector.load %arg6[%c5_85, %c0_86, %c0_87] : memref<9x8x128xbf16, #tpu.memory_space<vmem>>, vector<1x8x128xbf16>
    %150 = vector.shape_cast %149 : vector<1x8x128xbf16> to vector<8x128xbf16>
    %c6_88 = arith.constant 6 : index
    %c0_89 = arith.constant 0 : index
    %c0_90 = arith.constant 0 : index
    %151 = vector.load %arg6[%c6_88, %c0_89, %c0_90] : memref<9x8x128xbf16, #tpu.memory_space<vmem>>, vector<1x8x128xbf16>
    %152 = vector.shape_cast %151 : vector<1x8x128xbf16> to vector<8x128xbf16>
    %c7_91 = arith.constant 7 : index
    %c0_92 = arith.constant 0 : index
    %c0_93 = arith.constant 0 : index
    %153 = vector.load %arg6[%c7_91, %c0_92, %c0_93] : memref<9x8x128xbf16, #tpu.memory_space<vmem>>, vector<1x8x128xbf16>
    %154 = vector.shape_cast %153 : vector<1x8x128xbf16> to vector<8x128xbf16>
    %c8_94 = arith.constant 8 : index
    %c0_95 = arith.constant 0 : index
    %c0_96 = arith.constant 0 : index
    %155 = vector.load %arg6[%c8_94, %c0_95, %c0_96] : memref<9x8x128xbf16, #tpu.memory_space<vmem>>, vector<1x8x128xbf16>
    %156 = vector.shape_cast %155 : vector<1x8x128xbf16> to vector<8x128xbf16>
    %c0_97 = arith.constant 0 : index
    %c0_98 = arith.constant 0 : index
    %157 = vector.load %arg7[%c0_97, %c0_98] : memref<1x128xf32, #tpu.memory_space<vmem>>, vector<1x128xf32>
    %cst_99 = arith.constant 0.000000e+00 : f32
    %158 = vector.broadcast %cst_99 : f32 to vector<128x128xf32>
    %159 = vector.extract_strided_slice %112 {offsets = [0, 0, 0, 0], sizes = [1, 8, 16, 8], strides = [1, 1, 1, 1]} : vector<1x16x16x8xbf16> to vector<1x8x16x8xbf16>
    %160 = vector.shape_cast %159 : vector<1x8x16x8xbf16> to vector<128x8xbf16>
    %cst_100 = arith.constant dense<0.000000e+00> : vector<128x128xf32>
    %161 = tpu.matmul %160, %140, %cst_100 {dimension_numbers = #tpu.dot_dimension_numbers<[1], [0], [0], [1], [0, 0, 1, 1], [], []>} : vector<128x8xbf16>, vector<8x128xbf16>, vector<128x128xf32> -> vector<128x128xf32>
    %162 = arith.addf %158, %161 : vector<128x128xf32>
    %163 = vector.extract_strided_slice %113 {offsets = [0, 0, 0, 0], sizes = [1, 8, 16, 8], strides = [1, 1, 1, 1]} : vector<1x16x16x8xbf16> to vector<1x8x16x8xbf16>
    %164 = vector.shape_cast %163 : vector<1x8x16x8xbf16> to vector<128x8xbf16>
    %cst_101 = arith.constant dense<0.000000e+00> : vector<128x128xf32>
    %165 = tpu.matmul %164, %142, %cst_101 {dimension_numbers = #tpu.dot_dimension_numbers<[1], [0], [0], [1], [0, 0, 1, 1], [], []>} : vector<128x8xbf16>, vector<8x128xbf16>, vector<128x128xf32> -> vector<128x128xf32>
    %166 = arith.addf %162, %165 : vector<128x128xf32>
    %167 = vector.extract_strided_slice %117 {offsets = [0, 0, 0, 0], sizes = [1, 8, 16, 8], strides = [1, 1, 1, 1]} : vector<1x16x16x8xbf16> to vector<1x8x16x8xbf16>
    %168 = vector.shape_cast %167 : vector<1x8x16x8xbf16> to vector<128x8xbf16>
    %cst_102 = arith.constant dense<0.000000e+00> : vector<128x128xf32>
    %169 = tpu.matmul %168, %144, %cst_102 {dimension_numbers = #tpu.dot_dimension_numbers<[1], [0], [0], [1], [0, 0, 1, 1], [], []>} : vector<128x8xbf16>, vector<8x128xbf16>, vector<128x128xf32> -> vector<128x128xf32>
    %170 = arith.addf %166, %169 : vector<128x128xf32>
    %171 = vector.extract_strided_slice %121 {offsets = [0, 0, 0, 0], sizes = [1, 8, 16, 8], strides = [1, 1, 1, 1]} : vector<1x16x16x8xbf16> to vector<1x8x16x8xbf16>
    %172 = vector.shape_cast %171 : vector<1x8x16x8xbf16> to vector<128x8xbf16>
    %cst_103 = arith.constant dense<0.000000e+00> : vector<128x128xf32>
    %173 = tpu.matmul %172, %146, %cst_103 {dimension_numbers = #tpu.dot_dimension_numbers<[1], [0], [0], [1], [0, 0, 1, 1], [], []>} : vector<128x8xbf16>, vector<8x128xbf16>, vector<128x128xf32> -> vector<128x128xf32>
    %174 = arith.addf %170, %173 : vector<128x128xf32>
    %175 = vector.extract_strided_slice %122 {offsets = [0, 0, 0, 0], sizes = [1, 8, 16, 8], strides = [1, 1, 1, 1]} : vector<1x16x16x8xbf16> to vector<1x8x16x8xbf16>
    %176 = vector.shape_cast %175 : vector<1x8x16x8xbf16> to vector<128x8xbf16>
    %cst_104 = arith.constant dense<0.000000e+00> : vector<128x128xf32>
    %177 = tpu.matmul %176, %148, %cst_104 {dimension_numbers = #tpu.dot_dimension_numbers<[1], [0], [0], [1], [0, 0, 1, 1], [], []>} : vector<128x8xbf16>, vector<8x128xbf16>, vector<128x128xf32> -> vector<128x128xf32>
    %178 = arith.addf %174, %177 : vector<128x128xf32>
    %179 = vector.extract_strided_slice %126 {offsets = [0, 0, 0, 0], sizes = [1, 8, 16, 8], strides = [1, 1, 1, 1]} : vector<1x16x16x8xbf16> to vector<1x8x16x8xbf16>
    %180 = vector.shape_cast %179 : vector<1x8x16x8xbf16> to vector<128x8xbf16>
    %cst_105 = arith.constant dense<0.000000e+00> : vector<128x128xf32>
    %181 = tpu.matmul %180, %150, %cst_105 {dimension_numbers = #tpu.dot_dimension_numbers<[1], [0], [0], [1], [0, 0, 1, 1], [], []>} : vector<128x8xbf16>, vector<8x128xbf16>, vector<128x128xf32> -> vector<128x128xf32>
    %182 = arith.addf %178, %181 : vector<128x128xf32>
    %183 = vector.extract_strided_slice %133 {offsets = [0, 0, 0, 0], sizes = [1, 8, 16, 8], strides = [1, 1, 1, 1]} : vector<1x16x16x8xbf16> to vector<1x8x16x8xbf16>
    %184 = vector.shape_cast %183 : vector<1x8x16x8xbf16> to vector<128x8xbf16>
    %cst_106 = arith.constant dense<0.000000e+00> : vector<128x128xf32>
    %185 = tpu.matmul %184, %152, %cst_106 {dimension_numbers = #tpu.dot_dimension_numbers<[1], [0], [0], [1], [0, 0, 1, 1], [], []>} : vector<128x8xbf16>, vector<8x128xbf16>, vector<128x128xf32> -> vector<128x128xf32>
    %186 = arith.addf %182, %185 : vector<128x128xf32>
    %187 = vector.extract_strided_slice %134 {offsets = [0, 0, 0, 0], sizes = [1, 8, 16, 8], strides = [1, 1, 1, 1]} : vector<1x16x16x8xbf16> to vector<1x8x16x8xbf16>
    %188 = vector.shape_cast %187 : vector<1x8x16x8xbf16> to vector<128x8xbf16>
    %cst_107 = arith.constant dense<0.000000e+00> : vector<128x128xf32>
    %189 = tpu.matmul %188, %154, %cst_107 {dimension_numbers = #tpu.dot_dimension_numbers<[1], [0], [0], [1], [0, 0, 1, 1], [], []>} : vector<128x8xbf16>, vector<8x128xbf16>, vector<128x128xf32> -> vector<128x128xf32>
    %190 = arith.addf %186, %189 : vector<128x128xf32>
    %191 = vector.extract_strided_slice %138 {offsets = [0, 0, 0, 0], sizes = [1, 8, 16, 8], strides = [1, 1, 1, 1]} : vector<1x16x16x8xbf16> to vector<1x8x16x8xbf16>
    %192 = vector.shape_cast %191 : vector<1x8x16x8xbf16> to vector<128x8xbf16>
    %cst_108 = arith.constant dense<0.000000e+00> : vector<128x128xf32>
    %193 = tpu.matmul %192, %156, %cst_108 {dimension_numbers = #tpu.dot_dimension_numbers<[1], [0], [0], [1], [0, 0, 1, 1], [], []>} : vector<128x8xbf16>, vector<8x128xbf16>, vector<128x128xf32> -> vector<128x128xf32>
    %194 = arith.addf %190, %193 : vector<128x128xf32>
    %195 = vector.broadcast %157 : vector<1x128xf32> to vector<128x128xf32>
    %196 = arith.addf %194, %195 : vector<128x128xf32>
    %197 = vector.broadcast %5 : vector<1x128xf32> to vector<128x128xf32>
    %198 = arith.mulf %196, %197 : vector<128x128xf32>
    %199 = math.tanh %198 : vector<128x128xf32>
    %200 = vector.broadcast %5 : vector<1x128xf32> to vector<128x128xf32>
    %201 = arith.mulf %199, %200 : vector<128x128xf32>
    %202 = vector.broadcast %8 : vector<1x128xf32> to vector<128x128xf32>
    %203 = arith.addf %201, %202 : vector<128x128xf32>
    %204 = vector.extract_strided_slice %203 {offsets = [0, 0], sizes = [128, 32], strides = [1, 1]} : vector<128x128xf32> to vector<128x32xf32>
    %205 = vector.extract_strided_slice %203 {offsets = [0, 32], sizes = [128, 32], strides = [1, 1]} : vector<128x128xf32> to vector<128x32xf32>
    %206 = vector.extract_strided_slice %203 {offsets = [0, 64], sizes = [128, 32], strides = [1, 1]} : vector<128x128xf32> to vector<128x32xf32>
    %207 = vector.extract_strided_slice %203 {offsets = [0, 96], sizes = [128, 32], strides = [1, 1]} : vector<128x128xf32> to vector<128x32xf32>
    %c0_109 = arith.constant 0 : index
    %c0_110 = arith.constant 0 : index
    %c0_111 = arith.constant 0 : index
    %c0_112 = arith.constant 0 : index
    %208 = vector.load %arg3[%c0_109, %c0_110, %c0_111, %c0_112] : memref<1x16x16x32xf32, #tpu.memory_space<vmem>>, vector<1x8x16x32xf32>
    %209 = vector.shape_cast %208 : vector<1x8x16x32xf32> to vector<128x32xf32>
    %210 = arith.mulf %204, %209 : vector<128x32xf32>
    %211 = arith.mulf %205, %207 : vector<128x32xf32>
    %212 = arith.addf %210, %211 : vector<128x32xf32>
    %213 = math.tanh %212 : vector<128x32xf32>
    %214 = arith.mulf %206, %213 : vector<128x32xf32>
    %215 = vector.shape_cast %212 : vector<128x32xf32> to vector<1x8x16x32xf32>
    %c0_113 = arith.constant 0 : index
    %c0_114 = arith.constant 0 : index
    %c0_115 = arith.constant 0 : index
    %c0_116 = arith.constant 0 : index
    %216 = vector.load %arg9[%c0_113, %c0_114, %c0_115, %c0_116] : memref<1x16x16x32xf32, #tpu.memory_space<vmem>>, vector<1x8x16x32xf32>
    tpu.vector_store %arg9[%c0_113, %c0_114, %c0_115, %c0_116], %215 {strides = array<i32>} : memref<1x16x16x32xf32, #tpu.memory_space<vmem>>, vector<1x8x16x32xf32>,
    %217 = vector.shape_cast %214 : vector<128x32xf32> to vector<1x8x16x32xf32>
    %c0_117 = arith.constant 0 : index
    %c0_118 = arith.constant 0 : index
    %c0_119 = arith.constant 0 : index
    %c0_120 = arith.constant 0 : index
    %218 = vector.load %arg8[%c0_117, %c0_118, %c0_119, %c0_120] : memref<1x16x16x32xf32, #tpu.memory_space<vmem>>, vector<1x8x16x32xf32>
    tpu.vector_store %arg8[%c0_117, %c0_118, %c0_119, %c0_120], %217 {strides = array<i32>} : memref<1x16x16x32xf32, #tpu.memory_space<vmem>>, vector<1x8x16x32xf32>,
    %cst_121 = arith.constant 0.000000e+00 : f32
    %219 = vector.broadcast %cst_121 : f32 to vector<128x128xf32>
    %220 = vector.extract_strided_slice %112 {offsets = [0, 8, 0, 0], sizes = [1, 8, 16, 8], strides = [1, 1, 1, 1]} : vector<1x16x16x8xbf16> to vector<1x8x16x8xbf16>
    %221 = vector.shape_cast %220 : vector<1x8x16x8xbf16> to vector<128x8xbf16>
    %cst_122 = arith.constant dense<0.000000e+00> : vector<128x128xf32>
    %222 = tpu.matmul %221, %140, %cst_122 {dimension_numbers = #tpu.dot_dimension_numbers<[1], [0], [0], [1], [0, 0, 1, 1], [], []>} : vector<128x8xbf16>, vector<8x128xbf16>, vector<128x128xf32> -> vector<128x128xf32>
    %223 = arith.addf %219, %222 : vector<128x128xf32>
    %224 = vector.extract_strided_slice %113 {offsets = [0, 8, 0, 0], sizes = [1, 8, 16, 8], strides = [1, 1, 1, 1]} : vector<1x16x16x8xbf16> to vector<1x8x16x8xbf16>
    %225 = vector.shape_cast %224 : vector<1x8x16x8xbf16> to vector<128x8xbf16>
    %cst_123 = arith.constant dense<0.000000e+00> : vector<128x128xf32>
    %226 = tpu.matmul %225, %142, %cst_123 {dimension_numbers = #tpu.dot_dimension_numbers<[1], [0], [0], [1], [0, 0, 1, 1], [], []>} : vector<128x8xbf16>, vector<8x128xbf16>, vector<128x128xf32> -> vector<128x128xf32>
    %227 = arith.addf %223, %226 : vector<128x128xf32>
    %228 = vector.extract_strided_slice %117 {offsets = [0, 8, 0, 0], sizes = [1, 8, 16, 8], strides = [1, 1, 1, 1]} : vector<1x16x16x8xbf16> to vector<1x8x16x8xbf16>
    %229 = vector.shape_cast %228 : vector<1x8x16x8xbf16> to vector<128x8xbf16>
    %cst_124 = arith.constant dense<0.000000e+00> : vector<128x128xf32>
    %230 = tpu.matmul %229, %144, %cst_124 {dimension_numbers = #tpu.dot_dimension_numbers<[1], [0], [0], [1], [0, 0, 1, 1], [], []>} : vector<128x8xbf16>, vector<8x128xbf16>, vector<128x128xf32> -> vector<128x128xf32>
    %231 = arith.addf %227, %230 : vector<128x128xf32>
    %232 = vector.extract_strided_slice %121 {offsets = [0, 8, 0, 0], sizes = [1, 8, 16, 8], strides = [1, 1, 1, 1]} : vector<1x16x16x8xbf16> to vector<1x8x16x8xbf16>
    %233 = vector.shape_cast %232 : vector<1x8x16x8xbf16> to vector<128x8xbf16>
    %cst_125 = arith.constant dense<0.000000e+00> : vector<128x128xf32>
    %234 = tpu.matmul %233, %146, %cst_125 {dimension_numbers = #tpu.dot_dimension_numbers<[1], [0], [0], [1], [0, 0, 1, 1], [], []>} : vector<128x8xbf16>, vector<8x128xbf16>, vector<128x128xf32> -> vector<128x128xf32>
    %235 = arith.addf %231, %234 : vector<128x128xf32>
    %236 = vector.extract_strided_slice %122 {offsets = [0, 8, 0, 0], sizes = [1, 8, 16, 8], strides = [1, 1, 1, 1]} : vector<1x16x16x8xbf16> to vector<1x8x16x8xbf16>
    %237 = vector.shape_cast %236 : vector<1x8x16x8xbf16> to vector<128x8xbf16>
    %cst_126 = arith.constant dense<0.000000e+00> : vector<128x128xf32>
    %238 = tpu.matmul %237, %148, %cst_126 {dimension_numbers = #tpu.dot_dimension_numbers<[1], [0], [0], [1], [0, 0, 1, 1], [], []>} : vector<128x8xbf16>, vector<8x128xbf16>, vector<128x128xf32> -> vector<128x128xf32>
    %239 = arith.addf %235, %238 : vector<128x128xf32>
    %240 = vector.extract_strided_slice %126 {offsets = [0, 8, 0, 0], sizes = [1, 8, 16, 8], strides = [1, 1, 1, 1]} : vector<1x16x16x8xbf16> to vector<1x8x16x8xbf16>
    %241 = vector.shape_cast %240 : vector<1x8x16x8xbf16> to vector<128x8xbf16>
    %cst_127 = arith.constant dense<0.000000e+00> : vector<128x128xf32>
    %242 = tpu.matmul %241, %150, %cst_127 {dimension_numbers = #tpu.dot_dimension_numbers<[1], [0], [0], [1], [0, 0, 1, 1], [], []>} : vector<128x8xbf16>, vector<8x128xbf16>, vector<128x128xf32> -> vector<128x128xf32>
    %243 = arith.addf %239, %242 : vector<128x128xf32>
    %244 = vector.extract_strided_slice %133 {offsets = [0, 8, 0, 0], sizes = [1, 8, 16, 8], strides = [1, 1, 1, 1]} : vector<1x16x16x8xbf16> to vector<1x8x16x8xbf16>
    %245 = vector.shape_cast %244 : vector<1x8x16x8xbf16> to vector<128x8xbf16>
    %cst_128 = arith.constant dense<0.000000e+00> : vector<128x128xf32>
    %246 = tpu.matmul %245, %152, %cst_128 {dimension_numbers = #tpu.dot_dimension_numbers<[1], [0], [0], [1], [0, 0, 1, 1], [], []>} : vector<128x8xbf16>, vector<8x128xbf16>, vector<128x128xf32> -> vector<128x128xf32>
    %247 = arith.addf %243, %246 : vector<128x128xf32>
    %248 = vector.extract_strided_slice %134 {offsets = [0, 8, 0, 0], sizes = [1, 8, 16, 8], strides = [1, 1, 1, 1]} : vector<1x16x16x8xbf16> to vector<1x8x16x8xbf16>
    %249 = vector.shape_cast %248 : vector<1x8x16x8xbf16> to vector<128x8xbf16>
    %cst_129 = arith.constant dense<0.000000e+00> : vector<128x128xf32>
    %250 = tpu.matmul %249, %154, %cst_129 {dimension_numbers = #tpu.dot_dimension_numbers<[1], [0], [0], [1], [0, 0, 1, 1], [], []>} : vector<128x8xbf16>, vector<8x128xbf16>, vector<128x128xf32> -> vector<128x128xf32>
    %251 = arith.addf %247, %250 : vector<128x128xf32>
    %252 = vector.extract_strided_slice %138 {offsets = [0, 8, 0, 0], sizes = [1, 8, 16, 8], strides = [1, 1, 1, 1]} : vector<1x16x16x8xbf16> to vector<1x8x16x8xbf16>
    %253 = vector.shape_cast %252 : vector<1x8x16x8xbf16> to vector<128x8xbf16>
    %cst_130 = arith.constant dense<0.000000e+00> : vector<128x128xf32>
    %254 = tpu.matmul %253, %156, %cst_130 {dimension_numbers = #tpu.dot_dimension_numbers<[1], [0], [0], [1], [0, 0, 1, 1], [], []>} : vector<128x8xbf16>, vector<8x128xbf16>, vector<128x128xf32> -> vector<128x128xf32>
    %255 = arith.addf %251, %254 : vector<128x128xf32>
    %256 = vector.broadcast %157 : vector<1x128xf32> to vector<128x128xf32>
    %257 = arith.addf %255, %256 : vector<128x128xf32>
    %258 = vector.broadcast %5 : vector<1x128xf32> to vector<128x128xf32>
    %259 = arith.mulf %257, %258 : vector<128x128xf32>
    %260 = math.tanh %259 : vector<128x128xf32>
    %261 = vector.broadcast %5 : vector<1x128xf32> to vector<128x128xf32>
    %262 = arith.mulf %260, %261 : vector<128x128xf32>
    %263 = vector.broadcast %8 : vector<1x128xf32> to vector<128x128xf32>
    %264 = arith.addf %262, %263 : vector<128x128xf32>
    %265 = vector.extract_strided_slice %264 {offsets = [0, 0], sizes = [128, 32], strides = [1, 1]} : vector<128x128xf32> to vector<128x32xf32>
    %266 = vector.extract_strided_slice %264 {offsets = [0, 32], sizes = [128, 32], strides = [1, 1]} : vector<128x128xf32> to vector<128x32xf32>
    %267 = vector.extract_strided_slice %264 {offsets = [0, 64], sizes = [128, 32], strides = [1, 1]} : vector<128x128xf32> to vector<128x32xf32>
    %268 = vector.extract_strided_slice %264 {offsets = [0, 96], sizes = [128, 32], strides = [1, 1]} : vector<128x128xf32> to vector<128x32xf32>
    %c0_131 = arith.constant 0 : index
    %c8_132 = arith.constant 8 : index
    %c0_133 = arith.constant 0 : index
    %c0_134 = arith.constant 0 : index
    %269 = vector.load %arg3[%c0_131, %c8_132, %c0_133, %c0_134] : memref<1x16x16x32xf32, #tpu.memory_space<vmem>>, vector<1x8x16x32xf32>
    %270 = vector.shape_cast %269 : vector<1x8x16x32xf32> to vector<128x32xf32>
    %271 = arith.mulf %265, %270 : vector<128x32xf32>
    %272 = arith.mulf %266, %268 : vector<128x32xf32>
    %273 = arith.addf %271, %272 : vector<128x32xf32>
    %274 = math.tanh %273 : vector<128x32xf32>
    %275 = arith.mulf %267, %274 : vector<128x32xf32>
    %276 = vector.shape_cast %273 : vector<128x32xf32> to vector<1x8x16x32xf32>
    %c0_135 = arith.constant 0 : index
    %c8_136 = arith.constant 8 : index
    %c0_137 = arith.constant 0 : index
    %c0_138 = arith.constant 0 : index
    %277 = vector.load %arg9[%c0_135, %c8_136, %c0_137, %c0_138] : memref<1x16x16x32xf32, #tpu.memory_space<vmem>>, vector<1x8x16x32xf32>
    tpu.vector_store %arg9[%c0_135, %c8_136, %c0_137, %c0_138], %276 {strides = array<i32>} : memref<1x16x16x32xf32, #tpu.memory_space<vmem>>, vector<1x8x16x32xf32>,
    %278 = vector.shape_cast %275 : vector<128x32xf32> to vector<1x8x16x32xf32>
    %c0_139 = arith.constant 0 : index
    %c8_140 = arith.constant 8 : index
    %c0_141 = arith.constant 0 : index
    %c0_142 = arith.constant 0 : index
    %279 = vector.load %arg8[%c0_139, %c8_140, %c0_141, %c0_142] : memref<1x16x16x32xf32, #tpu.memory_space<vmem>>, vector<1x8x16x32xf32>
    tpu.vector_store %arg8[%c0_139, %c8_140, %c0_141, %c0_142], %278 {strides = array<i32>} : memref<1x16x16x32xf32, #tpu.memory_space<vmem>>, vector<1x8x16x32xf32>,
    return
  }
  func.func @transform_0(%arg0: i32) -> (i32, i32, i32, i32) {
    %c0_i32 = arith.constant 0 : i32
    %c0_i32_0 = arith.constant 0 : i32
    %c0_i32_1 = arith.constant 0 : i32
    %c0_i32_2 = arith.constant 0 : i32
    return %arg0, %c0_i32, %c0_i32_0, %c0_i32_1 : i32, i32, i32, i32
  }
  func.func @transform_1(%arg0: i32) -> (i32, i32, i32, i32) {
    %c0_i32 = arith.constant 0 : i32
    %c0_i32_0 = arith.constant 0 : i32
    %c0_i32_1 = arith.constant 0 : i32
    %c0_i32_2 = arith.constant 0 : i32
    return %arg0, %c0_i32, %c0_i32_0, %c0_i32_1 : i32, i32, i32, i32
  }
  func.func @transform_2(%arg0: i32) -> (i32, i32, i32, i32) {
    %c0_i32 = arith.constant 0 : i32
    %c0_i32_0 = arith.constant 0 : i32
    %c0_i32_1 = arith.constant 0 : i32
    %c0_i32_2 = arith.constant 0 : i32
    return %arg0, %c0_i32, %c0_i32_0, %c0_i32_1 : i32, i32, i32, i32
  }
  func.func @transform_3(%arg0: i32) -> (i32, i32, i32) {
    %c0_i32 = arith.constant 0 : i32
    %c0_i32_0 = arith.constant 0 : i32
    %c0_i32_1 = arith.constant 0 : i32
    %c0_i32_2 = arith.constant 0 : i32
    return %c0_i32, %c0_i32_0, %c0_i32_1 : i32, i32, i32
  }
  func.func @transform_4(%arg0: i32) -> (i32, i32) {
    %c0_i32 = arith.constant 0 : i32
    %c0_i32_0 = arith.constant 0 : i32
    %c0_i32_1 = arith.constant 0 : i32
    return %c0_i32, %c0_i32_0 : i32, i32
  }
  func.func @transform_5(%arg0: i32) -> (i32, i32, i32) {
    %c0_i32 = arith.constant 0 : i32
    %c0_i32_0 = arith.constant 0 : i32
    %c0_i32_1 = arith.constant 0 : i32
    %c0_i32_2 = arith.constant 0 : i32
    return %c0_i32, %c0_i32_0, %c0_i32_1 : i32, i32, i32
  }
  func.func @transform_6(%arg0: i32) -> (i32, i32) {
    %c0_i32 = arith.constant 0 : i32
    %c0_i32_0 = arith.constant 0 : i32
    %c0_i32_1 = arith.constant 0 : i32
    return %c0_i32, %c0_i32_0 : i32, i32
  }
  func.func @transform_7(%arg0: i32) -> (i32, i32, i32, i32) {
    %c0_i32 = arith.constant 0 : i32
    %c0_i32_0 = arith.constant 0 : i32
    %c0_i32_1 = arith.constant 0 : i32
    %c0_i32_2 = arith.constant 0 : i32
    return %arg0, %c0_i32, %c0_i32_0, %c0_i32_1 : i32, i32, i32, i32
  }
  func.func @transform_8(%arg0: i32) -> (i32, i32, i32, i32) {
    %c0_i32 = arith.constant 0 : i32
    %c0_i32_0 = arith.constant 0 : i32
    %c0_i32_1 = arith.constant 0 : i32
    %c0_i32_2 = arith.constant 0 : i32
    return %arg0, %c0_i32, %c0_i32_0, %c0_i32_1 : i32, i32, i32, i32
  }
}

</mosaic_0001>

<llo_original>
// kernel: conv2d_lstm_cell.1
$region0: #{conv2d_lstm_cell.1}
  #allocation0 [shape = 'u32[]', space=smem, size = 0x4, offset = 0x4, fixed_abs, tag = 'smem constant byte address 0x4 - core index']
  #allocation1 [shape = 'u32[144,128]{1,0:T(1,128)}', space=vmem, size = 0x12000, scoped, tag = 'internal scratch']
  %s0 = inlined_call_operand.vmem [shape: f32[2,16,16,8], index: 0, kind: input, shape index: {}]
  %s1 = inlined_call_operand.hbm [shape: f32[2,16,16,32], index: 1, kind: input, shape index: {}, may-alias: {1,7}]
  %s2 = inlined_call_operand.hbm [shape: f32[2,16,16,32], index: 2, kind: input, shape index: {}, may-alias: {2,8}]
  %s3 = inlined_call_operand.vmem [shape: bf16[9,32,8], index: 3, kind: input, shape index: {}]
  %s4 = inlined_call_operand.vmem [shape: f32[1,8], index: 4, kind: input, shape index: {}]
  %s5 = inlined_call_operand.vmem [shape: bf16[9,8,128], index: 5, kind: input, shape index: {}]
  %s6 = inlined_call_operand.vmem [shape: f32[1,128], index: 6, kind: input, shape index: {}]
  %s7 = inlined_call_operand.hbm [shape: f32[2,16,16,32], index: 7, kind: output, shape index: {0}, may-alias: {1,7}]
  %s8 = inlined_call_operand.hbm [shape: f32[2,16,16,32], index: 8, kind: output, shape index: {1}, may-alias: {2,8}]
  %9 = xla_tuple %s7, %s8
  %s10 = sld [smem:[#allocation0]]
  $region77: #{conv2d_lstm_cell.1} parent=0
    _
  %s12 = ssub.s32 1, %s10
  %s13 = scalar_select 0, %s12, %s10
  $region1: #{conv2d_lstm_cell.1} parent=0
    #allocation2 [shape = 'u8[262144]{0}', space=vmem, size = 0x40000, scoped, tag = 'input window, operand 1']
    #allocation3 [shape = 's32[2]{0}', space=sflag, size = 0x8, scoped, tag = 'scoped memory for conv2d_lstm_cell.1']
    #allocation4 [shape = 's32[2]{0}', space=sflag, size = 0x8, scoped, tag = 'scoped memory for conv2d_lstm_cell.1']
    #allocation5 [shape = 'u8[262144]{0}', space=vmem, size = 0x40000, scoped, tag = 'input window, operand 2']
    #allocation6 [shape = 's32[2]{0}', space=sflag, size = 0x8, scoped, tag = 'scoped memory for conv2d_lstm_cell.1']
    #allocation7 [shape = 'u8[262144]{0}', space=vmem, size = 0x40000, scoped, tag = 'output window, operand 0']
    #allocation8 [shape = 'u8[262144]{0}', space=vmem, size = 0x40000, scoped, tag = 'output window, operand 1']
    #allocation9 [shape = 's32[2]{0}', space=sflag, size = 0x8, scoped, tag = 'scoped memory for conv2d_lstm_cell.1']
    %14 = vsyncpa [#allocation3], 0
    %s15 = scalar_lea.sflag [#allocation3], 1
    %16 = vsyncpa %s15, 0
    %17 = vsyncpa [#allocation6], 0
    %s18 = scalar_lea.sflag [#allocation6], 1
    %19 = vsyncpa %s18, 0
    %20 = vsyncpa [#allocation4], 0
    %s21 = scalar_lea.sflag [#allocation4], 1
    %22 = vsyncpa %s21, 0
    %23 = vsyncpa [#allocation9], 0
    %s24 = scalar_lea.sflag [#allocation9], 1
    %25 = vsyncpa %s24, 0
    loop: start=0, step=1, limit=4
    $region2: #{conv2d_lstm_cell.1} parent=1 // loop_pre_header
      _
    $region3: #{conv2d_lstm_cell.1} parent=1 // loop_header
      %s27 = sphi 0, %s31
      %p28 = scmp.ge.s32.totalorder %s27, 4
      %s37 = sphi 0, %s39
      %s40 = sphi 0, %s37
      %s41 = sphi 0, %s40
      %s57 = sphi 0, %s41
      %s63 = sphi 0, %s65
      %s66 = sphi 0, %s63
      %s67 = sphi 0, %s66
      %s83 = sphi 0, %s67
      %s89 = sphi 0, %s91
      %s92 = sphi 0, %s89
      %s93 = sphi 0, %s92
      %s109 = sphi 0, %s93
      %s113 = sphi 0, %s113
      %s115 = sphi 0, %s113
      %s116 = sphi 0, %s115
      %s130 = sphi 0, %s116
      %s134 = sphi 0, %s134
      %s136 = sphi 0, %s134
      %s137 = sphi 0, %s136
      %s151 = sphi 0, %s137
      %s155 = sphi 0, %s155
      %s157 = sphi 0, %s155
      %s158 = sphi 0, %s157
      %s172 = sphi 0, %s158
      %s176 = sphi 0, %s176
      %s178 = sphi 0, %s176
      %s179 = sphi 0, %s178
      %s193 = sphi 0, %s179
      %s199 = sphi 0, %s201
      %s202 = sphi 0, %s199
      %s203 = sphi 0, %s202
      %s219 = sphi 0, %s203
      %s225 = sphi 0, %s227
      %s228 = sphi 0, %s225
      %s229 = sphi 0, %s228
      %s245 = sphi 0, %s229
    $region4: #{conv2d_lstm_cell.1} parent=1 // loop_header_branch
      %30 = sbr.rel (%p28) target = $region8
    $region5: #{conv2d_lstm_cell.1} parent=1 // loop_body
      %s32 = ssub.s32 %s27, 1
      %s33 = ssub.s32 %s27, 2
      %s34 = sadd.s32 %s27, 1
      %s35 = ssub.s32 %s27, %s34
      %p36 = scmp.eq.s32.totalorder %s35, 0
      %s38 = sadd.s32 %s37, 1
      %s39 = scalar_select %p36, %s37, %s38
      %p42 = pneg %p36
      %p43 = scmp.eq.s32.totalorder %s27, 1
      %p44 = por %p42, %p43
      %p45 = scmp.ne.s32.totalorder %s37, %s40
      %p46 = scmp.eq.s32.totalorder %s27, 0
      %p47 = por %p45, %p46
      %p48 = scmp.ne.s32.totalorder %s37, %s40
      %p49 = scmp.eq.s32.totalorder %s32, 1
      %p50 = por %p48, %p49
      %p51 = scmp.ne.s32.totalorder %s40, %s41
      %p52 = scmp.eq.s32.totalorder %s32, 0
      %p53 = por %p51, %p52
      %p54 = scmp.ne.s32.totalorder %s40, %s41
      %p55 = scmp.eq.s32.totalorder %s33, 1
      %p56 = por %p54, %p55
      %p58 = scmp.ne.s32.totalorder %s41, %s57
      %p59 = scmp.eq.s32.totalorder %s33, 0
      %p60 = por %p58, %p59
      %s61 = ssub.s32 %s27, %s34
      %p62 = scmp.eq.s32.totalorder %s61, 0
      %s64 = sadd.s32 %s63, 1
      %s65 = scalar_select %p62, %s63, %s64
      %p68 = pneg %p62
      %p69 = scmp.eq.s32.totalorder %s27, 1
      %p70 = por %p68, %p69
      %p71 = scmp.ne.s32.totalorder %s63, %s66
      %p72 = scmp.eq.s32.totalorder %s27, 0
      %p73 = por %p71, %p72
      %p74 = scmp.ne.s32.totalorder %s63, %s66
      %p75 = scmp.eq.s32.totalorder %s32, 1
      %p76 = por %p74, %p75
      %p77 = scmp.ne.s32.totalorder %s66, %s67
      %p78 = scmp.eq.s32.totalorder %s32, 0
      %p79 = por %p77, %p78
      %p80 = scmp.ne.s32.totalorder %s66, %s67
      %p81 = scmp.eq.s32.totalorder %s33, 1
      %p82 = por %p80, %p81
      %p84 = scmp.ne.s32.totalorder %s67, %s83
      %p85 = scmp.eq.s32.totalorder %s33, 0
      %p86 = por %p84, %p85
      %s87 = ssub.s32 %s27, %s34
      %p88 = scmp.eq.s32.totalorder %s87, 0
      %s90 = sadd.s32 %s89, 1
      %s91 = scalar_select %p88, %s89, %s90
      %p94 = pneg %p88
      %p95 = scmp.eq.s32.totalorder %s27, 1
      %p96 = por %p94, %p95
      %p97 = scmp.ne.s32.totalorder %s89, %s92
      %p98 = scmp.eq.s32.totalorder %s27, 0
      %p99 = por %p97, %p98
      %p100 = scmp.ne.s32.totalorder %s89, %s92
      %p101 = scmp.eq.s32.totalorder %s32, 1
      %p102 = por %p100, %p101
      %p103 = scmp.ne.s32.totalorder %s92, %s93
      %p104 = scmp.eq.s32.totalorder %s32, 0
      %p105 = por %p103, %p104
      %p106 = scmp.ne.s32.totalorder %s92, %s93
      %p107 = scmp.eq.s32.totalorder %s33, 1
      %p108 = por %p106, %p107
      %p110 = scmp.ne.s32.totalorder %s93, %s109
      %p111 = scmp.eq.s32.totalorder %s33, 0
      %p112 = por %p110, %p111
      %s114 = sadd.s32 %s113, 1
      %p117 = scmp.eq.s32.totalorder %s27, 1
      %p118 = scmp.ne.s32.totalorder %s113, %s115
      %p119 = scmp.eq.s32.totalorder %s27, 0
      %p120 = por %p118, %p119
      %p121 = scmp.ne.s32.totalorder %s113, %s115
      %p122 = scmp.eq.s32.totalorder %s32, 1
      %p123 = por %p121, %p122
      %p124 = scmp.ne.s32.totalorder %s115, %s116
      %p125 = scmp.eq.s32.totalorder %s32, 0
      %p126 = por %p124, %p125
      %p127 = scmp.ne.s32.totalorder %s115, %s116
      %p128 = scmp.eq.s32.totalorder %s33, 1
      %p129 = por %p127, %p128
      %p131 = scmp.ne.s32.totalorder %s116, %s130
      %p132 = scmp.eq.s32.totalorder %s33, 0
      %p133 = por %p131, %p132
      %s135 = sadd.s32 %s134, 1
      %p138 = scmp.eq.s32.totalorder %s27, 1
      %p139 = scmp.ne.s32.totalorder %s134, %s136
      %p140 = scmp.eq.s32.totalorder %s27, 0
      %p141 = por %p139, %p140
      %p142 = scmp.ne.s32.totalorder %s134, %s136
      %p143 = scmp.eq.s32.totalorder %s32, 1
      %p144 = por %p142, %p143
      %p145 = scmp.ne.s32.totalorder %s136, %s137
      %p146 = scmp.eq.s32.totalorder %s32, 0
      %p147 = por %p145, %p146
      %p148 = scmp.ne.s32.totalorder %s136, %s137
      %p149 = scmp.eq.s32.totalorder %s33, 1
      %p150 = por %p148, %p149
      %p152 = scmp.ne.s32.totalorder %s137, %s151
      %p153 = scmp.eq.s32.totalorder %s33, 0
      %p154 = por %p152, %p153
      %s156 = sadd.s32 %s155, 1
      %p159 = scmp.eq.s32.totalorder %s27, 1
      %p160 = scmp.ne.s32.totalorder %s155, %s157
      %p161 = scmp.eq.s32.totalorder %s27, 0
      %p162 = por %p160, %p161
      %p163 = scmp.ne.s32.totalorder %s155, %s157
      %p164 = scmp.eq.s32.totalorder %s32, 1
      %p165 = por %p163, %p164
      %p166 = scmp.ne.s32.totalorder %s157, %s158
      %p167 = scmp.eq.s32.totalorder %s32, 0
      %p168 = por %p166, %p167
      %p169 = scmp.ne.s32.totalorder %s157, %s158
      %p170 = scmp.eq.s32.totalorder %s33, 1
      %p171 = por %p169, %p170
      %p173 = scmp.ne.s32.totalorder %s158, %s172
      %p174 = scmp.eq.s32.totalorder %s33, 0
      %p175 = por %p173, %p174
      %s177 = sadd.s32 %s176, 1
      %p180 = scmp.eq.s32.totalorder %s27, 1
      %p181 = scmp.ne.s32.totalorder %s176, %s178
      %p182 = scmp.eq.s32.totalorder %s27, 0
      %p183 = por %p181, %p182
      %p184 = scmp.ne.s32.totalorder %s176, %s178
      %p185 = scmp.eq.s32.totalorder %s32, 1
      %p186 = por %p184, %p185
      %p187 = scmp.ne.s32.totalorder %s178, %s179
      %p188 = scmp.eq.s32.totalorder %s32, 0
      %p189 = por %p187, %p188
      %p190 = scmp.ne.s32.totalorder %s178, %s179
      %p191 = scmp.eq.s32.totalorder %s33, 1
      %p192 = por %p190, %p191
      %p194 = scmp.ne.s32.totalorder %s179, %s193
      %p195 = scmp.eq.s32.totalorder %s33, 0
      %p196 = por %p194, %p195
      %s197 = ssub.s32 %s27, %s34
      %p198 = scmp.eq.s32.totalorder %s197, 0
      %s200 = sadd.s32 %s199, 1
      %s201 = scalar_select %p198, %s199, %s200
      %p204 = pneg %p198
      %p205 = scmp.eq.s32.totalorder %s27, 1
      %p206 = por %p204, %p205
      %p207 = scmp.ne.s32.totalorder %s199, %s202
      %p208 = scmp.eq.s32.totalorder %s27, 0
      %p209 = por %p207, %p208
      %p210 = scmp.ne.s32.totalorder %s199, %s202
      %p211 = scmp.eq.s32.totalorder %s32, 1
      %p212 = por %p210, %p211
      %p213 = scmp.ne.s32.totalorder %s202, %s203
      %p214 = scmp.eq.s32.totalorder %s32, 0
      %p215 = por %p213, %p214
      %p216 = scmp.ne.s32.totalorder %s202, %s203
      %p217 = scmp.eq.s32.totalorder %s33, 1
      %p218 = por %p216, %p217
      %p220 = scmp.ne.s32.totalorder %s203, %s219
      %p221 = scmp.eq.s32.totalorder %s33, 0
      %p222 = por %p220, %p221
      %s223 = ssub.s32 %s27, %s34
      %p224 = scmp.eq.s32.totalorder %s223, 0
      %s226 = sadd.s32 %s225, 1
      %s227 = scalar_select %p224, %s225, %s226
      %p230 = pneg %p224
      %p231 = scmp.eq.s32.totalorder %s27, 1
      %p232 = por %p230, %p231
      %p233 = scmp.ne.s32.totalorder %s225, %s228
      %p234 = scmp.eq.s32.totalorder %s27, 0
      %p235 = por %p233, %p234
      %p236 = scmp.ne.s32.totalorder %s225, %s228
      %p237 = scmp.eq.s32.totalorder %s32, 1
      %p238 = por %p236, %p237
      %p239 = scmp.ne.s32.totalorder %s228, %s229
      %p240 = scmp.eq.s32.totalorder %s32, 0
      %p241 = por %p239, %p240
      %p242 = scmp.ne.s32.totalorder %s228, %s229
      %p243 = scmp.eq.s32.totalorder %s33, 1
      %p244 = por %p242, %p243
      %p246 = scmp.ne.s32.totalorder %s229, %s245
      %p247 = scmp.eq.s32.totalorder %s33, 0
      %p248 = por %p246, %p247
      %p249 = scmp.le.s32.totalorder 1, %s27
      %p250 = scmp.lt.s32.totalorder %s27, 3
      %p251 = pnand %p249, %p250
      %p252 = pneg %p251
      // Predicated region
      $region9: #{conv2d_lstm_cell.1} parent=5 // pred_check
        _
      $region10: #{conv2d_lstm_cell.1} parent=5 // pred_check_branch
        %254 = sbr.rel (%p251) target = $region12
      $region11: #{conv2d_lstm_cell.1} parent=5 // pred_region
        %s255 = ssub.s32 %s27, 1
        // Predicated region
        $region13: #{conv2d_lstm_cell.1} parent=11 // pred_check
          %p256 = pneg %p126
        $region14: #{conv2d_lstm_cell.1} parent=11 // pred_check_branch
          %258 = sbr.rel (%p256) target = $region16
        $region15: #{conv2d_lstm_cell.1} parent=11 // pred_region
          _
        $region16: #{conv2d_lstm_cell.1} parent=11 // pred_fallthru
          _
        // Predicated region
        $region17: #{conv2d_lstm_cell.1} parent=11 // pred_check
          %p259 = pneg %p147
        $region18: #{conv2d_lstm_cell.1} parent=11 // pred_check_branch
          %261 = sbr.rel (%p259) target = $region20
        $region19: #{conv2d_lstm_cell.1} parent=11 // pred_region
          _
        $region20: #{conv2d_lstm_cell.1} parent=11 // pred_fallthru
          _
        // Predicated region
        $region21: #{conv2d_lstm_cell.1} parent=11 // pred_check
          %p262 = pneg %p168
        $region22: #{conv2d_lstm_cell.1} parent=11 // pred_check_branch
          %264 = sbr.rel (%p262) target = $region24
        $region23: #{conv2d_lstm_cell.1} parent=11 // pred_region
          _
        $region24: #{conv2d_lstm_cell.1} parent=11 // pred_fallthru
          _
        // Predicated region
        $region25: #{conv2d_lstm_cell.1} parent=11 // pred_check
          %p265 = pneg %p189
        $region26: #{conv2d_lstm_cell.1} parent=11 // pred_check_branch
          %267 = sbr.rel (%p265) target = $region28
        $region27: #{conv2d_lstm_cell.1} parent=11 // pred_region
          _
        $region28: #{conv2d_lstm_cell.1} parent=11 // pred_fallthru
          _
      $region12: #{conv2d_lstm_cell.1} parent=5 // pred_fallthru
        _
      %p268 = scmp.lt.s32.totalorder %s27, 2
      // Predicated region
      $region29: #{conv2d_lstm_cell.1} parent=5 // pred_check
        %p269 = pneg %p268
      $region30: #{conv2d_lstm_cell.1} parent=5 // pred_check_branch
        %271 = sbr.rel (%p269) target = $region32
      $region31: #{conv2d_lstm_cell.1} parent=5 // pred_region
        // Predicated region
        $region33: #{conv2d_lstm_cell.1} parent=31 // pred_check
          %p272 = pneg %p47
        $region34: #{conv2d_lstm_cell.1} parent=31 // pred_check_branch
          %274 = sbr.rel (%p272) target = $region36
        $region35: #{conv2d_lstm_cell.1} parent=31 // pred_region
          %p275 = scmp.lt.s32.totalorder %s27, 1
          %s276 = scalar_select %p275, %s27, 1
          %s277 = smul.addr %s276, 32
          %s278 = smul.addr %s277, 8
          %s279 = scalar_lea.vmem %s0, %s278
        $region36: #{conv2d_lstm_cell.1} parent=31 // pred_fallthru
          _
        // Predicated region
        $region37: #{conv2d_lstm_cell.1} parent=31 // pred_check
          %p280 = pneg %p73
        $region38: #{conv2d_lstm_cell.1} parent=31 // pred_check_branch
          %282 = sbr.rel (%p280) target = $region40
        $region39: #{conv2d_lstm_cell.1} parent=31 // pred_region
          %s283 = sand.u32 %s63, 1
          %s284 = scalar_lea.sflag [#allocation3], %s283
          %s285 = sand.u32 %s63, 1
          %s286 = smul.addr %s285, 256
          %s287 = scalar_lea.vmem [#allocation2], %s286
          %s289 = ssub.s32 4096, 4096
          %290 = vsyncadd %s284, %s289
          %s291 = smul.addr %s27, 32
          %s292 = smul.addr %s291, 128
          %s293 = scalar_lea.hbm %s1, %s292
          %s294 = sshll.u32 %s287, 4
          %s295 = int_to_ptr.vmem [resolvable:$true] %s294
          %300 = dma.hbm_to_vmem [thread:$0]  %s293, 4096, %s295, %s284, 128, 128, 8
        $region40: #{conv2d_lstm_cell.1} parent=31 // pred_fallthru
          _
        // Predicated region
        $region41: #{conv2d_lstm_cell.1} parent=31 // pred_check
          %p301 = pneg %p99
        $region42: #{conv2d_lstm_cell.1} parent=31 // pred_check_branch
          %303 = sbr.rel (%p301) target = $region44
        $region43: #{conv2d_lstm_cell.1} parent=31 // pred_region
          %s304 = sand.u32 %s89, 1
          %s305 = scalar_lea.sflag [#allocation6], %s304
          %s306 = sand.u32 %s89, 1
          %s307 = smul.addr %s306, 256
          %s308 = scalar_lea.vmem [#allocation5], %s307
          %s310 = ssub.s32 4096, 4096
          %311 = vsyncadd %s305, %s310
          %s312 = smul.addr %s27, 32
          %s313 = smul.addr %s312, 128
          %s314 = scalar_lea.hbm %s2, %s313
          %s315 = sshll.u32 %s308, 4
          %s316 = int_to_ptr.vmem [resolvable:$true] %s315
          %321 = dma.hbm_to_vmem [thread:$0]  %s314, 4096, %s316, %s305, 128, 128, 8
        $region44: #{conv2d_lstm_cell.1} parent=31 // pred_fallthru
          _
      $region32: #{conv2d_lstm_cell.1} parent=5 // pred_fallthru
        _
      %p322 = scmp.le.s32.totalorder 1, %s27
      %p323 = scmp.lt.s32.totalorder %s27, 3
      %p324 = pnand %p322, %p323
      %p325 = pneg %p324
      // Predicated region
      $region45: #{conv2d_lstm_cell.1} parent=5 // pred_check
        _
      $region46: #{conv2d_lstm_cell.1} parent=5 // pred_check_branch
        %327 = sbr.rel (%p324) target = $region48
      $region47: #{conv2d_lstm_cell.1} parent=5 // pred_region
        %s328 = ssub.s32 %s27, 1
        %s329 = sand.u32 %s66, 1
        %s330 = scalar_lea.sflag [#allocation3], %s329
        %s331 = sand.u32 %s66, 1
        %s332 = smul.addr %s331, 256
        %s333 = scalar_lea.vmem [#allocation2], %s332
        // Predicated region
        $region49: #{conv2d_lstm_cell.1} parent=47 // pred_check
          %p334 = pneg %p79
        $region50: #{conv2d_lstm_cell.1} parent=47 // pred_check_branch
          %336 = sbr.rel (%p334) target = $region52
        $region51: #{conv2d_lstm_cell.1} parent=47 // pred_region
          %337 = dma.done %s330, 4096
        $region52: #{conv2d_lstm_cell.1} parent=47 // pred_fallthru
          _
        %s338 = sand.u32 %s92, 1
        %s339 = scalar_lea.sflag [#allocation6], %s338
        %s340 = sand.u32 %s92, 1
        %s341 = smul.addr %s340, 256
        %s342 = scalar_lea.vmem [#allocation5], %s341
        // Predicated region
        $region53: #{conv2d_lstm_cell.1} parent=47 // pred_check
          %p343 = pneg %p105
        $region54: #{conv2d_lstm_cell.1} parent=47 // pred_check_branch
          %345 = sbr.rel (%p343) target = $region56
        $region55: #{conv2d_lstm_cell.1} parent=47 // pred_region
          %346 = dma.done %s339, 4096
        $region56: #{conv2d_lstm_cell.1} parent=47 // pred_fallthru
          _
        %p347 = scmp.lt.s32.totalorder %s32, 1
        %s348 = scalar_select %p347, %s32, 1
        %s349 = smul.addr %s348, 32
        %s350 = smul.addr %s349, 8
        %s351 = scalar_lea.vmem %s0, %s350
        %p352 = pneg %p53
        %p353 = pneg %p50
        %s354 = sand.u32 %s66, 1
        %s355 = scalar_lea.sflag [#allocation3], %s354
        %s356 = sand.u32 %s66, 1
        %s357 = smul.addr %s356, 256
        %s358 = scalar_lea.vmem [#allocation2], %s357
        %p359 = pneg %p79
        %p360 = pneg %p76
        %s361 = sand.u32 %s92, 1
        %s362 = scalar_lea.sflag [#allocation6], %s361
        %s363 = sand.u32 %s92, 1
        %s364 = smul.addr %s363, 256
        %s365 = scalar_lea.vmem [#allocation5], %s364
        %p366 = pneg %p105
        %p367 = pneg %p102
        %p368 = pneg %p126
        %p369 = pneg %p123
        %p370 = pneg %p147
        %p371 = pneg %p144
        %p372 = pneg %p168
        %p373 = pneg %p165
        %p374 = pneg %p189
        %p375 = pneg %p186
        %p376 = pneg %p215
        %p377 = pneg %p212
        %s378 = sand.u32 %s202, 1
        %s379 = scalar_lea.sflag [#allocation4], %s378
        %s380 = sand.u32 %s202, 1
        %s381 = smul.addr %s380, 256
        %s382 = scalar_lea.vmem [#allocation7], %s381
        %p383 = pneg %p241
        %p384 = pneg %p238
        %s385 = sand.u32 %s228, 1
        %s386 = scalar_lea.sflag [#allocation9], %s385
        %s387 = sand.u32 %s228, 1
        %s388 = smul.addr %s387, 256
        %s389 = scalar_lea.vmem [#allocation8], %s388
        %p390 = scmp.lt.s32.totalorder %s32, 1
        %s391 = scalar_select %p390, %s32, 1
        %s392 = smul.addr %s391, 32
        %s393 = smul.addr %s392, 8
        %s394 = scalar_lea.vmem %s0, %s393
        %v396 = vlaneseq
        %v397 = vand.u32 %v396, 127
        %vm398 = vcmp.lt.s32.totalorder %v397, 96
        %v399 = vsel %vm398, 0.5, 1.0
        %v400 = vsel %vm398, 0.5, 0.0
        %v401 = vld [vmem:[%s394] sm:$0xff]
        %v402 = vld [vmem:[%s394 + $0x8] sm:$0xff]
        %v403 = vld [vmem:[%s394 + $0x10] sm:$0xff]
        %v404 = vld [vmem:[%s394 + $0x18] sm:$0xff]
        %v405 = vld [vmem:[%s394 + $0x20] sm:$0xff]
        %v406 = vld [vmem:[%s394 + $0x28] sm:$0xff]
        %v407 = vld [vmem:[%s394 + $0x30] sm:$0xff]
        %v408 = vld [vmem:[%s394 + $0x38] sm:$0xff]
        %v409 = vld [vmem:[%s394 + $0x40] sm:$0xff]
        %v410 = vld [vmem:[%s394 + $0x48] sm:$0xff]
        %v411 = vld [vmem:[%s394 + $0x50] sm:$0xff]
        %v412 = vld [vmem:[%s394 + $0x58] sm:$0xff]
        %v413 = vld [vmem:[%s394 + $0x60] sm:$0xff]
        %v414 = vld [vmem:[%s394 + $0x68] sm:$0xff]
        %v415 = vld [vmem:[%s394 + $0x70] sm:$0xff]
        %v416 = vld [vmem:[%s394 + $0x78] sm:$0xff]
        %v417 = vld [vmem:[%s394 + $0x80] sm:$0xff]
        %v418 = vld [vmem:[%s394 + $0x88] sm:$0xff]
        %v419 = vld [vmem:[%s394 + $0x90] sm:$0xff]
        %v420 = vld [vmem:[%s394 + $0x98] sm:$0xff]
        %v421 = vld [vmem:[%s394 + $0xa0] sm:$0xff]
        %v422 = vld [vmem:[%s394 + $0xa8] sm:$0xff]
        %v423 = vld [vmem:[%s394 + $0xb0] sm:$0xff]
        %v424 = vld [vmem:[%s394 + $0xb8] sm:$0xff]
        %v425 = vld [vmem:[%s394 + $0xc0] sm:$0xff]
        %v426 = vld [vmem:[%s394 + $0xc8] sm:$0xff]
        %v427 = vld [vmem:[%s394 + $0xd0] sm:$0xff]
        %v428 = vld [vmem:[%s394 + $0xd8] sm:$0xff]
        %v429 = vld [vmem:[%s394 + $0xe0] sm:$0xff]
        %v430 = vld [vmem:[%s394 + $0xe8] sm:$0xff]
        %v431 = vld [vmem:[%s394 + $0xf0] sm:$0xff]
        %v432 = vld [vmem:[%s394 + $0xf8] sm:$0xff]
        %v433 = vld [vmem:[%s333] sm:$0xff]
        %v434 = vld [vmem:[%s333 + $0x8] sm:$0xff]
        %v435 = vld [vmem:[%s333 + $0x10] sm:$0xff]
        %v436 = vld [vmem:[%s333 + $0x18] sm:$0xff]
        %v437 = vld [vmem:[%s333 + $0x20] sm:$0xff]
        %v438 = vld [vmem:[%s333 + $0x28] sm:$0xff]
        %v439 = vld [vmem:[%s333 + $0x30] sm:$0xff]
        %v440 = vld [vmem:[%s333 + $0x38] sm:$0xff]
        %v441 = vld [vmem:[%s333 + $0x40] sm:$0xff]
        %v442 = vld [vmem:[%s333 + $0x48] sm:$0xff]
        %v443 = vld [vmem:[%s333 + $0x50] sm:$0xff]
        %v444 = vld [vmem:[%s333 + $0x58] sm:$0xff]
        %v445 = vld [vmem:[%s333 + $0x60] sm:$0xff]
        %v446 = vld [vmem:[%s333 + $0x68] sm:$0xff]
        %v447 = vld [vmem:[%s333 + $0x70] sm:$0xff]
        %v448 = vld [vmem:[%s333 + $0x78] sm:$0xff]
        %v449 = vld [vmem:[%s333 + $0x80] sm:$0xff]
        %v450 = vld [vmem:[%s333 + $0x88] sm:$0xff]
        %v451 = vld [vmem:[%s333 + $0x90] sm:$0xff]
        %v452 = vld [vmem:[%s333 + $0x98] sm:$0xff]
        %v453 = vld [vmem:[%s333 + $0xa0] sm:$0xff]
        %v454 = vld [vmem:[%s333 + $0xa8] sm:$0xff]
        %v455 = vld [vmem:[%s333 + $0xb0] sm:$0xff]
        %v456 = vld [vmem:[%s333 + $0xb8] sm:$0xff]
        %v457 = vld [vmem:[%s333 + $0xc0] sm:$0xff]
        %v458 = vld [vmem:[%s333 + $0xc8] sm:$0xff]
        %v459 = vld [vmem:[%s333 + $0xd0] sm:$0xff]
        %v460 = vld [vmem:[%s333 + $0xd8] sm:$0xff]
        %v461 = vld [vmem:[%s333 + $0xe0] sm:$0xff]
        %v462 = vld [vmem:[%s333 + $0xe8] sm:$0xff]
        %v463 = vld [vmem:[%s333 + $0xf0] sm:$0xff]
        %v464 = vld [vmem:[%s333 + $0xf8] sm:$0xff]
        %v465 = vlaneseq
        %v466 = vshrl.u32 %v465, 7
        %v467 = vadd.s32 %v466, 8
        %vm468 = vcmp.ge.s32.totalorder %v466, 1
        %vm469 = vcmp.ge.s32.totalorder %v467, 1
        %vm470 = vcmp.le.s32.totalorder %v466, 14
        %vm471 = vcmp.le.s32.totalorder %v467, 14
        %v472 = vrot.slane %v433, 7
        %v473 = vrot.slane %v435, 7
        %v474 = vrot.slane %v437, 7
        %v475 = vrot.slane %v439, 7
        %v476 = vrot.slane %v441, 7
        %v477 = vrot.slane %v443, 7
        %v478 = vrot.slane %v445, 7
        %v479 = vrot.slane %v447, 7
        %v480 = vrot.slane %v449, 7
        %v481 = vrot.slane %v451, 7
        %v482 = vrot.slane %v453, 7
        %v483 = vrot.slane %v455, 7
        %v484 = vrot.slane %v457, 7
        %v485 = vrot.slane %v459, 7
        %v486 = vrot.slane %v461, 7
        %v487 = vrot.slane %v434, 7
        %v488 = vrot.slane %v436, 7
        %v489 = vrot.slane %v438, 7
        %v490 = vrot.slane %v440, 7
        %v491 = vrot.slane %v442, 7
        %v492 = vrot.slane %v444, 7
        %v493 = vrot.slane %v446, 7
        %v494 = vrot.slane %v448, 7
        %v495 = vrot.slane %v450, 7
        %v496 = vrot.slane %v452, 7
        %v497 = vrot.slane %v454, 7
        %v498 = vrot.slane %v456, 7
        %v499 = vrot.slane %v458, 7
        %v500 = vrot.slane %v460, 7
        %v501 = vrot.slane %v462, 7
        %vm502 = vcmp.lt.s32.totalorder %v466, 1
        %v503 = vsel %vm502, %v472, %v487
        %v504 = vsel %vm502, %v473, %v488
        %v505 = vsel %vm502, %v474, %v489
        %v506 = vsel %vm502, %v475, %v490
        %v507 = vsel %vm502, %v476, %v491
        %v508 = vsel %vm502, %v477, %v492
        %v509 = vsel %vm502, %v478, %v493
        %v510 = vsel %vm502, %v479, %v494
        %v511 = vsel %vm502, %v480, %v495
        %v512 = vsel %vm502, %v481, %v496
        %v513 = vsel %vm502, %v482, %v497
        %v514 = vsel %vm502, %v483, %v498
        %v515 = vsel %vm502, %v484, %v499
        %v516 = vsel %vm502, %v485, %v500
        %v517 = vsel %vm502, %v486, %v501
        %v518 = vsel %vm502, %v487, %v472
        %v519 = vsel %vm502, %v488, %v473
        %v520 = vsel %vm502, %v489, %v474
        %v521 = vsel %vm502, %v490, %v475
        %v522 = vsel %vm502, %v491, %v476
        %v523 = vsel %vm502, %v492, %v477
        %v524 = vsel %vm502, %v493, %v478
        %v525 = vsel %vm502, %v494, %v479
        %v526 = vsel %vm502, %v495, %v480
        %v527 = vsel %vm502, %v496, %v481
        %v528 = vsel %vm502, %v497, %v482
        %v529 = vsel %vm502, %v498, %v483
        %v530 = vsel %vm502, %v499, %v484
        %v531 = vsel %vm502, %v500, %v485
        %v532 = vsel %vm502, %v501, %v486
        %v533 = vsel %vm468, 0.0, 0.0
        %v534 = vsel %vm469, 0.0, 0.0
        %v535 = vsel %vm468, %v518, 0.0
        %v536 = vsel %vm469, %v503, 0.0
        %v537 = vsel %vm468, %v519, 0.0
        %v538 = vsel %vm469, %v504, 0.0
        %v539 = vsel %vm468, %v520, 0.0
        %v540 = vsel %vm469, %v505, 0.0
        %v541 = vsel %vm468, %v521, 0.0
        %v542 = vsel %vm469, %v506, 0.0
        %v543 = vsel %vm468, %v522, 0.0
        %v544 = vsel %vm469, %v507, 0.0
        %v545 = vsel %vm468, %v523, 0.0
        %v546 = vsel %vm469, %v508, 0.0
        %v547 = vsel %vm468, %v524, 0.0
        %v548 = vsel %vm469, %v509, 0.0
        %v549 = vsel %vm468, %v525, 0.0
        %v550 = vsel %vm469, %v510, 0.0
        %v551 = vsel %vm468, %v526, 0.0
        %v552 = vsel %vm469, %v511, 0.0
        %v553 = vsel %vm468, %v527, 0.0
        %v554 = vsel %vm469, %v512, 0.0
        %v555 = vsel %vm468, %v528, 0.0
        %v556 = vsel %vm469, %v513, 0.0
        %v557 = vsel %vm468, %v529, 0.0
        %v558 = vsel %vm469, %v514, 0.0
        %v559 = vsel %vm468, %v530, 0.0
        %v560 = vsel %vm469, %v515, 0.0
        %v561 = vsel %vm468, %v531, 0.0
        %v562 = vsel %vm469, %v516, 0.0
        %v563 = vsel %vm468, %v532, 0.0
        %v564 = vsel %vm469, %v517, 0.0
        %v565 = vpack.c.bf16 %v534, %v533
        %v566 = vpack.c.bf16 %v536, %v535
        %v567 = vpack.c.bf16 %v538, %v537
        %v568 = vpack.c.bf16 %v540, %v539
        %v569 = vpack.c.bf16 %v542, %v541
        %v570 = vpack.c.bf16 %v544, %v543
        %v571 = vpack.c.bf16 %v546, %v545
        %v572 = vpack.c.bf16 %v548, %v547
        %v573 = vpack.c.bf16 %v550, %v549
        %v574 = vpack.c.bf16 %v552, %v551
        %v575 = vpack.c.bf16 %v554, %v553
        %v576 = vpack.c.bf16 %v556, %v555
        %v577 = vpack.c.bf16 %v558, %v557
        %v578 = vpack.c.bf16 %v560, %v559
        %v579 = vpack.c.bf16 %v562, %v561
        %v580 = vpack.c.bf16 %v564, %v563
        %v581 = vpack.c.bf16 0.0, 0.0
        %v582 = vpack.c.bf16 %v434, %v433
        %v583 = vpack.c.bf16 %v436, %v435
        %v584 = vpack.c.bf16 %v438, %v437
        %v585 = vpack.c.bf16 %v440, %v439
        %v586 = vpack.c.bf16 %v442, %v441
        %v587 = vpack.c.bf16 %v444, %v443
        %v588 = vpack.c.bf16 %v446, %v445
        %v589 = vpack.c.bf16 %v448, %v447
        %v590 = vpack.c.bf16 %v450, %v449
        %v591 = vpack.c.bf16 %v452, %v451
        %v592 = vpack.c.bf16 %v454, %v453
        %v593 = vpack.c.bf16 %v456, %v455
        %v594 = vpack.c.bf16 %v458, %v457
        %v595 = vpack.c.bf16 %v460, %v459
        %v596 = vpack.c.bf16 %v462, %v461
        %v597 = vrot.slane %v433, 1
        %v598 = vrot.slane %v435, 1
        %v599 = vrot.slane %v437, 1
        %v600 = vrot.slane %v439, 1
        %v601 = vrot.slane %v441, 1
        %v602 = vrot.slane %v443, 1
        %v603 = vrot.slane %v445, 1
        %v604 = vrot.slane %v447, 1
        %v605 = vrot.slane %v449, 1
        %v606 = vrot.slane %v451, 1
        %v607 = vrot.slane %v453, 1
        %v608 = vrot.slane %v455, 1
        %v609 = vrot.slane %v457, 1
        %v610 = vrot.slane %v459, 1
        %v611 = vrot.slane %v461, 1
        %v612 = vrot.slane %v434, 1
        %v613 = vrot.slane %v436, 1
        %v614 = vrot.slane %v438, 1
        %v615 = vrot.slane %v440, 1
        %v616 = vrot.slane %v442, 1
        %v617 = vrot.slane %v444, 1
        %v618 = vrot.slane %v446, 1
        %v619 = vrot.slane %v448, 1
        %v620 = vrot.slane %v450, 1
        %v621 = vrot.slane %v452, 1
        %v622 = vrot.slane %v454, 1
        %v623 = vrot.slane %v456, 1
        %v624 = vrot.slane %v458, 1
        %v625 = vrot.slane %v460, 1
        %v626 = vrot.slane %v462, 1
        %vm627 = vcmp.lt.s32.totalorder %v466, 7
        %v628 = vsel %vm627, %v597, %v612
        %v629 = vsel %vm627, %v598, %v613
        %v630 = vsel %vm627, %v599, %v614
        %v631 = vsel %vm627, %v600, %v615
        %v632 = vsel %vm627, %v601, %v616
        %v633 = vsel %vm627, %v602, %v617
        %v634 = vsel %vm627, %v603, %v618
        %v635 = vsel %vm627, %v604, %v619
        %v636 = vsel %vm627, %v605, %v620
        %v637 = vsel %vm627, %v606, %v621
        %v638 = vsel %vm627, %v607, %v622
        %v639 = vsel %vm627, %v608, %v623
        %v640 = vsel %vm627, %v609, %v624
        %v641 = vsel %vm627, %v610, %v625
        %v642 = vsel %vm627, %v611, %v626
        %v643 = vsel %vm627, %v612, %v597
        %v644 = vsel %vm627, %v613, %v598
        %v645 = vsel %vm627, %v614, %v599
        %v646 = vsel %vm627, %v615, %v600
        %v647 = vsel %vm627, %v616, %v601
        %v648 = vsel %vm627, %v617, %v602
        %v649 = vsel %vm627, %v618, %v603
        %v650 = vsel %vm627, %v619, %v604
        %v651 = vsel %vm627, %v620, %v605
        %v652 = vsel %vm627, %v621, %v606
        %v653 = vsel %vm627, %v622, %v607
        %v654 = vsel %vm627, %v623, %v608
        %v655 = vsel %vm627, %v624, %v609
        %v656 = vsel %vm627, %v625, %v610
        %v657 = vsel %vm627, %v626, %v611
        %v658 = vsel %vm470, 0.0, 0.0
        %v659 = vsel %vm471, 0.0, 0.0
        %v660 = vsel %vm470, %v628, 0.0
        %v661 = vsel %vm471, %v643, 0.0
        %v662 = vsel %vm470, %v629, 0.0
        %v663 = vsel %vm471, %v644, 0.0
        %v664 = vsel %vm470, %v630, 0.0
        %v665 = vsel %vm471, %v645, 0.0
        %v666 = vsel %vm470, %v631, 0.0
        %v667 = vsel %vm471, %v646, 0.0
        %v668 = vsel %vm470, %v632, 0.0
        %v669 = vsel %vm471, %v647, 0.0
        %v670 = vsel %vm470, %v633, 0.0
        %v671 = vsel %vm471, %v648, 0.0
        %v672 = vsel %vm470, %v634, 0.0
        %v673 = vsel %vm471, %v649, 0.0
        %v674 = vsel %vm470, %v635, 0.0
        %v675 = vsel %vm471, %v650, 0.0
        %v676 = vsel %vm470, %v636, 0.0
        %v677 = vsel %vm471, %v651, 0.0
        %v678 = vsel %vm470, %v637, 0.0
        %v679 = vsel %vm471, %v652, 0.0
        %v680 = vsel %vm470, %v638, 0.0
        %v681 = vsel %vm471, %v653, 0.0
        %v682 = vsel %vm470, %v639, 0.0
        %v683 = vsel %vm471, %v654, 0.0
        %v684 = vsel %vm470, %v640, 0.0
        %v685 = vsel %vm471, %v655, 0.0
        %v686 = vsel %vm470, %v641, 0.0
        %v687 = vsel %vm471, %v656, 0.0
        %v688 = vsel %vm470, %v642, 0.0
        %v689 = vsel %vm471, %v657, 0.0
        %v690 = vpack.c.bf16 %v659, %v658
        %v691 = vpack.c.bf16 %v661, %v660
        %v692 = vpack.c.bf16 %v663, %v662
        %v693 = vpack.c.bf16 %v665, %v664
        %v694 = vpack.c.bf16 %v667, %v666
        %v695 = vpack.c.bf16 %v669, %v668
        %v696 = vpack.c.bf16 %v671, %v670
        %v697 = vpack.c.bf16 %v673, %v672
        %v698 = vpack.c.bf16 %v675, %v674
        %v699 = vpack.c.bf16 %v677, %v676
        %v700 = vpack.c.bf16 %v679, %v678
        %v701 = vpack.c.bf16 %v681, %v680
        %v702 = vpack.c.bf16 %v683, %v682
        %v703 = vpack.c.bf16 %v685, %v684
        %v704 = vpack.c.bf16 %v687, %v686
        %v705 = vpack.c.bf16 %v689, %v688
        %v706 = vrot.slane %v463, 7
        %v707 = vrot.slane %v464, 7
        %v708 = vsel %vm502, %v706, %v707
        %v709 = vsel %vm502, %v707, %v706
        %v710 = vsel %vm468, %v709, 0.0
        %v711 = vsel %vm469, %v708, 0.0
        %v712 = vpack.c.bf16 %v711, %v710
        %v713 = vpack.c.bf16 %v464, %v463
        %v714 = vrot.slane %v463, 1
        %v715 = vrot.slane %v464, 1
        %v716 = vsel %vm627, %v714, %v715
        %v717 = vsel %vm627, %v715, %v714
        %v718 = vsel %vm470, %v716, 0.0
        %v719 = vsel %vm471, %v717, 0.0
        %v720 = vpack.c.bf16 %v719, %v718
        %v721 = vld [vmem:[%s3] sm:$0xf]
        %v722 = vld [vmem:[%s3 + $0x4] sm:$0xf]
        %v723 = vld [vmem:[%s3 + $0x8] sm:$0xf]
        %v724 = vld [vmem:[%s3 + $0xc] sm:$0xf]
        %s725 = scalar_lea.vmem %s3, 16
        %v726 = vld [vmem:[%s725] sm:$0xf]
        %v727 = vld [vmem:[%s725 + $0x4] sm:$0xf]
        %v728 = vld [vmem:[%s725 + $0x8] sm:$0xf]
        %v729 = vld [vmem:[%s725 + $0xc] sm:$0xf]
        %v734 = vunpack.c.l.b16 %v726
        %v735 = vunpack.c.l.b16 %v727
        %v736 = vunpack.c.l.b16 %v728
        %v737 = vunpack.c.l.b16 %v729
        %v738 = vpack.c.b16 %v735, %v734
        %v739 = vpack.c.b16 %v737, %v736
        %vm742 = vcmask 261120
        %v744 = vsel %vm742, %v581, 0
        %v747 = vsel %vm742, %v582, 0
        %v750 = vsel %vm742, %v583, 0
        %v753 = vsel %vm742, %v584, 0
        %v756 = vsel %vm742, %v585, 0
        %v759 = vsel %vm742, %v586, 0
        %v762 = vsel %vm742, %v587, 0
        %v765 = vsel %vm742, %v588, 0
        %v768 = vsel %vm742, %v589, 0
        %v771 = vsel %vm742, %v590, 0
        %v774 = vsel %vm742, %v591, 0
        %v777 = vsel %vm742, %v592, 0
        %v780 = vsel %vm742, %v593, 0
        %v783 = vsel %vm742, %v594, 0
        %v786 = vsel %vm742, %v595, 0
        %v789 = vsel %vm742, %v596, 0
        %791 = vmatprep.subr.bf16.mxu0 0
        %792 = vmatpush1.bf16.msra.mxu0 0
        %793 = vmatprep.subr.bf16.mxu0 0
        %794 = vmatpush1.bf16.msra.mxu0 0
        %795 = vmatprep.subr.bf16.mxu0 0
        %796 = vmatpush1.bf16.msra.mxu0 0
        %797 = vmatprep.subr.bf16.mxu0 0
        %798 = vmatpush1.bf16.msra.mxu0 0
        %799 = vmatprep.subr.bf16.mxu0 0
        %800 = vmatpush1.bf16.msra.mxu0 0
        %801 = vmatprep.subr.bf16.mxu0 0
        %802 = vmatpush1.bf16.msra.mxu0 0
        %803 = vmatprep.subr.bf16.mxu0 0
        %804 = vmatpush1.bf16.msra.mxu0 %v739
        %805 = vmatprep.subr.bf16.mxu0 0
        %806 = vmatpush1.bf16.msra.mxu0 %v738
        %807 = vmatprep.subr.bf16.mxu0 0
        %808 = vmatpush2.bf16.msra.mxu0 0
        %809 = vmatprep.subr.bf16.mxu0 0
        %810 = vmatpush2.bf16.msra.mxu0 0
        %811 = vmatprep.subr.bf16.mxu0 0
        %812 = vmatpush2.bf16.msra.mxu0 0
        %813 = vmatprep.subr.bf16.mxu0 0
        %814 = vmatpush2.bf16.msra.mxu0 0
        %815 = vmatprep.subr.bf16.mxu0 0
        %816 = vmatpush2.bf16.msra.mxu0 0
        %817 = vmatprep.subr.bf16.mxu0 0
        %818 = vmatpush2.bf16.msra.mxu0 0
        %819 = vmatprep.subr.bf16.mxu0 0
        %820 = vmatpush2.bf16.msra.mxu0 0
        %821 = vmatprep.subr.bf16.mxu0 0
        %822 = vmatpush2.bf16.msra.mxu0 0
        %823 = vmatprep.mubr.bf16.mxu0 0
        %824 = vmatmul.mubr.bf16.gmra.mxu0 %v744
        %v825 = vpop.f32.mrf.mxu0
        %v826 = vadd.f32 0.0, %v825
        %v827 = vpop.f32.mrf.mxu0
        %v828 = vpop.f32.mrf.mxu0
        %v829 = vadd.f32 0.0, %v828
        %v830 = vpop.f32.mrf.mxu0
        %831 = vmatprep.mubr.bf16.mxu0 0
        %832 = vmatmul.mubr.bf16.gmra.mxu0 %v747
        %v833 = vpop.f32.mrf.mxu0
        %v834 = vadd.f32 0.0, %v833
        %v835 = vpop.f32.mrf.mxu0
        %v836 = vpop.f32.mrf.mxu0
        %v837 = vadd.f32 0.0, %v836
        %v838 = vpop.f32.mrf.mxu0
        %839 = vmatprep.mubr.bf16.mxu0 0
        %840 = vmatmul.mubr.bf16.gmra.mxu0 %v750
        %v841 = vpop.f32.mrf.mxu0
        %v842 = vadd.f32 0.0, %v841
        %v843 = vpop.f32.mrf.mxu0
        %v844 = vpop.f32.mrf.mxu0
        %v845 = vadd.f32 0.0, %v844
        %v846 = vpop.f32.mrf.mxu0
        %847 = vmatprep.mubr.bf16.mxu0 0
        %848 = vmatmul.mubr.bf16.gmra.mxu0 %v753
        %v849 = vpop.f32.mrf.mxu0
        %v850 = vadd.f32 0.0, %v849
        %v851 = vpop.f32.mrf.mxu0
        %v852 = vpop.f32.mrf.mxu0
        %v853 = vadd.f32 0.0, %v852
        %v854 = vpop.f32.mrf.mxu0
        %855 = vmatprep.mubr.bf16.mxu0 0
        %856 = vmatmul.mubr.bf16.gmra.mxu0 %v756
        %v857 = vpop.f32.mrf.mxu0
        %v858 = vadd.f32 0.0, %v857
        %v859 = vpop.f32.mrf.mxu0
        %v860 = vpop.f32.mrf.mxu0
        %v861 = vadd.f32 0.0, %v860
        %v862 = vpop.f32.mrf.mxu0
        %863 = vmatprep.mubr.bf16.mxu0 0
        %864 = vmatmul.mubr.bf16.gmra.mxu0 %v759
        %v865 = vpop.f32.mrf.mxu0
        %v866 = vadd.f32 0.0, %v865
        %v867 = vpop.f32.mrf.mxu0
        %v868 = vpop.f32.mrf.mxu0
        %v869 = vadd.f32 0.0, %v868
        %v870 = vpop.f32.mrf.mxu0
        %871 = vmatprep.mubr.bf16.mxu0 0
        %872 = vmatmul.mubr.bf16.gmra.mxu0 %v762
        %v873 = vpop.f32.mrf.mxu0
        %v874 = vadd.f32 0.0, %v873
        %v875 = vpop.f32.mrf.mxu0
        %v876 = vpop.f32.mrf.mxu0
        %v877 = vadd.f32 0.0, %v876
        %v878 = vpop.f32.mrf.mxu0
        %879 = vmatprep.mubr.bf16.mxu0 0
        %880 = vmatmul.mubr.bf16.gmra.mxu0 %v765
        %v881 = vpop.f32.mrf.mxu0
        %v882 = vadd.f32 0.0, %v881
        %v883 = vpop.f32.mrf.mxu0
        %v884 = vpop.f32.mrf.mxu0
        %v885 = vadd.f32 0.0, %v884
        %v886 = vpop.f32.mrf.mxu0
        %887 = vmatprep.mubr.bf16.mxu0 0
        %888 = vmatmul.mubr.bf16.gmra.mxu0 %v768
        %v889 = vpop.f32.mrf.mxu0
        %v890 = vadd.f32 0.0, %v889
        %v891 = vpop.f32.mrf.mxu0
        %v892 = vpop.f32.mrf.mxu0
        %v893 = vadd.f32 0.0, %v892
        %v894 = vpop.f32.mrf.mxu0
        %895 = vmatprep.mubr.bf16.mxu0 0
        %896 = vmatmul.mubr.bf16.gmra.mxu0 %v771
        %v897 = vpop.f32.mrf.mxu0
        %v898 = vadd.f32 0.0, %v897
        %v899 = vpop.f32.mrf.mxu0
        %v900 = vpop.f32.mrf.mxu0
        %v901 = vadd.f32 0.0, %v900
        %v902 = vpop.f32.mrf.mxu0
        %903 = vmatprep.mubr.bf16.mxu0 0
        %904 = vmatmul.mubr.bf16.gmra.mxu0 %v774
        %v905 = vpop.f32.mrf.mxu0
        %v906 = vadd.f32 0.0, %v905
        %v907 = vpop.f32.mrf.mxu0
        %v908 = vpop.f32.mrf.mxu0
        %v909 = vadd.f32 0.0, %v908
        %v910 = vpop.f32.mrf.mxu0
        %911 = vmatprep.mubr.bf16.mxu0 0
        %912 = vmatmul.mubr.bf16.gmra.mxu0 %v777
        %v913 = vpop.f32.mrf.mxu0
        %v914 = vadd.f32 0.0, %v913
        %v915 = vpop.f32.mrf.mxu0
        %v916 = vpop.f32.mrf.mxu0
        %v917 = vadd.f32 0.0, %v916
        %v918 = vpop.f32.mrf.mxu0
        %919 = vmatprep.mubr.bf16.mxu0 0
        %920 = vmatmul.mubr.bf16.gmra.mxu0 %v780
        %v921 = vpop.f32.mrf.mxu0
        %v922 = vadd.f32 0.0, %v921
        %v923 = vpop.f32.mrf.mxu0
        %v924 = vpop.f32.mrf.mxu0
        %v925 = vadd.f32 0.0, %v924
        %v926 = vpop.f32.mrf.mxu0
        %927 = vmatprep.mubr.bf16.mxu0 0
        %928 = vmatmul.mubr.bf16.gmra.mxu0 %v783
        %v929 = vpop.f32.mrf.mxu0
        %v930 = vadd.f32 0.0, %v929
        %v931 = vpop.f32.mrf.mxu0
        %v932 = vpop.f32.mrf.mxu0
        %v933 = vadd.f32 0.0, %v932
        %v934 = vpop.f32.mrf.mxu0
        %935 = vmatprep.mubr.bf16.mxu0 0
        %936 = vmatmul.mubr.bf16.gmra.mxu0 %v786
        %v937 = vpop.f32.mrf.mxu0
        %v938 = vadd.f32 0.0, %v937
        %v939 = vpop.f32.mrf.mxu0
        %v940 = vpop.f32.mrf.mxu0
        %v941 = vadd.f32 0.0, %v940
        %v942 = vpop.f32.mrf.mxu0
        %943 = vmatprep.mubr.bf16.mxu0 0
        %944 = vmatmul.mubr.bf16.gmra.mxu0 %v789
        %v945 = vpop.f32.mrf.mxu0
        %v946 = vadd.f32 0.0, %v945
        %v947 = vpop.f32.mrf.mxu0
        %v948 = vpop.f32.mrf.mxu0
        %v949 = vadd.f32 0.0, %v948
        %v950 = vpop.f32.mrf.mxu0
        %951 = vdwg.mxu0
        %v956 = vunpack.c.l.b16 %v721
        %v957 = vunpack.c.l.b16 %v722
        %v958 = vunpack.c.l.b16 %v723
        %v959 = vunpack.c.l.b16 %v724
        %v960 = vpack.c.b16 %v957, %v956
        %v961 = vpack.c.b16 %v959, %v958
        %v965 = vsel %vm742, %v565, 0
        %v968 = vsel %vm742, %v566, 0
        %v971 = vsel %vm742, %v567, 0
        %v974 = vsel %vm742, %v568, 0
        %v977 = vsel %vm742, %v569, 0
        %v980 = vsel %vm742, %v570, 0
        %v983 = vsel %vm742, %v571, 0
        %v986 = vsel %vm742, %v572, 0
        %v989 = vsel %vm742, %v573, 0
        %v992 = vsel %vm742, %v574, 0
        %v995 = vsel %vm742, %v575, 0
        %v998 = vsel %vm742, %v576, 0
        %v1001 = vsel %vm742, %v577, 0
        %v1004 = vsel %vm742, %v578, 0
        %v1007 = vsel %vm742, %v579, 0
        %v1010 = vsel %vm742, %v580, 0
        %1012 = vmatprep.subr.bf16.mxu0 0
        %1013 = vmatpush1.bf16.msra.mxu0 0
        %1014 = vmatprep.subr.bf16.mxu0 0
        %1015 = vmatpush1.bf16.msra.mxu0 0
        %1016 = vmatprep.subr.bf16.mxu0 0
        %1017 = vmatpush1.bf16.msra.mxu0 0
        %1018 = vmatprep.subr.bf16.mxu0 0
        %1019 = vmatpush1.bf16.msra.mxu0 0
        %1020 = vmatprep.subr.bf16.mxu0 0
        %1021 = vmatpush1.bf16.msra.mxu0 0
        %1022 = vmatprep.subr.bf16.mxu0 0
        %1023 = vmatpush1.bf16.msra.mxu0 0
        %1024 = vmatprep.subr.bf16.mxu0 0
        %1025 = vmatpush1.bf16.msra.mxu0 %v961
        %1026 = vmatprep.subr.bf16.mxu0 0
        %1027 = vmatpush1.bf16.msra.mxu0 %v960
        %1028 = vmatprep.subr.bf16.mxu0 0
        %1029 = vmatpush2.bf16.msra.mxu0 0
        %1030 = vmatprep.subr.bf16.mxu0 0
        %1031 = vmatpush2.bf16.msra.mxu0 0
        %1032 = vmatprep.subr.bf16.mxu0 0
        %1033 = vmatpush2.bf16.msra.mxu0 0
        %1034 = vmatprep.subr.bf16.mxu0 0
        %1035 = vmatpush2.bf16.msra.mxu0 0
        %1036 = vmatprep.subr.bf16.mxu0 0
        %1037 = vmatpush2.bf16.msra.mxu0 0
        %1038 = vmatprep.subr.bf16.mxu0 0
        %1039 = vmatpush2.bf16.msra.mxu0 0
        %1040 = vmatprep.subr.bf16.mxu0 0
        %1041 = vmatpush2.bf16.msra.mxu0 0
        %1042 = vmatprep.subr.bf16.mxu0 0
        %1043 = vmatpush2.bf16.msra.mxu0 0
        %1044 = vmatprep.mubr.bf16.mxu0 0
        %1045 = vmatmul.mubr.bf16.gmra.mxu0 %v965
        %v1046 = vpop.f32.mrf.mxu0
        %v1047 = vadd.f32 %v826, %v1046
        %v1048 = vpop.f32.mrf.mxu0
        %v1049 = vpop.f32.mrf.mxu0
        %v1050 = vadd.f32 %v829, %v1049
        %v1051 = vpop.f32.mrf.mxu0
        %1052 = vmatprep.mubr.bf16.mxu0 0
        %1053 = vmatmul.mubr.bf16.gmra.mxu0 %v968
        %v1054 = vpop.f32.mrf.mxu0
        %v1055 = vadd.f32 %v834, %v1054
        %v1056 = vpop.f32.mrf.mxu0
        %v1057 = vpop.f32.mrf.mxu0
        %v1058 = vadd.f32 %v837, %v1057
        %v1059 = vpop.f32.mrf.mxu0
        %1060 = vmatprep.mubr.bf16.mxu0 0
        %1061 = vmatmul.mubr.bf16.gmra.mxu0 %v971
        %v1062 = vpop.f32.mrf.mxu0
        %v1063 = vadd.f32 %v842, %v1062
        %v1064 = vpop.f32.mrf.mxu0
        %v1065 = vpop.f32.mrf.mxu0
        %v1066 = vadd.f32 %v845, %v1065
        %v1067 = vpop.f32.mrf.mxu0
        %1068 = vmatprep.mubr.bf16.mxu0 0
        %1069 = vmatmul.mubr.bf16.gmra.mxu0 %v974
        %v1070 = vpop.f32.mrf.mxu0
        %v1071 = vadd.f32 %v850, %v1070
        %v1072 = vpop.f32.mrf.mxu0
        %v1073 = vpop.f32.mrf.mxu0
        %v1074 = vadd.f32 %v853, %v1073
        %v1075 = vpop.f32.mrf.mxu0
        %1076 = vmatprep.mubr.bf16.mxu0 0
        %1077 = vmatmul.mubr.bf16.gmra.mxu0 %v977
        %v1078 = vpop.f32.mrf.mxu0
        %v1079 = vadd.f32 %v858, %v1078
        %v1080 = vpop.f32.mrf.mxu0
        %v1081 = vpop.f32.mrf.mxu0
        %v1082 = vadd.f32 %v861, %v1081
        %v1083 = vpop.f32.mrf.mxu0
        %1084 = vmatprep.mubr.bf16.mxu0 0
        %1085 = vmatmul.mubr.bf16.gmra.mxu0 %v980
        %v1086 = vpop.f32.mrf.mxu0
        %v1087 = vadd.f32 %v866, %v1086
        %v1088 = vpop.f32.mrf.mxu0
        %v1089 = vpop.f32.mrf.mxu0
        %v1090 = vadd.f32 %v869, %v1089
        %v1091 = vpop.f32.mrf.mxu0
        %1092 = vmatprep.mubr.bf16.mxu0 0
        %1093 = vmatmul.mubr.bf16.gmra.mxu0 %v983
        %v1094 = vpop.f32.mrf.mxu0
        %v1095 = vadd.f32 %v874, %v1094
        %v1096 = vpop.f32.mrf.mxu0
        %v1097 = vpop.f32.mrf.mxu0
        %v1098 = vadd.f32 %v877, %v1097
        %v1099 = vpop.f32.mrf.mxu0
        %1100 = vmatprep.mubr.bf16.mxu0 0
        %1101 = vmatmul.mubr.bf16.gmra.mxu0 %v986
        %v1102 = vpop.f32.mrf.mxu0
        %v1103 = vadd.f32 %v882, %v1102
        %v1104 = vpop.f32.mrf.mxu0
        %v1105 = vpop.f32.mrf.mxu0
        %v1106 = vadd.f32 %v885, %v1105
        %v1107 = vpop.f32.mrf.mxu0
        %1108 = vmatprep.mubr.bf16.mxu0 0
        %1109 = vmatmul.mubr.bf16.gmra.mxu0 %v989
        %v1110 = vpop.f32.mrf.mxu0
        %v1111 = vadd.f32 %v890, %v1110
        %v1112 = vpop.f32.mrf.mxu0
        %v1113 = vpop.f32.mrf.mxu0
        %v1114 = vadd.f32 %v893, %v1113
        %v1115 = vpop.f32.mrf.mxu0
        %1116 = vmatprep.mubr.bf16.mxu0 0
        %1117 = vmatmul.mubr.bf16.gmra.mxu0 %v992
        %v1118 = vpop.f32.mrf.mxu0
        %v1119 = vadd.f32 %v898, %v1118
        %v1120 = vpop.f32.mrf.mxu0
        %v1121 = vpop.f32.mrf.mxu0
        %v1122 = vadd.f32 %v901, %v1121
        %v1123 = vpop.f32.mrf.mxu0
        %1124 = vmatprep.mubr.bf16.mxu0 0
        %1125 = vmatmul.mubr.bf16.gmra.mxu0 %v995
        %v1126 = vpop.f32.mrf.mxu0
        %v1127 = vadd.f32 %v906, %v1126
        %v1128 = vpop.f32.mrf.mxu0
        %v1129 = vpop.f32.mrf.mxu0
        %v1130 = vadd.f32 %v909, %v1129
        %v1131 = vpop.f32.mrf.mxu0
        %1132 = vmatprep.mubr.bf16.mxu0 0
        %1133 = vmatmul.mubr.bf16.gmra.mxu0 %v998
        %v1134 = vpop.f32.mrf.mxu0
        %v1135 = vadd.f32 %v914, %v1134
        %v1136 = vpop.f32.mrf.mxu0
        %v1137 = vpop.f32.mrf.mxu0
        %v1138 = vadd.f32 %v917, %v1137
        %v1139 = vpop.f32.mrf.mxu0
        %1140 = vmatprep.mubr.bf16.mxu0 0
        %1141 = vmatmul.mubr.bf16.gmra.mxu0 %v1001
        %v1142 = vpop.f32.mrf.mxu0
        %v1143 = vadd.f32 %v922, %v1142
        %v1144 = vpop.f32.mrf.mxu0
        %v1145 = vpop.f32.mrf.mxu0
        %v1146 = vadd.f32 %v925, %v1145
        %v1147 = vpop.f32.mrf.mxu0
        %1148 = vmatprep.mubr.bf16.mxu0 0
        %1149 = vmatmul.mubr.bf16.gmra.mxu0 %v1004
        %v1150 = vpop.f32.mrf.mxu0
        %v1151 = vadd.f32 %v930, %v1150
        %v1152 = vpop.f32.mrf.mxu0
        %v1153 = vpop.f32.mrf.mxu0
        %v1154 = vadd.f32 %v933, %v1153
        %v1155 = vpop.f32.mrf.mxu0
        %1156 = vmatprep.mubr.bf16.mxu0 0
        %1157 = vmatmul.mubr.bf16.gmra.mxu0 %v1007
        %v1158 = vpop.f32.mrf.mxu0
        %v1159 = vadd.f32 %v938, %v1158
        %v1160 = vpop.f32.mrf.mxu0
        %v1161 = vpop.f32.mrf.mxu0
        %v1162 = vadd.f32 %v941, %v1161
        %v1163 = vpop.f32.mrf.mxu0
        %1164 = vmatprep.mubr.bf16.mxu0 0
        %1165 = vmatmul.mubr.bf16.gmra.mxu0 %v1010
        %v1166 = vpop.f32.mrf.mxu0
        %v1167 = vadd.f32 %v946, %v1166
        %v1168 = vpop.f32.mrf.mxu0
        %v1169 = vpop.f32.mrf.mxu0
        %v1170 = vadd.f32 %v949, %v1169
        %v1171 = vpop.f32.mrf.mxu0
        %1172 = vdwg.mxu0
        %s1173 = scalar_lea.vmem %s3, 32
        %v1174 = vld [vmem:[%s1173] sm:$0xf]
        %v1175 = vld [vmem:[%s1173 + $0x4] sm:$0xf]
        %v1176 = vld [vmem:[%s1173 + $0x8] sm:$0xf]
        %v1177 = vld [vmem:[%s1173 + $0xc] sm:$0xf]
        %v1182 = vunpack.c.l.b16 %v1174
        %v1183 = vunpack.c.l.b16 %v1175
        %v1184 = vunpack.c.l.b16 %v1176
        %v1185 = vunpack.c.l.b16 %v1177
        %v1186 = vpack.c.b16 %v1183, %v1182
        %v1187 = vpack.c.b16 %v1185, %v1184
        %v1191 = vsel %vm742, %v690, 0
        %v1194 = vsel %vm742, %v691, 0
        %v1197 = vsel %vm742, %v692, 0
        %v1200 = vsel %vm742, %v693, 0
        %v1203 = vsel %vm742, %v694, 0
        %v1206 = vsel %vm742, %v695, 0
        %v1209 = vsel %vm742, %v696, 0
        %v1212 = vsel %vm742, %v697, 0
        %v1215 = vsel %vm742, %v698, 0
        %v1218 = vsel %vm742, %v699, 0
        %v1221 = vsel %vm742, %v700, 0
        %v1224 = vsel %vm742, %v701, 0
        %v1227 = vsel %vm742, %v702, 0
        %v1230 = vsel %vm742, %v703, 0
        %v1233 = vsel %vm742, %v704, 0
        %v1236 = vsel %vm742, %v705, 0
        %1238 = vmatprep.subr.bf16.mxu0 0
        %1239 = vmatpush1.bf16.msra.mxu0 0
        %1240 = vmatprep.subr.bf16.mxu0 0
        %1241 = vmatpush1.bf16.msra.mxu0 0
        %1242 = vmatprep.subr.bf16.mxu0 0
        %1243 = vmatpush1.bf16.msra.mxu0 0
        %1244 = vmatprep.subr.bf16.mxu0 0
        %1245 = vmatpush1.bf16.msra.mxu0 0
        %1246 = vmatprep.subr.bf16.mxu0 0
        %1247 = vmatpush1.bf16.msra.mxu0 0
        %1248 = vmatprep.subr.bf16.mxu0 0
        %1249 = vmatpush1.bf16.msra.mxu0 0
        %1250 = vmatprep.subr.bf16.mxu0 0
        %1251 = vmatpush1.bf16.msra.mxu0 %v1187
        %1252 = vmatprep.subr.bf16.mxu0 0
        %1253 = vmatpush1.bf16.msra.mxu0 %v1186
        %1254 = vmatprep.subr.bf16.mxu0 0
        %1255 = vmatpush2.bf16.msra.mxu0 0
        %1256 = vmatprep.subr.bf16.mxu0 0
        %1257 = vmatpush2.bf16.msra.mxu0 0
        %1258 = vmatprep.subr.bf16.mxu0 0
        %1259 = vmatpush2.bf16.msra.mxu0 0
        %1260 = vmatprep.subr.bf16.mxu0 0
        %1261 = vmatpush2.bf16.msra.mxu0 0
        %1262 = vmatprep.subr.bf16.mxu0 0
        %1263 = vmatpush2.bf16.msra.mxu0 0
        %1264 = vmatprep.subr.bf16.mxu0 0
        %1265 = vmatpush2.bf16.msra.mxu0 0
        %1266 = vmatprep.subr.bf16.mxu0 0
        %1267 = vmatpush2.bf16.msra.mxu0 0
        %1268 = vmatprep.subr.bf16.mxu0 0
        %1269 = vmatpush2.bf16.msra.mxu0 0
        %1270 = vmatprep.mubr.bf16.mxu0 0
        %1271 = vmatmul.mubr.bf16.gmra.mxu0 %v1191
        %v1272 = vpop.f32.mrf.mxu0
        %v1273 = vadd.f32 0.0, %v1272
        %v1274 = vpop.f32.mrf.mxu0
        %v1275 = vpop.f32.mrf.mxu0
        %v1276 = vadd.f32 0.0, %v1275
        %v1277 = vpop.f32.mrf.mxu0
        %1278 = vmatprep.mubr.bf16.mxu0 0
        %1279 = vmatmul.mubr.bf16.gmra.mxu0 %v1194
        %v1280 = vpop.f32.mrf.mxu0
        %v1281 = vadd.f32 0.0, %v1280
        %v1282 = vpop.f32.mrf.mxu0
        %v1283 = vpop.f32.mrf.mxu0
        %v1284 = vadd.f32 0.0, %v1283
        %v1285 = vpop.f32.mrf.mxu0
        %1286 = vmatprep.mubr.bf16.mxu0 0
        %1287 = vmatmul.mubr.bf16.gmra.mxu0 %v1197
        %v1288 = vpop.f32.mrf.mxu0
        %v1289 = vadd.f32 0.0, %v1288
        %v1290 = vpop.f32.mrf.mxu0
        %v1291 = vpop.f32.mrf.mxu0
        %v1292 = vadd.f32 0.0, %v1291
        %v1293 = vpop.f32.mrf.mxu0
        %1294 = vmatprep.mubr.bf16.mxu0 0
        %1295 = vmatmul.mubr.bf16.gmra.mxu0 %v1200
        %v1296 = vpop.f32.mrf.mxu0
        %v1297 = vadd.f32 0.0, %v1296
        %v1298 = vpop.f32.mrf.mxu0
        %v1299 = vpop.f32.mrf.mxu0
        %v1300 = vadd.f32 0.0, %v1299
        %v1301 = vpop.f32.mrf.mxu0
        %1302 = vmatprep.mubr.bf16.mxu0 0
        %1303 = vmatmul.mubr.bf16.gmra.mxu0 %v1203
        %v1304 = vpop.f32.mrf.mxu0
        %v1305 = vadd.f32 0.0, %v1304
        %v1306 = vpop.f32.mrf.mxu0
        %v1307 = vpop.f32.mrf.mxu0
        %v1308 = vadd.f32 0.0, %v1307
        %v1309 = vpop.f32.mrf.mxu0
        %1310 = vmatprep.mubr.bf16.mxu0 0
        %1311 = vmatmul.mubr.bf16.gmra.mxu0 %v1206
        %v1312 = vpop.f32.mrf.mxu0
        %v1313 = vadd.f32 0.0, %v1312
        %v1314 = vpop.f32.mrf.mxu0
        %v1315 = vpop.f32.mrf.mxu0
        %v1316 = vadd.f32 0.0, %v1315
        %v1317 = vpop.f32.mrf.mxu0
        %1318 = vmatprep.mubr.bf16.mxu0 0
        %1319 = vmatmul.mubr.bf16.gmra.mxu0 %v1209
        %v1320 = vpop.f32.mrf.mxu0
        %v1321 = vadd.f32 0.0, %v1320
        %v1322 = vpop.f32.mrf.mxu0
        %v1323 = vpop.f32.mrf.mxu0
        %v1324 = vadd.f32 0.0, %v1323
        %v1325 = vpop.f32.mrf.mxu0
        %1326 = vmatprep.mubr.bf16.mxu0 0
        %1327 = vmatmul.mubr.bf16.gmra.mxu0 %v1212
        %v1328 = vpop.f32.mrf.mxu0
        %v1329 = vadd.f32 0.0, %v1328
        %v1330 = vpop.f32.mrf.mxu0
        %v1331 = vpop.f32.mrf.mxu0
        %v1332 = vadd.f32 0.0, %v1331
        %v1333 = vpop.f32.mrf.mxu0
        %1334 = vmatprep.mubr.bf16.mxu0 0
        %1335 = vmatmul.mubr.bf16.gmra.mxu0 %v1215
        %v1336 = vpop.f32.mrf.mxu0
        %v1337 = vadd.f32 0.0, %v1336
        %v1338 = vpop.f32.mrf.mxu0
        %v1339 = vpop.f32.mrf.mxu0
        %v1340 = vadd.f32 0.0, %v1339
        %v1341 = vpop.f32.mrf.mxu0
        %1342 = vmatprep.mubr.bf16.mxu0 0
        %1343 = vmatmul.mubr.bf16.gmra.mxu0 %v1218
        %v1344 = vpop.f32.mrf.mxu0
        %v1345 = vadd.f32 0.0, %v1344
        %v1346 = vpop.f32.mrf.mxu0
        %v1347 = vpop.f32.mrf.mxu0
        %v1348 = vadd.f32 0.0, %v1347
        %v1349 = vpop.f32.mrf.mxu0
        %1350 = vmatprep.mubr.bf16.mxu0 0
        %1351 = vmatmul.mubr.bf16.gmra.mxu0 %v1221
        %v1352 = vpop.f32.mrf.mxu0
        %v1353 = vadd.f32 0.0, %v1352
        %v1354 = vpop.f32.mrf.mxu0
        %v1355 = vpop.f32.mrf.mxu0
        %v1356 = vadd.f32 0.0, %v1355
        %v1357 = vpop.f32.mrf.mxu0
        %1358 = vmatprep.mubr.bf16.mxu0 0
        %1359 = vmatmul.mubr.bf16.gmra.mxu0 %v1224
        %v1360 = vpop.f32.mrf.mxu0
        %v1361 = vadd.f32 0.0, %v1360
        %v1362 = vpop.f32.mrf.mxu0
        %v1363 = vpop.f32.mrf.mxu0
        %v1364 = vadd.f32 0.0, %v1363
        %v1365 = vpop.f32.mrf.mxu0
        %1366 = vmatprep.mubr.bf16.mxu0 0
        %1367 = vmatmul.mubr.bf16.gmra.mxu0 %v1227
        %v1368 = vpop.f32.mrf.mxu0
        %v1369 = vadd.f32 0.0, %v1368
        %v1370 = vpop.f32.mrf.mxu0
        %v1371 = vpop.f32.mrf.mxu0
        %v1372 = vadd.f32 0.0, %v1371
        %v1373 = vpop.f32.mrf.mxu0
        %1374 = vmatprep.mubr.bf16.mxu0 0
        %1375 = vmatmul.mubr.bf16.gmra.mxu0 %v1230
        %v1376 = vpop.f32.mrf.mxu0
        %v1377 = vadd.f32 0.0, %v1376
        %v1378 = vpop.f32.mrf.mxu0
        %v1379 = vpop.f32.mrf.mxu0
        %v1380 = vadd.f32 0.0, %v1379
        %v1381 = vpop.f32.mrf.mxu0
        %1382 = vmatprep.mubr.bf16.mxu0 0
        %1383 = vmatmul.mubr.bf16.gmra.mxu0 %v1233
        %v1384 = vpop.f32.mrf.mxu0
        %v1385 = vadd.f32 0.0, %v1384
        %v1386 = vpop.f32.mrf.mxu0
        %v1387 = vpop.f32.mrf.mxu0
        %v1388 = vadd.f32 0.0, %v1387
        %v1389 = vpop.f32.mrf.mxu0
        %1390 = vmatprep.mubr.bf16.mxu0 0
        %1391 = vmatmul.mubr.bf16.gmra.mxu0 %v1236
        %v1392 = vpop.f32.mrf.mxu0
        %v1393 = vadd.f32 0.0, %v1392
        %v1394 = vpop.f32.mrf.mxu0
        %v1395 = vpop.f32.mrf.mxu0
        %v1396 = vadd.f32 0.0, %v1395
        %v1397 = vpop.f32.mrf.mxu0
        %1398 = vdwg.mxu0
        %v1399 = vadd.f32 %v1047, %v1273
        %v1400 = vadd.f32 %v1050, %v1276
        %v1401 = vadd.f32 %v1055, %v1281
        %v1402 = vadd.f32 %v1058, %v1284
        %v1403 = vadd.f32 %v1063, %v1289
        %v1404 = vadd.f32 %v1066, %v1292
        %v1405 = vadd.f32 %v1071, %v1297
        %v1406 = vadd.f32 %v1074, %v1300
        %v1407 = vadd.f32 %v1079, %v1305
        %v1408 = vadd.f32 %v1082, %v1308
        %v1409 = vadd.f32 %v1087, %v1313
        %v1410 = vadd.f32 %v1090, %v1316
        %v1411 = vadd.f32 %v1095, %v1321
        %v1412 = vadd.f32 %v1098, %v1324
        %v1413 = vadd.f32 %v1103, %v1329
        %v1414 = vadd.f32 %v1106, %v1332
        %v1415 = vadd.f32 %v1111, %v1337
        %v1416 = vadd.f32 %v1114, %v1340
        %v1417 = vadd.f32 %v1119, %v1345
        %v1418 = vadd.f32 %v1122, %v1348
        %v1419 = vadd.f32 %v1127, %v1353
        %v1420 = vadd.f32 %v1130, %v1356
        %v1421 = vadd.f32 %v1135, %v1361
        %v1422 = vadd.f32 %v1138, %v1364
        %v1423 = vadd.f32 %v1143, %v1369
        %v1424 = vadd.f32 %v1146, %v1372
        %v1425 = vadd.f32 %v1151, %v1377
        %v1426 = vadd.f32 %v1154, %v1380
        %v1427 = vadd.f32 %v1159, %v1385
        %v1428 = vadd.f32 %v1162, %v1388
        %v1429 = vadd.f32 %v1167, %v1393
        %v1430 = vadd.f32 %v1170, %v1396
        %s1431 = scalar_lea.vmem %s3, 48
        %v1432 = vld [vmem:[%s1431] sm:$0xf]
        %v1433 = vld [vmem:[%s1431 + $0x4] sm:$0xf]
        %v1434 = vld [vmem:[%s1431 + $0x8] sm:$0xf]
        %v1435 = vld [vmem:[%s1431 + $0xc] sm:$0xf]
        %v1440 = vunpack.c.l.b16 %v1432
        %v1441 = vunpack.c.l.b16 %v1433
        %v1442 = vunpack.c.l.b16 %v1434
        %v1443 = vunpack.c.l.b16 %v1435
        %v1444 = vpack.c.b16 %v1441, %v1440
        %v1445 = vpack.c.b16 %v1443, %v1442
        %v1449 = vsel %vm742, %v712, 0
        %1451 = vmatprep.subr.bf16.mxu0 0
        %1452 = vmatpush1.bf16.msra.mxu0 0
        %1453 = vmatprep.subr.bf16.mxu0 0
        %1454 = vmatpush1.bf16.msra.mxu0 0
        %1455 = vmatprep.subr.bf16.mxu0 0
        %1456 = vmatpush1.bf16.msra.mxu0 0
        %1457 = vmatprep.subr.bf16.mxu0 0
        %1458 = vmatpush1.bf16.msra.mxu0 0
        %1459 = vmatprep.subr.bf16.mxu0 0
        %1460 = vmatpush1.bf16.msra.mxu0 0
        %1461 = vmatprep.subr.bf16.mxu0 0
        %1462 = vmatpush1.bf16.msra.mxu0 0
        %1463 = vmatprep.subr.bf16.mxu0 0
        %1464 = vmatpush1.bf16.msra.mxu0 %v1445
        %1465 = vmatprep.subr.bf16.mxu0 0
        %1466 = vmatpush1.bf16.msra.mxu0 %v1444
        %1467 = vmatprep.subr.bf16.mxu0 0
        %1468 = vmatpush2.bf16.msra.mxu0 0
        %1469 = vmatprep.subr.bf16.mxu0 0
        %1470 = vmatpush2.bf16.msra.mxu0 0
        %1471 = vmatprep.subr.bf16.mxu0 0
        %1472 = vmatpush2.bf16.msra.mxu0 0
        %1473 = vmatprep.subr.bf16.mxu0 0
        %1474 = vmatpush2.bf16.msra.mxu0 0
        %1475 = vmatprep.subr.bf16.mxu0 0
        %1476 = vmatpush2.bf16.msra.mxu0 0
        %1477 = vmatprep.subr.bf16.mxu0 0
        %1478 = vmatpush2.bf16.msra.mxu0 0
        %1479 = vmatprep.subr.bf16.mxu0 0
        %1480 = vmatpush2.bf16.msra.mxu0 0
        %1481 = vmatprep.subr.bf16.mxu0 0
        %1482 = vmatpush2.bf16.msra.mxu0 0
        %1483 = vmatprep.mubr.bf16.mxu0 0
        %1484 = vmatmul.mubr.bf16.gmra.mxu0 %v968
        %v1485 = vpop.f32.mrf.mxu0
        %v1486 = vadd.f32 0.0, %v1485
        %v1487 = vpop.f32.mrf.mxu0
        %v1488 = vpop.f32.mrf.mxu0
        %v1489 = vadd.f32 0.0, %v1488
        %v1490 = vpop.f32.mrf.mxu0
        %1491 = vmatprep.mubr.bf16.mxu0 0
        %1492 = vmatmul.mubr.bf16.gmra.mxu0 %v971
        %v1493 = vpop.f32.mrf.mxu0
        %v1494 = vadd.f32 0.0, %v1493
        %v1495 = vpop.f32.mrf.mxu0
        %v1496 = vpop.f32.mrf.mxu0
        %v1497 = vadd.f32 0.0, %v1496
        %v1498 = vpop.f32.mrf.mxu0
        %1499 = vmatprep.mubr.bf16.mxu0 0
        %1500 = vmatmul.mubr.bf16.gmra.mxu0 %v974
        %v1501 = vpop.f32.mrf.mxu0
        %v1502 = vadd.f32 0.0, %v1501
        %v1503 = vpop.f32.mrf.mxu0
        %v1504 = vpop.f32.mrf.mxu0
        %v1505 = vadd.f32 0.0, %v1504
        %v1506 = vpop.f32.mrf.mxu0
        %1507 = vmatprep.mubr.bf16.mxu0 0
        %1508 = vmatmul.mubr.bf16.gmra.mxu0 %v977
        %v1509 = vpop.f32.mrf.mxu0
        %v1510 = vadd.f32 0.0, %v1509
        %v1511 = vpop.f32.mrf.mxu0
        %v1512 = vpop.f32.mrf.mxu0
        %v1513 = vadd.f32 0.0, %v1512
        %v1514 = vpop.f32.mrf.mxu0
        %1515 = vmatprep.mubr.bf16.mxu0 0
        %1516 = vmatmul.mubr.bf16.gmra.mxu0 %v980
        %v1517 = vpop.f32.mrf.mxu0
        %v1518 = vadd.f32 0.0, %v1517
        %v1519 = vpop.f32.mrf.mxu0
        %v1520 = vpop.f32.mrf.mxu0
        %v1521 = vadd.f32 0.0, %v1520
        %v1522 = vpop.f32.mrf.mxu0
        %1523 = vmatprep.mubr.bf16.mxu0 0
        %1524 = vmatmul.mubr.bf16.gmra.mxu0 %v983
        %v1525 = vpop.f32.mrf.mxu0
        %v1526 = vadd.f32 0.0, %v1525
        %v1527 = vpop.f32.mrf.mxu0
        %v1528 = vpop.f32.mrf.mxu0
        %v1529 = vadd.f32 0.0, %v1528
        %v1530 = vpop.f32.mrf.mxu0
        %1531 = vmatprep.mubr.bf16.mxu0 0
        %1532 = vmatmul.mubr.bf16.gmra.mxu0 %v986
        %v1533 = vpop.f32.mrf.mxu0
        %v1534 = vadd.f32 0.0, %v1533
        %v1535 = vpop.f32.mrf.mxu0
        %v1536 = vpop.f32.mrf.mxu0
        %v1537 = vadd.f32 0.0, %v1536
        %v1538 = vpop.f32.mrf.mxu0
        %1539 = vmatprep.mubr.bf16.mxu0 0
        %1540 = vmatmul.mubr.bf16.gmra.mxu0 %v989
        %v1541 = vpop.f32.mrf.mxu0
        %v1542 = vadd.f32 0.0, %v1541
        %v1543 = vpop.f32.mrf.mxu0
        %v1544 = vpop.f32.mrf.mxu0
        %v1545 = vadd.f32 0.0, %v1544
        %v1546 = vpop.f32.mrf.mxu0
        %1547 = vmatprep.mubr.bf16.mxu0 0
        %1548 = vmatmul.mubr.bf16.gmra.mxu0 %v992
        %v1549 = vpop.f32.mrf.mxu0
        %v1550 = vadd.f32 0.0, %v1549
        %v1551 = vpop.f32.mrf.mxu0
        %v1552 = vpop.f32.mrf.mxu0
        %v1553 = vadd.f32 0.0, %v1552
        %v1554 = vpop.f32.mrf.mxu0
        %1555 = vmatprep.mubr.bf16.mxu0 0
        %1556 = vmatmul.mubr.bf16.gmra.mxu0 %v995
        %v1557 = vpop.f32.mrf.mxu0
        %v1558 = vadd.f32 0.0, %v1557
        %v1559 = vpop.f32.mrf.mxu0
        %v1560 = vpop.f32.mrf.mxu0
        %v1561 = vadd.f32 0.0, %v1560
        %v1562 = vpop.f32.mrf.mxu0
        %1563 = vmatprep.mubr.bf16.mxu0 0
        %1564 = vmatmul.mubr.bf16.gmra.mxu0 %v998
        %v1565 = vpop.f32.mrf.mxu0
        %v1566 = vadd.f32 0.0, %v1565
        %v1567 = vpop.f32.mrf.mxu0
        %v1568 = vpop.f32.mrf.mxu0
        %v1569 = vadd.f32 0.0, %v1568
        %v1570 = vpop.f32.mrf.mxu0
        %1571 = vmatprep.mubr.bf16.mxu0 0
        %1572 = vmatmul.mubr.bf16.gmra.mxu0 %v1001
        %v1573 = vpop.f32.mrf.mxu0
        %v1574 = vadd.f32 0.0, %v1573
        %v1575 = vpop.f32.mrf.mxu0
        %v1576 = vpop.f32.mrf.mxu0
        %v1577 = vadd.f32 0.0, %v1576
        %v1578 = vpop.f32.mrf.mxu0
        %1579 = vmatprep.mubr.bf16.mxu0 0
        %1580 = vmatmul.mubr.bf16.gmra.mxu0 %v1004
        %v1581 = vpop.f32.mrf.mxu0
        %v1582 = vadd.f32 0.0, %v1581
        %v1583 = vpop.f32.mrf.mxu0
        %v1584 = vpop.f32.mrf.mxu0
        %v1585 = vadd.f32 0.0, %v1584
        %v1586 = vpop.f32.mrf.mxu0
        %1587 = vmatprep.mubr.bf16.mxu0 0
        %1588 = vmatmul.mubr.bf16.gmra.mxu0 %v1007
        %v1589 = vpop.f32.mrf.mxu0
        %v1590 = vadd.f32 0.0, %v1589
        %v1591 = vpop.f32.mrf.mxu0
        %v1592 = vpop.f32.mrf.mxu0
        %v1593 = vadd.f32 0.0, %v1592
        %v1594 = vpop.f32.mrf.mxu0
        %1595 = vmatprep.mubr.bf16.mxu0 0
        %1596 = vmatmul.mubr.bf16.gmra.mxu0 %v1010
        %v1597 = vpop.f32.mrf.mxu0
        %v1598 = vadd.f32 0.0, %v1597
        %v1599 = vpop.f32.mrf.mxu0
        %v1600 = vpop.f32.mrf.mxu0
        %v1601 = vadd.f32 0.0, %v1600
        %v1602 = vpop.f32.mrf.mxu0
        %1603 = vmatprep.mubr.bf16.mxu0 0
        %1604 = vmatmul.mubr.bf16.gmra.mxu0 %v1449
        %v1605 = vpop.f32.mrf.mxu0
        %v1606 = vadd.f32 0.0, %v1605
        %v1607 = vpop.f32.mrf.mxu0
        %v1608 = vpop.f32.mrf.mxu0
        %v1609 = vadd.f32 0.0, %v1608
        %v1610 = vpop.f32.mrf.mxu0
        %1611 = vdwg.mxu0
        %v1612 = vadd.f32 %v1399, %v1486
        %v1613 = vadd.f32 %v1400, %v1489
        %v1614 = vadd.f32 %v1401, %v1494
        %v1615 = vadd.f32 %v1402, %v1497
        %v1616 = vadd.f32 %v1403, %v1502
        %v1617 = vadd.f32 %v1404, %v1505
        %v1618 = vadd.f32 %v1405, %v1510
        %v1619 = vadd.f32 %v1406, %v1513
        %v1620 = vadd.f32 %v1407, %v1518
        %v1621 = vadd.f32 %v1408, %v1521
        %v1622 = vadd.f32 %v1409, %v1526
        %v1623 = vadd.f32 %v1410, %v1529
        %v1624 = vadd.f32 %v1411, %v1534
        %v1625 = vadd.f32 %v1412, %v1537
        %v1626 = vadd.f32 %v1413, %v1542
        %v1627 = vadd.f32 %v1414, %v1545
        %v1628 = vadd.f32 %v1415, %v1550
        %v1629 = vadd.f32 %v1416, %v1553
        %v1630 = vadd.f32 %v1417, %v1558
        %v1631 = vadd.f32 %v1418, %v1561
        %v1632 = vadd.f32 %v1419, %v1566
        %v1633 = vadd.f32 %v1420, %v1569
        %v1634 = vadd.f32 %v1421, %v1574
        %v1635 = vadd.f32 %v1422, %v1577
        %v1636 = vadd.f32 %v1423, %v1582
        %v1637 = vadd.f32 %v1424, %v1585
        %v1638 = vadd.f32 %v1425, %v1590
        %v1639 = vadd.f32 %v1426, %v1593
        %v1640 = vadd.f32 %v1427, %v1598
        %v1641 = vadd.f32 %v1428, %v1601
        %v1642 = vadd.f32 %v1429, %v1606
        %v1643 = vadd.f32 %v1430, %v1609
        %s1644 = scalar_lea.vmem %s3, 64
        %v1645 = vld [vmem:[%s1644] sm:$0xf]
        %v1646 = vld [vmem:[%s1644 + $0x4] sm:$0xf]
        %v1647 = vld [vmem:[%s1644 + $0x8] sm:$0xf]
        %v1648 = vld [vmem:[%s1644 + $0xc] sm:$0xf]
        %v1653 = vunpack.c.l.b16 %v1645
        %v1654 = vunpack.c.l.b16 %v1646
        %v1655 = vunpack.c.l.b16 %v1647
        %v1656 = vunpack.c.l.b16 %v1648
        %v1657 = vpack.c.b16 %v1654, %v1653
        %v1658 = vpack.c.b16 %v1656, %v1655
        %v1662 = vsel %vm742, %v713, 0
        %1664 = vmatprep.subr.bf16.mxu0 0
        %1665 = vmatpush1.bf16.msra.mxu0 0
        %1666 = vmatprep.subr.bf16.mxu0 0
        %1667 = vmatpush1.bf16.msra.mxu0 0
        %1668 = vmatprep.subr.bf16.mxu0 0
        %1669 = vmatpush1.bf16.msra.mxu0 0
        %1670 = vmatprep.subr.bf16.mxu0 0
        %1671 = vmatpush1.bf16.msra.mxu0 0
        %1672 = vmatprep.subr.bf16.mxu0 0
        %1673 = vmatpush1.bf16.msra.mxu0 0
        %1674 = vmatprep.subr.bf16.mxu0 0
        %1675 = vmatpush1.bf16.msra.mxu0 0
        %1676 = vmatprep.subr.bf16.mxu0 0
        %1677 = vmatpush1.bf16.msra.mxu0 %v1658
        %1678 = vmatprep.subr.bf16.mxu0 0
        %1679 = vmatpush1.bf16.msra.mxu0 %v1657
        %1680 = vmatprep.subr.bf16.mxu0 0
        %1681 = vmatpush2.bf16.msra.mxu0 0
        %1682 = vmatprep.subr.bf16.mxu0 0
        %1683 = vmatpush2.bf16.msra.mxu0 0
        %1684 = vmatprep.subr.bf16.mxu0 0
        %1685 = vmatpush2.bf16.msra.mxu0 0
        %1686 = vmatprep.subr.bf16.mxu0 0
        %1687 = vmatpush2.bf16.msra.mxu0 0
        %1688 = vmatprep.subr.bf16.mxu0 0
        %1689 = vmatpush2.bf16.msra.mxu0 0
        %1690 = vmatprep.subr.bf16.mxu0 0
        %1691 = vmatpush2.bf16.msra.mxu0 0
        %1692 = vmatprep.subr.bf16.mxu0 0
        %1693 = vmatpush2.bf16.msra.mxu0 0
        %1694 = vmatprep.subr.bf16.mxu0 0
        %1695 = vmatpush2.bf16.msra.mxu0 0
        %1696 = vmatprep.mubr.bf16.mxu0 0
        %1697 = vmatmul.mubr.bf16.gmra.mxu0 %v747
        %v1698 = vpop.f32.mrf.mxu0
        %v1699 = vadd.f32 0.0, %v1698
        %v1700 = vpop.f32.mrf.mxu0
        %v1701 = vpop.f32.mrf.mxu0
        %v1702 = vadd.f32 0.0, %v1701
        %v1703 = vpop.f32.mrf.mxu0
        %1704 = vmatprep.mubr.bf16.mxu0 0
        %1705 = vmatmul.mubr.bf16.gmra.mxu0 %v750
        %v1706 = vpop.f32.mrf.mxu0
        %v1707 = vadd.f32 0.0, %v1706
        %v1708 = vpop.f32.mrf.mxu0
        %v1709 = vpop.f32.mrf.mxu0
        %v1710 = vadd.f32 0.0, %v1709
        %v1711 = vpop.f32.mrf.mxu0
        %1712 = vmatprep.mubr.bf16.mxu0 0
        %1713 = vmatmul.mubr.bf16.gmra.mxu0 %v753
        %v1714 = vpop.f32.mrf.mxu0
        %v1715 = vadd.f32 0.0, %v1714
        %v1716 = vpop.f32.mrf.mxu0
        %v1717 = vpop.f32.mrf.mxu0
        %v1718 = vadd.f32 0.0, %v1717
        %v1719 = vpop.f32.mrf.mxu0
        %1720 = vmatprep.mubr.bf16.mxu0 0
        %1721 = vmatmul.mubr.bf16.gmra.mxu0 %v756
        %v1722 = vpop.f32.mrf.mxu0
        %v1723 = vadd.f32 0.0, %v1722
        %v1724 = vpop.f32.mrf.mxu0
        %v1725 = vpop.f32.mrf.mxu0
        %v1726 = vadd.f32 0.0, %v1725
        %v1727 = vpop.f32.mrf.mxu0
        %1728 = vmatprep.mubr.bf16.mxu0 0
        %1729 = vmatmul.mubr.bf16.gmra.mxu0 %v759
        %v1730 = vpop.f32.mrf.mxu0
        %v1731 = vadd.f32 0.0, %v1730
        %v1732 = vpop.f32.mrf.mxu0
        %v1733 = vpop.f32.mrf.mxu0
        %v1734 = vadd.f32 0.0, %v1733
        %v1735 = vpop.f32.mrf.mxu0
        %1736 = vmatprep.mubr.bf16.mxu0 0
        %1737 = vmatmul.mubr.bf16.gmra.mxu0 %v762
        %v1738 = vpop.f32.mrf.mxu0
        %v1739 = vadd.f32 0.0, %v1738
        %v1740 = vpop.f32.mrf.mxu0
        %v1741 = vpop.f32.mrf.mxu0
        %v1742 = vadd.f32 0.0, %v1741
        %v1743 = vpop.f32.mrf.mxu0
        %1744 = vmatprep.mubr.bf16.mxu0 0
        %1745 = vmatmul.mubr.bf16.gmra.mxu0 %v765
        %v1746 = vpop.f32.mrf.mxu0
        %v1747 = vadd.f32 0.0, %v1746
        %v1748 = vpop.f32.mrf.mxu0
        %v1749 = vpop.f32.mrf.mxu0
        %v1750 = vadd.f32 0.0, %v1749
        %v1751 = vpop.f32.mrf.mxu0
        %1752 = vmatprep.mubr.bf16.mxu0 0
        %1753 = vmatmul.mubr.bf16.gmra.mxu0 %v768
        %v1754 = vpop.f32.mrf.mxu0
        %v1755 = vadd.f32 0.0, %v1754
        %v1756 = vpop.f32.mrf.mxu0
        %v1757 = vpop.f32.mrf.mxu0
        %v1758 = vadd.f32 0.0, %v1757
        %v1759 = vpop.f32.mrf.mxu0
        %1760 = vmatprep.mubr.bf16.mxu0 0
        %1761 = vmatmul.mubr.bf16.gmra.mxu0 %v771
        %v1762 = vpop.f32.mrf.mxu0
        %v1763 = vadd.f32 0.0, %v1762
        %v1764 = vpop.f32.mrf.mxu0
        %v1765 = vpop.f32.mrf.mxu0
        %v1766 = vadd.f32 0.0, %v1765
        %v1767 = vpop.f32.mrf.mxu0
        %1768 = vmatprep.mubr.bf16.mxu0 0
        %1769 = vmatmul.mubr.bf16.gmra.mxu0 %v774
        %v1770 = vpop.f32.mrf.mxu0
        %v1771 = vadd.f32 0.0, %v1770
        %v1772 = vpop.f32.mrf.mxu0
        %v1773 = vpop.f32.mrf.mxu0
        %v1774 = vadd.f32 0.0, %v1773
        %v1775 = vpop.f32.mrf.mxu0
        %1776 = vmatprep.mubr.bf16.mxu0 0
        %1777 = vmatmul.mubr.bf16.gmra.mxu0 %v777
        %v1778 = vpop.f32.mrf.mxu0
        %v1779 = vadd.f32 0.0, %v1778
        %v1780 = vpop.f32.mrf.mxu0
        %v1781 = vpop.f32.mrf.mxu0
        %v1782 = vadd.f32 0.0, %v1781
        %v1783 = vpop.f32.mrf.mxu0
        %1784 = vmatprep.mubr.bf16.mxu0 0
        %1785 = vmatmul.mubr.bf16.gmra.mxu0 %v780
        %v1786 = vpop.f32.mrf.mxu0
        %v1787 = vadd.f32 0.0, %v1786
        %v1788 = vpop.f32.mrf.mxu0
        %v1789 = vpop.f32.mrf.mxu0
        %v1790 = vadd.f32 0.0, %v1789
        %v1791 = vpop.f32.mrf.mxu0
        %1792 = vmatprep.mubr.bf16.mxu0 0
        %1793 = vmatmul.mubr.bf16.gmra.mxu0 %v783
        %v1794 = vpop.f32.mrf.mxu0
        %v1795 = vadd.f32 0.0, %v1794
        %v1796 = vpop.f32.mrf.mxu0
        %v1797 = vpop.f32.mrf.mxu0
        %v1798 = vadd.f32 0.0, %v1797
        %v1799 = vpop.f32.mrf.mxu0
        %1800 = vmatprep.mubr.bf16.mxu0 0
        %1801 = vmatmul.mubr.bf16.gmra.mxu0 %v786
        %v1802 = vpop.f32.mrf.mxu0
        %v1803 = vadd.f32 0.0, %v1802
        %v1804 = vpop.f32.mrf.mxu0
        %v1805 = vpop.f32.mrf.mxu0
        %v1806 = vadd.f32 0.0, %v1805
        %v1807 = vpop.f32.mrf.mxu0
        %1808 = vmatprep.mubr.bf16.mxu0 0
        %1809 = vmatmul.mubr.bf16.gmra.mxu0 %v789
        %v1810 = vpop.f32.mrf.mxu0
        %v1811 = vadd.f32 0.0, %v1810
        %v1812 = vpop.f32.mrf.mxu0
        %v1813 = vpop.f32.mrf.mxu0
        %v1814 = vadd.f32 0.0, %v1813
        %v1815 = vpop.f32.mrf.mxu0
        %1816 = vmatprep.mubr.bf16.mxu0 0
        %1817 = vmatmul.mubr.bf16.gmra.mxu0 %v1662
        %v1818 = vpop.f32.mrf.mxu0
        %v1819 = vadd.f32 0.0, %v1818
        %v1820 = vpop.f32.mrf.mxu0
        %v1821 = vpop.f32.mrf.mxu0
        %v1822 = vadd.f32 0.0, %v1821
        %v1823 = vpop.f32.mrf.mxu0
        %1824 = vdwg.mxu0
        %v1825 = vadd.f32 %v1612, %v1699
        %v1826 = vadd.f32 %v1613, %v1702
        %v1827 = vadd.f32 %v1614, %v1707
        %v1828 = vadd.f32 %v1615, %v1710
        %v1829 = vadd.f32 %v1616, %v1715
        %v1830 = vadd.f32 %v1617, %v1718
        %v1831 = vadd.f32 %v1618, %v1723
        %v1832 = vadd.f32 %v1619, %v1726
        %v1833 = vadd.f32 %v1620, %v1731
        %v1834 = vadd.f32 %v1621, %v1734
        %v1835 = vadd.f32 %v1622, %v1739
        %v1836 = vadd.f32 %v1623, %v1742
        %v1837 = vadd.f32 %v1624, %v1747
        %v1838 = vadd.f32 %v1625, %v1750
        %v1839 = vadd.f32 %v1626, %v1755
        %v1840 = vadd.f32 %v1627, %v1758
        %v1841 = vadd.f32 %v1628, %v1763
        %v1842 = vadd.f32 %v1629, %v1766
        %v1843 = vadd.f32 %v1630, %v1771
        %v1844 = vadd.f32 %v1631, %v1774
        %v1845 = vadd.f32 %v1632, %v1779
        %v1846 = vadd.f32 %v1633, %v1782
        %v1847 = vadd.f32 %v1634, %v1787
        %v1848 = vadd.f32 %v1635, %v1790
        %v1849 = vadd.f32 %v1636, %v1795
        %v1850 = vadd.f32 %v1637, %v1798
        %v1851 = vadd.f32 %v1638, %v1803
        %v1852 = vadd.f32 %v1639, %v1806
        %v1853 = vadd.f32 %v1640, %v1811
        %v1854 = vadd.f32 %v1641, %v1814
        %v1855 = vadd.f32 %v1642, %v1819
        %v1856 = vadd.f32 %v1643, %v1822
        %s1857 = scalar_lea.vmem %s3, 80
        %v1858 = vld [vmem:[%s1857] sm:$0xf]
        %v1859 = vld [vmem:[%s1857 + $0x4] sm:$0xf]
        %v1860 = vld [vmem:[%s1857 + $0x8] sm:$0xf]
        %v1861 = vld [vmem:[%s1857 + $0xc] sm:$0xf]
        %v1866 = vunpack.c.l.b16 %v1858
        %v1867 = vunpack.c.l.b16 %v1859
        %v1868 = vunpack.c.l.b16 %v1860
        %v1869 = vunpack.c.l.b16 %v1861
        %v1870 = vpack.c.b16 %v1867, %v1866
        %v1871 = vpack.c.b16 %v1869, %v1868
        %v1875 = vsel %vm742, %v720, 0
        %1877 = vmatprep.subr.bf16.mxu0 0
        %1878 = vmatpush1.bf16.msra.mxu0 0
        %1879 = vmatprep.subr.bf16.mxu0 0
        %1880 = vmatpush1.bf16.msra.mxu0 0
        %1881 = vmatprep.subr.bf16.mxu0 0
        %1882 = vmatpush1.bf16.msra.mxu0 0
        %1883 = vmatprep.subr.bf16.mxu0 0
        %1884 = vmatpush1.bf16.msra.mxu0 0
        %1885 = vmatprep.subr.bf16.mxu0 0
        %1886 = vmatpush1.bf16.msra.mxu0 0
        %1887 = vmatprep.subr.bf16.mxu0 0
        %1888 = vmatpush1.bf16.msra.mxu0 0
        %1889 = vmatprep.subr.bf16.mxu0 0
        %1890 = vmatpush1.bf16.msra.mxu0 %v1871
        %1891 = vmatprep.subr.bf16.mxu0 0
        %1892 = vmatpush1.bf16.msra.mxu0 %v1870
        %1893 = vmatprep.subr.bf16.mxu0 0
        %1894 = vmatpush2.bf16.msra.mxu0 0
        %1895 = vmatprep.subr.bf16.mxu0 0
        %1896 = vmatpush2.bf16.msra.mxu0 0
        %1897 = vmatprep.subr.bf16.mxu0 0
        %1898 = vmatpush2.bf16.msra.mxu0 0
        %1899 = vmatprep.subr.bf16.mxu0 0
        %1900 = vmatpush2.bf16.msra.mxu0 0
        %1901 = vmatprep.subr.bf16.mxu0 0
        %1902 = vmatpush2.bf16.msra.mxu0 0
        %1903 = vmatprep.subr.bf16.mxu0 0
        %1904 = vmatpush2.bf16.msra.mxu0 0
        %1905 = vmatprep.subr.bf16.mxu0 0
        %1906 = vmatpush2.bf16.msra.mxu0 0
        %1907 = vmatprep.subr.bf16.mxu0 0
        %1908 = vmatpush2.bf16.msra.mxu0 0
        %1909 = vmatprep.mubr.bf16.mxu0 0
        %1910 = vmatmul.mubr.bf16.gmra.mxu0 %v1194
        %v1911 = vpop.f32.mrf.mxu0
        %v1912 = vadd.f32 0.0, %v1911
        %v1913 = vpop.f32.mrf.mxu0
        %v1914 = vpop.f32.mrf.mxu0
        %v1915 = vadd.f32 0.0, %v1914
        %v1916 = vpop.f32.mrf.mxu0
        %1917 = vmatprep.mubr.bf16.mxu0 0
        %1918 = vmatmul.mubr.bf16.gmra.mxu0 %v1197
        %v1919 = vpop.f32.mrf.mxu0
        %v1920 = vadd.f32 0.0, %v1919
        %v1921 = vpop.f32.mrf.mxu0
        %v1922 = vpop.f32.mrf.mxu0
        %v1923 = vadd.f32 0.0, %v1922
        %v1924 = vpop.f32.mrf.mxu0
        %1925 = vmatprep.mubr.bf16.mxu0 0
        %1926 = vmatmul.mubr.bf16.gmra.mxu0 %v1200
        %v1927 = vpop.f32.mrf.mxu0
        %v1928 = vadd.f32 0.0, %v1927
        %v1929 = vpop.f32.mrf.mxu0
        %v1930 = vpop.f32.mrf.mxu0
        %v1931 = vadd.f32 0.0, %v1930
        %v1932 = vpop.f32.mrf.mxu0
        %1933 = vmatprep.mubr.bf16.mxu0 0
        %1934 = vmatmul.mubr.bf16.gmra.mxu0 %v1203
        %v1935 = vpop.f32.mrf.mxu0
        %v1936 = vadd.f32 0.0, %v1935
        %v1937 = vpop.f32.mrf.mxu0
        %v1938 = vpop.f32.mrf.mxu0
        %v1939 = vadd.f32 0.0, %v1938
        %v1940 = vpop.f32.mrf.mxu0
        %1941 = vmatprep.mubr.bf16.mxu0 0
        %1942 = vmatmul.mubr.bf16.gmra.mxu0 %v1206
        %v1943 = vpop.f32.mrf.mxu0
        %v1944 = vadd.f32 0.0, %v1943
        %v1945 = vpop.f32.mrf.mxu0
        %v1946 = vpop.f32.mrf.mxu0
        %v1947 = vadd.f32 0.0, %v1946
        %v1948 = vpop.f32.mrf.mxu0
        %1949 = vmatprep.mubr.bf16.mxu0 0
        %1950 = vmatmul.mubr.bf16.gmra.mxu0 %v1209
        %v1951 = vpop.f32.mrf.mxu0
        %v1952 = vadd.f32 0.0, %v1951
        %v1953 = vpop.f32.mrf.mxu0
        %v1954 = vpop.f32.mrf.mxu0
        %v1955 = vadd.f32 0.0, %v1954
        %v1956 = vpop.f32.mrf.mxu0
        %1957 = vmatprep.mubr.bf16.mxu0 0
        %1958 = vmatmul.mubr.bf16.gmra.mxu0 %v1212
        %v1959 = vpop.f32.mrf.mxu0
        %v1960 = vadd.f32 0.0, %v1959
        %v1961 = vpop.f32.mrf.mxu0
        %v1962 = vpop.f32.mrf.mxu0
        %v1963 = vadd.f32 0.0, %v1962
        %v1964 = vpop.f32.mrf.mxu0
        %1965 = vmatprep.mubr.bf16.mxu0 0
        %1966 = vmatmul.mubr.bf16.gmra.mxu0 %v1215
        %v1967 = vpop.f32.mrf.mxu0
        %v1968 = vadd.f32 0.0, %v1967
        %v1969 = vpop.f32.mrf.mxu0
        %v1970 = vpop.f32.mrf.mxu0
        %v1971 = vadd.f32 0.0, %v1970
        %v1972 = vpop.f32.mrf.mxu0
        %1973 = vmatprep.mubr.bf16.mxu0 0
        %1974 = vmatmul.mubr.bf16.gmra.mxu0 %v1218
        %v1975 = vpop.f32.mrf.mxu0
        %v1976 = vadd.f32 0.0, %v1975
        %v1977 = vpop.f32.mrf.mxu0
        %v1978 = vpop.f32.mrf.mxu0
        %v1979 = vadd.f32 0.0, %v1978
        %v1980 = vpop.f32.mrf.mxu0
        %1981 = vmatprep.mubr.bf16.mxu0 0
        %1982 = vmatmul.mubr.bf16.gmra.mxu0 %v1221
        %v1983 = vpop.f32.mrf.mxu0
        %v1984 = vadd.f32 0.0, %v1983
        %v1985 = vpop.f32.mrf.mxu0
        %v1986 = vpop.f32.mrf.mxu0
        %v1987 = vadd.f32 0.0, %v1986
        %v1988 = vpop.f32.mrf.mxu0
        %1989 = vmatprep.mubr.bf16.mxu0 0
        %1990 = vmatmul.mubr.bf16.gmra.mxu0 %v1224
        %v1991 = vpop.f32.mrf.mxu0
        %v1992 = vadd.f32 0.0, %v1991
        %v1993 = vpop.f32.mrf.mxu0
        %v1994 = vpop.f32.mrf.mxu0
        %v1995 = vadd.f32 0.0, %v1994
        %v1996 = vpop.f32.mrf.mxu0
        %1997 = vmatprep.mubr.bf16.mxu0 0
        %1998 = vmatmul.mubr.bf16.gmra.mxu0 %v1227
        %v1999 = vpop.f32.mrf.mxu0
        %v2000 = vadd.f32 0.0, %v1999
        %v2001 = vpop.f32.mrf.mxu0
        %v2002 = vpop.f32.mrf.mxu0
        %v2003 = vadd.f32 0.0, %v2002
        %v2004 = vpop.f32.mrf.mxu0
        %2005 = vmatprep.mubr.bf16.mxu0 0
        %2006 = vmatmul.mubr.bf16.gmra.mxu0 %v1230
        %v2007 = vpop.f32.mrf.mxu0
        %v2008 = vadd.f32 0.0, %v2007
        %v2009 = vpop.f32.mrf.mxu0
        %v2010 = vpop.f32.mrf.mxu0
        %v2011 = vadd.f32 0.0, %v2010
        %v2012 = vpop.f32.mrf.mxu0
        %2013 = vmatprep.mubr.bf16.mxu0 0
        %2014 = vmatmul.mubr.bf16.gmra.mxu0 %v1233
        %v2015 = vpop.f32.mrf.mxu0
        %v2016 = vadd.f32 0.0, %v2015
        %v2017 = vpop.f32.mrf.mxu0
        %v2018 = vpop.f32.mrf.mxu0
        %v2019 = vadd.f32 0.0, %v2018
        %v2020 = vpop.f32.mrf.mxu0
        %2021 = vmatprep.mubr.bf16.mxu0 0
        %2022 = vmatmul.mubr.bf16.gmra.mxu0 %v1236
        %v2023 = vpop.f32.mrf.mxu0
        %v2024 = vadd.f32 0.0, %v2023
        %v2025 = vpop.f32.mrf.mxu0
        %v2026 = vpop.f32.mrf.mxu0
        %v2027 = vadd.f32 0.0, %v2026
        %v2028 = vpop.f32.mrf.mxu0
        %2029 = vmatprep.mubr.bf16.mxu0 0
        %2030 = vmatmul.mubr.bf16.gmra.mxu0 %v1875
        %v2031 = vpop.f32.mrf.mxu0
        %v2032 = vadd.f32 0.0, %v2031
        %v2033 = vpop.f32.mrf.mxu0
        %v2034 = vpop.f32.mrf.mxu0
        %v2035 = vadd.f32 0.0, %v2034
        %v2036 = vpop.f32.mrf.mxu0
        %2037 = vdwg.mxu0
        %v2038 = vadd.f32 %v1825, %v1912
        %v2039 = vadd.f32 %v1826, %v1915
        %v2040 = vadd.f32 %v1827, %v1920
        %v2041 = vadd.f32 %v1828, %v1923
        %v2042 = vadd.f32 %v1829, %v1928
        %v2043 = vadd.f32 %v1830, %v1931
        %v2044 = vadd.f32 %v1831, %v1936
        %v2045 = vadd.f32 %v1832, %v1939
        %v2046 = vadd.f32 %v1833, %v1944
        %v2047 = vadd.f32 %v1834, %v1947
        %v2048 = vadd.f32 %v1835, %v1952
        %v2049 = vadd.f32 %v1836, %v1955
        %v2050 = vadd.f32 %v1837, %v1960
        %v2051 = vadd.f32 %v1838, %v1963
        %v2052 = vadd.f32 %v1839, %v1968
        %v2053 = vadd.f32 %v1840, %v1971
        %v2054 = vadd.f32 %v1841, %v1976
        %v2055 = vadd.f32 %v1842, %v1979
        %v2056 = vadd.f32 %v1843, %v1984
        %v2057 = vadd.f32 %v1844, %v1987
        %v2058 = vadd.f32 %v1845, %v1992
        %v2059 = vadd.f32 %v1846, %v1995
        %v2060 = vadd.f32 %v1847, %v2000
        %v2061 = vadd.f32 %v1848, %v2003
        %v2062 = vadd.f32 %v1849, %v2008
        %v2063 = vadd.f32 %v1850, %v2011
        %v2064 = vadd.f32 %v1851, %v2016
        %v2065 = vadd.f32 %v1852, %v2019
        %v2066 = vadd.f32 %v1853, %v2024
        %v2067 = vadd.f32 %v1854, %v2027
        %v2068 = vadd.f32 %v1855, %v2032
        %v2069 = vadd.f32 %v1856, %v2035
        %s2070 = scalar_lea.vmem %s3, 96
        %v2071 = vld [vmem:[%s2070] sm:$0xf]
        %v2072 = vld [vmem:[%s2070 + $0x4] sm:$0xf]
        %v2073 = vld [vmem:[%s2070 + $0x8] sm:$0xf]
        %v2074 = vld [vmem:[%s2070 + $0xc] sm:$0xf]
        %v2079 = vunpack.c.l.b16 %v2071
        %v2080 = vunpack.c.l.b16 %v2072
        %v2081 = vunpack.c.l.b16 %v2073
        %v2082 = vunpack.c.l.b16 %v2074
        %v2083 = vpack.c.b16 %v2080, %v2079
        %v2084 = vpack.c.b16 %v2082, %v2081
        %2087 = vmatprep.subr.bf16.mxu0 0
        %2088 = vmatpush1.bf16.msra.mxu0 0
        %2089 = vmatprep.subr.bf16.mxu0 0
        %2090 = vmatpush1.bf16.msra.mxu0 0
        %2091 = vmatprep.subr.bf16.mxu0 0
        %2092 = vmatpush1.bf16.msra.mxu0 0
        %2093 = vmatprep.subr.bf16.mxu0 0
        %2094 = vmatpush1.bf16.msra.mxu0 0
        %2095 = vmatprep.subr.bf16.mxu0 0
        %2096 = vmatpush1.bf16.msra.mxu0 0
        %2097 = vmatprep.subr.bf16.mxu0 0
        %2098 = vmatpush1.bf16.msra.mxu0 0
        %2099 = vmatprep.subr.bf16.mxu0 0
        %2100 = vmatpush1.bf16.msra.mxu0 %v2084
        %2101 = vmatprep.subr.bf16.mxu0 0
        %2102 = vmatpush1.bf16.msra.mxu0 %v2083
        %2103 = vmatprep.subr.bf16.mxu0 0
        %2104 = vmatpush2.bf16.msra.mxu0 0
        %2105 = vmatprep.subr.bf16.mxu0 0
        %2106 = vmatpush2.bf16.msra.mxu0 0
        %2107 = vmatprep.subr.bf16.mxu0 0
        %2108 = vmatpush2.bf16.msra.mxu0 0
        %2109 = vmatprep.subr.bf16.mxu0 0
        %2110 = vmatpush2.bf16.msra.mxu0 0
        %2111 = vmatprep.subr.bf16.mxu0 0
        %2112 = vmatpush2.bf16.msra.mxu0 0
        %2113 = vmatprep.subr.bf16.mxu0 0
        %2114 = vmatpush2.bf16.msra.mxu0 0
        %2115 = vmatprep.subr.bf16.mxu0 0
        %2116 = vmatpush2.bf16.msra.mxu0 0
        %2117 = vmatprep.subr.bf16.mxu0 0
        %2118 = vmatpush2.bf16.msra.mxu0 0
        %2119 = vmatprep.mubr.bf16.mxu0 0
        %2120 = vmatmul.mubr.bf16.gmra.mxu0 %v971
        %v2121 = vpop.f32.mrf.mxu0
        %v2122 = vadd.f32 0.0, %v2121
        %v2123 = vpop.f32.mrf.mxu0
        %v2124 = vpop.f32.mrf.mxu0
        %v2125 = vadd.f32 0.0, %v2124
        %v2126 = vpop.f32.mrf.mxu0
        %2127 = vmatprep.mubr.bf16.mxu0 0
        %2128 = vmatmul.mubr.bf16.gmra.mxu0 %v974
        %v2129 = vpop.f32.mrf.mxu0
        %v2130 = vadd.f32 0.0, %v2129
        %v2131 = vpop.f32.mrf.mxu0
        %v2132 = vpop.f32.mrf.mxu0
        %v2133 = vadd.f32 0.0, %v2132
        %v2134 = vpop.f32.mrf.mxu0
        %2135 = vmatprep.mubr.bf16.mxu0 0
        %2136 = vmatmul.mubr.bf16.gmra.mxu0 %v977
        %v2137 = vpop.f32.mrf.mxu0
        %v2138 = vadd.f32 0.0, %v2137
        %v2139 = vpop.f32.mrf.mxu0
        %v2140 = vpop.f32.mrf.mxu0
        %v2141 = vadd.f32 0.0, %v2140
        %v2142 = vpop.f32.mrf.mxu0
        %2143 = vmatprep.mubr.bf16.mxu0 0
        %2144 = vmatmul.mubr.bf16.gmra.mxu0 %v980
        %v2145 = vpop.f32.mrf.mxu0
        %v2146 = vadd.f32 0.0, %v2145
        %v2147 = vpop.f32.mrf.mxu0
        %v2148 = vpop.f32.mrf.mxu0
        %v2149 = vadd.f32 0.0, %v2148
        %v2150 = vpop.f32.mrf.mxu0
        %2151 = vmatprep.mubr.bf16.mxu0 0
        %2152 = vmatmul.mubr.bf16.gmra.mxu0 %v983
        %v2153 = vpop.f32.mrf.mxu0
        %v2154 = vadd.f32 0.0, %v2153
        %v2155 = vpop.f32.mrf.mxu0
        %v2156 = vpop.f32.mrf.mxu0
        %v2157 = vadd.f32 0.0, %v2156
        %v2158 = vpop.f32.mrf.mxu0
        %2159 = vmatprep.mubr.bf16.mxu0 0
        %2160 = vmatmul.mubr.bf16.gmra.mxu0 %v986
        %v2161 = vpop.f32.mrf.mxu0
        %v2162 = vadd.f32 0.0, %v2161
        %v2163 = vpop.f32.mrf.mxu0
        %v2164 = vpop.f32.mrf.mxu0
        %v2165 = vadd.f32 0.0, %v2164
        %v2166 = vpop.f32.mrf.mxu0
        %2167 = vmatprep.mubr.bf16.mxu0 0
        %2168 = vmatmul.mubr.bf16.gmra.mxu0 %v989
        %v2169 = vpop.f32.mrf.mxu0
        %v2170 = vadd.f32 0.0, %v2169
        %v2171 = vpop.f32.mrf.mxu0
        %v2172 = vpop.f32.mrf.mxu0
        %v2173 = vadd.f32 0.0, %v2172
        %v2174 = vpop.f32.mrf.mxu0
        %2175 = vmatprep.mubr.bf16.mxu0 0
        %2176 = vmatmul.mubr.bf16.gmra.mxu0 %v992
        %v2177 = vpop.f32.mrf.mxu0
        %v2178 = vadd.f32 0.0, %v2177
        %v2179 = vpop.f32.mrf.mxu0
        %v2180 = vpop.f32.mrf.mxu0
        %v2181 = vadd.f32 0.0, %v2180
        %v2182 = vpop.f32.mrf.mxu0
        %2183 = vmatprep.mubr.bf16.mxu0 0
        %2184 = vmatmul.mubr.bf16.gmra.mxu0 %v995
        %v2185 = vpop.f32.mrf.mxu0
        %v2186 = vadd.f32 0.0, %v2185
        %v2187 = vpop.f32.mrf.mxu0
        %v2188 = vpop.f32.mrf.mxu0
        %v2189 = vadd.f32 0.0, %v2188
        %v2190 = vpop.f32.mrf.mxu0
        %2191 = vmatprep.mubr.bf16.mxu0 0
        %2192 = vmatmul.mubr.bf16.gmra.mxu0 %v998
        %v2193 = vpop.f32.mrf.mxu0
        %v2194 = vadd.f32 0.0, %v2193
        %v2195 = vpop.f32.mrf.mxu0
        %v2196 = vpop.f32.mrf.mxu0
        %v2197 = vadd.f32 0.0, %v2196
        %v2198 = vpop.f32.mrf.mxu0
        %2199 = vmatprep.mubr.bf16.mxu0 0
        %2200 = vmatmul.mubr.bf16.gmra.mxu0 %v1001
        %v2201 = vpop.f32.mrf.mxu0
        %v2202 = vadd.f32 0.0, %v2201
        %v2203 = vpop.f32.mrf.mxu0
        %v2204 = vpop.f32.mrf.mxu0
        %v2205 = vadd.f32 0.0, %v2204
        %v2206 = vpop.f32.mrf.mxu0
        %2207 = vmatprep.mubr.bf16.mxu0 0
        %2208 = vmatmul.mubr.bf16.gmra.mxu0 %v1004
        %v2209 = vpop.f32.mrf.mxu0
        %v2210 = vadd.f32 0.0, %v2209
        %v2211 = vpop.f32.mrf.mxu0
        %v2212 = vpop.f32.mrf.mxu0
        %v2213 = vadd.f32 0.0, %v2212
        %v2214 = vpop.f32.mrf.mxu0
        %2215 = vmatprep.mubr.bf16.mxu0 0
        %2216 = vmatmul.mubr.bf16.gmra.mxu0 %v1007
        %v2217 = vpop.f32.mrf.mxu0
        %v2218 = vadd.f32 0.0, %v2217
        %v2219 = vpop.f32.mrf.mxu0
        %v2220 = vpop.f32.mrf.mxu0
        %v2221 = vadd.f32 0.0, %v2220
        %v2222 = vpop.f32.mrf.mxu0
        %2223 = vmatprep.mubr.bf16.mxu0 0
        %2224 = vmatmul.mubr.bf16.gmra.mxu0 %v1010
        %v2225 = vpop.f32.mrf.mxu0
        %v2226 = vadd.f32 0.0, %v2225
        %v2227 = vpop.f32.mrf.mxu0
        %v2228 = vpop.f32.mrf.mxu0
        %v2229 = vadd.f32 0.0, %v2228
        %v2230 = vpop.f32.mrf.mxu0
        %2231 = vmatprep.mubr.bf16.mxu0 0
        %2232 = vmatmul.mubr.bf16.gmra.mxu0 %v1449
        %v2233 = vpop.f32.mrf.mxu0
        %v2234 = vadd.f32 0.0, %v2233
        %v2235 = vpop.f32.mrf.mxu0
        %v2236 = vpop.f32.mrf.mxu0
        %v2237 = vadd.f32 0.0, %v2236
        %v2238 = vpop.f32.mrf.mxu0
        %2239 = vmatprep.mubr.bf16.mxu0 0
        %2240 = vmatmul.mubr.bf16.gmra.mxu0 %v965
        %v2241 = vpop.f32.mrf.mxu0
        %v2242 = vadd.f32 0.0, %v2241
        %v2243 = vpop.f32.mrf.mxu0
        %v2244 = vpop.f32.mrf.mxu0
        %v2245 = vadd.f32 0.0, %v2244
        %v2246 = vpop.f32.mrf.mxu0
        %2247 = vdwg.mxu0
        %v2248 = vadd.f32 %v2038, %v2122
        %v2249 = vadd.f32 %v2039, %v2125
        %v2250 = vadd.f32 %v2040, %v2130
        %v2251 = vadd.f32 %v2041, %v2133
        %v2252 = vadd.f32 %v2042, %v2138
        %v2253 = vadd.f32 %v2043, %v2141
        %v2254 = vadd.f32 %v2044, %v2146
        %v2255 = vadd.f32 %v2045, %v2149
        %v2256 = vadd.f32 %v2046, %v2154
        %v2257 = vadd.f32 %v2047, %v2157
        %v2258 = vadd.f32 %v2048, %v2162
        %v2259 = vadd.f32 %v2049, %v2165
        %v2260 = vadd.f32 %v2050, %v2170
        %v2261 = vadd.f32 %v2051, %v2173
        %v2262 = vadd.f32 %v2052, %v2178
        %v2263 = vadd.f32 %v2053, %v2181
        %v2264 = vadd.f32 %v2054, %v2186
        %v2265 = vadd.f32 %v2055, %v2189
        %v2266 = vadd.f32 %v2056, %v2194
        %v2267 = vadd.f32 %v2057, %v2197
        %v2268 = vadd.f32 %v2058, %v2202
        %v2269 = vadd.f32 %v2059, %v2205
        %v2270 = vadd.f32 %v2060, %v2210
        %v2271 = vadd.f32 %v2061, %v2213
        %v2272 = vadd.f32 %v2062, %v2218
        %v2273 = vadd.f32 %v2063, %v2221
        %v2274 = vadd.f32 %v2064, %v2226
        %v2275 = vadd.f32 %v2065, %v2229
        %v2276 = vadd.f32 %v2066, %v2234
        %v2277 = vadd.f32 %v2067, %v2237
        %v2278 = vadd.f32 %v2068, %v2242
        %v2279 = vadd.f32 %v2069, %v2245
        %s2280 = scalar_lea.vmem %s3, 112
        %v2281 = vld [vmem:[%s2280] sm:$0xf]
        %v2282 = vld [vmem:[%s2280 + $0x4] sm:$0xf]
        %v2283 = vld [vmem:[%s2280 + $0x8] sm:$0xf]
        %v2284 = vld [vmem:[%s2280 + $0xc] sm:$0xf]
        %v2289 = vunpack.c.l.b16 %v2281
        %v2290 = vunpack.c.l.b16 %v2282
        %v2291 = vunpack.c.l.b16 %v2283
        %v2292 = vunpack.c.l.b16 %v2284
        %v2293 = vpack.c.b16 %v2290, %v2289
        %v2294 = vpack.c.b16 %v2292, %v2291
        %2297 = vmatprep.subr.bf16.mxu0 0
        %2298 = vmatpush1.bf16.msra.mxu0 0
        %2299 = vmatprep.subr.bf16.mxu0 0
        %2300 = vmatpush1.bf16.msra.mxu0 0
        %2301 = vmatprep.subr.bf16.mxu0 0
        %2302 = vmatpush1.bf16.msra.mxu0 0
        %2303 = vmatprep.subr.bf16.mxu0 0
        %2304 = vmatpush1.bf16.msra.mxu0 0
        %2305 = vmatprep.subr.bf16.mxu0 0
        %2306 = vmatpush1.bf16.msra.mxu0 0
        %2307 = vmatprep.subr.bf16.mxu0 0
        %2308 = vmatpush1.bf16.msra.mxu0 0
        %2309 = vmatprep.subr.bf16.mxu0 0
        %2310 = vmatpush1.bf16.msra.mxu0 %v2294
        %2311 = vmatprep.subr.bf16.mxu0 0
        %2312 = vmatpush1.bf16.msra.mxu0 %v2293
        %2313 = vmatprep.subr.bf16.mxu0 0
        %2314 = vmatpush2.bf16.msra.mxu0 0
        %2315 = vmatprep.subr.bf16.mxu0 0
        %2316 = vmatpush2.bf16.msra.mxu0 0
        %2317 = vmatprep.subr.bf16.mxu0 0
        %2318 = vmatpush2.bf16.msra.mxu0 0
        %2319 = vmatprep.subr.bf16.mxu0 0
        %2320 = vmatpush2.bf16.msra.mxu0 0
        %2321 = vmatprep.subr.bf16.mxu0 0
        %2322 = vmatpush2.bf16.msra.mxu0 0
        %2323 = vmatprep.subr.bf16.mxu0 0
        %2324 = vmatpush2.bf16.msra.mxu0 0
        %2325 = vmatprep.subr.bf16.mxu0 0
        %2326 = vmatpush2.bf16.msra.mxu0 0
        %2327 = vmatprep.subr.bf16.mxu0 0
        %2328 = vmatpush2.bf16.msra.mxu0 0
        %2329 = vmatprep.mubr.bf16.mxu0 0
        %2330 = vmatmul.mubr.bf16.gmra.mxu0 %v750
        %v2331 = vpop.f32.mrf.mxu0
        %v2332 = vadd.f32 0.0, %v2331
        %v2333 = vpop.f32.mrf.mxu0
        %v2334 = vpop.f32.mrf.mxu0
        %v2335 = vadd.f32 0.0, %v2334
        %v2336 = vpop.f32.mrf.mxu0
        %2337 = vmatprep.mubr.bf16.mxu0 0
        %2338 = vmatmul.mubr.bf16.gmra.mxu0 %v753
        %v2339 = vpop.f32.mrf.mxu0
        %v2340 = vadd.f32 0.0, %v2339
        %v2341 = vpop.f32.mrf.mxu0
        %v2342 = vpop.f32.mrf.mxu0
        %v2343 = vadd.f32 0.0, %v2342
        %v2344 = vpop.f32.mrf.mxu0
        %2345 = vmatprep.mubr.bf16.mxu0 0
        %2346 = vmatmul.mubr.bf16.gmra.mxu0 %v756
        %v2347 = vpop.f32.mrf.mxu0
        %v2348 = vadd.f32 0.0, %v2347
        %v2349 = vpop.f32.mrf.mxu0
        %v2350 = vpop.f32.mrf.mxu0
        %v2351 = vadd.f32 0.0, %v2350
        %v2352 = vpop.f32.mrf.mxu0
        %2353 = vmatprep.mubr.bf16.mxu0 0
        %2354 = vmatmul.mubr.bf16.gmra.mxu0 %v759
        %v2355 = vpop.f32.mrf.mxu0
        %v2356 = vadd.f32 0.0, %v2355
        %v2357 = vpop.f32.mrf.mxu0
        %v2358 = vpop.f32.mrf.mxu0
        %v2359 = vadd.f32 0.0, %v2358
        %v2360 = vpop.f32.mrf.mxu0
        %2361 = vmatprep.mubr.bf16.mxu0 0
        %2362 = vmatmul.mubr.bf16.gmra.mxu0 %v762
        %v2363 = vpop.f32.mrf.mxu0
        %v2364 = vadd.f32 0.0, %v2363
        %v2365 = vpop.f32.mrf.mxu0
        %v2366 = vpop.f32.mrf.mxu0
        %v2367 = vadd.f32 0.0, %v2366
        %v2368 = vpop.f32.mrf.mxu0
        %2369 = vmatprep.mubr.bf16.mxu0 0
        %2370 = vmatmul.mubr.bf16.gmra.mxu0 %v765
        %v2371 = vpop.f32.mrf.mxu0
        %v2372 = vadd.f32 0.0, %v2371
        %v2373 = vpop.f32.mrf.mxu0
        %v2374 = vpop.f32.mrf.mxu0
        %v2375 = vadd.f32 0.0, %v2374
        %v2376 = vpop.f32.mrf.mxu0
        %2377 = vmatprep.mubr.bf16.mxu0 0
        %2378 = vmatmul.mubr.bf16.gmra.mxu0 %v768
        %v2379 = vpop.f32.mrf.mxu0
        %v2380 = vadd.f32 0.0, %v2379
        %v2381 = vpop.f32.mrf.mxu0
        %v2382 = vpop.f32.mrf.mxu0
        %v2383 = vadd.f32 0.0, %v2382
        %v2384 = vpop.f32.mrf.mxu0
        %2385 = vmatprep.mubr.bf16.mxu0 0
        %2386 = vmatmul.mubr.bf16.gmra.mxu0 %v771
        %v2387 = vpop.f32.mrf.mxu0
        %v2388 = vadd.f32 0.0, %v2387
        %v2389 = vpop.f32.mrf.mxu0
        %v2390 = vpop.f32.mrf.mxu0
        %v2391 = vadd.f32 0.0, %v2390
        %v2392 = vpop.f32.mrf.mxu0
        %2393 = vmatprep.mubr.bf16.mxu0 0
        %2394 = vmatmul.mubr.bf16.gmra.mxu0 %v774
        %v2395 = vpop.f32.mrf.mxu0
        %v2396 = vadd.f32 0.0, %v2395
        %v2397 = vpop.f32.mrf.mxu0
        %v2398 = vpop.f32.mrf.mxu0
        %v2399 = vadd.f32 0.0, %v2398
        %v2400 = vpop.f32.mrf.mxu0
        %2401 = vmatprep.mubr.bf16.mxu0 0
        %2402 = vmatmul.mubr.bf16.gmra.mxu0 %v777
        %v2403 = vpop.f32.mrf.mxu0
        %v2404 = vadd.f32 0.0, %v2403
        %v2405 = vpop.f32.mrf.mxu0
        %v2406 = vpop.f32.mrf.mxu0
        %v2407 = vadd.f32 0.0, %v2406
        %v2408 = vpop.f32.mrf.mxu0
        %2409 = vmatprep.mubr.bf16.mxu0 0
        %2410 = vmatmul.mubr.bf16.gmra.mxu0 %v780
        %v2411 = vpop.f32.mrf.mxu0
        %v2412 = vadd.f32 0.0, %v2411
        %v2413 = vpop.f32.mrf.mxu0
        %v2414 = vpop.f32.mrf.mxu0
        %v2415 = vadd.f32 0.0, %v2414
        %v2416 = vpop.f32.mrf.mxu0
        %2417 = vmatprep.mubr.bf16.mxu0 0
        %2418 = vmatmul.mubr.bf16.gmra.mxu0 %v783
        %v2419 = vpop.f32.mrf.mxu0
        %v2420 = vadd.f32 0.0, %v2419
        %v2421 = vpop.f32.mrf.mxu0
        %v2422 = vpop.f32.mrf.mxu0
        %v2423 = vadd.f32 0.0, %v2422
        %v2424 = vpop.f32.mrf.mxu0
        %2425 = vmatprep.mubr.bf16.mxu0 0
        %2426 = vmatmul.mubr.bf16.gmra.mxu0 %v786
        %v2427 = vpop.f32.mrf.mxu0
        %v2428 = vadd.f32 0.0, %v2427
        %v2429 = vpop.f32.mrf.mxu0
        %v2430 = vpop.f32.mrf.mxu0
        %v2431 = vadd.f32 0.0, %v2430
        %v2432 = vpop.f32.mrf.mxu0
        %2433 = vmatprep.mubr.bf16.mxu0 0
        %2434 = vmatmul.mubr.bf16.gmra.mxu0 %v789
        %v2435 = vpop.f32.mrf.mxu0
        %v2436 = vadd.f32 0.0, %v2435
        %v2437 = vpop.f32.mrf.mxu0
        %v2438 = vpop.f32.mrf.mxu0
        %v2439 = vadd.f32 0.0, %v2438
        %v2440 = vpop.f32.mrf.mxu0
        %2441 = vmatprep.mubr.bf16.mxu0 0
        %2442 = vmatmul.mubr.bf16.gmra.mxu0 %v1662
        %v2443 = vpop.f32.mrf.mxu0
        %v2444 = vadd.f32 0.0, %v2443
        %v2445 = vpop.f32.mrf.mxu0
        %v2446 = vpop.f32.mrf.mxu0
        %v2447 = vadd.f32 0.0, %v2446
        %v2448 = vpop.f32.mrf.mxu0
        %2449 = vmatprep.mubr.bf16.mxu0 0
        %2450 = vmatmul.mubr.bf16.gmra.mxu0 %v744
        %v2451 = vpop.f32.mrf.mxu0
        %v2452 = vadd.f32 0.0, %v2451
        %v2453 = vpop.f32.mrf.mxu0
        %v2454 = vpop.f32.mrf.mxu0
        %v2455 = vadd.f32 0.0, %v2454
        %v2456 = vpop.f32.mrf.mxu0
        %2457 = vdwg.mxu0
        %v2458 = vadd.f32 %v2248, %v2332
        %v2459 = vadd.f32 %v2249, %v2335
        %v2460 = vadd.f32 %v2250, %v2340
        %v2461 = vadd.f32 %v2251, %v2343
        %v2462 = vadd.f32 %v2252, %v2348
        %v2463 = vadd.f32 %v2253, %v2351
        %v2464 = vadd.f32 %v2254, %v2356
        %v2465 = vadd.f32 %v2255, %v2359
        %v2466 = vadd.f32 %v2256, %v2364
        %v2467 = vadd.f32 %v2257, %v2367
        %v2468 = vadd.f32 %v2258, %v2372
        %v2469 = vadd.f32 %v2259, %v2375
        %v2470 = vadd.f32 %v2260, %v2380
        %v2471 = vadd.f32 %v2261, %v2383
        %v2472 = vadd.f32 %v2262, %v2388
        %v2473 = vadd.f32 %v2263, %v2391
        %v2474 = vadd.f32 %v2264, %v2396
        %v2475 = vadd.f32 %v2265, %v2399
        %v2476 = vadd.f32 %v2266, %v2404
        %v2477 = vadd.f32 %v2267, %v2407
        %v2478 = vadd.f32 %v2268, %v2412
        %v2479 = vadd.f32 %v2269, %v2415
        %v2480 = vadd.f32 %v2270, %v2420
        %v2481 = vadd.f32 %v2271, %v2423
        %v2482 = vadd.f32 %v2272, %v2428
        %v2483 = vadd.f32 %v2273, %v2431
        %v2484 = vadd.f32 %v2274, %v2436
        %v2485 = vadd.f32 %v2275, %v2439
        %v2486 = vadd.f32 %v2276, %v2444
        %v2487 = vadd.f32 %v2277, %v2447
        %v2488 = vadd.f32 %v2278, %v2452
        %v2489 = vadd.f32 %v2279, %v2455
        %s2490 = scalar_lea.vmem %s3, 128
        %v2491 = vld [vmem:[%s2490] sm:$0xf]
        %v2492 = vld [vmem:[%s2490 + $0x4] sm:$0xf]
        %v2493 = vld [vmem:[%s2490 + $0x8] sm:$0xf]
        %v2494 = vld [vmem:[%s2490 + $0xc] sm:$0xf]
        %v2499 = vunpack.c.l.b16 %v2491
        %v2500 = vunpack.c.l.b16 %v2492
        %v2501 = vunpack.c.l.b16 %v2493
        %v2502 = vunpack.c.l.b16 %v2494
        %v2503 = vpack.c.b16 %v2500, %v2499
        %v2504 = vpack.c.b16 %v2502, %v2501
        %2507 = vmatprep.subr.bf16.mxu0 0
        %2508 = vmatpush1.bf16.msra.mxu0 0
        %2509 = vmatprep.subr.bf16.mxu0 0
        %2510 = vmatpush1.bf16.msra.mxu0 0
        %2511 = vmatprep.subr.bf16.mxu0 0
        %2512 = vmatpush1.bf16.msra.mxu0 0
        %2513 = vmatprep.subr.bf16.mxu0 0
        %2514 = vmatpush1.bf16.msra.mxu0 0
        %2515 = vmatprep.subr.bf16.mxu0 0
        %2516 = vmatpush1.bf16.msra.mxu0 0
        %2517 = vmatprep.subr.bf16.mxu0 0
        %2518 = vmatpush1.bf16.msra.mxu0 0
        %2519 = vmatprep.subr.bf16.mxu0 0
        %2520 = vmatpush1.bf16.msra.mxu0 %v2504
        %2521 = vmatprep.subr.bf16.mxu0 0
        %2522 = vmatpush1.bf16.msra.mxu0 %v2503
        %2523 = vmatprep.subr.bf16.mxu0 0
        %2524 = vmatpush2.bf16.msra.mxu0 0
        %2525 = vmatprep.subr.bf16.mxu0 0
        %2526 = vmatpush2.bf16.msra.mxu0 0
        %2527 = vmatprep.subr.bf16.mxu0 0
        %2528 = vmatpush2.bf16.msra.mxu0 0
        %2529 = vmatprep.subr.bf16.mxu0 0
        %2530 = vmatpush2.bf16.msra.mxu0 0
        %2531 = vmatprep.subr.bf16.mxu0 0
        %2532 = vmatpush2.bf16.msra.mxu0 0
        %2533 = vmatprep.subr.bf16.mxu0 0
        %2534 = vmatpush2.bf16.msra.mxu0 0
        %2535 = vmatprep.subr.bf16.mxu0 0
        %2536 = vmatpush2.bf16.msra.mxu0 0
        %2537 = vmatprep.subr.bf16.mxu0 0
        %2538 = vmatpush2.bf16.msra.mxu0 0
        %2539 = vmatprep.mubr.bf16.mxu0 0
        %2540 = vmatmul.mubr.bf16.gmra.mxu0 %v1197
        %v2541 = vpop.f32.mrf.mxu0
        %v2542 = vadd.f32 0.0, %v2541
        %v2543 = vpop.f32.mrf.mxu0
        %v2544 = vpop.f32.mrf.mxu0
        %v2545 = vadd.f32 0.0, %v2544
        %v2546 = vpop.f32.mrf.mxu0
        %2547 = vmatprep.mubr.bf16.mxu0 0
        %2548 = vmatmul.mubr.bf16.gmra.mxu0 %v1200
        %v2549 = vpop.f32.mrf.mxu0
        %v2550 = vadd.f32 0.0, %v2549
        %v2551 = vpop.f32.mrf.mxu0
        %v2552 = vpop.f32.mrf.mxu0
        %v2553 = vadd.f32 0.0, %v2552
        %v2554 = vpop.f32.mrf.mxu0
        %2555 = vmatprep.mubr.bf16.mxu0 0
        %2556 = vmatmul.mubr.bf16.gmra.mxu0 %v1203
        %v2557 = vpop.f32.mrf.mxu0
        %v2558 = vadd.f32 0.0, %v2557
        %v2559 = vpop.f32.mrf.mxu0
        %v2560 = vpop.f32.mrf.mxu0
        %v2561 = vadd.f32 0.0, %v2560
        %v2562 = vpop.f32.mrf.mxu0
        %2563 = vmatprep.mubr.bf16.mxu0 0
        %2564 = vmatmul.mubr.bf16.gmra.mxu0 %v1206
        %v2565 = vpop.f32.mrf.mxu0
        %v2566 = vadd.f32 0.0, %v2565
        %v2567 = vpop.f32.mrf.mxu0
        %v2568 = vpop.f32.mrf.mxu0
        %v2569 = vadd.f32 0.0, %v2568
        %v2570 = vpop.f32.mrf.mxu0
        %2571 = vmatprep.mubr.bf16.mxu0 0
        %2572 = vmatmul.mubr.bf16.gmra.mxu0 %v1209
        %v2573 = vpop.f32.mrf.mxu0
        %v2574 = vadd.f32 0.0, %v2573
        %v2575 = vpop.f32.mrf.mxu0
        %v2576 = vpop.f32.mrf.mxu0
        %v2577 = vadd.f32 0.0, %v2576
        %v2578 = vpop.f32.mrf.mxu0
        %2579 = vmatprep.mubr.bf16.mxu0 0
        %2580 = vmatmul.mubr.bf16.gmra.mxu0 %v1212
        %v2581 = vpop.f32.mrf.mxu0
        %v2582 = vadd.f32 0.0, %v2581
        %v2583 = vpop.f32.mrf.mxu0
        %v2584 = vpop.f32.mrf.mxu0
        %v2585 = vadd.f32 0.0, %v2584
        %v2586 = vpop.f32.mrf.mxu0
        %2587 = vmatprep.mubr.bf16.mxu0 0
        %2588 = vmatmul.mubr.bf16.gmra.mxu0 %v1215
        %v2589 = vpop.f32.mrf.mxu0
        %v2590 = vadd.f32 0.0, %v2589
        %v2591 = vpop.f32.mrf.mxu0
        %v2592 = vpop.f32.mrf.mxu0
        %v2593 = vadd.f32 0.0, %v2592
        %v2594 = vpop.f32.mrf.mxu0
        %2595 = vmatprep.mubr.bf16.mxu0 0
        %2596 = vmatmul.mubr.bf16.gmra.mxu0 %v1218
        %v2597 = vpop.f32.mrf.mxu0
        %v2598 = vadd.f32 0.0, %v2597
        %v2599 = vpop.f32.mrf.mxu0
        %v2600 = vpop.f32.mrf.mxu0
        %v2601 = vadd.f32 0.0, %v2600
        %v2602 = vpop.f32.mrf.mxu0
        %2603 = vmatprep.mubr.bf16.mxu0 0
        %2604 = vmatmul.mubr.bf16.gmra.mxu0 %v1221
        %v2605 = vpop.f32.mrf.mxu0
        %v2606 = vadd.f32 0.0, %v2605
        %v2607 = vpop.f32.mrf.mxu0
        %v2608 = vpop.f32.mrf.mxu0
        %v2609 = vadd.f32 0.0, %v2608
        %v2610 = vpop.f32.mrf.mxu0
        %2611 = vmatprep.mubr.bf16.mxu0 0
        %2612 = vmatmul.mubr.bf16.gmra.mxu0 %v1224
        %v2613 = vpop.f32.mrf.mxu0
        %v2614 = vadd.f32 0.0, %v2613
        %v2615 = vpop.f32.mrf.mxu0
        %v2616 = vpop.f32.mrf.mxu0
        %v2617 = vadd.f32 0.0, %v2616
        %v2618 = vpop.f32.mrf.mxu0
        %2619 = vmatprep.mubr.bf16.mxu0 0
        %2620 = vmatmul.mubr.bf16.gmra.mxu0 %v1227
        %v2621 = vpop.f32.mrf.mxu0
        %v2622 = vadd.f32 0.0, %v2621
        %v2623 = vpop.f32.mrf.mxu0
        %v2624 = vpop.f32.mrf.mxu0
        %v2625 = vadd.f32 0.0, %v2624
        %v2626 = vpop.f32.mrf.mxu0
        %2627 = vmatprep.mubr.bf16.mxu0 0
        %2628 = vmatmul.mubr.bf16.gmra.mxu0 %v1230
        %v2629 = vpop.f32.mrf.mxu0
        %v2630 = vadd.f32 0.0, %v2629
        %v2631 = vpop.f32.mrf.mxu0
        %v2632 = vpop.f32.mrf.mxu0
        %v2633 = vadd.f32 0.0, %v2632
        %v2634 = vpop.f32.mrf.mxu0
        %2635 = vmatprep.mubr.bf16.mxu0 0
        %2636 = vmatmul.mubr.bf16.gmra.mxu0 %v1233
        %v2637 = vpop.f32.mrf.mxu0
        %v2638 = vadd.f32 0.0, %v2637
        %v2639 = vpop.f32.mrf.mxu0
        %v2640 = vpop.f32.mrf.mxu0
        %v2641 = vadd.f32 0.0, %v2640
        %v2642 = vpop.f32.mrf.mxu0
        %2643 = vmatprep.mubr.bf16.mxu0 0
        %2644 = vmatmul.mubr.bf16.gmra.mxu0 %v1236
        %v2645 = vpop.f32.mrf.mxu0
        %v2646 = vadd.f32 0.0, %v2645
        %v2647 = vpop.f32.mrf.mxu0
        %v2648 = vpop.f32.mrf.mxu0
        %v2649 = vadd.f32 0.0, %v2648
        %v2650 = vpop.f32.mrf.mxu0
        %2651 = vmatprep.mubr.bf16.mxu0 0
        %2652 = vmatmul.mubr.bf16.gmra.mxu0 %v1875
        %v2653 = vpop.f32.mrf.mxu0
        %v2654 = vadd.f32 0.0, %v2653
        %v2655 = vpop.f32.mrf.mxu0
        %v2656 = vpop.f32.mrf.mxu0
        %v2657 = vadd.f32 0.0, %v2656
        %v2658 = vpop.f32.mrf.mxu0
        %2659 = vmatprep.mubr.bf16.mxu0 0
        %2660 = vmatmul.mubr.bf16.gmra.mxu0 %v1191
        %v2661 = vpop.f32.mrf.mxu0
        %v2662 = vadd.f32 0.0, %v2661
        %v2663 = vpop.f32.mrf.mxu0
        %v2664 = vpop.f32.mrf.mxu0
        %v2665 = vadd.f32 0.0, %v2664
        %v2666 = vpop.f32.mrf.mxu0
        %2667 = vdwg.mxu0
        %v2668 = vadd.f32 %v2458, %v2542
        %v2669 = vadd.f32 %v2459, %v2545
        %v2670 = vadd.f32 %v2460, %v2550
        %v2671 = vadd.f32 %v2461, %v2553
        %v2672 = vadd.f32 %v2462, %v2558
        %v2673 = vadd.f32 %v2463, %v2561
        %v2674 = vadd.f32 %v2464, %v2566
        %v2675 = vadd.f32 %v2465, %v2569
        %v2676 = vadd.f32 %v2466, %v2574
        %v2677 = vadd.f32 %v2467, %v2577
        %v2678 = vadd.f32 %v2468, %v2582
        %v2679 = vadd.f32 %v2469, %v2585
        %v2680 = vadd.f32 %v2470, %v2590
        %v2681 = vadd.f32 %v2471, %v2593
        %v2682 = vadd.f32 %v2472, %v2598
        %v2683 = vadd.f32 %v2473, %v2601
        %v2684 = vadd.f32 %v2474, %v2606
        %v2685 = vadd.f32 %v2475, %v2609
        %v2686 = vadd.f32 %v2476, %v2614
        %v2687 = vadd.f32 %v2477, %v2617
        %v2688 = vadd.f32 %v2478, %v2622
        %v2689 = vadd.f32 %v2479, %v2625
        %v2690 = vadd.f32 %v2480, %v2630
        %v2691 = vadd.f32 %v2481, %v2633
        %v2692 = vadd.f32 %v2482, %v2638
        %v2693 = vadd.f32 %v2483, %v2641
        %v2694 = vadd.f32 %v2484, %v2646
        %v2695 = vadd.f32 %v2485, %v2649
        %v2696 = vadd.f32 %v2486, %v2654
        %v2697 = vadd.f32 %v2487, %v2657
        %v2698 = vadd.f32 %v2488, %v2662
        %v2699 = vadd.f32 %v2489, %v2665
        %v2700 = vadd.f32 %v401, %v2668
        %v2701 = vadd.f32 %v402, %v2669
        %v2702 = vadd.f32 %v403, %v2670
        %v2703 = vadd.f32 %v404, %v2671
        %v2704 = vadd.f32 %v405, %v2672
        %v2705 = vadd.f32 %v406, %v2673
        %v2706 = vadd.f32 %v407, %v2674
        %v2707 = vadd.f32 %v408, %v2675
        %v2708 = vadd.f32 %v409, %v2676
        %v2709 = vadd.f32 %v410, %v2677
        %v2710 = vadd.f32 %v411, %v2678
        %v2711 = vadd.f32 %v412, %v2679
        %v2712 = vadd.f32 %v413, %v2680
        %v2713 = vadd.f32 %v414, %v2681
        %v2714 = vadd.f32 %v415, %v2682
        %v2715 = vadd.f32 %v416, %v2683
        %v2716 = vadd.f32 %v417, %v2684
        %v2717 = vadd.f32 %v418, %v2685
        %v2718 = vadd.f32 %v419, %v2686
        %v2719 = vadd.f32 %v420, %v2687
        %v2720 = vadd.f32 %v421, %v2688
        %v2721 = vadd.f32 %v422, %v2689
        %v2722 = vadd.f32 %v423, %v2690
        %v2723 = vadd.f32 %v424, %v2691
        %v2724 = vadd.f32 %v425, %v2692
        %v2725 = vadd.f32 %v426, %v2693
        %v2726 = vadd.f32 %v427, %v2694
        %v2727 = vadd.f32 %v428, %v2695
        %v2728 = vadd.f32 %v429, %v2696
        %v2729 = vadd.f32 %v430, %v2697
        %v2730 = vadd.f32 %v431, %v2698
        %v2731 = vadd.f32 %v432, %v2699
        %v2732 = vld [vmem:[%s4] sm:$0x1]
        %v2734 = vlaneseq
        %v2735 = vshrl.u32 %v2734, 7
        %v2736 = vsub.s32 0, %v2735
        %v2737 = vrot.slane %v2732, %v2736
        %v2739 = vadd.f32 %v2700, %v2737
        %v2740 = vadd.f32 %v2701, %v2737
        %v2741 = vadd.f32 %v2702, %v2737
        %v2742 = vadd.f32 %v2703, %v2737
        %v2743 = vadd.f32 %v2704, %v2737
        %v2744 = vadd.f32 %v2705, %v2737
        %v2745 = vadd.f32 %v2706, %v2737
        %v2746 = vadd.f32 %v2707, %v2737
        %v2747 = vadd.f32 %v2708, %v2737
        %v2748 = vadd.f32 %v2709, %v2737
        %v2749 = vadd.f32 %v2710, %v2737
        %v2750 = vadd.f32 %v2711, %v2737
        %v2751 = vadd.f32 %v2712, %v2737
        %v2752 = vadd.f32 %v2713, %v2737
        %v2753 = vadd.f32 %v2714, %v2737
        %v2754 = vadd.f32 %v2715, %v2737
        %v2755 = vadd.f32 %v2716, %v2737
        %v2756 = vadd.f32 %v2717, %v2737
        %v2757 = vadd.f32 %v2718, %v2737
        %v2758 = vadd.f32 %v2719, %v2737
        %v2759 = vadd.f32 %v2720, %v2737
        %v2760 = vadd.f32 %v2721, %v2737
        %v2761 = vadd.f32 %v2722, %v2737
        %v2762 = vadd.f32 %v2723, %v2737
        %v2763 = vadd.f32 %v2724, %v2737
        %v2764 = vadd.f32 %v2725, %v2737
        %v2765 = vadd.f32 %v2726, %v2737
        %v2766 = vadd.f32 %v2727, %v2737
        %v2767 = vadd.f32 %v2728, %v2737
        %v2768 = vadd.f32 %v2729, %v2737
        %v2769 = vadd.f32 %v2730, %v2737
        %v2770 = vadd.f32 %v2731, %v2737
        %v2771 = vrot.slane %v2739, 7
        %v2772 = vrot.slane %v2741, 7
        %v2773 = vrot.slane %v2743, 7
        %v2774 = vrot.slane %v2745, 7
        %v2775 = vrot.slane %v2747, 7
        %v2776 = vrot.slane %v2749, 7
        %v2777 = vrot.slane %v2751, 7
        %v2778 = vrot.slane %v2753, 7
        %v2779 = vrot.slane %v2755, 7
        %v2780 = vrot.slane %v2757, 7
        %v2781 = vrot.slane %v2759, 7
        %v2782 = vrot.slane %v2761, 7
        %v2783 = vrot.slane %v2763, 7
        %v2784 = vrot.slane %v2765, 7
        %v2785 = vrot.slane %v2767, 7
        %v2786 = vrot.slane %v2740, 7
        %v2787 = vrot.slane %v2742, 7
        %v2788 = vrot.slane %v2744, 7
        %v2789 = vrot.slane %v2746, 7
        %v2790 = vrot.slane %v2748, 7
        %v2791 = vrot.slane %v2750, 7
        %v2792 = vrot.slane %v2752, 7
        %v2793 = vrot.slane %v2754, 7
        %v2794 = vrot.slane %v2756, 7
        %v2795 = vrot.slane %v2758, 7
        %v2796 = vrot.slane %v2760, 7
        %v2797 = vrot.slane %v2762, 7
        %v2798 = vrot.slane %v2764, 7
        %v2799 = vrot.slane %v2766, 7
        %v2800 = vrot.slane %v2768, 7
        %v2801 = vsel %vm502, %v2771, %v2786
        %v2802 = vsel %vm502, %v2772, %v2787
        %v2803 = vsel %vm502, %v2773, %v2788
        %v2804 = vsel %vm502, %v2774, %v2789
        %v2805 = vsel %vm502, %v2775, %v2790
        %v2806 = vsel %vm502, %v2776, %v2791
        %v2807 = vsel %vm502, %v2777, %v2792
        %v2808 = vsel %vm502, %v2778, %v2793
        %v2809 = vsel %vm502, %v2779, %v2794
        %v2810 = vsel %vm502, %v2780, %v2795
        %v2811 = vsel %vm502, %v2781, %v2796
        %v2812 = vsel %vm502, %v2782, %v2797
        %v2813 = vsel %vm502, %v2783, %v2798
        %v2814 = vsel %vm502, %v2784, %v2799
        %v2815 = vsel %vm502, %v2785, %v2800
        %v2816 = vsel %vm502, %v2786, %v2771
        %v2817 = vsel %vm502, %v2787, %v2772
        %v2818 = vsel %vm502, %v2788, %v2773
        %v2819 = vsel %vm502, %v2789, %v2774
        %v2820 = vsel %vm502, %v2790, %v2775
        %v2821 = vsel %vm502, %v2791, %v2776
        %v2822 = vsel %vm502, %v2792, %v2777
        %v2823 = vsel %vm502, %v2793, %v2778
        %v2824 = vsel %vm502, %v2794, %v2779
        %v2825 = vsel %vm502, %v2795, %v2780
        %v2826 = vsel %vm502, %v2796, %v2781
        %v2827 = vsel %vm502, %v2797, %v2782
        %v2828 = vsel %vm502, %v2798, %v2783
        %v2829 = vsel %vm502, %v2799, %v2784
        %v2830 = vsel %vm502, %v2800, %v2785
        %v2831 = vsel %vm468, %v2816, 0.0
        %v2832 = vsel %vm469, %v2801, 0.0
        %v2833 = vsel %vm468, %v2817, 0.0
        %v2834 = vsel %vm469, %v2802, 0.0
        %v2835 = vsel %vm468, %v2818, 0.0
        %v2836 = vsel %vm469, %v2803, 0.0
        %v2837 = vsel %vm468, %v2819, 0.0
        %v2838 = vsel %vm469, %v2804, 0.0
        %v2839 = vsel %vm468, %v2820, 0.0
        %v2840 = vsel %vm469, %v2805, 0.0
        %v2841 = vsel %vm468, %v2821, 0.0
        %v2842 = vsel %vm469, %v2806, 0.0
        %v2843 = vsel %vm468, %v2822, 0.0
        %v2844 = vsel %vm469, %v2807, 0.0
        %v2845 = vsel %vm468, %v2823, 0.0
        %v2846 = vsel %vm469, %v2808, 0.0
        %v2847 = vsel %vm468, %v2824, 0.0
        %v2848 = vsel %vm469, %v2809, 0.0
        %v2849 = vsel %vm468, %v2825, 0.0
        %v2850 = vsel %vm469, %v2810, 0.0
        %v2851 = vsel %vm468, %v2826, 0.0
        %v2852 = vsel %vm469, %v2811, 0.0
        %v2853 = vsel %vm468, %v2827, 0.0
        %v2854 = vsel %vm469, %v2812, 0.0
        %v2855 = vsel %vm468, %v2828, 0.0
        %v2856 = vsel %vm469, %v2813, 0.0
        %v2857 = vsel %vm468, %v2829, 0.0
        %v2858 = vsel %vm469, %v2814, 0.0
        %v2859 = vsel %vm468, %v2830, 0.0
        %v2860 = vsel %vm469, %v2815, 0.0
        %v2861 = vpack.c.bf16 %v2832, %v2831
        %v2862 = vpack.c.bf16 %v2834, %v2833
        %v2863 = vpack.c.bf16 %v2836, %v2835
        %v2864 = vpack.c.bf16 %v2838, %v2837
        %v2865 = vpack.c.bf16 %v2840, %v2839
        %v2866 = vpack.c.bf16 %v2842, %v2841
        %v2867 = vpack.c.bf16 %v2844, %v2843
        %v2868 = vpack.c.bf16 %v2846, %v2845
        %v2869 = vpack.c.bf16 %v2848, %v2847
        %v2870 = vpack.c.bf16 %v2850, %v2849
        %v2871 = vpack.c.bf16 %v2852, %v2851
        %v2872 = vpack.c.bf16 %v2854, %v2853
        %v2873 = vpack.c.bf16 %v2856, %v2855
        %v2874 = vpack.c.bf16 %v2858, %v2857
        %v2875 = vpack.c.bf16 %v2860, %v2859
        %v2876 = vpack.c.bf16 %v2740, %v2739
        %v2877 = vpack.c.bf16 %v2742, %v2741
        %v2878 = vpack.c.bf16 %v2744, %v2743
        %v2879 = vpack.c.bf16 %v2746, %v2745
        %v2880 = vpack.c.bf16 %v2748, %v2747
        %v2881 = vpack.c.bf16 %v2750, %v2749
        %v2882 = vpack.c.bf16 %v2752, %v2751
        %v2883 = vpack.c.bf16 %v2754, %v2753
        %v2884 = vpack.c.bf16 %v2756, %v2755
        %v2885 = vpack.c.bf16 %v2758, %v2757
        %v2886 = vpack.c.bf16 %v2760, %v2759
        %v2887 = vpack.c.bf16 %v2762, %v2761
        %v2888 = vpack.c.bf16 %v2764, %v2763
        %v2889 = vpack.c.bf16 %v2766, %v2765
        %v2890 = vpack.c.bf16 %v2768, %v2767
        %v2891 = vrot.slane %v2739, 1
        %v2892 = vrot.slane %v2741, 1
        %v2893 = vrot.slane %v2743, 1
        %v2894 = vrot.slane %v2745, 1
        %v2895 = vrot.slane %v2747, 1
        %v2896 = vrot.slane %v2749, 1
        %v2897 = vrot.slane %v2751, 1
        %v2898 = vrot.slane %v2753, 1
        %v2899 = vrot.slane %v2755, 1
        %v2900 = vrot.slane %v2757, 1
        %v2901 = vrot.slane %v2759, 1
        %v2902 = vrot.slane %v2761, 1
        %v2903 = vrot.slane %v2763, 1
        %v2904 = vrot.slane %v2765, 1
        %v2905 = vrot.slane %v2767, 1
        %v2906 = vrot.slane %v2740, 1
        %v2907 = vrot.slane %v2742, 1
        %v2908 = vrot.slane %v2744, 1
        %v2909 = vrot.slane %v2746, 1
        %v2910 = vrot.slane %v2748, 1
        %v2911 = vrot.slane %v2750, 1
        %v2912 = vrot.slane %v2752, 1
        %v2913 = vrot.slane %v2754, 1
        %v2914 = vrot.slane %v2756, 1
        %v2915 = vrot.slane %v2758, 1
        %v2916 = vrot.slane %v2760, 1
        %v2917 = vrot.slane %v2762, 1
        %v2918 = vrot.slane %v2764, 1
        %v2919 = vrot.slane %v2766, 1
        %v2920 = vrot.slane %v2768, 1
        %v2921 = vsel %vm627, %v2891, %v2906
        %v2922 = vsel %vm627, %v2892, %v2907
        %v2923 = vsel %vm627, %v2893, %v2908
        %v2924 = vsel %vm627, %v2894, %v2909
        %v2925 = vsel %vm627, %v2895, %v2910
        %v2926 = vsel %vm627, %v2896, %v2911
        %v2927 = vsel %vm627, %v2897, %v2912
        %v2928 = vsel %vm627, %v2898, %v2913
        %v2929 = vsel %vm627, %v2899, %v2914
        %v2930 = vsel %vm627, %v2900, %v2915
        %v2931 = vsel %vm627, %v2901, %v2916
        %v2932 = vsel %vm627, %v2902, %v2917
        %v2933 = vsel %vm627, %v2903, %v2918
        %v2934 = vsel %vm627, %v2904, %v2919
        %v2935 = vsel %vm627, %v2905, %v2920
        %v2936 = vsel %vm627, %v2906, %v2891
        %v2937 = vsel %vm627, %v2907, %v2892
        %v2938 = vsel %vm627, %v2908, %v2893
        %v2939 = vsel %vm627, %v2909, %v2894
        %v2940 = vsel %vm627, %v2910, %v2895
        %v2941 = vsel %vm627, %v2911, %v2896
        %v2942 = vsel %vm627, %v2912, %v2897
        %v2943 = vsel %vm627, %v2913, %v2898
        %v2944 = vsel %vm627, %v2914, %v2899
        %v2945 = vsel %vm627, %v2915, %v2900
        %v2946 = vsel %vm627, %v2916, %v2901
        %v2947 = vsel %vm627, %v2917, %v2902
        %v2948 = vsel %vm627, %v2918, %v2903
        %v2949 = vsel %vm627, %v2919, %v2904
        %v2950 = vsel %vm627, %v2920, %v2905
        %v2951 = vsel %vm470, %v2921, 0.0
        %v2952 = vsel %vm471, %v2936, 0.0
        %v2953 = vsel %vm470, %v2922, 0.0
        %v2954 = vsel %vm471, %v2937, 0.0
        %v2955 = vsel %vm470, %v2923, 0.0
        %v2956 = vsel %vm471, %v2938, 0.0
        %v2957 = vsel %vm470, %v2924, 0.0
        %v2958 = vsel %vm471, %v2939, 0.0
        %v2959 = vsel %vm470, %v2925, 0.0
        %v2960 = vsel %vm471, %v2940, 0.0
        %v2961 = vsel %vm470, %v2926, 0.0
        %v2962 = vsel %vm471, %v2941, 0.0
        %v2963 = vsel %vm470, %v2927, 0.0
        %v2964 = vsel %vm471, %v2942, 0.0
        %v2965 = vsel %vm470, %v2928, 0.0
        %v2966 = vsel %vm471, %v2943, 0.0
        %v2967 = vsel %vm470, %v2929, 0.0
        %v2968 = vsel %vm471, %v2944, 0.0
        %v2969 = vsel %vm470, %v2930, 0.0
        %v2970 = vsel %vm471, %v2945, 0.0
        %v2971 = vsel %vm470, %v2931, 0.0
        %v2972 = vsel %vm471, %v2946, 0.0
        %v2973 = vsel %vm470, %v2932, 0.0
        %v2974 = vsel %vm471, %v2947, 0.0
        %v2975 = vsel %vm470, %v2933, 0.0
        %v2976 = vsel %vm471, %v2948, 0.0
        %v2977 = vsel %vm470, %v2934, 0.0
        %v2978 = vsel %vm471, %v2949, 0.0
        %v2979 = vsel %vm470, %v2935, 0.0
        %v2980 = vsel %vm471, %v2950, 0.0
        %v2981 = vpack.c.bf16 %v2952, %v2951
        %v2982 = vpack.c.bf16 %v2954, %v2953
        %v2983 = vpack.c.bf16 %v2956, %v2955
        %v2984 = vpack.c.bf16 %v2958, %v2957
        %v2985 = vpack.c.bf16 %v2960, %v2959
        %v2986 = vpack.c.bf16 %v2962, %v2961
        %v2987 = vpack.c.bf16 %v2964, %v2963
        %v2988 = vpack.c.bf16 %v2966, %v2965
        %v2989 = vpack.c.bf16 %v2968, %v2967
        %v2990 = vpack.c.bf16 %v2970, %v2969
        %v2991 = vpack.c.bf16 %v2972, %v2971
        %v2992 = vpack.c.bf16 %v2974, %v2973
        %v2993 = vpack.c.bf16 %v2976, %v2975
        %v2994 = vpack.c.bf16 %v2978, %v2977
        %v2995 = vpack.c.bf16 %v2980, %v2979
        %v2996 = vrot.slane %v2769, 7
        %v2997 = vrot.slane %v2770, 7
        %v2998 = vsel %vm502, %v2996, %v2997
        %v2999 = vsel %vm502, %v2997, %v2996
        %v3000 = vsel %vm468, %v2999, 0.0
        %v3001 = vsel %vm469, %v2998, 0.0
        %v3002 = vpack.c.bf16 %v3001, %v3000
        %v3003 = vpack.c.bf16 %v2770, %v2769
        %v3004 = vrot.slane %v2769, 1
        %v3005 = vrot.slane %v2770, 1
        %v3006 = vsel %vm627, %v3004, %v3005
        %v3007 = vsel %vm627, %v3005, %v3004
        %v3008 = vsel %vm470, %v3006, 0.0
        %v3009 = vsel %vm471, %v3007, 0.0
        %v3010 = vpack.c.bf16 %v3009, %v3008
        %v3011 = vld [vmem:[%s5] sm:$0xf]
        %s3012 = scalar_lea.vmem %s5, 4
        %v3013 = vld [vmem:[%s3012] sm:$0xf]
        %s3014 = scalar_lea.vmem %s5, 8
        %v3015 = vld [vmem:[%s3014] sm:$0xf]
        %s3016 = scalar_lea.vmem %s5, 12
        %v3017 = vld [vmem:[%s3016] sm:$0xf]
        %s3018 = scalar_lea.vmem %s5, 16
        %v3019 = vld [vmem:[%s3018] sm:$0xf]
        %s3020 = scalar_lea.vmem %s5, 20
        %v3021 = vld [vmem:[%s3020] sm:$0xf]
        %s3022 = scalar_lea.vmem %s5, 24
        %v3023 = vld [vmem:[%s3022] sm:$0xf]
        %s3024 = scalar_lea.vmem %s5, 28
        %v3025 = vld [vmem:[%s3024] sm:$0xf]
        %s3026 = scalar_lea.vmem %s5, 32
        %v3027 = vld [vmem:[%s3026] sm:$0xf]
        %v3028 = vld [vmem:[%s6] sm:$0x1]
        %vm3029 = vcmask 64512
        %v3030 = vsel %vm3029, %v581, 0
        %v3033 = vsel %vm3029, %v2876, 0
        %v3036 = vsel %vm3029, %v2877, 0
        %v3039 = vsel %vm3029, %v2878, 0
        %v3042 = vsel %vm3029, %v2879, 0
        %v3045 = vsel %vm3029, %v2880, 0
        %v3048 = vsel %vm3029, %v2881, 0
        %v3051 = vsel %vm3029, %v2882, 0
        %vm3053 = vcmask 1043456
        %v3055 = vsel %vm3053, %v3013, 0
        %3057 = vmatprep.subr.bf16.mxu0 0
        %3058 = vmatpush1.bf16.msra.mxu0 0
        %3059 = vmatprep.subr.bf16.mxu0 0
        %3060 = vmatpush1.bf16.msra.mxu0 0
        %3061 = vmatprep.subr.bf16.mxu0 0
        %3062 = vmatpush1.bf16.msra.mxu0 0
        %3063 = vmatprep.subr.bf16.mxu0 0
        %3064 = vmatpush1.bf16.msra.mxu0 0
        %3065 = vmatprep.subr.bf16.mxu0 0
        %3066 = vmatpush1.bf16.msra.mxu0 0
        %3067 = vmatprep.subr.bf16.mxu0 0
        %3068 = vmatpush1.bf16.msra.mxu0 0
        %3069 = vmatprep.subr.bf16.mxu0 0
        %3070 = vmatpush1.bf16.msra.mxu0 0
        %3071 = vmatprep.subr.bf16.mxu0 0
        %3072 = vmatpush1.bf16.msra.mxu0 %v3055
        %3073 = vmatprep.subr.bf16.mxu0 0
        %3074 = vmatpush2.bf16.msra.mxu0 0
        %3075 = vmatprep.subr.bf16.mxu0 0
        %3076 = vmatpush2.bf16.msra.mxu0 0
        %3077 = vmatprep.subr.bf16.mxu0 0
        %3078 = vmatpush2.bf16.msra.mxu0 0
        %3079 = vmatprep.subr.bf16.mxu0 0
        %3080 = vmatpush2.bf16.msra.mxu0 0
        %3081 = vmatprep.subr.bf16.mxu0 0
        %3082 = vmatpush2.bf16.msra.mxu0 0
        %3083 = vmatprep.subr.bf16.mxu0 0
        %3084 = vmatpush2.bf16.msra.mxu0 0
        %3085 = vmatprep.subr.bf16.mxu0 0
        %3086 = vmatpush2.bf16.msra.mxu0 0
        %3087 = vmatprep.subr.bf16.mxu0 0
        %3088 = vmatpush2.bf16.msra.mxu0 0
        %3089 = vmatprep.mubr.bf16.mxu0 0
        %3090 = vmatmul.mubr.bf16.gmra.mxu0 %v3030
        %v3091 = vpop.f32.mrf.mxu0
        %v3092 = vadd.f32 0.0, %v3091
        %v3093 = vpop.f32.mrf.mxu0
        %v3094 = vpop.f32.mrf.mxu0
        %v3095 = vadd.f32 0.0, %v3094
        %v3096 = vpop.f32.mrf.mxu0
        %3097 = vmatprep.mubr.bf16.mxu0 0
        %3098 = vmatmul.mubr.bf16.gmra.mxu0 %v3033
        %v3099 = vpop.f32.mrf.mxu0
        %v3100 = vadd.f32 0.0, %v3099
        %v3101 = vpop.f32.mrf.mxu0
        %v3102 = vpop.f32.mrf.mxu0
        %v3103 = vadd.f32 0.0, %v3102
        %v3104 = vpop.f32.mrf.mxu0
        %3105 = vmatprep.mubr.bf16.mxu0 0
        %3106 = vmatmul.mubr.bf16.gmra.mxu0 %v3036
        %v3107 = vpop.f32.mrf.mxu0
        %v3108 = vadd.f32 0.0, %v3107
        %v3109 = vpop.f32.mrf.mxu0
        %v3110 = vpop.f32.mrf.mxu0
        %v3111 = vadd.f32 0.0, %v3110
        %v3112 = vpop.f32.mrf.mxu0
        %3113 = vmatprep.mubr.bf16.mxu0 0
        %3114 = vmatmul.mubr.bf16.gmra.mxu0 %v3039
        %v3115 = vpop.f32.mrf.mxu0
        %v3116 = vadd.f32 0.0, %v3115
        %v3117 = vpop.f32.mrf.mxu0
        %v3118 = vpop.f32.mrf.mxu0
        %v3119 = vadd.f32 0.0, %v3118
        %v3120 = vpop.f32.mrf.mxu0
        %3121 = vmatprep.mubr.bf16.mxu0 0
        %3122 = vmatmul.mubr.bf16.gmra.mxu0 %v3042
        %v3123 = vpop.f32.mrf.mxu0
        %v3124 = vadd.f32 0.0, %v3123
        %v3125 = vpop.f32.mrf.mxu0
        %v3126 = vpop.f32.mrf.mxu0
        %v3127 = vadd.f32 0.0, %v3126
        %v3128 = vpop.f32.mrf.mxu0
        %3129 = vmatprep.mubr.bf16.mxu0 0
        %3130 = vmatmul.mubr.bf16.gmra.mxu0 %v3045
        %v3131 = vpop.f32.mrf.mxu0
        %v3132 = vadd.f32 0.0, %v3131
        %v3133 = vpop.f32.mrf.mxu0
        %v3134 = vpop.f32.mrf.mxu0
        %v3135 = vadd.f32 0.0, %v3134
        %v3136 = vpop.f32.mrf.mxu0
        %3137 = vmatprep.mubr.bf16.mxu0 0
        %3138 = vmatmul.mubr.bf16.gmra.mxu0 %v3048
        %v3139 = vpop.f32.mrf.mxu0
        %v3140 = vadd.f32 0.0, %v3139
        %v3141 = vpop.f32.mrf.mxu0
        %v3142 = vpop.f32.mrf.mxu0
        %v3143 = vadd.f32 0.0, %v3142
        %v3144 = vpop.f32.mrf.mxu0
        %3145 = vmatprep.mubr.bf16.mxu0 0
        %3146 = vmatmul.mubr.bf16.gmra.mxu0 %v3051
        %v3147 = vpop.f32.mrf.mxu0
        %v3148 = vadd.f32 0.0, %v3147
        %v3149 = vpop.f32.mrf.mxu0
        %v3150 = vpop.f32.mrf.mxu0
        %v3151 = vadd.f32 0.0, %v3150
        %v3152 = vpop.f32.mrf.mxu0
        %3153 = vdwg.mxu0
        %v3154 = vsel %vm3029, %v565, 0
        %v3157 = vsel %vm3029, %v2861, 0
        %v3160 = vsel %vm3029, %v2862, 0
        %v3163 = vsel %vm3029, %v2863, 0
        %v3166 = vsel %vm3029, %v2864, 0
        %v3169 = vsel %vm3029, %v2865, 0
        %v3172 = vsel %vm3029, %v2866, 0
        %v3175 = vsel %vm3029, %v2867, 0
        %v3178 = vsel %vm3053, %v3011, 0
        %3180 = vmatprep.subr.bf16.mxu0 0
        %3181 = vmatpush1.bf16.msra.mxu0 0
        %3182 = vmatprep.subr.bf16.mxu0 0
        %3183 = vmatpush1.bf16.msra.mxu0 0
        %3184 = vmatprep.subr.bf16.mxu0 0
        %3185 = vmatpush1.bf16.msra.mxu0 0
        %3186 = vmatprep.subr.bf16.mxu0 0
        %3187 = vmatpush1.bf16.msra.mxu0 0
        %3188 = vmatprep.subr.bf16.mxu0 0
        %3189 = vmatpush1.bf16.msra.mxu0 0
        %3190 = vmatprep.subr.bf16.mxu0 0
        %3191 = vmatpush1.bf16.msra.mxu0 0
        %3192 = vmatprep.subr.bf16.mxu0 0
        %3193 = vmatpush1.bf16.msra.mxu0 0
        %3194 = vmatprep.subr.bf16.mxu0 0
        %3195 = vmatpush1.bf16.msra.mxu0 %v3178
        %3196 = vmatprep.subr.bf16.mxu0 0
        %3197 = vmatpush2.bf16.msra.mxu0 0
        %3198 = vmatprep.subr.bf16.mxu0 0
        %3199 = vmatpush2.bf16.msra.mxu0 0
        %3200 = vmatprep.subr.bf16.mxu0 0
        %3201 = vmatpush2.bf16.msra.mxu0 0
        %3202 = vmatprep.subr.bf16.mxu0 0
        %3203 = vmatpush2.bf16.msra.mxu0 0
        %3204 = vmatprep.subr.bf16.mxu0 0
        %3205 = vmatpush2.bf16.msra.mxu0 0
        %3206 = vmatprep.subr.bf16.mxu0 0
        %3207 = vmatpush2.bf16.msra.mxu0 0
        %3208 = vmatprep.subr.bf16.mxu0 0
        %3209 = vmatpush2.bf16.msra.mxu0 0
        %3210 = vmatprep.subr.bf16.mxu0 0
        %3211 = vmatpush2.bf16.msra.mxu0 0
        %3212 = vmatprep.mubr.bf16.mxu0 0
        %3213 = vmatmul.mubr.bf16.gmra.mxu0 %v3154
        %v3214 = vpop.f32.mrf.mxu0
        %v3215 = vadd.f32 %v3092, %v3214
        %v3216 = vpop.f32.mrf.mxu0
        %v3217 = vpop.f32.mrf.mxu0
        %v3218 = vadd.f32 %v3095, %v3217
        %v3219 = vpop.f32.mrf.mxu0
        %3220 = vmatprep.mubr.bf16.mxu0 0
        %3221 = vmatmul.mubr.bf16.gmra.mxu0 %v3157
        %v3222 = vpop.f32.mrf.mxu0
        %v3223 = vadd.f32 %v3100, %v3222
        %v3224 = vpop.f32.mrf.mxu0
        %v3225 = vpop.f32.mrf.mxu0
        %v3226 = vadd.f32 %v3103, %v3225
        %v3227 = vpop.f32.mrf.mxu0
        %3228 = vmatprep.mubr.bf16.mxu0 0
        %3229 = vmatmul.mubr.bf16.gmra.mxu0 %v3160
        %v3230 = vpop.f32.mrf.mxu0
        %v3231 = vadd.f32 %v3108, %v3230
        %v3232 = vpop.f32.mrf.mxu0
        %v3233 = vpop.f32.mrf.mxu0
        %v3234 = vadd.f32 %v3111, %v3233
        %v3235 = vpop.f32.mrf.mxu0
        %3236 = vmatprep.mubr.bf16.mxu0 0
        %3237 = vmatmul.mubr.bf16.gmra.mxu0 %v3163
        %v3238 = vpop.f32.mrf.mxu0
        %v3239 = vadd.f32 %v3116, %v3238
        %v3240 = vpop.f32.mrf.mxu0
        %v3241 = vpop.f32.mrf.mxu0
        %v3242 = vadd.f32 %v3119, %v3241
        %v3243 = vpop.f32.mrf.mxu0
        %3244 = vmatprep.mubr.bf16.mxu0 0
        %3245 = vmatmul.mubr.bf16.gmra.mxu0 %v3166
        %v3246 = vpop.f32.mrf.mxu0
        %v3247 = vadd.f32 %v3124, %v3246
        %v3248 = vpop.f32.mrf.mxu0
        %v3249 = vpop.f32.mrf.mxu0
        %v3250 = vadd.f32 %v3127, %v3249
        %v3251 = vpop.f32.mrf.mxu0
        %3252 = vmatprep.mubr.bf16.mxu0 0
        %3253 = vmatmul.mubr.bf16.gmra.mxu0 %v3169
        %v3254 = vpop.f32.mrf.mxu0
        %v3255 = vadd.f32 %v3132, %v3254
        %v3256 = vpop.f32.mrf.mxu0
        %v3257 = vpop.f32.mrf.mxu0
        %v3258 = vadd.f32 %v3135, %v3257
        %v3259 = vpop.f32.mrf.mxu0
        %3260 = vmatprep.mubr.bf16.mxu0 0
        %3261 = vmatmul.mubr.bf16.gmra.mxu0 %v3172
        %v3262 = vpop.f32.mrf.mxu0
        %v3263 = vadd.f32 %v3140, %v3262
        %v3264 = vpop.f32.mrf.mxu0
        %v3265 = vpop.f32.mrf.mxu0
        %v3266 = vadd.f32 %v3143, %v3265
        %v3267 = vpop.f32.mrf.mxu0
        %3268 = vmatprep.mubr.bf16.mxu0 0
        %3269 = vmatmul.mubr.bf16.gmra.mxu0 %v3175
        %v3270 = vpop.f32.mrf.mxu0
        %v3271 = vadd.f32 %v3148, %v3270
        %v3272 = vpop.f32.mrf.mxu0
        %v3273 = vpop.f32.mrf.mxu0
        %v3274 = vadd.f32 %v3151, %v3273
        %v3275 = vpop.f32.mrf.mxu0
        %3276 = vdwg.mxu0
        %v3277 = vsel %vm3029, %v690, 0
        %v3280 = vsel %vm3029, %v2981, 0
        %v3283 = vsel %vm3029, %v2982, 0
        %v3286 = vsel %vm3029, %v2983, 0
        %v3289 = vsel %vm3029, %v2984, 0
        %v3292 = vsel %vm3029, %v2985, 0
        %v3295 = vsel %vm3029, %v2986, 0
        %v3298 = vsel %vm3029, %v2987, 0
        %v3301 = vsel %vm3053, %v3015, 0
        %3303 = vmatprep.subr.bf16.mxu0 0
        %3304 = vmatpush1.bf16.msra.mxu0 0
        %3305 = vmatprep.subr.bf16.mxu0 0
        %3306 = vmatpush1.bf16.msra.mxu0 0
        %3307 = vmatprep.subr.bf16.mxu0 0
        %3308 = vmatpush1.bf16.msra.mxu0 0
        %3309 = vmatprep.subr.bf16.mxu0 0
        %3310 = vmatpush1.bf16.msra.mxu0 0
        %3311 = vmatprep.subr.bf16.mxu0 0
        %3312 = vmatpush1.bf16.msra.mxu0 0
        %3313 = vmatprep.subr.bf16.mxu0 0
        %3314 = vmatpush1.bf16.msra.mxu0 0
        %3315 = vmatprep.subr.bf16.mxu0 0
        %3316 = vmatpush1.bf16.msra.mxu0 0
        %3317 = vmatprep.subr.bf16.mxu0 0
        %3318 = vmatpush1.bf16.msra.mxu0 %v3301
        %3319 = vmatprep.subr.bf16.mxu0 0
        %3320 = vmatpush2.bf16.msra.mxu0 0
        %3321 = vmatprep.subr.bf16.mxu0 0
        %3322 = vmatpush2.bf16.msra.mxu0 0
        %3323 = vmatprep.subr.bf16.mxu0 0
        %3324 = vmatpush2.bf16.msra.mxu0 0
        %3325 = vmatprep.subr.bf16.mxu0 0
        %3326 = vmatpush2.bf16.msra.mxu0 0
        %3327 = vmatprep.subr.bf16.mxu0 0
        %3328 = vmatpush2.bf16.msra.mxu0 0
        %3329 = vmatprep.subr.bf16.mxu0 0
        %3330 = vmatpush2.bf16.msra.mxu0 0
        %3331 = vmatprep.subr.bf16.mxu0 0
        %3332 = vmatpush2.bf16.msra.mxu0 0
        %3333 = vmatprep.subr.bf16.mxu0 0
        %3334 = vmatpush2.bf16.msra.mxu0 0
        %3335 = vmatprep.mubr.bf16.mxu0 0
        %3336 = vmatmul.mubr.bf16.gmra.mxu0 %v3277
        %v3337 = vpop.f32.mrf.mxu0
        %v3338 = vadd.f32 0.0, %v3337
        %v3339 = vpop.f32.mrf.mxu0
        %v3340 = vpop.f32.mrf.mxu0
        %v3341 = vadd.f32 0.0, %v3340
        %v3342 = vpop.f32.mrf.mxu0
        %3343 = vmatprep.mubr.bf16.mxu0 0
        %3344 = vmatmul.mubr.bf16.gmra.mxu0 %v3280
        %v3345 = vpop.f32.mrf.mxu0
        %v3346 = vadd.f32 0.0, %v3345
        %v3347 = vpop.f32.mrf.mxu0
        %v3348 = vpop.f32.mrf.mxu0
        %v3349 = vadd.f32 0.0, %v3348
        %v3350 = vpop.f32.mrf.mxu0
        %3351 = vmatprep.mubr.bf16.mxu0 0
        %3352 = vmatmul.mubr.bf16.gmra.mxu0 %v3283
        %v3353 = vpop.f32.mrf.mxu0
        %v3354 = vadd.f32 0.0, %v3353
        %v3355 = vpop.f32.mrf.mxu0
        %v3356 = vpop.f32.mrf.mxu0
        %v3357 = vadd.f32 0.0, %v3356
        %v3358 = vpop.f32.mrf.mxu0
        %3359 = vmatprep.mubr.bf16.mxu0 0
        %3360 = vmatmul.mubr.bf16.gmra.mxu0 %v3286
        %v3361 = vpop.f32.mrf.mxu0
        %v3362 = vadd.f32 0.0, %v3361
        %v3363 = vpop.f32.mrf.mxu0
        %v3364 = vpop.f32.mrf.mxu0
        %v3365 = vadd.f32 0.0, %v3364
        %v3366 = vpop.f32.mrf.mxu0
        %3367 = vmatprep.mubr.bf16.mxu0 0
        %3368 = vmatmul.mubr.bf16.gmra.mxu0 %v3289
        %v3369 = vpop.f32.mrf.mxu0
        %v3370 = vadd.f32 0.0, %v3369
        %v3371 = vpop.f32.mrf.mxu0
        %v3372 = vpop.f32.mrf.mxu0
        %v3373 = vadd.f32 0.0, %v3372
        %v3374 = vpop.f32.mrf.mxu0
        %3375 = vmatprep.mubr.bf16.mxu0 0
        %3376 = vmatmul.mubr.bf16.gmra.mxu0 %v3292
        %v3377 = vpop.f32.mrf.mxu0
        %v3378 = vadd.f32 0.0, %v3377
        %v3379 = vpop.f32.mrf.mxu0
        %v3380 = vpop.f32.mrf.mxu0
        %v3381 = vadd.f32 0.0, %v3380
        %v3382 = vpop.f32.mrf.mxu0
        %3383 = vmatprep.mubr.bf16.mxu0 0
        %3384 = vmatmul.mubr.bf16.gmra.mxu0 %v3295
        %v3385 = vpop.f32.mrf.mxu0
        %v3386 = vadd.f32 0.0, %v3385
        %v3387 = vpop.f32.mrf.mxu0
        %v3388 = vpop.f32.mrf.mxu0
        %v3389 = vadd.f32 0.0, %v3388
        %v3390 = vpop.f32.mrf.mxu0
        %3391 = vmatprep.mubr.bf16.mxu0 0
        %3392 = vmatmul.mubr.bf16.gmra.mxu0 %v3298
        %v3393 = vpop.f32.mrf.mxu0
        %v3394 = vadd.f32 0.0, %v3393
        %v3395 = vpop.f32.mrf.mxu0
        %v3396 = vpop.f32.mrf.mxu0
        %v3397 = vadd.f32 0.0, %v3396
        %v3398 = vpop.f32.mrf.mxu0
        %3399 = vdwg.mxu0
        %v3400 = vadd.f32 %v3215, %v3338
        %v3401 = vadd.f32 %v3218, %v3341
        %v3402 = vadd.f32 %v3223, %v3346
        %v3403 = vadd.f32 %v3226, %v3349
        %v3404 = vadd.f32 %v3231, %v3354
        %v3405 = vadd.f32 %v3234, %v3357
        %v3406 = vadd.f32 %v3239, %v3362
        %v3407 = vadd.f32 %v3242, %v3365
        %v3408 = vadd.f32 %v3247, %v3370
        %v3409 = vadd.f32 %v3250, %v3373
        %v3410 = vadd.f32 %v3255, %v3378
        %v3411 = vadd.f32 %v3258, %v3381
        %v3412 = vadd.f32 %v3263, %v3386
        %v3413 = vadd.f32 %v3266, %v3389
        %v3414 = vadd.f32 %v3271, %v3394
        %v3415 = vadd.f32 %v3274, %v3397
        %v3417 = vsel %vm3029, %v2868, 0
        %v3420 = vsel %vm3053, %v3017, 0
        %3422 = vmatprep.subr.bf16.mxu0 0
        %3423 = vmatpush1.bf16.msra.mxu0 0
        %3424 = vmatprep.subr.bf16.mxu0 0
        %3425 = vmatpush1.bf16.msra.mxu0 0
        %3426 = vmatprep.subr.bf16.mxu0 0
        %3427 = vmatpush1.bf16.msra.mxu0 0
        %3428 = vmatprep.subr.bf16.mxu0 0
        %3429 = vmatpush1.bf16.msra.mxu0 0
        %3430 = vmatprep.subr.bf16.mxu0 0
        %3431 = vmatpush1.bf16.msra.mxu0 0
        %3432 = vmatprep.subr.bf16.mxu0 0
        %3433 = vmatpush1.bf16.msra.mxu0 0
        %3434 = vmatprep.subr.bf16.mxu0 0
        %3435 = vmatpush1.bf16.msra.mxu0 0
        %3436 = vmatprep.subr.bf16.mxu0 0
        %3437 = vmatpush1.bf16.msra.mxu0 %v3420
        %3438 = vmatprep.subr.bf16.mxu0 0
        %3439 = vmatpush2.bf16.msra.mxu0 0
        %3440 = vmatprep.subr.bf16.mxu0 0
        %3441 = vmatpush2.bf16.msra.mxu0 0
        %3442 = vmatprep.subr.bf16.mxu0 0
        %3443 = vmatpush2.bf16.msra.mxu0 0
        %3444 = vmatprep.subr.bf16.mxu0 0
        %3445 = vmatpush2.bf16.msra.mxu0 0
        %3446 = vmatprep.subr.bf16.mxu0 0
        %3447 = vmatpush2.bf16.msra.mxu0 0
        %3448 = vmatprep.subr.bf16.mxu0 0
        %3449 = vmatpush2.bf16.msra.mxu0 0
        %3450 = vmatprep.subr.bf16.mxu0 0
        %3451 = vmatpush2.bf16.msra.mxu0 0
        %3452 = vmatprep.subr.bf16.mxu0 0
        %3453 = vmatpush2.bf16.msra.mxu0 0
        %3454 = vmatprep.mubr.bf16.mxu0 0
        %3455 = vmatmul.mubr.bf16.gmra.mxu0 %v3157
        %v3456 = vpop.f32.mrf.mxu0
        %v3457 = vadd.f32 0.0, %v3456
        %v3458 = vpop.f32.mrf.mxu0
        %v3459 = vpop.f32.mrf.mxu0
        %v3460 = vadd.f32 0.0, %v3459
        %v3461 = vpop.f32.mrf.mxu0
        %3462 = vmatprep.mubr.bf16.mxu0 0
        %3463 = vmatmul.mubr.bf16.gmra.mxu0 %v3160
        %v3464 = vpop.f32.mrf.mxu0
        %v3465 = vadd.f32 0.0, %v3464
        %v3466 = vpop.f32.mrf.mxu0
        %v3467 = vpop.f32.mrf.mxu0
        %v3468 = vadd.f32 0.0, %v3467
        %v3469 = vpop.f32.mrf.mxu0
        %3470 = vmatprep.mubr.bf16.mxu0 0
        %3471 = vmatmul.mubr.bf16.gmra.mxu0 %v3163
        %v3472 = vpop.f32.mrf.mxu0
        %v3473 = vadd.f32 0.0, %v3472
        %v3474 = vpop.f32.mrf.mxu0
        %v3475 = vpop.f32.mrf.mxu0
        %v3476 = vadd.f32 0.0, %v3475
        %v3477 = vpop.f32.mrf.mxu0
        %3478 = vmatprep.mubr.bf16.mxu0 0
        %3479 = vmatmul.mubr.bf16.gmra.mxu0 %v3166
        %v3480 = vpop.f32.mrf.mxu0
        %v3481 = vadd.f32 0.0, %v3480
        %v3482 = vpop.f32.mrf.mxu0
        %v3483 = vpop.f32.mrf.mxu0
        %v3484 = vadd.f32 0.0, %v3483
        %v3485 = vpop.f32.mrf.mxu0
        %3486 = vmatprep.mubr.bf16.mxu0 0
        %3487 = vmatmul.mubr.bf16.gmra.mxu0 %v3169
        %v3488 = vpop.f32.mrf.mxu0
        %v3489 = vadd.f32 0.0, %v3488
        %v3490 = vpop.f32.mrf.mxu0
        %v3491 = vpop.f32.mrf.mxu0
        %v3492 = vadd.f32 0.0, %v3491
        %v3493 = vpop.f32.mrf.mxu0
        %3494 = vmatprep.mubr.bf16.mxu0 0
        %3495 = vmatmul.mubr.bf16.gmra.mxu0 %v3172
        %v3496 = vpop.f32.mrf.mxu0
        %v3497 = vadd.f32 0.0, %v3496
        %v3498 = vpop.f32.mrf.mxu0
        %v3499 = vpop.f32.mrf.mxu0
        %v3500 = vadd.f32 0.0, %v3499
        %v3501 = vpop.f32.mrf.mxu0
        %3502 = vmatprep.mubr.bf16.mxu0 0
        %3503 = vmatmul.mubr.bf16.gmra.mxu0 %v3175
        %v3504 = vpop.f32.mrf.mxu0
        %v3505 = vadd.f32 0.0, %v3504
        %v3506 = vpop.f32.mrf.mxu0
        %v3507 = vpop.f32.mrf.mxu0
        %v3508 = vadd.f32 0.0, %v3507
        %v3509 = vpop.f32.mrf.mxu0
        %3510 = vmatprep.mubr.bf16.mxu0 0
        %3511 = vmatmul.mubr.bf16.gmra.mxu0 %v3417
        %v3512 = vpop.f32.mrf.mxu0
        %v3513 = vadd.f32 0.0, %v3512
        %v3514 = vpop.f32.mrf.mxu0
        %v3515 = vpop.f32.mrf.mxu0
        %v3516 = vadd.f32 0.0, %v3515
        %v3517 = vpop.f32.mrf.mxu0
        %3518 = vdwg.mxu0
        %v3519 = vadd.f32 %v3400, %v3457
        %v3520 = vadd.f32 %v3401, %v3460
        %v3521 = vadd.f32 %v3402, %v3465
        %v3522 = vadd.f32 %v3403, %v3468
        %v3523 = vadd.f32 %v3404, %v3473
        %v3524 = vadd.f32 %v3405, %v3476
        %v3525 = vadd.f32 %v3406, %v3481
        %v3526 = vadd.f32 %v3407, %v3484
        %v3527 = vadd.f32 %v3408, %v3489
        %v3528 = vadd.f32 %v3409, %v3492
        %v3529 = vadd.f32 %v3410, %v3497
        %v3530 = vadd.f32 %v3411, %v3500
        %v3531 = vadd.f32 %v3412, %v3505
        %v3532 = vadd.f32 %v3413, %v3508
        %v3533 = vadd.f32 %v3414, %v3513
        %v3534 = vadd.f32 %v3415, %v3516
        %v3536 = vsel %vm3029, %v2883, 0
        %v3539 = vsel %vm3053, %v3019, 0
        %3541 = vmatprep.subr.bf16.mxu0 0
        %3542 = vmatpush1.bf16.msra.mxu0 0
        %3543 = vmatprep.subr.bf16.mxu0 0
        %3544 = vmatpush1.bf16.msra.mxu0 0
        %3545 = vmatprep.subr.bf16.mxu0 0
        %3546 = vmatpush1.bf16.msra.mxu0 0
        %3547 = vmatprep.subr.bf16.mxu0 0
        %3548 = vmatpush1.bf16.msra.mxu0 0
        %3549 = vmatprep.subr.bf16.mxu0 0
        %3550 = vmatpush1.bf16.msra.mxu0 0
        %3551 = vmatprep.subr.bf16.mxu0 0
        %3552 = vmatpush1.bf16.msra.mxu0 0
        %3553 = vmatprep.subr.bf16.mxu0 0
        %3554 = vmatpush1.bf16.msra.mxu0 0
        %3555 = vmatprep.subr.bf16.mxu0 0
        %3556 = vmatpush1.bf16.msra.mxu0 %v3539
        %3557 = vmatprep.subr.bf16.mxu0 0
        %3558 = vmatpush2.bf16.msra.mxu0 0
        %3559 = vmatprep.subr.bf16.mxu0 0
        %3560 = vmatpush2.bf16.msra.mxu0 0
        %3561 = vmatprep.subr.bf16.mxu0 0
        %3562 = vmatpush2.bf16.msra.mxu0 0
        %3563 = vmatprep.subr.bf16.mxu0 0
        %3564 = vmatpush2.bf16.msra.mxu0 0
        %3565 = vmatprep.subr.bf16.mxu0 0
        %3566 = vmatpush2.bf16.msra.mxu0 0
        %3567 = vmatprep.subr.bf16.mxu0 0
        %3568 = vmatpush2.bf16.msra.mxu0 0
        %3569 = vmatprep.subr.bf16.mxu0 0
        %3570 = vmatpush2.bf16.msra.mxu0 0
        %3571 = vmatprep.subr.bf16.mxu0 0
        %3572 = vmatpush2.bf16.msra.mxu0 0
        %3573 = vmatprep.mubr.bf16.mxu0 0
        %3574 = vmatmul.mubr.bf16.gmra.mxu0 %v3033
        %v3575 = vpop.f32.mrf.mxu0
        %v3576 = vadd.f32 0.0, %v3575
        %v3577 = vpop.f32.mrf.mxu0
        %v3578 = vpop.f32.mrf.mxu0
        %v3579 = vadd.f32 0.0, %v3578
        %v3580 = vpop.f32.mrf.mxu0
        %3581 = vmatprep.mubr.bf16.mxu0 0
        %3582 = vmatmul.mubr.bf16.gmra.mxu0 %v3036
        %v3583 = vpop.f32.mrf.mxu0
        %v3584 = vadd.f32 0.0, %v3583
        %v3585 = vpop.f32.mrf.mxu0
        %v3586 = vpop.f32.mrf.mxu0
        %v3587 = vadd.f32 0.0, %v3586
        %v3588 = vpop.f32.mrf.mxu0
        %3589 = vmatprep.mubr.bf16.mxu0 0
        %3590 = vmatmul.mubr.bf16.gmra.mxu0 %v3039
        %v3591 = vpop.f32.mrf.mxu0
        %v3592 = vadd.f32 0.0, %v3591
        %v3593 = vpop.f32.mrf.mxu0
        %v3594 = vpop.f32.mrf.mxu0
        %v3595 = vadd.f32 0.0, %v3594
        %v3596 = vpop.f32.mrf.mxu0
        %3597 = vmatprep.mubr.bf16.mxu0 0
        %3598 = vmatmul.mubr.bf16.gmra.mxu0 %v3042
        %v3599 = vpop.f32.mrf.mxu0
        %v3600 = vadd.f32 0.0, %v3599
        %v3601 = vpop.f32.mrf.mxu0
        %v3602 = vpop.f32.mrf.mxu0
        %v3603 = vadd.f32 0.0, %v3602
        %v3604 = vpop.f32.mrf.mxu0
        %3605 = vmatprep.mubr.bf16.mxu0 0
        %3606 = vmatmul.mubr.bf16.gmra.mxu0 %v3045
        %v3607 = vpop.f32.mrf.mxu0
        %v3608 = vadd.f32 0.0, %v3607
        %v3609 = vpop.f32.mrf.mxu0
        %v3610 = vpop.f32.mrf.mxu0
        %v3611 = vadd.f32 0.0, %v3610
        %v3612 = vpop.f32.mrf.mxu0
        %3613 = vmatprep.mubr.bf16.mxu0 0
        %3614 = vmatmul.mubr.bf16.gmra.mxu0 %v3048
        %v3615 = vpop.f32.mrf.mxu0
        %v3616 = vadd.f32 0.0, %v3615
        %v3617 = vpop.f32.mrf.mxu0
        %v3618 = vpop.f32.mrf.mxu0
        %v3619 = vadd.f32 0.0, %v3618
        %v3620 = vpop.f32.mrf.mxu0
        %3621 = vmatprep.mubr.bf16.mxu0 0
        %3622 = vmatmul.mubr.bf16.gmra.mxu0 %v3051
        %v3623 = vpop.f32.mrf.mxu0
        %v3624 = vadd.f32 0.0, %v3623
        %v3625 = vpop.f32.mrf.mxu0
        %v3626 = vpop.f32.mrf.mxu0
        %v3627 = vadd.f32 0.0, %v3626
        %v3628 = vpop.f32.mrf.mxu0
        %3629 = vmatprep.mubr.bf16.mxu0 0
        %3630 = vmatmul.mubr.bf16.gmra.mxu0 %v3536
        %v3631 = vpop.f32.mrf.mxu0
        %v3632 = vadd.f32 0.0, %v3631
        %v3633 = vpop.f32.mrf.mxu0
        %v3634 = vpop.f32.mrf.mxu0
        %v3635 = vadd.f32 0.0, %v3634
        %v3636 = vpop.f32.mrf.mxu0
        %3637 = vdwg.mxu0
        %v3638 = vadd.f32 %v3519, %v3576
        %v3639 = vadd.f32 %v3520, %v3579
        %v3640 = vadd.f32 %v3521, %v3584
        %v3641 = vadd.f32 %v3522, %v3587
        %v3642 = vadd.f32 %v3523, %v3592
        %v3643 = vadd.f32 %v3524, %v3595
        %v3644 = vadd.f32 %v3525, %v3600
        %v3645 = vadd.f32 %v3526, %v3603
        %v3646 = vadd.f32 %v3527, %v3608
        %v3647 = vadd.f32 %v3528, %v3611
        %v3648 = vadd.f32 %v3529, %v3616
        %v3649 = vadd.f32 %v3530, %v3619
        %v3650 = vadd.f32 %v3531, %v3624
        %v3651 = vadd.f32 %v3532, %v3627
        %v3652 = vadd.f32 %v3533, %v3632
        %v3653 = vadd.f32 %v3534, %v3635
        %v3655 = vsel %vm3029, %v2988, 0
        %v3658 = vsel %vm3053, %v3021, 0
        %3660 = vmatprep.subr.bf16.mxu0 0
        %3661 = vmatpush1.bf16.msra.mxu0 0
        %3662 = vmatprep.subr.bf16.mxu0 0
        %3663 = vmatpush1.bf16.msra.mxu0 0
        %3664 = vmatprep.subr.bf16.mxu0 0
        %3665 = vmatpush1.bf16.msra.mxu0 0
        %3666 = vmatprep.subr.bf16.mxu0 0
        %3667 = vmatpush1.bf16.msra.mxu0 0
        %3668 = vmatprep.subr.bf16.mxu0 0
        %3669 = vmatpush1.bf16.msra.mxu0 0
        %3670 = vmatprep.subr.bf16.mxu0 0
        %3671 = vmatpush1.bf16.msra.mxu0 0
        %3672 = vmatprep.subr.bf16.mxu0 0
        %3673 = vmatpush1.bf16.msra.mxu0 0
        %3674 = vmatprep.subr.bf16.mxu0 0
        %3675 = vmatpush1.bf16.msra.mxu0 %v3658
        %3676 = vmatprep.subr.bf16.mxu0 0
        %3677 = vmatpush2.bf16.msra.mxu0 0
        %3678 = vmatprep.subr.bf16.mxu0 0
        %3679 = vmatpush2.bf16.msra.mxu0 0
        %3680 = vmatprep.subr.bf16.mxu0 0
        %3681 = vmatpush2.bf16.msra.mxu0 0
        %3682 = vmatprep.subr.bf16.mxu0 0
        %3683 = vmatpush2.bf16.msra.mxu0 0
        %3684 = vmatprep.subr.bf16.mxu0 0
        %3685 = vmatpush2.bf16.msra.mxu0 0
        %3686 = vmatprep.subr.bf16.mxu0 0
        %3687 = vmatpush2.bf16.msra.mxu0 0
        %3688 = vmatprep.subr.bf16.mxu0 0
        %3689 = vmatpush2.bf16.msra.mxu0 0
        %3690 = vmatprep.subr.bf16.mxu0 0
        %3691 = vmatpush2.bf16.msra.mxu0 0
        %3692 = vmatprep.mubr.bf16.mxu0 0
        %3693 = vmatmul.mubr.bf16.gmra.mxu0 %v3280
        %v3694 = vpop.f32.mrf.mxu0
        %v3695 = vadd.f32 0.0, %v3694
        %v3696 = vpop.f32.mrf.mxu0
        %v3697 = vpop.f32.mrf.mxu0
        %v3698 = vadd.f32 0.0, %v3697
        %v3699 = vpop.f32.mrf.mxu0
        %3700 = vmatprep.mubr.bf16.mxu0 0
        %3701 = vmatmul.mubr.bf16.gmra.mxu0 %v3283
        %v3702 = vpop.f32.mrf.mxu0
        %v3703 = vadd.f32 0.0, %v3702
        %v3704 = vpop.f32.mrf.mxu0
        %v3705 = vpop.f32.mrf.mxu0
        %v3706 = vadd.f32 0.0, %v3705
        %v3707 = vpop.f32.mrf.mxu0
        %3708 = vmatprep.mubr.bf16.mxu0 0
        %3709 = vmatmul.mubr.bf16.gmra.mxu0 %v3286
        %v3710 = vpop.f32.mrf.mxu0
        %v3711 = vadd.f32 0.0, %v3710
        %v3712 = vpop.f32.mrf.mxu0
        %v3713 = vpop.f32.mrf.mxu0
        %v3714 = vadd.f32 0.0, %v3713
        %v3715 = vpop.f32.mrf.mxu0
        %3716 = vmatprep.mubr.bf16.mxu0 0
        %3717 = vmatmul.mubr.bf16.gmra.mxu0 %v3289
        %v3718 = vpop.f32.mrf.mxu0
        %v3719 = vadd.f32 0.0, %v3718
        %v3720 = vpop.f32.mrf.mxu0
        %v3721 = vpop.f32.mrf.mxu0
        %v3722 = vadd.f32 0.0, %v3721
        %v3723 = vpop.f32.mrf.mxu0
        %3724 = vmatprep.mubr.bf16.mxu0 0
        %3725 = vmatmul.mubr.bf16.gmra.mxu0 %v3292
        %v3726 = vpop.f32.mrf.mxu0
        %v3727 = vadd.f32 0.0, %v3726
        %v3728 = vpop.f32.mrf.mxu0
        %v3729 = vpop.f32.mrf.mxu0
        %v3730 = vadd.f32 0.0, %v3729
        %v3731 = vpop.f32.mrf.mxu0
        %3732 = vmatprep.mubr.bf16.mxu0 0
        %3733 = vmatmul.mubr.bf16.gmra.mxu0 %v3295
        %v3734 = vpop.f32.mrf.mxu0
        %v3735 = vadd.f32 0.0, %v3734
        %v3736 = vpop.f32.mrf.mxu0
        %v3737 = vpop.f32.mrf.mxu0
        %v3738 = vadd.f32 0.0, %v3737
        %v3739 = vpop.f32.mrf.mxu0
        %3740 = vmatprep.mubr.bf16.mxu0 0
        %3741 = vmatmul.mubr.bf16.gmra.mxu0 %v3298
        %v3742 = vpop.f32.mrf.mxu0
        %v3743 = vadd.f32 0.0, %v3742
        %v3744 = vpop.f32.mrf.mxu0
        %v3745 = vpop.f32.mrf.mxu0
        %v3746 = vadd.f32 0.0, %v3745
        %v3747 = vpop.f32.mrf.mxu0
        %3748 = vmatprep.mubr.bf16.mxu0 0
        %3749 = vmatmul.mubr.bf16.gmra.mxu0 %v3655
        %v3750 = vpop.f32.mrf.mxu0
        %v3751 = vadd.f32 0.0, %v3750
        %v3752 = vpop.f32.mrf.mxu0
        %v3753 = vpop.f32.mrf.mxu0
        %v3754 = vadd.f32 0.0, %v3753
        %v3755 = vpop.f32.mrf.mxu0
        %3756 = vdwg.mxu0
        %v3757 = vadd.f32 %v3638, %v3695
        %v3758 = vadd.f32 %v3639, %v3698
        %v3759 = vadd.f32 %v3640, %v3703
        %v3760 = vadd.f32 %v3641, %v3706
        %v3761 = vadd.f32 %v3642, %v3711
        %v3762 = vadd.f32 %v3643, %v3714
        %v3763 = vadd.f32 %v3644, %v3719
        %v3764 = vadd.f32 %v3645, %v3722
        %v3765 = vadd.f32 %v3646, %v3727
        %v3766 = vadd.f32 %v3647, %v3730
        %v3767 = vadd.f32 %v3648, %v3735
        %v3768 = vadd.f32 %v3649, %v3738
        %v3769 = vadd.f32 %v3650, %v3743
        %v3770 = vadd.f32 %v3651, %v3746
        %v3771 = vadd.f32 %v3652, %v3751
        %v3772 = vadd.f32 %v3653, %v3754
        %v3774 = vsel %vm3029, %v2869, 0
        %v3777 = vsel %vm3053, %v3023, 0
        %3779 = vmatprep.subr.bf16.mxu0 0
        %3780 = vmatpush1.bf16.msra.mxu0 0
        %3781 = vmatprep.subr.bf16.mxu0 0
        %3782 = vmatpush1.bf16.msra.mxu0 0
        %3783 = vmatprep.subr.bf16.mxu0 0
        %3784 = vmatpush1.bf16.msra.mxu0 0
        %3785 = vmatprep.subr.bf16.mxu0 0
        %3786 = vmatpush1.bf16.msra.mxu0 0
        %3787 = vmatprep.subr.bf16.mxu0 0
        %3788 = vmatpush1.bf16.msra.mxu0 0
        %3789 = vmatprep.subr.bf16.mxu0 0
        %3790 = vmatpush1.bf16.msra.mxu0 0
        %3791 = vmatprep.subr.bf16.mxu0 0
        %3792 = vmatpush1.bf16.msra.mxu0 0
        %3793 = vmatprep.subr.bf16.mxu0 0
        %3794 = vmatpush1.bf16.msra.mxu0 %v3777
        %3795 = vmatprep.subr.bf16.mxu0 0
        %3796 = vmatpush2.bf16.msra.mxu0 0
        %3797 = vmatprep.subr.bf16.mxu0 0
        %3798 = vmatpush2.bf16.msra.mxu0 0
        %3799 = vmatprep.subr.bf16.mxu0 0
        %3800 = vmatpush2.bf16.msra.mxu0 0
        %3801 = vmatprep.subr.bf16.mxu0 0
        %3802 = vmatpush2.bf16.msra.mxu0 0
        %3803 = vmatprep.subr.bf16.mxu0 0
        %3804 = vmatpush2.bf16.msra.mxu0 0
        %3805 = vmatprep.subr.bf16.mxu0 0
        %3806 = vmatpush2.bf16.msra.mxu0 0
        %3807 = vmatprep.subr.bf16.mxu0 0
        %3808 = vmatpush2.bf16.msra.mxu0 0
        %3809 = vmatprep.subr.bf16.mxu0 0
        %3810 = vmatpush2.bf16.msra.mxu0 0
        %3811 = vmatprep.mubr.bf16.mxu0 0
        %3812 = vmatmul.mubr.bf16.gmra.mxu0 %v3160
        %v3813 = vpop.f32.mrf.mxu0
        %v3814 = vadd.f32 0.0, %v3813
        %v3815 = vpop.f32.mrf.mxu0
        %v3816 = vpop.f32.mrf.mxu0
        %v3817 = vadd.f32 0.0, %v3816
        %v3818 = vpop.f32.mrf.mxu0
        %3819 = vmatprep.mubr.bf16.mxu0 0
        %3820 = vmatmul.mubr.bf16.gmra.mxu0 %v3163
        %v3821 = vpop.f32.mrf.mxu0
        %v3822 = vadd.f32 0.0, %v3821
        %v3823 = vpop.f32.mrf.mxu0
        %v3824 = vpop.f32.mrf.mxu0
        %v3825 = vadd.f32 0.0, %v3824
        %v3826 = vpop.f32.mrf.mxu0
        %3827 = vmatprep.mubr.bf16.mxu0 0
        %3828 = vmatmul.mubr.bf16.gmra.mxu0 %v3166
        %v3829 = vpop.f32.mrf.mxu0
        %v3830 = vadd.f32 0.0, %v3829
        %v3831 = vpop.f32.mrf.mxu0
        %v3832 = vpop.f32.mrf.mxu0
        %v3833 = vadd.f32 0.0, %v3832
        %v3834 = vpop.f32.mrf.mxu0
        %3835 = vmatprep.mubr.bf16.mxu0 0
        %3836 = vmatmul.mubr.bf16.gmra.mxu0 %v3169
        %v3837 = vpop.f32.mrf.mxu0
        %v3838 = vadd.f32 0.0, %v3837
        %v3839 = vpop.f32.mrf.mxu0
        %v3840 = vpop.f32.mrf.mxu0
        %v3841 = vadd.f32 0.0, %v3840
        %v3842 = vpop.f32.mrf.mxu0
        %3843 = vmatprep.mubr.bf16.mxu0 0
        %3844 = vmatmul.mubr.bf16.gmra.mxu0 %v3172
        %v3845 = vpop.f32.mrf.mxu0
        %v3846 = vadd.f32 0.0, %v3845
        %v3847 = vpop.f32.mrf.mxu0
        %v3848 = vpop.f32.mrf.mxu0
        %v3849 = vadd.f32 0.0, %v3848
        %v3850 = vpop.f32.mrf.mxu0
        %3851 = vmatprep.mubr.bf16.mxu0 0
        %3852 = vmatmul.mubr.bf16.gmra.mxu0 %v3175
        %v3853 = vpop.f32.mrf.mxu0
        %v3854 = vadd.f32 0.0, %v3853
        %v3855 = vpop.f32.mrf.mxu0
        %v3856 = vpop.f32.mrf.mxu0
        %v3857 = vadd.f32 0.0, %v3856
        %v3858 = vpop.f32.mrf.mxu0
        %3859 = vmatprep.mubr.bf16.mxu0 0
        %3860 = vmatmul.mubr.bf16.gmra.mxu0 %v3417
        %v3861 = vpop.f32.mrf.mxu0
        %v3862 = vadd.f32 0.0, %v3861
        %v3863 = vpop.f32.mrf.mxu0
        %v3864 = vpop.f32.mrf.mxu0
        %v3865 = vadd.f32 0.0, %v3864
        %v3866 = vpop.f32.mrf.mxu0
        %3867 = vmatprep.mubr.bf16.mxu0 0
        %3868 = vmatmul.mubr.bf16.gmra.mxu0 %v3774
        %v3869 = vpop.f32.mrf.mxu0
        %v3870 = vadd.f32 0.0, %v3869
        %v3871 = vpop.f32.mrf.mxu0
        %v3872 = vpop.f32.mrf.mxu0
        %v3873 = vadd.f32 0.0, %v3872
        %v3874 = vpop.f32.mrf.mxu0
        %3875 = vdwg.mxu0
        %v3876 = vadd.f32 %v3757, %v3814
        %v3877 = vadd.f32 %v3758, %v3817
        %v3878 = vadd.f32 %v3759, %v3822
        %v3879 = vadd.f32 %v3760, %v3825
        %v3880 = vadd.f32 %v3761, %v3830
        %v3881 = vadd.f32 %v3762, %v3833
        %v3882 = vadd.f32 %v3763, %v3838
        %v3883 = vadd.f32 %v3764, %v3841
        %v3884 = vadd.f32 %v3765, %v3846
        %v3885 = vadd.f32 %v3766, %v3849
        %v3886 = vadd.f32 %v3767, %v3854
        %v3887 = vadd.f32 %v3768, %v3857
        %v3888 = vadd.f32 %v3769, %v3862
        %v3889 = vadd.f32 %v3770, %v3865
        %v3890 = vadd.f32 %v3771, %v3870
        %v3891 = vadd.f32 %v3772, %v3873
        %v3893 = vsel %vm3029, %v2884, 0
        %v3896 = vsel %vm3053, %v3025, 0
        %3898 = vmatprep.subr.bf16.mxu0 0
        %3899 = vmatpush1.bf16.msra.mxu0 0
        %3900 = vmatprep.subr.bf16.mxu0 0
        %3901 = vmatpush1.bf16.msra.mxu0 0
        %3902 = vmatprep.subr.bf16.mxu0 0
        %3903 = vmatpush1.bf16.msra.mxu0 0
        %3904 = vmatprep.subr.bf16.mxu0 0
        %3905 = vmatpush1.bf16.msra.mxu0 0
        %3906 = vmatprep.subr.bf16.mxu0 0
        %3907 = vmatpush1.bf16.msra.mxu0 0
        %3908 = vmatprep.subr.bf16.mxu0 0
        %3909 = vmatpush1.bf16.msra.mxu0 0
        %3910 = vmatprep.subr.bf16.mxu0 0
        %3911 = vmatpush1.bf16.msra.mxu0 0
        %3912 = vmatprep.subr.bf16.mxu0 0
        %3913 = vmatpush1.bf16.msra.mxu0 %v3896
        %3914 = vmatprep.subr.bf16.mxu0 0
        %3915 = vmatpush2.bf16.msra.mxu0 0
        %3916 = vmatprep.subr.bf16.mxu0 0
        %3917 = vmatpush2.bf16.msra.mxu0 0
        %3918 = vmatprep.subr.bf16.mxu0 0
        %3919 = vmatpush2.bf16.msra.mxu0 0
        %3920 = vmatprep.subr.bf16.mxu0 0
        %3921 = vmatpush2.bf16.msra.mxu0 0
        %3922 = vmatprep.subr.bf16.mxu0 0
        %3923 = vmatpush2.bf16.msra.mxu0 0
        %3924 = vmatprep.subr.bf16.mxu0 0
        %3925 = vmatpush2.bf16.msra.mxu0 0
        %3926 = vmatprep.subr.bf16.mxu0 0
        %3927 = vmatpush2.bf16.msra.mxu0 0
        %3928 = vmatprep.subr.bf16.mxu0 0
        %3929 = vmatpush2.bf16.msra.mxu0 0
        %3930 = vmatprep.mubr.bf16.mxu0 0
        %3931 = vmatmul.mubr.bf16.gmra.mxu0 %v3036
        %v3932 = vpop.f32.mrf.mxu0
        %v3933 = vadd.f32 0.0, %v3932
        %v3934 = vpop.f32.mrf.mxu0
        %v3935 = vpop.f32.mrf.mxu0
        %v3936 = vadd.f32 0.0, %v3935
        %v3937 = vpop.f32.mrf.mxu0
        %3938 = vmatprep.mubr.bf16.mxu0 0
        %3939 = vmatmul.mubr.bf16.gmra.mxu0 %v3039
        %v3940 = vpop.f32.mrf.mxu0
        %v3941 = vadd.f32 0.0, %v3940
        %v3942 = vpop.f32.mrf.mxu0
        %v3943 = vpop.f32.mrf.mxu0
        %v3944 = vadd.f32 0.0, %v3943
        %v3945 = vpop.f32.mrf.mxu0
        %3946 = vmatprep.mubr.bf16.mxu0 0
        %3947 = vmatmul.mubr.bf16.gmra.mxu0 %v3042
        %v3948 = vpop.f32.mrf.mxu0
        %v3949 = vadd.f32 0.0, %v3948
        %v3950 = vpop.f32.mrf.mxu0
        %v3951 = vpop.f32.mrf.mxu0
        %v3952 = vadd.f32 0.0, %v3951
        %v3953 = vpop.f32.mrf.mxu0
        %3954 = vmatprep.mubr.bf16.mxu0 0
        %3955 = vmatmul.mubr.bf16.gmra.mxu0 %v3045
        %v3956 = vpop.f32.mrf.mxu0
        %v3957 = vadd.f32 0.0, %v3956
        %v3958 = vpop.f32.mrf.mxu0
        %v3959 = vpop.f32.mrf.mxu0
        %v3960 = vadd.f32 0.0, %v3959
        %v3961 = vpop.f32.mrf.mxu0
        %3962 = vmatprep.mubr.bf16.mxu0 0
        %3963 = vmatmul.mubr.bf16.gmra.mxu0 %v3048
        %v3964 = vpop.f32.mrf.mxu0
        %v3965 = vadd.f32 0.0, %v3964
        %v3966 = vpop.f32.mrf.mxu0
        %v3967 = vpop.f32.mrf.mxu0
        %v3968 = vadd.f32 0.0, %v3967
        %v3969 = vpop.f32.mrf.mxu0
        %3970 = vmatprep.mubr.bf16.mxu0 0
        %3971 = vmatmul.mubr.bf16.gmra.mxu0 %v3051
        %v3972 = vpop.f32.mrf.mxu0
        %v3973 = vadd.f32 0.0, %v3972
        %v3974 = vpop.f32.mrf.mxu0
        %v3975 = vpop.f32.mrf.mxu0
        %v3976 = vadd.f32 0.0, %v3975
        %v3977 = vpop.f32.mrf.mxu0
        %3978 = vmatprep.mubr.bf16.mxu0 0
        %3979 = vmatmul.mubr.bf16.gmra.mxu0 %v3536
        %v3980 = vpop.f32.mrf.mxu0
        %v3981 = vadd.f32 0.0, %v3980
        %v3982 = vpop.f32.mrf.mxu0
        %v3983 = vpop.f32.mrf.mxu0
        %v3984 = vadd.f32 0.0, %v3983
        %v3985 = vpop.f32.mrf.mxu0
        %3986 = vmatprep.mubr.bf16.mxu0 0
        %3987 = vmatmul.mubr.bf16.gmra.mxu0 %v3893
        %v3988 = vpop.f32.mrf.mxu0
        %v3989 = vadd.f32 0.0, %v3988
        %v3990 = vpop.f32.mrf.mxu0
        %v3991 = vpop.f32.mrf.mxu0
        %v3992 = vadd.f32 0.0, %v3991
        %v3993 = vpop.f32.mrf.mxu0
        %3994 = vdwg.mxu0
        %v3995 = vadd.f32 %v3876, %v3933
        %v3996 = vadd.f32 %v3877, %v3936
        %v3997 = vadd.f32 %v3878, %v3941
        %v3998 = vadd.f32 %v3879, %v3944
        %v3999 = vadd.f32 %v3880, %v3949
        %v4000 = vadd.f32 %v3881, %v3952
        %v4001 = vadd.f32 %v3882, %v3957
        %v4002 = vadd.f32 %v3883, %v3960
        %v4003 = vadd.f32 %v3884, %v3965
        %v4004 = vadd.f32 %v3885, %v3968
        %v4005 = vadd.f32 %v3886, %v3973
        %v4006 = vadd.f32 %v3887, %v3976
        %v4007 = vadd.f32 %v3888, %v3981
        %v4008 = vadd.f32 %v3889, %v3984
        %v4009 = vadd.f32 %v3890, %v3989
        %v4010 = vadd.f32 %v3891, %v3992
        %v4012 = vsel %vm3029, %v2989, 0
        %v4015 = vsel %vm3053, %v3027, 0
        %4017 = vmatprep.subr.bf16.mxu0 0
        %4018 = vmatpush1.bf16.msra.mxu0 0
        %4019 = vmatprep.subr.bf16.mxu0 0
        %4020 = vmatpush1.bf16.msra.mxu0 0
        %4021 = vmatprep.subr.bf16.mxu0 0
        %4022 = vmatpush1.bf16.msra.mxu0 0
        %4023 = vmatprep.subr.bf16.mxu0 0
        %4024 = vmatpush1.bf16.msra.mxu0 0
        %4025 = vmatprep.subr.bf16.mxu0 0
        %4026 = vmatpush1.bf16.msra.mxu0 0
        %4027 = vmatprep.subr.bf16.mxu0 0
        %4028 = vmatpush1.bf16.msra.mxu0 0
        %4029 = vmatprep.subr.bf16.mxu0 0
        %4030 = vmatpush1.bf16.msra.mxu0 0
        %4031 = vmatprep.subr.bf16.mxu0 0
        %4032 = vmatpush1.bf16.msra.mxu0 %v4015
        %4033 = vmatprep.subr.bf16.mxu0 0
        %4034 = vmatpush2.bf16.msra.mxu0 0
        %4035 = vmatprep.subr.bf16.mxu0 0
        %4036 = vmatpush2.bf16.msra.mxu0 0
        %4037 = vmatprep.subr.bf16.mxu0 0
        %4038 = vmatpush2.bf16.msra.mxu0 0
        %4039 = vmatprep.subr.bf16.mxu0 0
        %4040 = vmatpush2.bf16.msra.mxu0 0
        %4041 = vmatprep.subr.bf16.mxu0 0
        %4042 = vmatpush2.bf16.msra.mxu0 0
        %4043 = vmatprep.subr.bf16.mxu0 0
        %4044 = vmatpush2.bf16.msra.mxu0 0
        %4045 = vmatprep.subr.bf16.mxu0 0
        %4046 = vmatpush2.bf16.msra.mxu0 0
        %4047 = vmatprep.subr.bf16.mxu0 0
        %4048 = vmatpush2.bf16.msra.mxu0 0
        %4049 = vmatprep.mubr.bf16.mxu0 0
        %4050 = vmatmul.mubr.bf16.gmra.mxu0 %v3283
        %v4051 = vpop.f32.mrf.mxu0
        %v4052 = vadd.f32 0.0, %v4051
        %v4053 = vpop.f32.mrf.mxu0
        %v4054 = vpop.f32.mrf.mxu0
        %v4055 = vadd.f32 0.0, %v4054
        %v4056 = vpop.f32.mrf.mxu0
        %4057 = vmatprep.mubr.bf16.mxu0 0
        %4058 = vmatmul.mubr.bf16.gmra.mxu0 %v3286
        %v4059 = vpop.f32.mrf.mxu0
        %v4060 = vadd.f32 0.0, %v4059
        %v4061 = vpop.f32.mrf.mxu0
        %v4062 = vpop.f32.mrf.mxu0
        %v4063 = vadd.f32 0.0, %v4062
        %v4064 = vpop.f32.mrf.mxu0
        %4065 = vmatprep.mubr.bf16.mxu0 0
        %4066 = vmatmul.mubr.bf16.gmra.mxu0 %v3289
        %v4067 = vpop.f32.mrf.mxu0
        %v4068 = vadd.f32 0.0, %v4067
        %v4069 = vpop.f32.mrf.mxu0
        %v4070 = vpop.f32.mrf.mxu0
        %v4071 = vadd.f32 0.0, %v4070
        %v4072 = vpop.f32.mrf.mxu0
        %4073 = vmatprep.mubr.bf16.mxu0 0
        %4074 = vmatmul.mubr.bf16.gmra.mxu0 %v3292
        %v4075 = vpop.f32.mrf.mxu0
        %v4076 = vadd.f32 0.0, %v4075
        %v4077 = vpop.f32.mrf.mxu0
        %v4078 = vpop.f32.mrf.mxu0
        %v4079 = vadd.f32 0.0, %v4078
        %v4080 = vpop.f32.mrf.mxu0
        %4081 = vmatprep.mubr.bf16.mxu0 0
        %4082 = vmatmul.mubr.bf16.gmra.mxu0 %v3295
        %v4083 = vpop.f32.mrf.mxu0
        %v4084 = vadd.f32 0.0, %v4083
        %v4085 = vpop.f32.mrf.mxu0
        %v4086 = vpop.f32.mrf.mxu0
        %v4087 = vadd.f32 0.0, %v4086
        %v4088 = vpop.f32.mrf.mxu0
        %4089 = vmatprep.mubr.bf16.mxu0 0
        %4090 = vmatmul.mubr.bf16.gmra.mxu0 %v3298
        %v4091 = vpop.f32.mrf.mxu0
        %v4092 = vadd.f32 0.0, %v4091
        %v4093 = vpop.f32.mrf.mxu0
        %v4094 = vpop.f32.mrf.mxu0
        %v4095 = vadd.f32 0.0, %v4094
        %v4096 = vpop.f32.mrf.mxu0
        %4097 = vmatprep.mubr.bf16.mxu0 0
        %4098 = vmatmul.mubr.bf16.gmra.mxu0 %v3655
        %v4099 = vpop.f32.mrf.mxu0
        %v4100 = vadd.f32 0.0, %v4099
        %v4101 = vpop.f32.mrf.mxu0
        %v4102 = vpop.f32.mrf.mxu0
        %v4103 = vadd.f32 0.0, %v4102
        %v4104 = vpop.f32.mrf.mxu0
        %4105 = vmatprep.mubr.bf16.mxu0 0
        %4106 = vmatmul.mubr.bf16.gmra.mxu0 %v4012
        %v4107 = vpop.f32.mrf.mxu0
        %v4108 = vadd.f32 0.0, %v4107
        %v4109 = vpop.f32.mrf.mxu0
        %v4110 = vpop.f32.mrf.mxu0
        %v4111 = vadd.f32 0.0, %v4110
        %v4112 = vpop.f32.mrf.mxu0
        %4113 = vdwg.mxu0
        %v4114 = vadd.f32 %v3995, %v4052
        %v4115 = vadd.f32 %v3996, %v4055
        %v4116 = vadd.f32 %v3997, %v4060
        %v4117 = vadd.f32 %v3998, %v4063
        %v4118 = vadd.f32 %v3999, %v4068
        %v4119 = vadd.f32 %v4000, %v4071
        %v4120 = vadd.f32 %v4001, %v4076
        %v4121 = vadd.f32 %v4002, %v4079
        %v4122 = vadd.f32 %v4003, %v4084
        %v4123 = vadd.f32 %v4004, %v4087
        %v4124 = vadd.f32 %v4005, %v4092
        %v4125 = vadd.f32 %v4006, %v4095
        %v4126 = vadd.f32 %v4007, %v4100
        %v4127 = vadd.f32 %v4008, %v4103
        %v4128 = vadd.f32 %v4009, %v4108
        %v4129 = vadd.f32 %v4010, %v4111
        %v4131 = vlaneseq
        %v4132 = vshrl.u32 %v4131, 7
        %v4133 = vsub.s32 0, %v4132
        %v4134 = vrot.slane %v3028, %v4133
        %v4136 = vadd.f32 %v4114, %v4134
        %v4137 = vadd.f32 %v4115, %v4134
        %v4138 = vadd.f32 %v4116, %v4134
        %v4139 = vadd.f32 %v4117, %v4134
        %v4140 = vadd.f32 %v4118, %v4134
        %v4141 = vadd.f32 %v4119, %v4134
        %v4142 = vadd.f32 %v4120, %v4134
        %v4143 = vadd.f32 %v4121, %v4134
        %v4144 = vadd.f32 %v4122, %v4134
        %v4145 = vadd.f32 %v4123, %v4134
        %v4146 = vadd.f32 %v4124, %v4134
        %v4147 = vadd.f32 %v4125, %v4134
        %v4148 = vadd.f32 %v4126, %v4134
        %v4149 = vadd.f32 %v4127, %v4134
        %v4150 = vadd.f32 %v4128, %v4134
        %v4151 = vadd.f32 %v4129, %v4134
        %v4152 = vmul.f32 %v4136, %v399
        %v4153 = vmul.f32 %v4137, %v399
        %v4154 = vmul.f32 %v4138, %v399
        %v4155 = vmul.f32 %v4139, %v399
        %v4156 = vmul.f32 %v4140, %v399
        %v4157 = vmul.f32 %v4141, %v399
        %v4158 = vmul.f32 %v4142, %v399
        %v4159 = vmul.f32 %v4143, %v399
        %v4160 = vmul.f32 %v4144, %v399
        %v4161 = vmul.f32 %v4145, %v399
        %v4162 = vmul.f32 %v4146, %v399
        %v4163 = vmul.f32 %v4147, %v399
        %v4164 = vmul.f32 %v4148, %v399
        %v4165 = vmul.f32 %v4149, %v399
        %v4166 = vmul.f32 %v4150, %v399
        %v4167 = vmul.f32 %v4151, %v399
        %v4168 = vtanh.pop %v4152
        %v4169 = vtanh.pop %v4153
        %v4170 = vtanh.pop %v4154
        %v4171 = vtanh.pop %v4155
        %v4172 = vtanh.pop %v4156
        %v4173 = vtanh.pop %v4157
        %v4174 = vtanh.pop %v4158
        %v4175 = vtanh.pop %v4159
        %v4176 = vtanh.pop %v4160
        %v4177 = vtanh.pop %v4161
        %v4178 = vtanh.pop %v4162
        %v4179 = vtanh.pop %v4163
        %v4180 = vtanh.pop %v4164
        %v4181 = vtanh.pop %v4165
        %v4182 = vtanh.pop %v4166
        %v4183 = vtanh.pop %v4167
        %v4184 = vmul.f32 %v4168, %v399
        %v4185 = vmul.f32 %v4169, %v399
        %v4186 = vmul.f32 %v4170, %v399
        %v4187 = vmul.f32 %v4171, %v399
        %v4188 = vmul.f32 %v4172, %v399
        %v4189 = vmul.f32 %v4173, %v399
        %v4190 = vmul.f32 %v4174, %v399
        %v4191 = vmul.f32 %v4175, %v399
        %v4192 = vmul.f32 %v4176, %v399
        %v4193 = vmul.f32 %v4177, %v399
        %v4194 = vmul.f32 %v4178, %v399
        %v4195 = vmul.f32 %v4179, %v399
        %v4196 = vmul.f32 %v4180, %v399
        %v4197 = vmul.f32 %v4181, %v399
        %v4198 = vmul.f32 %v4182, %v399
        %v4199 = vmul.f32 %v4183, %v399
        %v4200 = vadd.f32 %v4184, %v400
        %v4201 = vadd.f32 %v4185, %v400
        %v4202 = vadd.f32 %v4186, %v400
        %v4203 = vadd.f32 %v4187, %v400
        %v4204 = vadd.f32 %v4188, %v400
        %v4205 = vadd.f32 %v4189, %v400
        %v4206 = vadd.f32 %v4190, %v400
        %v4207 = vadd.f32 %v4191, %v400
        %v4208 = vadd.f32 %v4192, %v400
        %v4209 = vadd.f32 %v4193, %v400
        %v4210 = vadd.f32 %v4194, %v400
        %v4211 = vadd.f32 %v4195, %v400
        %v4212 = vadd.f32 %v4196, %v400
        %v4213 = vadd.f32 %v4197, %v400
        %v4214 = vadd.f32 %v4198, %v400
        %v4215 = vadd.f32 %v4199, %v400
        %v4216 = vld [vmem:[%s342] sm:$0xff]
        %v4217 = vld [vmem:[%s342 + $0x8] sm:$0xff]
        %v4218 = vld [vmem:[%s342 + $0x10] sm:$0xff]
        %v4219 = vld [vmem:[%s342 + $0x18] sm:$0xff]
        %v4220 = vld [vmem:[%s342 + $0x20] sm:$0xff]
        %v4221 = vld [vmem:[%s342 + $0x28] sm:$0xff]
        %v4222 = vld [vmem:[%s342 + $0x30] sm:$0xff]
        %v4223 = vld [vmem:[%s342 + $0x38] sm:$0xff]
        %v4224 = vld [vmem:[%s342 + $0x40] sm:$0xff]
        %v4225 = vld [vmem:[%s342 + $0x48] sm:$0xff]
        %v4226 = vld [vmem:[%s342 + $0x50] sm:$0xff]
        %v4227 = vld [vmem:[%s342 + $0x58] sm:$0xff]
        %v4228 = vld [vmem:[%s342 + $0x60] sm:$0xff]
        %v4229 = vld [vmem:[%s342 + $0x68] sm:$0xff]
        %v4230 = vld [vmem:[%s342 + $0x70] sm:$0xff]
        %v4231 = vld [vmem:[%s342 + $0x78] sm:$0xff]
        %v4232 = vmul.f32 %v4200, %v4216
        %v4233 = vmul.f32 %v4201, %v4217
        %v4234 = vmul.f32 %v4202, %v4218
        %v4235 = vmul.f32 %v4203, %v4219
        %v4236 = vmul.f32 %v4204, %v4220
        %v4237 = vmul.f32 %v4205, %v4221
        %v4238 = vmul.f32 %v4206, %v4222
        %v4239 = vmul.f32 %v4207, %v4223
        %v4240 = vmul.f32 %v4208, %v4224
        %v4241 = vmul.f32 %v4209, %v4225
        %v4242 = vmul.f32 %v4210, %v4226
        %v4243 = vmul.f32 %v4211, %v4227
        %v4244 = vmul.f32 %v4212, %v4228
        %v4245 = vmul.f32 %v4213, %v4229
        %v4246 = vmul.f32 %v4214, %v4230
        %v4247 = vmul.f32 %v4215, %v4231
        %4264 = vrot.lane.b32.xlu0 %v4200, 64
        %v4265 = vpop.permute.xlu0 %4264
        %4266 = vrot.lane.b32.xlu0 %v4201, 64
        %v4267 = vpop.permute.xlu0 %4266
        %4268 = vrot.lane.b32.xlu0 %v4202, 64
        %v4269 = vpop.permute.xlu0 %4268
        %4270 = vrot.lane.b32.xlu0 %v4203, 64
        %v4271 = vpop.permute.xlu0 %4270
        %4272 = vrot.lane.b32.xlu0 %v4204, 64
        %v4273 = vpop.permute.xlu0 %4272
        %4274 = vrot.lane.b32.xlu0 %v4205, 64
        %v4275 = vpop.permute.xlu0 %4274
        %4276 = vrot.lane.b32.xlu0 %v4206, 64
        %v4277 = vpop.permute.xlu0 %4276
        %4278 = vrot.lane.b32.xlu0 %v4207, 64
        %v4279 = vpop.permute.xlu0 %4278
        %4280 = vrot.lane.b32.xlu0 %v4208, 64
        %v4281 = vpop.permute.xlu0 %4280
        %4282 = vrot.lane.b32.xlu0 %v4209, 64
        %v4283 = vpop.permute.xlu0 %4282
        %4284 = vrot.lane.b32.xlu0 %v4210, 64
        %v4285 = vpop.permute.xlu0 %4284
        %4286 = vrot.lane.b32.xlu0 %v4211, 64
        %v4287 = vpop.permute.xlu0 %4286
        %4288 = vrot.lane.b32.xlu0 %v4212, 64
        %v4289 = vpop.permute.xlu0 %4288
        %4290 = vrot.lane.b32.xlu0 %v4213, 64
        %v4291 = vpop.permute.xlu0 %4290
        %4292 = vrot.lane.b32.xlu0 %v4214, 64
        %v4293 = vpop.permute.xlu0 %4292
        %4294 = vrot.lane.b32.xlu0 %v4215, 64
        %v4295 = vpop.permute.xlu0 %4294
        %v4312 = vmul.f32 %v4200, %v4265
        %v4313 = vmul.f32 %v4201, %v4267
        %v4314 = vmul.f32 %v4202, %v4269
        %v4315 = vmul.f32 %v4203, %v4271
        %v4316 = vmul.f32 %v4204, %v4273
        %v4317 = vmul.f32 %v4205, %v4275
        %v4318 = vmul.f32 %v4206, %v4277
        %v4319 = vmul.f32 %v4207, %v4279
        %v4320 = vmul.f32 %v4208, %v4281
        %v4321 = vmul.f32 %v4209, %v4283
        %v4322 = vmul.f32 %v4210, %v4285
        %v4323 = vmul.f32 %v4211, %v4287
        %v4324 = vmul.f32 %v4212, %v4289
        %v4325 = vmul.f32 %v4213, %v4291
        %v4326 = vmul.f32 %v4214, %v4293
        %v4327 = vmul.f32 %v4215, %v4295
        %4344 = vrot.lane.b32.xlu0 %v4312, 96
        %v4345 = vpop.permute.xlu0 %4344
        %4346 = vrot.lane.b32.xlu0 %v4313, 96
        %v4347 = vpop.permute.xlu0 %4346
        %4348 = vrot.lane.b32.xlu0 %v4314, 96
        %v4349 = vpop.permute.xlu0 %4348
        %4350 = vrot.lane.b32.xlu0 %v4315, 96
        %v4351 = vpop.permute.xlu0 %4350
        %4352 = vrot.lane.b32.xlu0 %v4316, 96
        %v4353 = vpop.permute.xlu0 %4352
        %4354 = vrot.lane.b32.xlu0 %v4317, 96
        %v4355 = vpop.permute.xlu0 %4354
        %4356 = vrot.lane.b32.xlu0 %v4318, 96
        %v4357 = vpop.permute.xlu0 %4356
        %4358 = vrot.lane.b32.xlu0 %v4319, 96
        %v4359 = vpop.permute.xlu0 %4358
        %4360 = vrot.lane.b32.xlu0 %v4320, 96
        %v4361 = vpop.permute.xlu0 %4360
        %4362 = vrot.lane.b32.xlu0 %v4321, 96
        %v4363 = vpop.permute.xlu0 %4362
        %4364 = vrot.lane.b32.xlu0 %v4322, 96
        %v4365 = vpop.permute.xlu0 %4364
        %4366 = vrot.lane.b32.xlu0 %v4323, 96
        %v4367 = vpop.permute.xlu0 %4366
        %4368 = vrot.lane.b32.xlu0 %v4324, 96
        %v4369 = vpop.permute.xlu0 %4368
        %4370 = vrot.lane.b32.xlu0 %v4325, 96
        %v4371 = vpop.permute.xlu0 %4370
        %4372 = vrot.lane.b32.xlu0 %v4326, 96
        %v4373 = vpop.permute.xlu0 %4372
        %4374 = vrot.lane.b32.xlu0 %v4327, 96
        %v4375 = vpop.permute.xlu0 %4374
        %v4392 = vadd.f32 %v4232, %v4345
        %v4393 = vadd.f32 %v4233, %v4347
        %v4394 = vadd.f32 %v4234, %v4349
        %v4395 = vadd.f32 %v4235, %v4351
        %v4396 = vadd.f32 %v4236, %v4353
        %v4397 = vadd.f32 %v4237, %v4355
        %v4398 = vadd.f32 %v4238, %v4357
        %v4399 = vadd.f32 %v4239, %v4359
        %v4400 = vadd.f32 %v4240, %v4361
        %v4401 = vadd.f32 %v4241, %v4363
        %v4402 = vadd.f32 %v4242, %v4365
        %v4403 = vadd.f32 %v4243, %v4367
        %v4404 = vadd.f32 %v4244, %v4369
        %v4405 = vadd.f32 %v4245, %v4371
        %v4406 = vadd.f32 %v4246, %v4373
        %v4407 = vadd.f32 %v4247, %v4375
        %v4408 = vtanh.pop %v4392
        %v4409 = vtanh.pop %v4393
        %v4410 = vtanh.pop %v4394
        %v4411 = vtanh.pop %v4395
        %v4412 = vtanh.pop %v4396
        %v4413 = vtanh.pop %v4397
        %v4414 = vtanh.pop %v4398
        %v4415 = vtanh.pop %v4399
        %v4416 = vtanh.pop %v4400
        %v4417 = vtanh.pop %v4401
        %v4418 = vtanh.pop %v4402
        %v4419 = vtanh.pop %v4403
        %v4420 = vtanh.pop %v4404
        %v4421 = vtanh.pop %v4405
        %v4422 = vtanh.pop %v4406
        %v4423 = vtanh.pop %v4407
        %4440 = vrot.lane.b32.xlu0 %v4408, 64
        %v4441 = vpop.permute.xlu0 %4440
        %4442 = vrot.lane.b32.xlu0 %v4409, 64
        %v4443 = vpop.permute.xlu0 %4442
        %4444 = vrot.lane.b32.xlu0 %v4410, 64
        %v4445 = vpop.permute.xlu0 %4444
        %4446 = vrot.lane.b32.xlu0 %v4411, 64
        %v4447 = vpop.permute.xlu0 %4446
        %4448 = vrot.lane.b32.xlu0 %v4412, 64
        %v4449 = vpop.permute.xlu0 %4448
        %4450 = vrot.lane.b32.xlu0 %v4413, 64
        %v4451 = vpop.permute.xlu0 %4450
        %4452 = vrot.lane.b32.xlu0 %v4414, 64
        %v4453 = vpop.permute.xlu0 %4452
        %4454 = vrot.lane.b32.xlu0 %v4415, 64
        %v4455 = vpop.permute.xlu0 %4454
        %4456 = vrot.lane.b32.xlu0 %v4416, 64
        %v4457 = vpop.permute.xlu0 %4456
        %4458 = vrot.lane.b32.xlu0 %v4417, 64
        %v4459 = vpop.permute.xlu0 %4458
        %4460 = vrot.lane.b32.xlu0 %v4418, 64
        %v4461 = vpop.permute.xlu0 %4460
        %4462 = vrot.lane.b32.xlu0 %v4419, 64
        %v4463 = vpop.permute.xlu0 %4462
        %4464 = vrot.lane.b32.xlu0 %v4420, 64
        %v4465 = vpop.permute.xlu0 %4464
        %4466 = vrot.lane.b32.xlu0 %v4421, 64
        %v4467 = vpop.permute.xlu0 %4466
        %4468 = vrot.lane.b32.xlu0 %v4422, 64
        %v4469 = vpop.permute.xlu0 %4468
        %4470 = vrot.lane.b32.xlu0 %v4423, 64
        %v4471 = vpop.permute.xlu0 %4470
        %v4488 = vmul.f32 %v4200, %v4441
        %v4489 = vmul.f32 %v4201, %v4443
        %v4490 = vmul.f32 %v4202, %v4445
        %v4491 = vmul.f32 %v4203, %v4447
        %v4492 = vmul.f32 %v4204, %v4449
        %v4493 = vmul.f32 %v4205, %v4451
        %v4494 = vmul.f32 %v4206, %v4453
        %v4495 = vmul.f32 %v4207, %v4455
        %v4496 = vmul.f32 %v4208, %v4457
        %v4497 = vmul.f32 %v4209, %v4459
        %v4498 = vmul.f32 %v4210, %v4461
        %v4499 = vmul.f32 %v4211, %v4463
        %v4500 = vmul.f32 %v4212, %v4465
        %v4501 = vmul.f32 %v4213, %v4467
        %v4502 = vmul.f32 %v4214, %v4469
        %v4503 = vmul.f32 %v4215, %v4471
        %4504 = vst.msk [vmem:[%s389] sm:$0xff] %vm742, %v4392
        %4505 = vst.msk [vmem:[%s389 + $0x8] sm:$0xff] %vm742, %v4393
        %4506 = vst.msk [vmem:[%s389 + $0x10] sm:$0xff] %vm742, %v4394
        %4507 = vst.msk [vmem:[%s389 + $0x18] sm:$0xff] %vm742, %v4395
        %4508 = vst.msk [vmem:[%s389 + $0x20] sm:$0xff] %vm742, %v4396
        %4509 = vst.msk [vmem:[%s389 + $0x28] sm:$0xff] %vm742, %v4397
        %4510 = vst.msk [vmem:[%s389 + $0x30] sm:$0xff] %vm742, %v4398
        %4511 = vst.msk [vmem:[%s389 + $0x38] sm:$0xff] %vm742, %v4399
        %4512 = vst.msk [vmem:[%s389 + $0x40] sm:$0xff] %vm742, %v4400
        %4513 = vst.msk [vmem:[%s389 + $0x48] sm:$0xff] %vm742, %v4401
        %4514 = vst.msk [vmem:[%s389 + $0x50] sm:$0xff] %vm742, %v4402
        %4515 = vst.msk [vmem:[%s389 + $0x58] sm:$0xff] %vm742, %v4403
        %4516 = vst.msk [vmem:[%s389 + $0x60] sm:$0xff] %vm742, %v4404
        %4517 = vst.msk [vmem:[%s389 + $0x68] sm:$0xff] %vm742, %v4405
        %4518 = vst.msk [vmem:[%s389 + $0x70] sm:$0xff] %vm742, %v4406
        %4519 = vst.msk [vmem:[%s389 + $0x78] sm:$0xff] %vm742, %v4407
        %4536 = vrot.lane.b32.xlu0 %v4488, 64
        %v4537 = vpop.permute.xlu0 %4536
        %4538 = vrot.lane.b32.xlu0 %v4489, 64
        %v4539 = vpop.permute.xlu0 %4538
        %4540 = vrot.lane.b32.xlu0 %v4490, 64
        %v4541 = vpop.permute.xlu0 %4540
        %4542 = vrot.lane.b32.xlu0 %v4491, 64
        %v4543 = vpop.permute.xlu0 %4542
        %4544 = vrot.lane.b32.xlu0 %v4492, 64
        %v4545 = vpop.permute.xlu0 %4544
        %4546 = vrot.lane.b32.xlu0 %v4493, 64
        %v4547 = vpop.permute.xlu0 %4546
        %4548 = vrot.lane.b32.xlu0 %v4494, 64
        %v4549 = vpop.permute.xlu0 %4548
        %4550 = vrot.lane.b32.xlu0 %v4495, 64
        %v4551 = vpop.permute.xlu0 %4550
        %4552 = vrot.lane.b32.xlu0 %v4496, 64
        %v4553 = vpop.permute.xlu0 %4552
        %4554 = vrot.lane.b32.xlu0 %v4497, 64
        %v4555 = vpop.permute.xlu0 %4554
        %4556 = vrot.lane.b32.xlu0 %v4498, 64
        %v4557 = vpop.permute.xlu0 %4556
        %4558 = vrot.lane.b32.xlu0 %v4499, 64
        %v4559 = vpop.permute.xlu0 %4558
        %4560 = vrot.lane.b32.xlu0 %v4500, 64
        %v4561 = vpop.permute.xlu0 %4560
        %4562 = vrot.lane.b32.xlu0 %v4501, 64
        %v4563 = vpop.permute.xlu0 %4562
        %4564 = vrot.lane.b32.xlu0 %v4502, 64
        %v4565 = vpop.permute.xlu0 %4564
        %4566 = vrot.lane.b32.xlu0 %v4503, 64
        %v4567 = vpop.permute.xlu0 %4566
        %4584 = vst.msk [vmem:[%s382] sm:$0xff] %vm742, %v4537
        %4585 = vst.msk [vmem:[%s382 + $0x8] sm:$0xff] %vm742, %v4539
        %4586 = vst.msk [vmem:[%s382 + $0x10] sm:$0xff] %vm742, %v4541
        %4587 = vst.msk [vmem:[%s382 + $0x18] sm:$0xff] %vm742, %v4543
        %4588 = vst.msk [vmem:[%s382 + $0x20] sm:$0xff] %vm742, %v4545
        %4589 = vst.msk [vmem:[%s382 + $0x28] sm:$0xff] %vm742, %v4547
        %4590 = vst.msk [vmem:[%s382 + $0x30] sm:$0xff] %vm742, %v4549
        %4591 = vst.msk [vmem:[%s382 + $0x38] sm:$0xff] %vm742, %v4551
        %4592 = vst.msk [vmem:[%s382 + $0x40] sm:$0xff] %vm742, %v4553
        %4593 = vst.msk [vmem:[%s382 + $0x48] sm:$0xff] %vm742, %v4555
        %4594 = vst.msk [vmem:[%s382 + $0x50] sm:$0xff] %vm742, %v4557
        %4595 = vst.msk [vmem:[%s382 + $0x58] sm:$0xff] %vm742, %v4559
        %4596 = vst.msk [vmem:[%s382 + $0x60] sm:$0xff] %vm742, %v4561
        %4597 = vst.msk [vmem:[%s382 + $0x68] sm:$0xff] %vm742, %v4563
        %4598 = vst.msk [vmem:[%s382 + $0x70] sm:$0xff] %vm742, %v4565
        %4599 = vst.msk [vmem:[%s382 + $0x78] sm:$0xff] %vm742, %v4567
        %v4601 = vsel %vm3029, %v2885, 0
        %v4604 = vsel %vm3029, %v2886, 0
        %v4607 = vsel %vm3029, %v2887, 0
        %v4610 = vsel %vm3029, %v2888, 0
        %v4613 = vsel %vm3029, %v2889, 0
        %v4616 = vsel %vm3029, %v2890, 0
        %4618 = vmatprep.subr.bf16.mxu0 0
        %4619 = vmatpush1.bf16.msra.mxu0 0
        %4620 = vmatprep.subr.bf16.mxu0 0
        %4621 = vmatpush1.bf16.msra.mxu0 0
        %4622 = vmatprep.subr.bf16.mxu0 0
        %4623 = vmatpush1.bf16.msra.mxu0 0
        %4624 = vmatprep.subr.bf16.mxu0 0
        %4625 = vmatpush1.bf16.msra.mxu0 0
        %4626 = vmatprep.subr.bf16.mxu0 0
        %4627 = vmatpush1.bf16.msra.mxu0 0
        %4628 = vmatprep.subr.bf16.mxu0 0
        %4629 = vmatpush1.bf16.msra.mxu0 0
        %4630 = vmatprep.subr.bf16.mxu0 0
        %4631 = vmatpush1.bf16.msra.mxu0 0
        %4632 = vmatprep.subr.bf16.mxu0 0
        %4633 = vmatpush1.bf16.msra.mxu0 %v3055
        %4634 = vmatprep.subr.bf16.mxu0 0
        %4635 = vmatpush2.bf16.msra.mxu0 0
        %4636 = vmatprep.subr.bf16.mxu0 0
        %4637 = vmatpush2.bf16.msra.mxu0 0
        %4638 = vmatprep.subr.bf16.mxu0 0
        %4639 = vmatpush2.bf16.msra.mxu0 0
        %4640 = vmatprep.subr.bf16.mxu0 0
        %4641 = vmatpush2.bf16.msra.mxu0 0
        %4642 = vmatprep.subr.bf16.mxu0 0
        %4643 = vmatpush2.bf16.msra.mxu0 0
        %4644 = vmatprep.subr.bf16.mxu0 0
        %4645 = vmatpush2.bf16.msra.mxu0 0
        %4646 = vmatprep.subr.bf16.mxu0 0
        %4647 = vmatpush2.bf16.msra.mxu0 0
        %4648 = vmatprep.subr.bf16.mxu0 0
        %4649 = vmatpush2.bf16.msra.mxu0 0
        %4650 = vmatprep.mubr.bf16.mxu0 0
        %4651 = vmatmul.mubr.bf16.gmra.mxu0 %v3536
        %v4652 = vpop.f32.mrf.mxu0
        %v4653 = vadd.f32 0.0, %v4652
        %v4654 = vpop.f32.mrf.mxu0
        %v4655 = vpop.f32.mrf.mxu0
        %v4656 = vadd.f32 0.0, %v4655
        %v4657 = vpop.f32.mrf.mxu0
        %4658 = vmatprep.mubr.bf16.mxu0 0
        %4659 = vmatmul.mubr.bf16.gmra.mxu0 %v3893
        %v4660 = vpop.f32.mrf.mxu0
        %v4661 = vadd.f32 0.0, %v4660
        %v4662 = vpop.f32.mrf.mxu0
        %v4663 = vpop.f32.mrf.mxu0
        %v4664 = vadd.f32 0.0, %v4663
        %v4665 = vpop.f32.mrf.mxu0
        %4666 = vmatprep.mubr.bf16.mxu0 0
        %4667 = vmatmul.mubr.bf16.gmra.mxu0 %v4601
        %v4668 = vpop.f32.mrf.mxu0
        %v4669 = vadd.f32 0.0, %v4668
        %v4670 = vpop.f32.mrf.mxu0
        %v4671 = vpop.f32.mrf.mxu0
        %v4672 = vadd.f32 0.0, %v4671
        %v4673 = vpop.f32.mrf.mxu0
        %4674 = vmatprep.mubr.bf16.mxu0 0
        %4675 = vmatmul.mubr.bf16.gmra.mxu0 %v4604
        %v4676 = vpop.f32.mrf.mxu0
        %v4677 = vadd.f32 0.0, %v4676
        %v4678 = vpop.f32.mrf.mxu0
        %v4679 = vpop.f32.mrf.mxu0
        %v4680 = vadd.f32 0.0, %v4679
        %v4681 = vpop.f32.mrf.mxu0
        %4682 = vmatprep.mubr.bf16.mxu0 0
        %4683 = vmatmul.mubr.bf16.gmra.mxu0 %v4607
        %v4684 = vpop.f32.mrf.mxu0
        %v4685 = vadd.f32 0.0, %v4684
        %v4686 = vpop.f32.mrf.mxu0
        %v4687 = vpop.f32.mrf.mxu0
        %v4688 = vadd.f32 0.0, %v4687
        %v4689 = vpop.f32.mrf.mxu0
        %4690 = vmatprep.mubr.bf16.mxu0 0
        %4691 = vmatmul.mubr.bf16.gmra.mxu0 %v4610
        %v4692 = vpop.f32.mrf.mxu0
        %v4693 = vadd.f32 0.0, %v4692
        %v4694 = vpop.f32.mrf.mxu0
        %v4695 = vpop.f32.mrf.mxu0
        %v4696 = vadd.f32 0.0, %v4695
        %v4697 = vpop.f32.mrf.mxu0
        %4698 = vmatprep.mubr.bf16.mxu0 0
        %4699 = vmatmul.mubr.bf16.gmra.mxu0 %v4613
        %v4700 = vpop.f32.mrf.mxu0
        %v4701 = vadd.f32 0.0, %v4700
        %v4702 = vpop.f32.mrf.mxu0
        %v4703 = vpop.f32.mrf.mxu0
        %v4704 = vadd.f32 0.0, %v4703
        %v4705 = vpop.f32.mrf.mxu0
        %4706 = vmatprep.mubr.bf16.mxu0 0
        %4707 = vmatmul.mubr.bf16.gmra.mxu0 %v4616
        %v4708 = vpop.f32.mrf.mxu0
        %v4709 = vadd.f32 0.0, %v4708
        %v4710 = vpop.f32.mrf.mxu0
        %v4711 = vpop.f32.mrf.mxu0
        %v4712 = vadd.f32 0.0, %v4711
        %v4713 = vpop.f32.mrf.mxu0
        %4714 = vdwg.mxu0
        %v4716 = vsel %vm3029, %v2870, 0
        %v4719 = vsel %vm3029, %v2871, 0
        %v4722 = vsel %vm3029, %v2872, 0
        %v4725 = vsel %vm3029, %v2873, 0
        %v4728 = vsel %vm3029, %v2874, 0
        %v4731 = vsel %vm3029, %v2875, 0
        %4733 = vmatprep.subr.bf16.mxu0 0
        %4734 = vmatpush1.bf16.msra.mxu0 0
        %4735 = vmatprep.subr.bf16.mxu0 0
        %4736 = vmatpush1.bf16.msra.mxu0 0
        %4737 = vmatprep.subr.bf16.mxu0 0
        %4738 = vmatpush1.bf16.msra.mxu0 0
        %4739 = vmatprep.subr.bf16.mxu0 0
        %4740 = vmatpush1.bf16.msra.mxu0 0
        %4741 = vmatprep.subr.bf16.mxu0 0
        %4742 = vmatpush1.bf16.msra.mxu0 0
        %4743 = vmatprep.subr.bf16.mxu0 0
        %4744 = vmatpush1.bf16.msra.mxu0 0
        %4745 = vmatprep.subr.bf16.mxu0 0
        %4746 = vmatpush1.bf16.msra.mxu0 0
        %4747 = vmatprep.subr.bf16.mxu0 0
        %4748 = vmatpush1.bf16.msra.mxu0 %v3178
        %4749 = vmatprep.subr.bf16.mxu0 0
        %4750 = vmatpush2.bf16.msra.mxu0 0
        %4751 = vmatprep.subr.bf16.mxu0 0
        %4752 = vmatpush2.bf16.msra.mxu0 0
        %4753 = vmatprep.subr.bf16.mxu0 0
        %4754 = vmatpush2.bf16.msra.mxu0 0
        %4755 = vmatprep.subr.bf16.mxu0 0
        %4756 = vmatpush2.bf16.msra.mxu0 0
        %4757 = vmatprep.subr.bf16.mxu0 0
        %4758 = vmatpush2.bf16.msra.mxu0 0
        %4759 = vmatprep.subr.bf16.mxu0 0
        %4760 = vmatpush2.bf16.msra.mxu0 0
        %4761 = vmatprep.subr.bf16.mxu0 0
        %4762 = vmatpush2.bf16.msra.mxu0 0
        %4763 = vmatprep.subr.bf16.mxu0 0
        %4764 = vmatpush2.bf16.msra.mxu0 0
        %4765 = vmatprep.mubr.bf16.mxu0 0
        %4766 = vmatmul.mubr.bf16.gmra.mxu0 %v3417
        %v4767 = vpop.f32.mrf.mxu0
        %v4768 = vadd.f32 %v4653, %v4767
        %v4769 = vpop.f32.mrf.mxu0
        %v4770 = vpop.f32.mrf.mxu0
        %v4771 = vadd.f32 %v4656, %v4770
        %v4772 = vpop.f32.mrf.mxu0
        %4773 = vmatprep.mubr.bf16.mxu0 0
        %4774 = vmatmul.mubr.bf16.gmra.mxu0 %v3774
        %v4775 = vpop.f32.mrf.mxu0
        %v4776 = vadd.f32 %v4661, %v4775
        %v4777 = vpop.f32.mrf.mxu0
        %v4778 = vpop.f32.mrf.mxu0
        %v4779 = vadd.f32 %v4664, %v4778
        %v4780 = vpop.f32.mrf.mxu0
        %4781 = vmatprep.mubr.bf16.mxu0 0
        %4782 = vmatmul.mubr.bf16.gmra.mxu0 %v4716
        %v4783 = vpop.f32.mrf.mxu0
        %v4784 = vadd.f32 %v4669, %v4783
        %v4785 = vpop.f32.mrf.mxu0
        %v4786 = vpop.f32.mrf.mxu0
        %v4787 = vadd.f32 %v4672, %v4786
        %v4788 = vpop.f32.mrf.mxu0
        %4789 = vmatprep.mubr.bf16.mxu0 0
        %4790 = vmatmul.mubr.bf16.gmra.mxu0 %v4719
        %v4791 = vpop.f32.mrf.mxu0
        %v4792 = vadd.f32 %v4677, %v4791
        %v4793 = vpop.f32.mrf.mxu0
        %v4794 = vpop.f32.mrf.mxu0
        %v4795 = vadd.f32 %v4680, %v4794
        %v4796 = vpop.f32.mrf.mxu0
        %4797 = vmatprep.mubr.bf16.mxu0 0
        %4798 = vmatmul.mubr.bf16.gmra.mxu0 %v4722
        %v4799 = vpop.f32.mrf.mxu0
        %v4800 = vadd.f32 %v4685, %v4799
        %v4801 = vpop.f32.mrf.mxu0
        %v4802 = vpop.f32.mrf.mxu0
        %v4803 = vadd.f32 %v4688, %v4802
        %v4804 = vpop.f32.mrf.mxu0
        %4805 = vmatprep.mubr.bf16.mxu0 0
        %4806 = vmatmul.mubr.bf16.gmra.mxu0 %v4725
        %v4807 = vpop.f32.mrf.mxu0
        %v4808 = vadd.f32 %v4693, %v4807
        %v4809 = vpop.f32.mrf.mxu0
        %v4810 = vpop.f32.mrf.mxu0
        %v4811 = vadd.f32 %v4696, %v4810
        %v4812 = vpop.f32.mrf.mxu0
        %4813 = vmatprep.mubr.bf16.mxu0 0
        %4814 = vmatmul.mubr.bf16.gmra.mxu0 %v4728
        %v4815 = vpop.f32.mrf.mxu0
        %v4816 = vadd.f32 %v4701, %v4815
        %v4817 = vpop.f32.mrf.mxu0
        %v4818 = vpop.f32.mrf.mxu0
        %v4819 = vadd.f32 %v4704, %v4818
        %v4820 = vpop.f32.mrf.mxu0
        %4821 = vmatprep.mubr.bf16.mxu0 0
        %4822 = vmatmul.mubr.bf16.gmra.mxu0 %v4731
        %v4823 = vpop.f32.mrf.mxu0
        %v4824 = vadd.f32 %v4709, %v4823
        %v4825 = vpop.f32.mrf.mxu0
        %v4826 = vpop.f32.mrf.mxu0
        %v4827 = vadd.f32 %v4712, %v4826
        %v4828 = vpop.f32.mrf.mxu0
        %4829 = vdwg.mxu0
        %v4831 = vsel %vm3029, %v2990, 0
        %v4834 = vsel %vm3029, %v2991, 0
        %v4837 = vsel %vm3029, %v2992, 0
        %v4840 = vsel %vm3029, %v2993, 0
        %v4843 = vsel %vm3029, %v2994, 0
        %v4846 = vsel %vm3029, %v2995, 0
        %4848 = vmatprep.subr.bf16.mxu0 0
        %4849 = vmatpush1.bf16.msra.mxu0 0
        %4850 = vmatprep.subr.bf16.mxu0 0
        %4851 = vmatpush1.bf16.msra.mxu0 0
        %4852 = vmatprep.subr.bf16.mxu0 0
        %4853 = vmatpush1.bf16.msra.mxu0 0
        %4854 = vmatprep.subr.bf16.mxu0 0
        %4855 = vmatpush1.bf16.msra.mxu0 0
        %4856 = vmatprep.subr.bf16.mxu0 0
        %4857 = vmatpush1.bf16.msra.mxu0 0
        %4858 = vmatprep.subr.bf16.mxu0 0
        %4859 = vmatpush1.bf16.msra.mxu0 0
        %4860 = vmatprep.subr.bf16.mxu0 0
        %4861 = vmatpush1.bf16.msra.mxu0 0
        %4862 = vmatprep.subr.bf16.mxu0 0
        %4863 = vmatpush1.bf16.msra.mxu0 %v3301
        %4864 = vmatprep.subr.bf16.mxu0 0
        %4865 = vmatpush2.bf16.msra.mxu0 0
        %4866 = vmatprep.subr.bf16.mxu0 0
        %4867 = vmatpush2.bf16.msra.mxu0 0
        %4868 = vmatprep.subr.bf16.mxu0 0
        %4869 = vmatpush2.bf16.msra.mxu0 0
        %4870 = vmatprep.subr.bf16.mxu0 0
        %4871 = vmatpush2.bf16.msra.mxu0 0
        %4872 = vmatprep.subr.bf16.mxu0 0
        %4873 = vmatpush2.bf16.msra.mxu0 0
        %4874 = vmatprep.subr.bf16.mxu0 0
        %4875 = vmatpush2.bf16.msra.mxu0 0
        %4876 = vmatprep.subr.bf16.mxu0 0
        %4877 = vmatpush2.bf16.msra.mxu0 0
        %4878 = vmatprep.subr.bf16.mxu0 0
        %4879 = vmatpush2.bf16.msra.mxu0 0
        %4880 = vmatprep.mubr.bf16.mxu0 0
        %4881 = vmatmul.mubr.bf16.gmra.mxu0 %v3655
        %v4882 = vpop.f32.mrf.mxu0
        %v4883 = vadd.f32 0.0, %v4882
        %v4884 = vpop.f32.mrf.mxu0
        %v4885 = vpop.f32.mrf.mxu0
        %v4886 = vadd.f32 0.0, %v4885
        %v4887 = vpop.f32.mrf.mxu0
        %4888 = vmatprep.mubr.bf16.mxu0 0
        %4889 = vmatmul.mubr.bf16.gmra.mxu0 %v4012
        %v4890 = vpop.f32.mrf.mxu0
        %v4891 = vadd.f32 0.0, %v4890
        %v4892 = vpop.f32.mrf.mxu0
        %v4893 = vpop.f32.mrf.mxu0
        %v4894 = vadd.f32 0.0, %v4893
        %v4895 = vpop.f32.mrf.mxu0
        %4896 = vmatprep.mubr.bf16.mxu0 0
        %4897 = vmatmul.mubr.bf16.gmra.mxu0 %v4831
        %v4898 = vpop.f32.mrf.mxu0
        %v4899 = vadd.f32 0.0, %v4898
        %v4900 = vpop.f32.mrf.mxu0
        %v4901 = vpop.f32.mrf.mxu0
        %v4902 = vadd.f32 0.0, %v4901
        %v4903 = vpop.f32.mrf.mxu0
        %4904 = vmatprep.mubr.bf16.mxu0 0
        %4905 = vmatmul.mubr.bf16.gmra.mxu0 %v4834
        %v4906 = vpop.f32.mrf.mxu0
        %v4907 = vadd.f32 0.0, %v4906
        %v4908 = vpop.f32.mrf.mxu0
        %v4909 = vpop.f32.mrf.mxu0
        %v4910 = vadd.f32 0.0, %v4909
        %v4911 = vpop.f32.mrf.mxu0
        %4912 = vmatprep.mubr.bf16.mxu0 0
        %4913 = vmatmul.mubr.bf16.gmra.mxu0 %v4837
        %v4914 = vpop.f32.mrf.mxu0
        %v4915 = vadd.f32 0.0, %v4914
        %v4916 = vpop.f32.mrf.mxu0
        %v4917 = vpop.f32.mrf.mxu0
        %v4918 = vadd.f32 0.0, %v4917
        %v4919 = vpop.f32.mrf.mxu0
        %4920 = vmatprep.mubr.bf16.mxu0 0
        %4921 = vmatmul.mubr.bf16.gmra.mxu0 %v4840
        %v4922 = vpop.f32.mrf.mxu0
        %v4923 = vadd.f32 0.0, %v4922
        %v4924 = vpop.f32.mrf.mxu0
        %v4925 = vpop.f32.mrf.mxu0
        %v4926 = vadd.f32 0.0, %v4925
        %v4927 = vpop.f32.mrf.mxu0
        %4928 = vmatprep.mubr.bf16.mxu0 0
        %4929 = vmatmul.mubr.bf16.gmra.mxu0 %v4843
        %v4930 = vpop.f32.mrf.mxu0
        %v4931 = vadd.f32 0.0, %v4930
        %v4932 = vpop.f32.mrf.mxu0
        %v4933 = vpop.f32.mrf.mxu0
        %v4934 = vadd.f32 0.0, %v4933
        %v4935 = vpop.f32.mrf.mxu0
        %4936 = vmatprep.mubr.bf16.mxu0 0
        %4937 = vmatmul.mubr.bf16.gmra.mxu0 %v4846
        %v4938 = vpop.f32.mrf.mxu0
        %v4939 = vadd.f32 0.0, %v4938
        %v4940 = vpop.f32.mrf.mxu0
        %v4941 = vpop.f32.mrf.mxu0
        %v4942 = vadd.f32 0.0, %v4941
        %v4943 = vpop.f32.mrf.mxu0
        %4944 = vdwg.mxu0
        %v4945 = vadd.f32 %v4768, %v4883
        %v4946 = vadd.f32 %v4771, %v4886
        %v4947 = vadd.f32 %v4776, %v4891
        %v4948 = vadd.f32 %v4779, %v4894
        %v4949 = vadd.f32 %v4784, %v4899
        %v4950 = vadd.f32 %v4787, %v4902
        %v4951 = vadd.f32 %v4792, %v4907
        %v4952 = vadd.f32 %v4795, %v4910
        %v4953 = vadd.f32 %v4800, %v4915
        %v4954 = vadd.f32 %v4803, %v4918
        %v4955 = vadd.f32 %v4808, %v4923
        %v4956 = vadd.f32 %v4811, %v4926
        %v4957 = vadd.f32 %v4816, %v4931
        %v4958 = vadd.f32 %v4819, %v4934
        %v4959 = vadd.f32 %v4824, %v4939
        %v4960 = vadd.f32 %v4827, %v4942
        %v4962 = vsel %vm3029, %v3002, 0
        %4964 = vmatprep.subr.bf16.mxu0 0
        %4965 = vmatpush1.bf16.msra.mxu0 0
        %4966 = vmatprep.subr.bf16.mxu0 0
        %4967 = vmatpush1.bf16.msra.mxu0 0
        %4968 = vmatprep.subr.bf16.mxu0 0
        %4969 = vmatpush1.bf16.msra.mxu0 0
        %4970 = vmatprep.subr.bf16.mxu0 0
        %4971 = vmatpush1.bf16.msra.mxu0 0
        %4972 = vmatprep.subr.bf16.mxu0 0
        %4973 = vmatpush1.bf16.msra.mxu0 0
        %4974 = vmatprep.subr.bf16.mxu0 0
        %4975 = vmatpush1.bf16.msra.mxu0 0
        %4976 = vmatprep.subr.bf16.mxu0 0
        %4977 = vmatpush1.bf16.msra.mxu0 0
        %4978 = vmatprep.subr.bf16.mxu0 0
        %4979 = vmatpush1.bf16.msra.mxu0 %v3420
        %4980 = vmatprep.subr.bf16.mxu0 0
        %4981 = vmatpush2.bf16.msra.mxu0 0
        %4982 = vmatprep.subr.bf16.mxu0 0
        %4983 = vmatpush2.bf16.msra.mxu0 0
        %4984 = vmatprep.subr.bf16.mxu0 0
        %4985 = vmatpush2.bf16.msra.mxu0 0
        %4986 = vmatprep.subr.bf16.mxu0 0
        %4987 = vmatpush2.bf16.msra.mxu0 0
        %4988 = vmatprep.subr.bf16.mxu0 0
        %4989 = vmatpush2.bf16.msra.mxu0 0
        %4990 = vmatprep.subr.bf16.mxu0 0
        %4991 = vmatpush2.bf16.msra.mxu0 0
        %4992 = vmatprep.subr.bf16.mxu0 0
        %4993 = vmatpush2.bf16.msra.mxu0 0
        %4994 = vmatprep.subr.bf16.mxu0 0
        %4995 = vmatpush2.bf16.msra.mxu0 0
        %4996 = vmatprep.mubr.bf16.mxu0 0
        %4997 = vmatmul.mubr.bf16.gmra.mxu0 %v3774
        %v4998 = vpop.f32.mrf.mxu0
        %v4999 = vadd.f32 0.0, %v4998
        %v5000 = vpop.f32.mrf.mxu0
        %v5001 = vpop.f32.mrf.mxu0
        %v5002 = vadd.f32 0.0, %v5001
        %v5003 = vpop.f32.mrf.mxu0
        %5004 = vmatprep.mubr.bf16.mxu0 0
        %5005 = vmatmul.mubr.bf16.gmra.mxu0 %v4716
        %v5006 = vpop.f32.mrf.mxu0
        %v5007 = vadd.f32 0.0, %v5006
        %v5008 = vpop.f32.mrf.mxu0
        %v5009 = vpop.f32.mrf.mxu0
        %v5010 = vadd.f32 0.0, %v5009
        %v5011 = vpop.f32.mrf.mxu0
        %5012 = vmatprep.mubr.bf16.mxu0 0
        %5013 = vmatmul.mubr.bf16.gmra.mxu0 %v4719
        %v5014 = vpop.f32.mrf.mxu0
        %v5015 = vadd.f32 0.0, %v5014
        %v5016 = vpop.f32.mrf.mxu0
        %v5017 = vpop.f32.mrf.mxu0
        %v5018 = vadd.f32 0.0, %v5017
        %v5019 = vpop.f32.mrf.mxu0
        %5020 = vmatprep.mubr.bf16.mxu0 0
        %5021 = vmatmul.mubr.bf16.gmra.mxu0 %v4722
        %v5022 = vpop.f32.mrf.mxu0
        %v5023 = vadd.f32 0.0, %v5022
        %v5024 = vpop.f32.mrf.mxu0
        %v5025 = vpop.f32.mrf.mxu0
        %v5026 = vadd.f32 0.0, %v5025
        %v5027 = vpop.f32.mrf.mxu0
        %5028 = vmatprep.mubr.bf16.mxu0 0
        %5029 = vmatmul.mubr.bf16.gmra.mxu0 %v4725
        %v5030 = vpop.f32.mrf.mxu0
        %v5031 = vadd.f32 0.0, %v5030
        %v5032 = vpop.f32.mrf.mxu0
        %v5033 = vpop.f32.mrf.mxu0
        %v5034 = vadd.f32 0.0, %v5033
        %v5035 = vpop.f32.mrf.mxu0
        %5036 = vmatprep.mubr.bf16.mxu0 0
        %5037 = vmatmul.mubr.bf16.gmra.mxu0 %v4728
        %v5038 = vpop.f32.mrf.mxu0
        %v5039 = vadd.f32 0.0, %v5038
        %v5040 = vpop.f32.mrf.mxu0
        %v5041 = vpop.f32.mrf.mxu0
        %v5042 = vadd.f32 0.0, %v5041
        %v5043 = vpop.f32.mrf.mxu0
        %5044 = vmatprep.mubr.bf16.mxu0 0
        %5045 = vmatmul.mubr.bf16.gmra.mxu0 %v4731
        %v5046 = vpop.f32.mrf.mxu0
        %v5047 = vadd.f32 0.0, %v5046
        %v5048 = vpop.f32.mrf.mxu0
        %v5049 = vpop.f32.mrf.mxu0
        %v5050 = vadd.f32 0.0, %v5049
        %v5051 = vpop.f32.mrf.mxu0
        %5052 = vmatprep.mubr.bf16.mxu0 0
        %5053 = vmatmul.mubr.bf16.gmra.mxu0 %v4962
        %v5054 = vpop.f32.mrf.mxu0
        %v5055 = vadd.f32 0.0, %v5054
        %v5056 = vpop.f32.mrf.mxu0
        %v5057 = vpop.f32.mrf.mxu0
        %v5058 = vadd.f32 0.0, %v5057
        %v5059 = vpop.f32.mrf.mxu0
        %5060 = vdwg.mxu0
        %v5061 = vadd.f32 %v4945, %v4999
        %v5062 = vadd.f32 %v4946, %v5002
        %v5063 = vadd.f32 %v4947, %v5007
        %v5064 = vadd.f32 %v4948, %v5010
        %v5065 = vadd.f32 %v4949, %v5015
        %v5066 = vadd.f32 %v4950, %v5018
        %v5067 = vadd.f32 %v4951, %v5023
        %v5068 = vadd.f32 %v4952, %v5026
        %v5069 = vadd.f32 %v4953, %v5031
        %v5070 = vadd.f32 %v4954, %v5034
        %v5071 = vadd.f32 %v4955, %v5039
        %v5072 = vadd.f32 %v4956, %v5042
        %v5073 = vadd.f32 %v4957, %v5047
        %v5074 = vadd.f32 %v4958, %v5050
        %v5075 = vadd.f32 %v4959, %v5055
        %v5076 = vadd.f32 %v4960, %v5058
        %v5078 = vsel %vm3029, %v3003, 0
        %5080 = vmatprep.subr.bf16.mxu0 0
        %5081 = vmatpush1.bf16.msra.mxu0 0
        %5082 = vmatprep.subr.bf16.mxu0 0
        %5083 = vmatpush1.bf16.msra.mxu0 0
        %5084 = vmatprep.subr.bf16.mxu0 0
        %5085 = vmatpush1.bf16.msra.mxu0 0
        %5086 = vmatprep.subr.bf16.mxu0 0
        %5087 = vmatpush1.bf16.msra.mxu0 0
        %5088 = vmatprep.subr.bf16.mxu0 0
        %5089 = vmatpush1.bf16.msra.mxu0 0
        %5090 = vmatprep.subr.bf16.mxu0 0
        %5091 = vmatpush1.bf16.msra.mxu0 0
        %5092 = vmatprep.subr.bf16.mxu0 0
        %5093 = vmatpush1.bf16.msra.mxu0 0
        %5094 = vmatprep.subr.bf16.mxu0 0
        %5095 = vmatpush1.bf16.msra.mxu0 %v3539
        %5096 = vmatprep.subr.bf16.mxu0 0
        %5097 = vmatpush2.bf16.msra.mxu0 0
        %5098 = vmatprep.subr.bf16.mxu0 0
        %5099 = vmatpush2.bf16.msra.mxu0 0
        %5100 = vmatprep.subr.bf16.mxu0 0
        %5101 = vmatpush2.bf16.msra.mxu0 0
        %5102 = vmatprep.subr.bf16.mxu0 0
        %5103 = vmatpush2.bf16.msra.mxu0 0
        %5104 = vmatprep.subr.bf16.mxu0 0
        %5105 = vmatpush2.bf16.msra.mxu0 0
        %5106 = vmatprep.subr.bf16.mxu0 0
        %5107 = vmatpush2.bf16.msra.mxu0 0
        %5108 = vmatprep.subr.bf16.mxu0 0
        %5109 = vmatpush2.bf16.msra.mxu0 0
        %5110 = vmatprep.subr.bf16.mxu0 0
        %5111 = vmatpush2.bf16.msra.mxu0 0
        %5112 = vmatprep.mubr.bf16.mxu0 0
        %5113 = vmatmul.mubr.bf16.gmra.mxu0 %v3893
        %v5114 = vpop.f32.mrf.mxu0
        %v5115 = vadd.f32 0.0, %v5114
        %v5116 = vpop.f32.mrf.mxu0
        %v5117 = vpop.f32.mrf.mxu0
        %v5118 = vadd.f32 0.0, %v5117
        %v5119 = vpop.f32.mrf.mxu0
        %5120 = vmatprep.mubr.bf16.mxu0 0
        %5121 = vmatmul.mubr.bf16.gmra.mxu0 %v4601
        %v5122 = vpop.f32.mrf.mxu0
        %v5123 = vadd.f32 0.0, %v5122
        %v5124 = vpop.f32.mrf.mxu0
        %v5125 = vpop.f32.mrf.mxu0
        %v5126 = vadd.f32 0.0, %v5125
        %v5127 = vpop.f32.mrf.mxu0
        %5128 = vmatprep.mubr.bf16.mxu0 0
        %5129 = vmatmul.mubr.bf16.gmra.mxu0 %v4604
        %v5130 = vpop.f32.mrf.mxu0
        %v5131 = vadd.f32 0.0, %v5130
        %v5132 = vpop.f32.mrf.mxu0
        %v5133 = vpop.f32.mrf.mxu0
        %v5134 = vadd.f32 0.0, %v5133
        %v5135 = vpop.f32.mrf.mxu0
        %5136 = vmatprep.mubr.bf16.mxu0 0
        %5137 = vmatmul.mubr.bf16.gmra.mxu0 %v4607
        %v5138 = vpop.f32.mrf.mxu0
        %v5139 = vadd.f32 0.0, %v5138
        %v5140 = vpop.f32.mrf.mxu0
        %v5141 = vpop.f32.mrf.mxu0
        %v5142 = vadd.f32 0.0, %v5141
        %v5143 = vpop.f32.mrf.mxu0
        %5144 = vmatprep.mubr.bf16.mxu0 0
        %5145 = vmatmul.mubr.bf16.gmra.mxu0 %v4610
        %v5146 = vpop.f32.mrf.mxu0
        %v5147 = vadd.f32 0.0, %v5146
        %v5148 = vpop.f32.mrf.mxu0
        %v5149 = vpop.f32.mrf.mxu0
        %v5150 = vadd.f32 0.0, %v5149
        %v5151 = vpop.f32.mrf.mxu0
        %5152 = vmatprep.mubr.bf16.mxu0 0
        %5153 = vmatmul.mubr.bf16.gmra.mxu0 %v4613
        %v5154 = vpop.f32.mrf.mxu0
        %v5155 = vadd.f32 0.0, %v5154
        %v5156 = vpop.f32.mrf.mxu0
        %v5157 = vpop.f32.mrf.mxu0
        %v5158 = vadd.f32 0.0, %v5157
        %v5159 = vpop.f32.mrf.mxu0
        %5160 = vmatprep.mubr.bf16.mxu0 0
        %5161 = vmatmul.mubr.bf16.gmra.mxu0 %v4616
        %v5162 = vpop.f32.mrf.mxu0
        %v5163 = vadd.f32 0.0, %v5162
        %v5164 = vpop.f32.mrf.mxu0
        %v5165 = vpop.f32.mrf.mxu0
        %v5166 = vadd.f32 0.0, %v5165
        %v5167 = vpop.f32.mrf.mxu0
        %5168 = vmatprep.mubr.bf16.mxu0 0
        %5169 = vmatmul.mubr.bf16.gmra.mxu0 %v5078
        %v5170 = vpop.f32.mrf.mxu0
        %v5171 = vadd.f32 0.0, %v5170
        %v5172 = vpop.f32.mrf.mxu0
        %v5173 = vpop.f32.mrf.mxu0
        %v5174 = vadd.f32 0.0, %v5173
        %v5175 = vpop.f32.mrf.mxu0
        %5176 = vdwg.mxu0
        %v5177 = vadd.f32 %v5061, %v5115
        %v5178 = vadd.f32 %v5062, %v5118
        %v5179 = vadd.f32 %v5063, %v5123
        %v5180 = vadd.f32 %v5064, %v5126
        %v5181 = vadd.f32 %v5065, %v5131
        %v5182 = vadd.f32 %v5066, %v5134
        %v5183 = vadd.f32 %v5067, %v5139
        %v5184 = vadd.f32 %v5068, %v5142
        %v5185 = vadd.f32 %v5069, %v5147
        %v5186 = vadd.f32 %v5070, %v5150
        %v5187 = vadd.f32 %v5071, %v5155
        %v5188 = vadd.f32 %v5072, %v5158
        %v5189 = vadd.f32 %v5073, %v5163
        %v5190 = vadd.f32 %v5074, %v5166
        %v5191 = vadd.f32 %v5075, %v5171
        %v5192 = vadd.f32 %v5076, %v5174
        %v5194 = vsel %vm3029, %v3010, 0
        %5196 = vmatprep.subr.bf16.mxu0 0
        %5197 = vmatpush1.bf16.msra.mxu0 0
        %5198 = vmatprep.subr.bf16.mxu0 0
        %5199 = vmatpush1.bf16.msra.mxu0 0
        %5200 = vmatprep.subr.bf16.mxu0 0
        %5201 = vmatpush1.bf16.msra.mxu0 0
        %5202 = vmatprep.subr.bf16.mxu0 0
        %5203 = vmatpush1.bf16.msra.mxu0 0
        %5204 = vmatprep.subr.bf16.mxu0 0
        %5205 = vmatpush1.bf16.msra.mxu0 0
        %5206 = vmatprep.subr.bf16.mxu0 0
        %5207 = vmatpush1.bf16.msra.mxu0 0
        %5208 = vmatprep.subr.bf16.mxu0 0
        %5209 = vmatpush1.bf16.msra.mxu0 0
        %5210 = vmatprep.subr.bf16.mxu0 0
        %5211 = vmatpush1.bf16.msra.mxu0 %v3658
        %5212 = vmatprep.subr.bf16.mxu0 0
        %5213 = vmatpush2.bf16.msra.mxu0 0
        %5214 = vmatprep.subr.bf16.mxu0 0
        %5215 = vmatpush2.bf16.msra.mxu0 0
        %5216 = vmatprep.subr.bf16.mxu0 0
        %5217 = vmatpush2.bf16.msra.mxu0 0
        %5218 = vmatprep.subr.bf16.mxu0 0
        %5219 = vmatpush2.bf16.msra.mxu0 0
        %5220 = vmatprep.subr.bf16.mxu0 0
        %5221 = vmatpush2.bf16.msra.mxu0 0
        %5222 = vmatprep.subr.bf16.mxu0 0
        %5223 = vmatpush2.bf16.msra.mxu0 0
        %5224 = vmatprep.subr.bf16.mxu0 0
        %5225 = vmatpush2.bf16.msra.mxu0 0
        %5226 = vmatprep.subr.bf16.mxu0 0
        %5227 = vmatpush2.bf16.msra.mxu0 0
        %5228 = vmatprep.mubr.bf16.mxu0 0
        %5229 = vmatmul.mubr.bf16.gmra.mxu0 %v4012
        %v5230 = vpop.f32.mrf.mxu0
        %v5231 = vadd.f32 0.0, %v5230
        %v5232 = vpop.f32.mrf.mxu0
        %v5233 = vpop.f32.mrf.mxu0
        %v5234 = vadd.f32 0.0, %v5233
        %v5235 = vpop.f32.mrf.mxu0
        %5236 = vmatprep.mubr.bf16.mxu0 0
        %5237 = vmatmul.mubr.bf16.gmra.mxu0 %v4831
        %v5238 = vpop.f32.mrf.mxu0
        %v5239 = vadd.f32 0.0, %v5238
        %v5240 = vpop.f32.mrf.mxu0
        %v5241 = vpop.f32.mrf.mxu0
        %v5242 = vadd.f32 0.0, %v5241
        %v5243 = vpop.f32.mrf.mxu0
        %5244 = vmatprep.mubr.bf16.mxu0 0
        %5245 = vmatmul.mubr.bf16.gmra.mxu0 %v4834
        %v5246 = vpop.f32.mrf.mxu0
        %v5247 = vadd.f32 0.0, %v5246
        %v5248 = vpop.f32.mrf.mxu0
        %v5249 = vpop.f32.mrf.mxu0
        %v5250 = vadd.f32 0.0, %v5249
        %v5251 = vpop.f32.mrf.mxu0
        %5252 = vmatprep.mubr.bf16.mxu0 0
        %5253 = vmatmul.mubr.bf16.gmra.mxu0 %v4837
        %v5254 = vpop.f32.mrf.mxu0
        %v5255 = vadd.f32 0.0, %v5254
        %v5256 = vpop.f32.mrf.mxu0
        %v5257 = vpop.f32.mrf.mxu0
        %v5258 = vadd.f32 0.0, %v5257
        %v5259 = vpop.f32.mrf.mxu0
        %5260 = vmatprep.mubr.bf16.mxu0 0
        %5261 = vmatmul.mubr.bf16.gmra.mxu0 %v4840
        %v5262 = vpop.f32.mrf.mxu0
        %v5263 = vadd.f32 0.0, %v5262
        %v5264 = vpop.f32.mrf.mxu0
        %v5265 = vpop.f32.mrf.mxu0
        %v5266 = vadd.f32 0.0, %v5265
        %v5267 = vpop.f32.mrf.mxu0
        %5268 = vmatprep.mubr.bf16.mxu0 0
        %5269 = vmatmul.mubr.bf16.gmra.mxu0 %v4843
        %v5270 = vpop.f32.mrf.mxu0
        %v5271 = vadd.f32 0.0, %v5270
        %v5272 = vpop.f32.mrf.mxu0
        %v5273 = vpop.f32.mrf.mxu0
        %v5274 = vadd.f32 0.0, %v5273
        %v5275 = vpop.f32.mrf.mxu0
        %5276 = vmatprep.mubr.bf16.mxu0 0
        %5277 = vmatmul.mubr.bf16.gmra.mxu0 %v4846
        %v5278 = vpop.f32.mrf.mxu0
        %v5279 = vadd.f32 0.0, %v5278
        %v5280 = vpop.f32.mrf.mxu0
        %v5281 = vpop.f32.mrf.mxu0
        %v5282 = vadd.f32 0.0, %v5281
        %v5283 = vpop.f32.mrf.mxu0
        %5284 = vmatprep.mubr.bf16.mxu0 0
        %5285 = vmatmul.mubr.bf16.gmra.mxu0 %v5194
        %v5286 = vpop.f32.mrf.mxu0
        %v5287 = vadd.f32 0.0, %v5286
        %v5288 = vpop.f32.mrf.mxu0
        %v5289 = vpop.f32.mrf.mxu0
        %v5290 = vadd.f32 0.0, %v5289
        %v5291 = vpop.f32.mrf.mxu0
        %5292 = vdwg.mxu0
        %v5293 = vadd.f32 %v5177, %v5231
        %v5294 = vadd.f32 %v5178, %v5234
        %v5295 = vadd.f32 %v5179, %v5239
        %v5296 = vadd.f32 %v5180, %v5242
        %v5297 = vadd.f32 %v5181, %v5247
        %v5298 = vadd.f32 %v5182, %v5250
        %v5299 = vadd.f32 %v5183, %v5255
        %v5300 = vadd.f32 %v5184, %v5258
        %v5301 = vadd.f32 %v5185, %v5263
        %v5302 = vadd.f32 %v5186, %v5266
        %v5303 = vadd.f32 %v5187, %v5271
        %v5304 = vadd.f32 %v5188, %v5274
        %v5305 = vadd.f32 %v5189, %v5279
        %v5306 = vadd.f32 %v5190, %v5282
        %v5307 = vadd.f32 %v5191, %v5287
        %v5308 = vadd.f32 %v5192, %v5290
        %5309 = vmatprep.subr.bf16.mxu0 0
        %5310 = vmatpush1.bf16.msra.mxu0 0
        %5311 = vmatprep.subr.bf16.mxu0 0
        %5312 = vmatpush1.bf16.msra.mxu0 0
        %5313 = vmatprep.subr.bf16.mxu0 0
        %5314 = vmatpush1.bf16.msra.mxu0 0
        %5315 = vmatprep.subr.bf16.mxu0 0
        %5316 = vmatpush1.bf16.msra.mxu0 0
        %5317 = vmatprep.subr.bf16.mxu0 0
        %5318 = vmatpush1.bf16.msra.mxu0 0
        %5319 = vmatprep.subr.bf16.mxu0 0
        %5320 = vmatpush1.bf16.msra.mxu0 0
        %5321 = vmatprep.subr.bf16.mxu0 0
        %5322 = vmatpush1.bf16.msra.mxu0 0
        %5323 = vmatprep.subr.bf16.mxu0 0
        %5324 = vmatpush1.bf16.msra.mxu0 %v3777
        %5325 = vmatprep.subr.bf16.mxu0 0
        %5326 = vmatpush2.bf16.msra.mxu0 0
        %5327 = vmatprep.subr.bf16.mxu0 0
        %5328 = vmatpush2.bf16.msra.mxu0 0
        %5329 = vmatprep.subr.bf16.mxu0 0
        %5330 = vmatpush2.bf16.msra.mxu0 0
        %5331 = vmatprep.subr.bf16.mxu0 0
        %5332 = vmatpush2.bf16.msra.mxu0 0
        %5333 = vmatprep.subr.bf16.mxu0 0
        %5334 = vmatpush2.bf16.msra.mxu0 0
        %5335 = vmatprep.subr.bf16.mxu0 0
        %5336 = vmatpush2.bf16.msra.mxu0 0
        %5337 = vmatprep.subr.bf16.mxu0 0
        %5338 = vmatpush2.bf16.msra.mxu0 0
        %5339 = vmatprep.subr.bf16.mxu0 0
        %5340 = vmatpush2.bf16.msra.mxu0 0
        %5341 = vmatprep.mubr.bf16.mxu0 0
        %5342 = vmatmul.mubr.bf16.gmra.mxu0 %v4716
        %v5343 = vpop.f32.mrf.mxu0
        %v5344 = vadd.f32 0.0, %v5343
        %v5345 = vpop.f32.mrf.mxu0
        %v5346 = vpop.f32.mrf.mxu0
        %v5347 = vadd.f32 0.0, %v5346
        %v5348 = vpop.f32.mrf.mxu0
        %5349 = vmatprep.mubr.bf16.mxu0 0
        %5350 = vmatmul.mubr.bf16.gmra.mxu0 %v4719
        %v5351 = vpop.f32.mrf.mxu0
        %v5352 = vadd.f32 0.0, %v5351
        %v5353 = vpop.f32.mrf.mxu0
        %v5354 = vpop.f32.mrf.mxu0
        %v5355 = vadd.f32 0.0, %v5354
        %v5356 = vpop.f32.mrf.mxu0
        %5357 = vmatprep.mubr.bf16.mxu0 0
        %5358 = vmatmul.mubr.bf16.gmra.mxu0 %v4722
        %v5359 = vpop.f32.mrf.mxu0
        %v5360 = vadd.f32 0.0, %v5359
        %v5361 = vpop.f32.mrf.mxu0
        %v5362 = vpop.f32.mrf.mxu0
        %v5363 = vadd.f32 0.0, %v5362
        %v5364 = vpop.f32.mrf.mxu0
        %5365 = vmatprep.mubr.bf16.mxu0 0
        %5366 = vmatmul.mubr.bf16.gmra.mxu0 %v4725
        %v5367 = vpop.f32.mrf.mxu0
        %v5368 = vadd.f32 0.0, %v5367
        %v5369 = vpop.f32.mrf.mxu0
        %v5370 = vpop.f32.mrf.mxu0
        %v5371 = vadd.f32 0.0, %v5370
        %v5372 = vpop.f32.mrf.mxu0
        %5373 = vmatprep.mubr.bf16.mxu0 0
        %5374 = vmatmul.mubr.bf16.gmra.mxu0 %v4728
        %v5375 = vpop.f32.mrf.mxu0
        %v5376 = vadd.f32 0.0, %v5375
        %v5377 = vpop.f32.mrf.mxu0
        %v5378 = vpop.f32.mrf.mxu0
        %v5379 = vadd.f32 0.0, %v5378
        %v5380 = vpop.f32.mrf.mxu0
        %5381 = vmatprep.mubr.bf16.mxu0 0
        %5382 = vmatmul.mubr.bf16.gmra.mxu0 %v4731
        %v5383 = vpop.f32.mrf.mxu0
        %v5384 = vadd.f32 0.0, %v5383
        %v5385 = vpop.f32.mrf.mxu0
        %v5386 = vpop.f32.mrf.mxu0
        %v5387 = vadd.f32 0.0, %v5386
        %v5388 = vpop.f32.mrf.mxu0
        %5389 = vmatprep.mubr.bf16.mxu0 0
        %5390 = vmatmul.mubr.bf16.gmra.mxu0 %v4962
        %v5391 = vpop.f32.mrf.mxu0
        %v5392 = vadd.f32 0.0, %v5391
        %v5393 = vpop.f32.mrf.mxu0
        %v5394 = vpop.f32.mrf.mxu0
        %v5395 = vadd.f32 0.0, %v5394
        %v5396 = vpop.f32.mrf.mxu0
        %5397 = vmatprep.mubr.bf16.mxu0 0
        %5398 = vmatmul.mubr.bf16.gmra.mxu0 %v3154
        %v5399 = vpop.f32.mrf.mxu0
        %v5400 = vadd.f32 0.0, %v5399
        %v5401 = vpop.f32.mrf.mxu0
        %v5402 = vpop.f32.mrf.mxu0
        %v5403 = vadd.f32 0.0, %v5402
        %v5404 = vpop.f32.mrf.mxu0
        %5405 = vdwg.mxu0
        %v5406 = vadd.f32 %v5293, %v5344
        %v5407 = vadd.f32 %v5294, %v5347
        %v5408 = vadd.f32 %v5295, %v5352
        %v5409 = vadd.f32 %v5296, %v5355
        %v5410 = vadd.f32 %v5297, %v5360
        %v5411 = vadd.f32 %v5298, %v5363
        %v5412 = vadd.f32 %v5299, %v5368
        %v5413 = vadd.f32 %v5300, %v5371
        %v5414 = vadd.f32 %v5301, %v5376
        %v5415 = vadd.f32 %v5302, %v5379
        %v5416 = vadd.f32 %v5303, %v5384
        %v5417 = vadd.f32 %v5304, %v5387
        %v5418 = vadd.f32 %v5305, %v5392
        %v5419 = vadd.f32 %v5306, %v5395
        %v5420 = vadd.f32 %v5307, %v5400
        %v5421 = vadd.f32 %v5308, %v5403
        %5422 = vmatprep.subr.bf16.mxu0 0
        %5423 = vmatpush1.bf16.msra.mxu0 0
        %5424 = vmatprep.subr.bf16.mxu0 0
        %5425 = vmatpush1.bf16.msra.mxu0 0
        %5426 = vmatprep.subr.bf16.mxu0 0
        %5427 = vmatpush1.bf16.msra.mxu0 0
        %5428 = vmatprep.subr.bf16.mxu0 0
        %5429 = vmatpush1.bf16.msra.mxu0 0
        %5430 = vmatprep.subr.bf16.mxu0 0
        %5431 = vmatpush1.bf16.msra.mxu0 0
        %5432 = vmatprep.subr.bf16.mxu0 0
        %5433 = vmatpush1.bf16.msra.mxu0 0
        %5434 = vmatprep.subr.bf16.mxu0 0
        %5435 = vmatpush1.bf16.msra.mxu0 0
        %5436 = vmatprep.subr.bf16.mxu0 0
        %5437 = vmatpush1.bf16.msra.mxu0 %v3896
        %5438 = vmatprep.subr.bf16.mxu0 0
        %5439 = vmatpush2.bf16.msra.mxu0 0
        %5440 = vmatprep.subr.bf16.mxu0 0
        %5441 = vmatpush2.bf16.msra.mxu0 0
        %5442 = vmatprep.subr.bf16.mxu0 0
        %5443 = vmatpush2.bf16.msra.mxu0 0
        %5444 = vmatprep.subr.bf16.mxu0 0
        %5445 = vmatpush2.bf16.msra.mxu0 0
        %5446 = vmatprep.subr.bf16.mxu0 0
        %5447 = vmatpush2.bf16.msra.mxu0 0
        %5448 = vmatprep.subr.bf16.mxu0 0
        %5449 = vmatpush2.bf16.msra.mxu0 0
        %5450 = vmatprep.subr.bf16.mxu0 0
        %5451 = vmatpush2.bf16.msra.mxu0 0
        %5452 = vmatprep.subr.bf16.mxu0 0
        %5453 = vmatpush2.bf16.msra.mxu0 0
        %5454 = vmatprep.mubr.bf16.mxu0 0
        %5455 = vmatmul.mubr.bf16.gmra.mxu0 %v4601
        %v5456 = vpop.f32.mrf.mxu0
        %v5457 = vadd.f32 0.0, %v5456
        %v5458 = vpop.f32.mrf.mxu0
        %v5459 = vpop.f32.mrf.mxu0
        %v5460 = vadd.f32 0.0, %v5459
        %v5461 = vpop.f32.mrf.mxu0
        %5462 = vmatprep.mubr.bf16.mxu0 0
        %5463 = vmatmul.mubr.bf16.gmra.mxu0 %v4604
        %v5464 = vpop.f32.mrf.mxu0
        %v5465 = vadd.f32 0.0, %v5464
        %v5466 = vpop.f32.mrf.mxu0
        %v5467 = vpop.f32.mrf.mxu0
        %v5468 = vadd.f32 0.0, %v5467
        %v5469 = vpop.f32.mrf.mxu0
        %5470 = vmatprep.mubr.bf16.mxu0 0
        %5471 = vmatmul.mubr.bf16.gmra.mxu0 %v4607
        %v5472 = vpop.f32.mrf.mxu0
        %v5473 = vadd.f32 0.0, %v5472
        %v5474 = vpop.f32.mrf.mxu0
        %v5475 = vpop.f32.mrf.mxu0
        %v5476 = vadd.f32 0.0, %v5475
        %v5477 = vpop.f32.mrf.mxu0
        %5478 = vmatprep.mubr.bf16.mxu0 0
        %5479 = vmatmul.mubr.bf16.gmra.mxu0 %v4610
        %v5480 = vpop.f32.mrf.mxu0
        %v5481 = vadd.f32 0.0, %v5480
        %v5482 = vpop.f32.mrf.mxu0
        %v5483 = vpop.f32.mrf.mxu0
        %v5484 = vadd.f32 0.0, %v5483
        %v5485 = vpop.f32.mrf.mxu0
        %5486 = vmatprep.mubr.bf16.mxu0 0
        %5487 = vmatmul.mubr.bf16.gmra.mxu0 %v4613
        %v5488 = vpop.f32.mrf.mxu0
        %v5489 = vadd.f32 0.0, %v5488
        %v5490 = vpop.f32.mrf.mxu0
        %v5491 = vpop.f32.mrf.mxu0
        %v5492 = vadd.f32 0.0, %v5491
        %v5493 = vpop.f32.mrf.mxu0
        %5494 = vmatprep.mubr.bf16.mxu0 0
        %5495 = vmatmul.mubr.bf16.gmra.mxu0 %v4616
        %v5496 = vpop.f32.mrf.mxu0
        %v5497 = vadd.f32 0.0, %v5496
        %v5498 = vpop.f32.mrf.mxu0
        %v5499 = vpop.f32.mrf.mxu0
        %v5500 = vadd.f32 0.0, %v5499
        %v5501 = vpop.f32.mrf.mxu0
        %5502 = vmatprep.mubr.bf16.mxu0 0
        %5503 = vmatmul.mubr.bf16.gmra.mxu0 %v5078
        %v5504 = vpop.f32.mrf.mxu0
        %v5505 = vadd.f32 0.0, %v5504
        %v5506 = vpop.f32.mrf.mxu0
        %v5507 = vpop.f32.mrf.mxu0
        %v5508 = vadd.f32 0.0, %v5507
        %v5509 = vpop.f32.mrf.mxu0
        %5510 = vmatprep.mubr.bf16.mxu0 0
        %5511 = vmatmul.mubr.bf16.gmra.mxu0 %v3030
        %v5512 = vpop.f32.mrf.mxu0
        %v5513 = vadd.f32 0.0, %v5512
        %v5514 = vpop.f32.mrf.mxu0
        %v5515 = vpop.f32.mrf.mxu0
        %v5516 = vadd.f32 0.0, %v5515
        %v5517 = vpop.f32.mrf.mxu0
        %5518 = vdwg.mxu0
        %v5519 = vadd.f32 %v5406, %v5457
        %v5520 = vadd.f32 %v5407, %v5460
        %v5521 = vadd.f32 %v5408, %v5465
        %v5522 = vadd.f32 %v5409, %v5468
        %v5523 = vadd.f32 %v5410, %v5473
        %v5524 = vadd.f32 %v5411, %v5476
        %v5525 = vadd.f32 %v5412, %v5481
        %v5526 = vadd.f32 %v5413, %v5484
        %v5527 = vadd.f32 %v5414, %v5489
        %v5528 = vadd.f32 %v5415, %v5492
        %v5529 = vadd.f32 %v5416, %v5497
        %v5530 = vadd.f32 %v5417, %v5500
        %v5531 = vadd.f32 %v5418, %v5505
        %v5532 = vadd.f32 %v5419, %v5508
        %v5533 = vadd.f32 %v5420, %v5513
        %v5534 = vadd.f32 %v5421, %v5516
        %5535 = vmatprep.subr.bf16.mxu0 0
        %5536 = vmatpush1.bf16.msra.mxu0 0
        %5537 = vmatprep.subr.bf16.mxu0 0
        %5538 = vmatpush1.bf16.msra.mxu0 0
        %5539 = vmatprep.subr.bf16.mxu0 0
        %5540 = vmatpush1.bf16.msra.mxu0 0
        %5541 = vmatprep.subr.bf16.mxu0 0
        %5542 = vmatpush1.bf16.msra.mxu0 0
        %5543 = vmatprep.subr.bf16.mxu0 0
        %5544 = vmatpush1.bf16.msra.mxu0 0
        %5545 = vmatprep.subr.bf16.mxu0 0
        %5546 = vmatpush1.bf16.msra.mxu0 0
        %5547 = vmatprep.subr.bf16.mxu0 0
        %5548 = vmatpush1.bf16.msra.mxu0 0
        %5549 = vmatprep.subr.bf16.mxu0 0
        %5550 = vmatpush1.bf16.msra.mxu0 %v4015
        %5551 = vmatprep.subr.bf16.mxu0 0
        %5552 = vmatpush2.bf16.msra.mxu0 0
        %5553 = vmatprep.subr.bf16.mxu0 0
        %5554 = vmatpush2.bf16.msra.mxu0 0
        %5555 = vmatprep.subr.bf16.mxu0 0
        %5556 = vmatpush2.bf16.msra.mxu0 0
        %5557 = vmatprep.subr.bf16.mxu0 0
        %5558 = vmatpush2.bf16.msra.mxu0 0
        %5559 = vmatprep.subr.bf16.mxu0 0
        %5560 = vmatpush2.bf16.msra.mxu0 0
        %5561 = vmatprep.subr.bf16.mxu0 0
        %5562 = vmatpush2.bf16.msra.mxu0 0
        %5563 = vmatprep.subr.bf16.mxu0 0
        %5564 = vmatpush2.bf16.msra.mxu0 0
        %5565 = vmatprep.subr.bf16.mxu0 0
        %5566 = vmatpush2.bf16.msra.mxu0 0
        %5567 = vmatprep.mubr.bf16.mxu0 0
        %5568 = vmatmul.mubr.bf16.gmra.mxu0 %v4831
        %v5569 = vpop.f32.mrf.mxu0
        %v5570 = vadd.f32 0.0, %v5569
        %v5571 = vpop.f32.mrf.mxu0
        %v5572 = vpop.f32.mrf.mxu0
        %v5573 = vadd.f32 0.0, %v5572
        %v5574 = vpop.f32.mrf.mxu0
        %5575 = vmatprep.mubr.bf16.mxu0 0
        %5576 = vmatmul.mubr.bf16.gmra.mxu0 %v4834
        %v5577 = vpop.f32.mrf.mxu0
        %v5578 = vadd.f32 0.0, %v5577
        %v5579 = vpop.f32.mrf.mxu0
        %v5580 = vpop.f32.mrf.mxu0
        %v5581 = vadd.f32 0.0, %v5580
        %v5582 = vpop.f32.mrf.mxu0
        %5583 = vmatprep.mubr.bf16.mxu0 0
        %5584 = vmatmul.mubr.bf16.gmra.mxu0 %v4837
        %v5585 = vpop.f32.mrf.mxu0
        %v5586 = vadd.f32 0.0, %v5585
        %v5587 = vpop.f32.mrf.mxu0
        %v5588 = vpop.f32.mrf.mxu0
        %v5589 = vadd.f32 0.0, %v5588
        %v5590 = vpop.f32.mrf.mxu0
        %5591 = vmatprep.mubr.bf16.mxu0 0
        %5592 = vmatmul.mubr.bf16.gmra.mxu0 %v4840
        %v5593 = vpop.f32.mrf.mxu0
        %v5594 = vadd.f32 0.0, %v5593
        %v5595 = vpop.f32.mrf.mxu0
        %v5596 = vpop.f32.mrf.mxu0
        %v5597 = vadd.f32 0.0, %v5596
        %v5598 = vpop.f32.mrf.mxu0
        %5599 = vmatprep.mubr.bf16.mxu0 0
        %5600 = vmatmul.mubr.bf16.gmra.mxu0 %v4843
        %v5601 = vpop.f32.mrf.mxu0
        %v5602 = vadd.f32 0.0, %v5601
        %v5603 = vpop.f32.mrf.mxu0
        %v5604 = vpop.f32.mrf.mxu0
        %v5605 = vadd.f32 0.0, %v5604
        %v5606 = vpop.f32.mrf.mxu0
        %5607 = vmatprep.mubr.bf16.mxu0 0
        %5608 = vmatmul.mubr.bf16.gmra.mxu0 %v4846
        %v5609 = vpop.f32.mrf.mxu0
        %v5610 = vadd.f32 0.0, %v5609
        %v5611 = vpop.f32.mrf.mxu0
        %v5612 = vpop.f32.mrf.mxu0
        %v5613 = vadd.f32 0.0, %v5612
        %v5614 = vpop.f32.mrf.mxu0
        %5615 = vmatprep.mubr.bf16.mxu0 0
        %5616 = vmatmul.mubr.bf16.gmra.mxu0 %v5194
        %v5617 = vpop.f32.mrf.mxu0
        %v5618 = vadd.f32 0.0, %v5617
        %v5619 = vpop.f32.mrf.mxu0
        %v5620 = vpop.f32.mrf.mxu0
        %v5621 = vadd.f32 0.0, %v5620
        %v5622 = vpop.f32.mrf.mxu0
        %5623 = vmatprep.mubr.bf16.mxu0 0
        %5624 = vmatmul.mubr.bf16.gmra.mxu0 %v3277
        %v5625 = vpop.f32.mrf.mxu0
        %v5626 = vadd.f32 0.0, %v5625
        %v5627 = vpop.f32.mrf.mxu0
        %v5628 = vpop.f32.mrf.mxu0
        %v5629 = vadd.f32 0.0, %v5628
        %v5630 = vpop.f32.mrf.mxu0
        %5631 = vdwg.mxu0
        %v5632 = vadd.f32 %v5519, %v5570
        %v5633 = vadd.f32 %v5520, %v5573
        %v5634 = vadd.f32 %v5521, %v5578
        %v5635 = vadd.f32 %v5522, %v5581
        %v5636 = vadd.f32 %v5523, %v5586
        %v5637 = vadd.f32 %v5524, %v5589
        %v5638 = vadd.f32 %v5525, %v5594
        %v5639 = vadd.f32 %v5526, %v5597
        %v5640 = vadd.f32 %v5527, %v5602
        %v5641 = vadd.f32 %v5528, %v5605
        %v5642 = vadd.f32 %v5529, %v5610
        %v5643 = vadd.f32 %v5530, %v5613
        %v5644 = vadd.f32 %v5531, %v5618
        %v5645 = vadd.f32 %v5532, %v5621
        %v5646 = vadd.f32 %v5533, %v5626
        %v5647 = vadd.f32 %v5534, %v5629
        %v5648 = vadd.f32 %v5632, %v4134
        %v5649 = vadd.f32 %v5633, %v4134
        %v5650 = vadd.f32 %v5634, %v4134
        %v5651 = vadd.f32 %v5635, %v4134
        %v5652 = vadd.f32 %v5636, %v4134
        %v5653 = vadd.f32 %v5637, %v4134
        %v5654 = vadd.f32 %v5638, %v4134
        %v5655 = vadd.f32 %v5639, %v4134
        %v5656 = vadd.f32 %v5640, %v4134
        %v5657 = vadd.f32 %v5641, %v4134
        %v5658 = vadd.f32 %v5642, %v4134
        %v5659 = vadd.f32 %v5643, %v4134
        %v5660 = vadd.f32 %v5644, %v4134
        %v5661 = vadd.f32 %v5645, %v4134
        %v5662 = vadd.f32 %v5646, %v4134
        %v5663 = vadd.f32 %v5647, %v4134
        %v5664 = vmul.f32 %v5648, %v399
        %v5665 = vmul.f32 %v5649, %v399
        %v5666 = vmul.f32 %v5650, %v399
        %v5667 = vmul.f32 %v5651, %v399
        %v5668 = vmul.f32 %v5652, %v399
        %v5669 = vmul.f32 %v5653, %v399
        %v5670 = vmul.f32 %v5654, %v399
        %v5671 = vmul.f32 %v5655, %v399
        %v5672 = vmul.f32 %v5656, %v399
        %v5673 = vmul.f32 %v5657, %v399
        %v5674 = vmul.f32 %v5658, %v399
        %v5675 = vmul.f32 %v5659, %v399
        %v5676 = vmul.f32 %v5660, %v399
        %v5677 = vmul.f32 %v5661, %v399
        %v5678 = vmul.f32 %v5662, %v399
        %v5679 = vmul.f32 %v5663, %v399
        %v5680 = vtanh.pop %v5664
        %v5681 = vtanh.pop %v5665
        %v5682 = vtanh.pop %v5666
        %v5683 = vtanh.pop %v5667
        %v5684 = vtanh.pop %v5668
        %v5685 = vtanh.pop %v5669
        %v5686 = vtanh.pop %v5670
        %v5687 = vtanh.pop %v5671
        %v5688 = vtanh.pop %v5672
        %v5689 = vtanh.pop %v5673
        %v5690 = vtanh.pop %v5674
        %v5691 = vtanh.pop %v5675
        %v5692 = vtanh.pop %v5676
        %v5693 = vtanh.pop %v5677
        %v5694 = vtanh.pop %v5678
        %v5695 = vtanh.pop %v5679
        %v5696 = vmul.f32 %v5680, %v399
        %v5697 = vmul.f32 %v5681, %v399
        %v5698 = vmul.f32 %v5682, %v399
        %v5699 = vmul.f32 %v5683, %v399
        %v5700 = vmul.f32 %v5684, %v399
        %v5701 = vmul.f32 %v5685, %v399
        %v5702 = vmul.f32 %v5686, %v399
        %v5703 = vmul.f32 %v5687, %v399
        %v5704 = vmul.f32 %v5688, %v399
        %v5705 = vmul.f32 %v5689, %v399
        %v5706 = vmul.f32 %v5690, %v399
        %v5707 = vmul.f32 %v5691, %v399
        %v5708 = vmul.f32 %v5692, %v399
        %v5709 = vmul.f32 %v5693, %v399
        %v5710 = vmul.f32 %v5694, %v399
        %v5711 = vmul.f32 %v5695, %v399
        %v5712 = vadd.f32 %v5696, %v400
        %v5713 = vadd.f32 %v5697, %v400
        %v5714 = vadd.f32 %v5698, %v400
        %v5715 = vadd.f32 %v5699, %v400
        %v5716 = vadd.f32 %v5700, %v400
        %v5717 = vadd.f32 %v5701, %v400
        %v5718 = vadd.f32 %v5702, %v400
        %v5719 = vadd.f32 %v5703, %v400
        %v5720 = vadd.f32 %v5704, %v400
        %v5721 = vadd.f32 %v5705, %v400
        %v5722 = vadd.f32 %v5706, %v400
        %v5723 = vadd.f32 %v5707, %v400
        %v5724 = vadd.f32 %v5708, %v400
        %v5725 = vadd.f32 %v5709, %v400
        %v5726 = vadd.f32 %v5710, %v400
        %v5727 = vadd.f32 %v5711, %v400
        %s5728 = scalar_lea.vmem %s342, 128 [#allocation5]
        %v5729 = vld [vmem:[%s5728] sm:$0xff]
        %v5730 = vld [vmem:[%s5728 + $0x8] sm:$0xff]
        %v5731 = vld [vmem:[%s5728 + $0x10] sm:$0xff]
        %v5732 = vld [vmem:[%s5728 + $0x18] sm:$0xff]
        %v5733 = vld [vmem:[%s5728 + $0x20] sm:$0xff]
        %v5734 = vld [vmem:[%s5728 + $0x28] sm:$0xff]
        %v5735 = vld [vmem:[%s5728 + $0x30] sm:$0xff]
        %v5736 = vld [vmem:[%s5728 + $0x38] sm:$0xff]
        %v5737 = vld [vmem:[%s5728 + $0x40] sm:$0xff]
        %v5738 = vld [vmem:[%s5728 + $0x48] sm:$0xff]
        %v5739 = vld [vmem:[%s5728 + $0x50] sm:$0xff]
        %v5740 = vld [vmem:[%s5728 + $0x58] sm:$0xff]
        %v5741 = vld [vmem:[%s5728 + $0x60] sm:$0xff]
        %v5742 = vld [vmem:[%s5728 + $0x68] sm:$0xff]
        %v5743 = vld [vmem:[%s5728 + $0x70] sm:$0xff]
        %v5744 = vld [vmem:[%s5728 + $0x78] sm:$0xff]
        %v5745 = vmul.f32 %v5712, %v5729
        %v5746 = vmul.f32 %v5713, %v5730
        %v5747 = vmul.f32 %v5714, %v5731
        %v5748 = vmul.f32 %v5715, %v5732
        %v5749 = vmul.f32 %v5716, %v5733
        %v5750 = vmul.f32 %v5717, %v5734
        %v5751 = vmul.f32 %v5718, %v5735
        %v5752 = vmul.f32 %v5719, %v5736
        %v5753 = vmul.f32 %v5720, %v5737
        %v5754 = vmul.f32 %v5721, %v5738
        %v5755 = vmul.f32 %v5722, %v5739
        %v5756 = vmul.f32 %v5723, %v5740
        %v5757 = vmul.f32 %v5724, %v5741
        %v5758 = vmul.f32 %v5725, %v5742
        %v5759 = vmul.f32 %v5726, %v5743
        %v5760 = vmul.f32 %v5727, %v5744
        %5777 = vrot.lane.b32.xlu0 %v5712, 64
        %v5778 = vpop.permute.xlu0 %5777
        %5779 = vrot.lane.b32.xlu0 %v5713, 64
        %v5780 = vpop.permute.xlu0 %5779
        %5781 = vrot.lane.b32.xlu0 %v5714, 64
        %v5782 = vpop.permute.xlu0 %5781
        %5783 = vrot.lane.b32.xlu0 %v5715, 64
        %v5784 = vpop.permute.xlu0 %5783
        %5785 = vrot.lane.b32.xlu0 %v5716, 64
        %v5786 = vpop.permute.xlu0 %5785
        %5787 = vrot.lane.b32.xlu0 %v5717, 64
        %v5788 = vpop.permute.xlu0 %5787
        %5789 = vrot.lane.b32.xlu0 %v5718, 64
        %v5790 = vpop.permute.xlu0 %5789
        %5791 = vrot.lane.b32.xlu0 %v5719, 64
        %v5792 = vpop.permute.xlu0 %5791
        %5793 = vrot.lane.b32.xlu0 %v5720, 64
        %v5794 = vpop.permute.xlu0 %5793
        %5795 = vrot.lane.b32.xlu0 %v5721, 64
        %v5796 = vpop.permute.xlu0 %5795
        %5797 = vrot.lane.b32.xlu0 %v5722, 64
        %v5798 = vpop.permute.xlu0 %5797
        %5799 = vrot.lane.b32.xlu0 %v5723, 64
        %v5800 = vpop.permute.xlu0 %5799
        %5801 = vrot.lane.b32.xlu0 %v5724, 64
        %v5802 = vpop.permute.xlu0 %5801
        %5803 = vrot.lane.b32.xlu0 %v5725, 64
        %v5804 = vpop.permute.xlu0 %5803
        %5805 = vrot.lane.b32.xlu0 %v5726, 64
        %v5806 = vpop.permute.xlu0 %5805
        %5807 = vrot.lane.b32.xlu0 %v5727, 64
        %v5808 = vpop.permute.xlu0 %5807
        %v5825 = vmul.f32 %v5712, %v5778
        %v5826 = vmul.f32 %v5713, %v5780
        %v5827 = vmul.f32 %v5714, %v5782
        %v5828 = vmul.f32 %v5715, %v5784
        %v5829 = vmul.f32 %v5716, %v5786
        %v5830 = vmul.f32 %v5717, %v5788
        %v5831 = vmul.f32 %v5718, %v5790
        %v5832 = vmul.f32 %v5719, %v5792
        %v5833 = vmul.f32 %v5720, %v5794
        %v5834 = vmul.f32 %v5721, %v5796
        %v5835 = vmul.f32 %v5722, %v5798
        %v5836 = vmul.f32 %v5723, %v5800
        %v5837 = vmul.f32 %v5724, %v5802
        %v5838 = vmul.f32 %v5725, %v5804
        %v5839 = vmul.f32 %v5726, %v5806
        %v5840 = vmul.f32 %v5727, %v5808
        %5857 = vrot.lane.b32.xlu0 %v5825, 96
        %v5858 = vpop.permute.xlu0 %5857
        %5859 = vrot.lane.b32.xlu0 %v5826, 96
        %v5860 = vpop.permute.xlu0 %5859
        %5861 = vrot.lane.b32.xlu0 %v5827, 96
        %v5862 = vpop.permute.xlu0 %5861
        %5863 = vrot.lane.b32.xlu0 %v5828, 96
        %v5864 = vpop.permute.xlu0 %5863
        %5865 = vrot.lane.b32.xlu0 %v5829, 96
        %v5866 = vpop.permute.xlu0 %5865
        %5867 = vrot.lane.b32.xlu0 %v5830, 96
        %v5868 = vpop.permute.xlu0 %5867
        %5869 = vrot.lane.b32.xlu0 %v5831, 96
        %v5870 = vpop.permute.xlu0 %5869
        %5871 = vrot.lane.b32.xlu0 %v5832, 96
        %v5872 = vpop.permute.xlu0 %5871
        %5873 = vrot.lane.b32.xlu0 %v5833, 96
        %v5874 = vpop.permute.xlu0 %5873
        %5875 = vrot.lane.b32.xlu0 %v5834, 96
        %v5876 = vpop.permute.xlu0 %5875
        %5877 = vrot.lane.b32.xlu0 %v5835, 96
        %v5878 = vpop.permute.xlu0 %5877
        %5879 = vrot.lane.b32.xlu0 %v5836, 96
        %v5880 = vpop.permute.xlu0 %5879
        %5881 = vrot.lane.b32.xlu0 %v5837, 96
        %v5882 = vpop.permute.xlu0 %5881
        %5883 = vrot.lane.b32.xlu0 %v5838, 96
        %v5884 = vpop.permute.xlu0 %5883
        %5885 = vrot.lane.b32.xlu0 %v5839, 96
        %v5886 = vpop.permute.xlu0 %5885
        %5887 = vrot.lane.b32.xlu0 %v5840, 96
        %v5888 = vpop.permute.xlu0 %5887
        %v5905 = vadd.f32 %v5745, %v5858
        %v5906 = vadd.f32 %v5746, %v5860
        %v5907 = vadd.f32 %v5747, %v5862
        %v5908 = vadd.f32 %v5748, %v5864
        %v5909 = vadd.f32 %v5749, %v5866
        %v5910 = vadd.f32 %v5750, %v5868
        %v5911 = vadd.f32 %v5751, %v5870
        %v5912 = vadd.f32 %v5752, %v5872
        %v5913 = vadd.f32 %v5753, %v5874
        %v5914 = vadd.f32 %v5754, %v5876
        %v5915 = vadd.f32 %v5755, %v5878
        %v5916 = vadd.f32 %v5756, %v5880
        %v5917 = vadd.f32 %v5757, %v5882
        %v5918 = vadd.f32 %v5758, %v5884
        %v5919 = vadd.f32 %v5759, %v5886
        %v5920 = vadd.f32 %v5760, %v5888
        %v5921 = vtanh.pop %v5905
        %v5922 = vtanh.pop %v5906
        %v5923 = vtanh.pop %v5907
        %v5924 = vtanh.pop %v5908
        %v5925 = vtanh.pop %v5909
        %v5926 = vtanh.pop %v5910
        %v5927 = vtanh.pop %v5911
        %v5928 = vtanh.pop %v5912
        %v5929 = vtanh.pop %v5913
        %v5930 = vtanh.pop %v5914
        %v5931 = vtanh.pop %v5915
        %v5932 = vtanh.pop %v5916
        %v5933 = vtanh.pop %v5917
        %v5934 = vtanh.pop %v5918
        %v5935 = vtanh.pop %v5919
        %v5936 = vtanh.pop %v5920
        %5953 = vrot.lane.b32.xlu0 %v5921, 64
        %v5954 = vpop.permute.xlu0 %5953
        %5955 = vrot.lane.b32.xlu0 %v5922, 64
        %v5956 = vpop.permute.xlu0 %5955
        %5957 = vrot.lane.b32.xlu0 %v5923, 64
        %v5958 = vpop.permute.xlu0 %5957
        %5959 = vrot.lane.b32.xlu0 %v5924, 64
        %v5960 = vpop.permute.xlu0 %5959
        %5961 = vrot.lane.b32.xlu0 %v5925, 64
        %v5962 = vpop.permute.xlu0 %5961
        %5963 = vrot.lane.b32.xlu0 %v5926, 64
        %v5964 = vpop.permute.xlu0 %5963
        %5965 = vrot.lane.b32.xlu0 %v5927, 64
        %v5966 = vpop.permute.xlu0 %5965
        %5967 = vrot.lane.b32.xlu0 %v5928, 64
        %v5968 = vpop.permute.xlu0 %5967
        %5969 = vrot.lane.b32.xlu0 %v5929, 64
        %v5970 = vpop.permute.xlu0 %5969
        %5971 = vrot.lane.b32.xlu0 %v5930, 64
        %v5972 = vpop.permute.xlu0 %5971
        %5973 = vrot.lane.b32.xlu0 %v5931, 64
        %v5974 = vpop.permute.xlu0 %5973
        %5975 = vrot.lane.b32.xlu0 %v5932, 64
        %v5976 = vpop.permute.xlu0 %5975
        %5977 = vrot.lane.b32.xlu0 %v5933, 64
        %v5978 = vpop.permute.xlu0 %5977
        %5979 = vrot.lane.b32.xlu0 %v5934, 64
        %v5980 = vpop.permute.xlu0 %5979
        %5981 = vrot.lane.b32.xlu0 %v5935, 64
        %v5982 = vpop.permute.xlu0 %5981
        %5983 = vrot.lane.b32.xlu0 %v5936, 64
        %v5984 = vpop.permute.xlu0 %5983
        %v6001 = vmul.f32 %v5712, %v5954
        %v6002 = vmul.f32 %v5713, %v5956
        %v6003 = vmul.f32 %v5714, %v5958
        %v6004 = vmul.f32 %v5715, %v5960
        %v6005 = vmul.f32 %v5716, %v5962
        %v6006 = vmul.f32 %v5717, %v5964
        %v6007 = vmul.f32 %v5718, %v5966
        %v6008 = vmul.f32 %v5719, %v5968
        %v6009 = vmul.f32 %v5720, %v5970
        %v6010 = vmul.f32 %v5721, %v5972
        %v6011 = vmul.f32 %v5722, %v5974
        %v6012 = vmul.f32 %v5723, %v5976
        %v6013 = vmul.f32 %v5724, %v5978
        %v6014 = vmul.f32 %v5725, %v5980
        %v6015 = vmul.f32 %v5726, %v5982
        %v6016 = vmul.f32 %v5727, %v5984
        %s6017 = scalar_lea.vmem %s389, 128 [#allocation8]
        %6018 = vst.msk [vmem:[%s6017] sm:$0xff] %vm742, %v5905
        %6019 = vst.msk [vmem:[%s6017 + $0x8] sm:$0xff] %vm742, %v5906
        %6020 = vst.msk [vmem:[%s6017 + $0x10] sm:$0xff] %vm742, %v5907
        %6021 = vst.msk [vmem:[%s6017 + $0x18] sm:$0xff] %vm742, %v5908
        %6022 = vst.msk [vmem:[%s6017 + $0x20] sm:$0xff] %vm742, %v5909
        %6023 = vst.msk [vmem:[%s6017 + $0x28] sm:$0xff] %vm742, %v5910
        %6024 = vst.msk [vmem:[%s6017 + $0x30] sm:$0xff] %vm742, %v5911
        %6025 = vst.msk [vmem:[%s6017 + $0x38] sm:$0xff] %vm742, %v5912
        %6026 = vst.msk [vmem:[%s6017 + $0x40] sm:$0xff] %vm742, %v5913
        %6027 = vst.msk [vmem:[%s6017 + $0x48] sm:$0xff] %vm742, %v5914
        %6028 = vst.msk [vmem:[%s6017 + $0x50] sm:$0xff] %vm742, %v5915
        %6029 = vst.msk [vmem:[%s6017 + $0x58] sm:$0xff] %vm742, %v5916
        %6030 = vst.msk [vmem:[%s6017 + $0x60] sm:$0xff] %vm742, %v5917
        %6031 = vst.msk [vmem:[%s6017 + $0x68] sm:$0xff] %vm742, %v5918
        %6032 = vst.msk [vmem:[%s6017 + $0x70] sm:$0xff] %vm742, %v5919
        %6033 = vst.msk [vmem:[%s6017 + $0x78] sm:$0xff] %vm742, %v5920
        %6050 = vrot.lane.b32.xlu0 %v6001, 64
        %v6051 = vpop.permute.xlu0 %6050
        %6052 = vrot.lane.b32.xlu0 %v6002, 64
        %v6053 = vpop.permute.xlu0 %6052
        %6054 = vrot.lane.b32.xlu0 %v6003, 64
        %v6055 = vpop.permute.xlu0 %6054
        %6056 = vrot.lane.b32.xlu0 %v6004, 64
        %v6057 = vpop.permute.xlu0 %6056
        %6058 = vrot.lane.b32.xlu0 %v6005, 64
        %v6059 = vpop.permute.xlu0 %6058
        %6060 = vrot.lane.b32.xlu0 %v6006, 64
        %v6061 = vpop.permute.xlu0 %6060
        %6062 = vrot.lane.b32.xlu0 %v6007, 64
        %v6063 = vpop.permute.xlu0 %6062
        %6064 = vrot.lane.b32.xlu0 %v6008, 64
        %v6065 = vpop.permute.xlu0 %6064
        %6066 = vrot.lane.b32.xlu0 %v6009, 64
        %v6067 = vpop.permute.xlu0 %6066
        %6068 = vrot.lane.b32.xlu0 %v6010, 64
        %v6069 = vpop.permute.xlu0 %6068
        %6070 = vrot.lane.b32.xlu0 %v6011, 64
        %v6071 = vpop.permute.xlu0 %6070
        %6072 = vrot.lane.b32.xlu0 %v6012, 64
        %v6073 = vpop.permute.xlu0 %6072
        %6074 = vrot.lane.b32.xlu0 %v6013, 64
        %v6075 = vpop.permute.xlu0 %6074
        %6076 = vrot.lane.b32.xlu0 %v6014, 64
        %v6077 = vpop.permute.xlu0 %6076
        %6078 = vrot.lane.b32.xlu0 %v6015, 64
        %v6079 = vpop.permute.xlu0 %6078
        %6080 = vrot.lane.b32.xlu0 %v6016, 64
        %v6081 = vpop.permute.xlu0 %6080
        %s6098 = scalar_lea.vmem %s382, 128 [#allocation7]
        %6099 = vst.msk [vmem:[%s6098] sm:$0xff] %vm742, %v6051
        %6100 = vst.msk [vmem:[%s6098 + $0x8] sm:$0xff] %vm742, %v6053
        %6101 = vst.msk [vmem:[%s6098 + $0x10] sm:$0xff] %vm742, %v6055
        %6102 = vst.msk [vmem:[%s6098 + $0x18] sm:$0xff] %vm742, %v6057
        %6103 = vst.msk [vmem:[%s6098 + $0x20] sm:$0xff] %vm742, %v6059
        %6104 = vst.msk [vmem:[%s6098 + $0x28] sm:$0xff] %vm742, %v6061
        %6105 = vst.msk [vmem:[%s6098 + $0x30] sm:$0xff] %vm742, %v6063
        %6106 = vst.msk [vmem:[%s6098 + $0x38] sm:$0xff] %vm742, %v6065
        %6107 = vst.msk [vmem:[%s6098 + $0x40] sm:$0xff] %vm742, %v6067
        %6108 = vst.msk [vmem:[%s6098 + $0x48] sm:$0xff] %vm742, %v6069
        %6109 = vst.msk [vmem:[%s6098 + $0x50] sm:$0xff] %vm742, %v6071
        %6110 = vst.msk [vmem:[%s6098 + $0x58] sm:$0xff] %vm742, %v6073
        %6111 = vst.msk [vmem:[%s6098 + $0x60] sm:$0xff] %vm742, %v6075
        %6112 = vst.msk [vmem:[%s6098 + $0x68] sm:$0xff] %vm742, %v6077
        %6113 = vst.msk [vmem:[%s6098 + $0x70] sm:$0xff] %vm742, %v6079
        %6114 = vst.msk [vmem:[%s6098 + $0x78] sm:$0xff] %vm742, %v6081
        %s6115 = sand.u32 %s202, 1
        %s6116 = scalar_lea.sflag [#allocation4], %s6115
        %s6117 = sand.u32 %s202, 1
        %s6118 = smul.addr %s6117, 256
        %s6119 = scalar_lea.vmem [#allocation7], %s6118
        %s6120 = sand.u32 %s228, 1
        %s6121 = scalar_lea.sflag [#allocation9], %s6120
        %s6122 = sand.u32 %s228, 1
        %s6123 = smul.addr %s6122, 256
        %s6124 = scalar_lea.vmem [#allocation8], %s6123
        // Predicated region
        $region57: #{conv2d_lstm_cell.1} parent=47 // pred_check
          %p6125 = pneg %p212
        $region58: #{conv2d_lstm_cell.1} parent=47 // pred_check_branch
          %6127 = sbr.rel (%p6125) target = $region60
        $region59: #{conv2d_lstm_cell.1} parent=47 // pred_region
          %s6129 = ssub.s32 4096, 4096
          %6130 = vsyncadd %s6116, %s6129
          %s6131 = smul.addr %s32, 32
          %s6132 = smul.addr %s6131, 128
          %s6133 = scalar_lea.hbm %s7, %s6132
          %s6134 = sshll.u32 %s6119, 4
          %s6135 = int_to_ptr.vmem [resolvable:$true] %s6134
          %6140 = dma.vmem_to_hbm [thread:$0]  %s6135, 4096, %s6133, %s6116, 128, 128, 8
        $region60: #{conv2d_lstm_cell.1} parent=47 // pred_fallthru
          _
        // Predicated region
        $region61: #{conv2d_lstm_cell.1} parent=47 // pred_check
          %p6141 = pneg %p238
        $region62: #{conv2d_lstm_cell.1} parent=47 // pred_check_branch
          %6143 = sbr.rel (%p6141) target = $region64
        $region63: #{conv2d_lstm_cell.1} parent=47 // pred_region
          %s6145 = ssub.s32 4096, 4096
          %6146 = vsyncadd %s6121, %s6145
          %s6147 = smul.addr %s32, 32
          %s6148 = smul.addr %s6147, 128
          %s6149 = scalar_lea.hbm %s8, %s6148
          %s6150 = sshll.u32 %s6124, 4
          %s6151 = int_to_ptr.vmem [resolvable:$true] %s6150
          %6156 = dma.vmem_to_hbm [thread:$0]  %s6151, 4096, %s6149, %s6121, 128, 128, 8
        $region64: #{conv2d_lstm_cell.1} parent=47 // pred_fallthru
          _
      $region48: #{conv2d_lstm_cell.1} parent=5 // pred_fallthru
        _
      %p6157 = scmp.le.s32.totalorder 2, %s27
      // Predicated region
      $region65: #{conv2d_lstm_cell.1} parent=5 // pred_check
        %p6158 = pneg %p6157
      $region66: #{conv2d_lstm_cell.1} parent=5 // pred_check_branch
        %6160 = sbr.rel (%p6158) target = $region68
      $region67: #{conv2d_lstm_cell.1} parent=5 // pred_region
        %s6161 = ssub.s32 %s27, 2
        // Predicated region
        $region69: #{conv2d_lstm_cell.1} parent=67 // pred_check
          %p6162 = pneg %p218
        $region70: #{conv2d_lstm_cell.1} parent=67 // pred_check_branch
          %6164 = sbr.rel (%p6162) target = $region72
        $region71: #{conv2d_lstm_cell.1} parent=67 // pred_region
          %s6165 = sand.u32 %s203, 1
          %s6166 = scalar_lea.sflag [#allocation4], %s6165
          %s6167 = sand.u32 %s203, 1
          %s6168 = smul.addr %s6167, 256
          %s6169 = scalar_lea.vmem [#allocation7], %s6168
          %6170 = dma.done %s6166, 4096
        $region72: #{conv2d_lstm_cell.1} parent=67 // pred_fallthru
          _
        // Predicated region
        $region73: #{conv2d_lstm_cell.1} parent=67 // pred_check
          %p6171 = pneg %p244
        $region74: #{conv2d_lstm_cell.1} parent=67 // pred_check_branch
          %6173 = sbr.rel (%p6171) target = $region76
        $region75: #{conv2d_lstm_cell.1} parent=67 // pred_region
          %s6174 = sand.u32 %s229, 1
          %s6175 = scalar_lea.sflag [#allocation9], %s6174
          %s6176 = sand.u32 %s229, 1
          %s6177 = smul.addr %s6176, 256
          %s6178 = scalar_lea.vmem [#allocation8], %s6177
          %6179 = dma.done %s6175, 4096
        $region76: #{conv2d_lstm_cell.1} parent=67 // pred_fallthru
          _
      $region68: #{conv2d_lstm_cell.1} parent=5 // pred_fallthru
        _
    $region6: #{conv2d_lstm_cell.1} parent=1 // loop_footer
      %s31 = sadd.s32 1, %s27
    $region7: #{conv2d_lstm_cell.1} parent=1 // loop_footer_branch
      %26 = sbr.rel target = $region3
    $region8: #{conv2d_lstm_cell.1} parent=1 // loop_exit
      _
    %6180 = vsyncpa [#allocation3], 1
    %s6181 = scalar_lea.sflag [#allocation3], 1
    %6182 = vsyncpa %s6181, 1
    %6183 = vsyncpa [#allocation6], 1
    %s6184 = scalar_lea.sflag [#allocation6], 1
    %6185 = vsyncpa %s6184, 1
    %6186 = vsyncpa [#allocation4], 1
    %s6187 = scalar_lea.sflag [#allocation4], 1
    %6188 = vsyncpa %s6187, 1
    %6189 = vsyncpa [#allocation9], 1
    %s6190 = scalar_lea.sflag [#allocation9], 1
    %6191 = vsyncpa %s6190, 1

</llo_original>
